<compile_context>
chip_gen: v5e
topology: v5e:2x2
jax: 0.10.0
libtpu: 0.0.40
codegen_flags: <defaults>
</compile_context>

<pallas_src>
import functools

import jax
import jax.numpy as jnp
from jax import lax
from jax.experimental import pallas as pl
from jax.experimental.pallas import tpu as pltpu


# -----------------------------------------------------------------------------
# Single fused kernel: 3x fused-BiLSTM layers -> fused conv head -> ReLU -> FC.
# -----------------------------------------------------------------------------
def _fused_kernel(T, B, H, L, x_ref, wl_ref, bl_ref, wc_ref, wfc_ref, bh_ref,
                  out_ref, s0, s1, u_scr, v_scr, pad):
    H2, G, TB = 2 * H, 8 * H, T * B

    def dot(a, b):
        return jnp.dot(a, b, preferred_element_type=jnp.float32)

    def fused_bilstm(inp, p_off, p_rows, layer, store):
        # Bulk input projection (hoisted out of the recurrence):
        #   U[r] = inp[r] @ P + bias ,  V[r] = inp[r] @ Q
        # and the fused per-step gate input is  gx(s) = U[s] + V[T-1-s]
        # (fwd gates at time s, bwd gates at time T-1-s), by construction of P/Q.
        u_scr[...] = dot(inp, wl_ref[p_off:p_off + p_rows, :]) + bl_ref[layer:layer + 1, :]
        v_scr[...] = dot(inp, wl_ref[p_off + p_rows:p_off + 2 * p_rows, :])
        whh = wl_ref[p_off + 2 * p_rows:p_off + 2 * p_rows + H2, :]   # (2H,8H) block-diag
        h = jnp.zeros((B, H2), jnp.float32)   # [h_fwd(time s) | h_bwd(time T-1-s)]
        c = jnp.zeros((B, H2), jnp.float32)
        for s in range(T):                    # static unroll; only h@W_hh is serial
            gx = u_scr[s * B:(s + 1) * B, :] + v_scr[(T - 1 - s) * B:(T - s) * B, :]
            g = gx + dot(h, whh)                               # (B,2H)@(2H,8H)
            a = jax.nn.sigmoid(g[:, 0:6 * H])                  # [i | f | o] contiguous
            gg = jnp.tanh(g[:, 6 * H:G])
            c = a[:, H2:2 * H2] * c + a[:, 0:H2] * gg
            h = a[:, 2 * H2:3 * H2] * jnp.tanh(c)
            store(s, h)

    def store_mixed(slab):
        def f(s, h):
            slab[s * B:(s + 1) * B, :] = h    # one lane-dense (B,2H) store per step
        return f

    # Layer-2 store: un-mix straight into the time-ordered conv pad slab
    # (fwd half belongs to time s, bwd half to time T-1-s; halo offset = 2B rows).
    def store_pad(s, h):
        pad[(2 + s) * B:(3 + s) * B, 0:H] = h[:, 0:H]
        pad[(T + 1 - s) * B:(T + 2 - s) * B, H:H2] = h[:, H:H2]

    # ---------------- 3 fused bidirectional LSTM layers ----------------
    fused_bilstm(x_ref[...], 0, H, 0, store_mixed(s0))
    fused_bilstm(s0[...], 4 * H, H2, 1, store_mixed(s1))
    # zero only the 4B halo rows of the conv pad slab
    pad[0:2 * B, :] = jnp.zeros((2 * B, H2), jnp.float32)
    pad[(2 + T) * B:(4 + T) * B, :] = jnp.zeros((2 * B, H2), jnp.float32)
    fused_bilstm(s1[...], 10 * H, H2, 2, store_pad)

    # ------- fused conv1/conv3/conv5 (k=5 stack, 'same' pad) + ReLU + FC -------
    # TODO(synk): inter-layer LSTM dropout and pre-FC dropout are eval-mode identities.
    acc = jnp.zeros((TB, H), jnp.float32) + bh_ref[0:1, :]
    for dk in range(5):                       # tap dk reads time t + dk - 2
        acc = acc + dot(pad[dk * B:dk * B + TB, :], wc_ref[dk * H2:(dk + 1) * H2, :])
    z = jnp.maximum(acc, 0.0)                 # ReLU
    out_ref[...] = dot(z, wfc_ref[...]) + bh_ref[1:2, 0:L]


# -----------------------------------------------------------------------------
# Wrapper
# -----------------------------------------------------------------------------
def make_forward(T, B, H, L):
    TB = T * B
    call = pl.pallas_call(
        functools.partial(_fused_kernel, T, B, H, L),
        out_shape=jax.ShapeDtypeStruct((TB, L), jnp.float32),
        scratch_shapes=[
            pltpu.VMEM((TB, 2 * H), jnp.float32),            # layer-0 output (mixed, lane-dense)
            pltpu.VMEM((TB, 2 * H), jnp.float32),            # layer-1 output (mixed, lane-dense)
            pltpu.VMEM((TB, 8 * H), jnp.float32),            # U slab (bulk gx, fwd-aligned)
            pltpu.VMEM((TB, 8 * H), jnp.float32),            # V slab (bulk gx, bwd-aligned)
            pltpu.VMEM(((T + 4) * B, 2 * H), jnp.float32),   # zero-halo conv pad slab
        ],
    )

    @jax.jit
    def forward(x, params):
        # x: (B, T, H) batch-first (PyTorch convention) -> time-major flat rows t*B + b.
        x_flat = jnp.transpose(x, (1, 0, 2)).reshape(TB, H)
        y = call(x_flat, params["w_lstm"], params["b_lstm"],
                 params["w_conv"], params["w_fc"], params["b_head"])
        return jnp.transpose(y.reshape(T, B, L), (1, 0, 2))   # (B, T, L)

    return forward


# -----------------------------------------------------------------------------
# Deterministic parameters in PyTorch layout, plus repacking for the kernel.
# -----------------------------------------------------------------------------
def init_torch_params(key, H, L):
    C = H // 3
    keys = iter(jax.random.split(key, 40))

    def u(shape, bound):
        return jax.random.uniform(next(keys), shape, jnp.float32, -bound, bound)

    p = {}
    bl = H ** -0.5
    for l in range(3):
        hin = H if l == 0 else 2 * H
        for suf in ("", "_r"):
            p[f"w_ih_l{l}{suf}"] = u((4 * H, hin), bl)
            p[f"w_hh_l{l}{suf}"] = u((4 * H, H), bl)
            p[f"b_ih_l{l}{suf}"] = u((4 * H,), bl)
            p[f"b_hh_l{l}{suf}"] = u((4 * H,), bl)
    for name, k, cout in (("conv1", 1, C), ("conv3", 3, C), ("conv5", 5, C + 1)):
        bc = (2 * H * k) ** -0.5
        p[f"{name}_w"] = u((cout, 2 * H, k), bc)
        p[f"{name}_b"] = u((cout,), bc)
    bf = H ** -0.5
    p["fc_w"] = u((L, H), bf)
    p["fc_b"] = u((L,), bf)
    return p


def _gate_blocks(wT, H):
    """Split (in, 4H) PyTorch-gate-ordered [i,f,g,o] columns -> list in fused order [i,f,o,g]."""
    i, f, g, o = (wT[:, j * H:(j + 1) * H] for j in range(4))
    return [i, f, o, g]


def _place_half(wT, H, side):
    """(in, 4H) torch order -> (in, 8H) fused layout [i_f i_b f_f f_b o_f o_b g_f g_b],
    with blocks only in the `side` half of each gate block (0 = fwd, 1 = bwd)."""
    blocks = _gate_blocks(wT, H)
    z = jnp.zeros_like(blocks[0])
    cols = []
    for b in blocks:
        cols.extend([b, z] if side == 0 else [z, b])
    return jnp.concatenate(cols, axis=1)


def pack_kernel_params(tp, H, L):
    H2, C = 2 * H, H // 3

    def wT(name):
        return jnp.transpose(tp[name])

    rows, biases = [], []
    for l in range(3):
        wihf, wihb = wT(f"w_ih_l{l}"), wT(f"w_ih_l{l}_r")        # (in, 4H)
        whhf, whhb = wT(f"w_hh_l{l}"), wT(f"w_hh_l{l}_r")        # (H, 4H)
        if l == 0:
            P = _place_half(wihf, H, 0)                          # (H, 8H)
            Q = _place_half(wihb, H, 1)                          # (H, 8H)
        else:
            # Input slab is "mixed": row r = [h_f(r) | h_b(T-1-r)].
            P = jnp.concatenate([_place_half(wihf[:H], H, 0),
                                 _place_half(wihb[H:], H, 1)], axis=0)   # (2H, 8H)
            Q = jnp.concatenate([_place_half(wihb[:H], H, 1),
                                 _place_half(wihf[H:], H, 0)], axis=0)   # (2H, 8H)
        Whh = jnp.concatenate([_place_half(whhf, H, 0),
                               _place_half(whhb, H, 1)], axis=0)          # (2H, 8H) block-diag
        rows += [P, Q, Whh]
        bfv = (tp[f"b_ih_l{l}"] + tp[f"b_hh_l{l}"]).reshape(1, 4 * H)
        bbv = (tp[f"b_ih_l{l}_r"] + tp[f"b_hh_l{l}_r"]).reshape(1, 4 * H)
        biases.append(_place_half(bfv, H, 0) + _place_half(bbv, H, 1))    # (1, 8H)

    w_lstm = jnp.concatenate(rows, axis=0)                                # (16H, 8H)
    b_lstm = jnp.concatenate(biases, axis=0)                              # (3, 8H)

    # Fused conv head: conv1/conv3 taps zero-padded inside a k=5 stack, outputs
    # concatenated column-wise [conv1 | conv3 | conv5] -> width H.
    w_conv = jnp.zeros((5 * H2, H), jnp.float32)
    w_conv = w_conv.at[2 * H2:3 * H2, 0:C].set(jnp.transpose(tp["conv1_w"][:, :, 0]))
    for j in range(3):
        w_conv = w_conv.at[(j + 1) * H2:(j + 2) * H2, C:2 * C].set(
            jnp.transpose(tp["conv3_w"][:, :, j]))
    for j in range(5):
        w_conv = w_conv.at[j * H2:(j + 1) * H2, 2 * C:H].set(
            jnp.transpose(tp["conv5_w"][:, :, j]))

    b_head = jnp.zeros((2, H), jnp.float32)
    b_head = b_head.at[0, :].set(
        jnp.concatenate([tp["conv1_b"], tp["conv3_b"], tp["conv5_b"]]))
    b_head = b_head.at[1, 0:L].set(tp["fc_b"])

    return {"w_lstm": w_lstm, "b_lstm": b_lstm, "w_conv": w_conv,
            "w_fc": jnp.transpose(tp["fc_w"]), "b_head": b_head}


# -----------------------------------------------------------------------------
# Pure-JAX reference (same math, no Pallas) used as a smoke check.
# -----------------------------------------------------------------------------
def reference_forward(x, tp, H):
    B, T, _ = x.shape
    HI = jax.lax.Precision.HIGHEST

    def run_dir(seq, w_ih, w_hh, b_ih, b_hh, reverse):
        def step(carry, x_t):
            h, c = carry
            g = (jnp.dot(x_t, w_ih.T, precision=HI) + b_ih
                 + jnp.dot(h, w_hh.T, precision=HI) + b_hh)
            i = jax.nn.sigmoid(g[:, 0:H])
            f = jax.nn.sigmoid(g[:, H:2 * H])
            gg = jnp.tanh(g[:, 2 * H:3 * H])
            o = jax.nn.sigmoid(g[:, 3 * H:4 * H])
            c = f * c + i * gg
            h = o * jnp.tanh(c)
            return (h, c), h

        z = jnp.zeros((seq.shape[1], H), jnp.float32)
        xs = seq[::-1] if reverse else seq
        _, hs = lax.scan(step, (z, z), xs)
        return hs[::-1] if reverse else hs

    seq = jnp.transpose(x, (1, 0, 2))                                  # (T, B, Hin)
    for l in range(3):
        hf = run_dir(seq, tp[f"w_ih_l{l}"], tp[f"w_hh_l{l}"],
                     tp[f"b_ih_l{l}"], tp[f"b_hh_l{l}"], False)
        hb = run_dir(seq, tp[f"w_ih_l{l}_r"], tp[f"w_hh_l{l}_r"],
                     tp[f"b_ih_l{l}_r"], tp[f"b_hh_l{l}_r"], True)
        seq = jnp.concatenate([hf, hb], axis=-1)
    lstm_out = jnp.transpose(seq, (1, 0, 2))                           # (B, T, 2H)

    def conv1d_same(inp, w, b, k):
        p = (k - 1) // 2
        padded = jnp.pad(inp, ((0, 0), (p, p), (0, 0)))
        acc = jnp.zeros(inp.shape[:2] + (w.shape[0],), jnp.float32) + b
        for dk in range(k):
            acc = acc + jnp.einsum("btc,oc->bto", padded[:, dk:dk + T, :],
                                   w[:, :, dk], precision=HI)
        return jax.nn.relu(acc)

    c1 = conv1d_same(lstm_out, tp["conv1_w"], tp["conv1_b"], 1)
    c3 = conv1d_same(lstm_out, tp["conv3_w"], tp["conv3_b"], 3)
    c5 = conv1d_same(lstm_out, tp["conv5_w"], tp["conv5_b"], 5)
    z = jnp.concatenate([c1, c3, c5], axis=-1)                         # (B, T, H)
    return jnp.dot(z, tp["fc_w"].T, precision=HI) + tp["fc_b"]


if __name__ == "__main__":
    # hidden_size must satisfy H % 3 == 1 so cat(conv1, conv3, conv5) width
    # (3*(H//3)+1) equals fc.in_features == hidden_size, as the module requires.
    B, T, H, L = 2, 8, 64, 2
    assert H % 3 == 1

    key = jax.random.PRNGKey(0)
    kx, kp = jax.random.split(key)
    x = jax.random.normal(kx, (B, T, H), dtype=jnp.float32)
    torch_params = init_torch_params(kp, H, L)
    params = pack_kernel_params(torch_params, H, L)

    forward = make_forward(T, B, H, L)
    y = jax.block_until_ready(forward(x, params))
    assert y.shape == (B, T, L), y.shape

    # Smoke check against the pure-JAX reference (loose tol: default MXU pass precision).
    y_ref = reference_forward(x, torch_params, H)
    err = float(jnp.max(jnp.abs(y - y_ref)))
    assert err < 3e-2, f"kernel/reference mismatch: max abs err = {err}"
    print("KERNEL_OK")
</pallas_src>

<mosaic_0001>
module attributes {stable_mosaic.version = 11 : i64} {
  func.func @_fused_kernel(%arg0: memref<16x64xf32, #tpu.memory_space<vmem>>, %arg1: memref<1024x512xf32, #tpu.memory_space<vmem>>, %arg2: memref<3x512xf32, #tpu.memory_space<vmem>>, %arg3: memref<640x64xf32, #tpu.memory_space<vmem>>, %arg4: memref<64x2xf32, #tpu.memory_space<vmem>>, %arg5: memref<2x64xf32, #tpu.memory_space<vmem>>, %arg6: memref<16x2xf32, #tpu.memory_space<vmem>>, %arg7: memref<16x128xf32, #tpu.memory_space<vmem>>, %arg8: memref<16x128xf32, #tpu.memory_space<vmem>>, %arg9: memref<16x512xf32, #tpu.memory_space<vmem>>, %arg10: memref<16x512xf32, #tpu.memory_space<vmem>>, %arg11: memref<24x128xf32, #tpu.memory_space<vmem>>) attributes {dimension_semantics = [], scalar_prefetch = 0 : i64, scratch_operands = 5 : i64, tpu.core_type = #tpu.core_type<tc>} {
    %c0 = arith.constant 0 : index
    %c0_0 = arith.constant 0 : index
    %0 = vector.load %arg0[%c0, %c0_0] : memref<16x64xf32, #tpu.memory_space<vmem>>, vector<16x64xf32>
    %c0_1 = arith.constant 0 : index
    %c0_2 = arith.constant 0 : index
    %1 = vector.load %arg1[%c0_1, %c0_2] : memref<1024x512xf32, #tpu.memory_space<vmem>>, vector<64x512xf32>
    %cst = arith.constant dense<0.000000e+00> : vector<16x512xf32>
    %2 = tpu.matmul %0, %1, %cst {dimension_numbers = #tpu.dot_dimension_numbers<[1], [0], [0], [1], [0, 0, 1, 1], [], []>} : vector<16x64xf32>, vector<64x512xf32>, vector<16x512xf32> -> vector<16x512xf32>
    %c0_3 = arith.constant 0 : index
    %c0_4 = arith.constant 0 : index
    %3 = vector.load %arg2[%c0_3, %c0_4] : memref<3x512xf32, #tpu.memory_space<vmem>>, vector<1x512xf32>
    %4 = vector.broadcast %3 : vector<1x512xf32> to vector<16x512xf32>
    %5 = arith.addf %2, %4 : vector<16x512xf32>
    %c0_5 = arith.constant 0 : index
    %c0_6 = arith.constant 0 : index
    %6 = vector.load %arg9[%c0_5, %c0_6] : memref<16x512xf32, #tpu.memory_space<vmem>>, vector<16x512xf32>
    tpu.vector_store %arg9[%c0_5, %c0_6], %5 {strides = array<i32>} : memref<16x512xf32, #tpu.memory_space<vmem>>, vector<16x512xf32>,
    %c64 = arith.constant 64 : index
    %c0_7 = arith.constant 0 : index
    %7 = vector.load %arg1[%c64, %c0_7] : memref<1024x512xf32, #tpu.memory_space<vmem>>, vector<64x512xf32>
    %cst_8 = arith.constant dense<0.000000e+00> : vector<16x512xf32>
    %8 = tpu.matmul %0, %7, %cst_8 {dimension_numbers = #tpu.dot_dimension_numbers<[1], [0], [0], [1], [0, 0, 1, 1], [], []>} : vector<16x64xf32>, vector<64x512xf32>, vector<16x512xf32> -> vector<16x512xf32>
    %c0_9 = arith.constant 0 : index
    %c0_10 = arith.constant 0 : index
    %9 = vector.load %arg10[%c0_9, %c0_10] : memref<16x512xf32, #tpu.memory_space<vmem>>, vector<16x512xf32>
    tpu.vector_store %arg10[%c0_9, %c0_10], %8 {strides = array<i32>} : memref<16x512xf32, #tpu.memory_space<vmem>>, vector<16x512xf32>,
    %c128 = arith.constant 128 : index
    %c0_11 = arith.constant 0 : index
    %10 = vector.load %arg1[%c128, %c0_11] : memref<1024x512xf32, #tpu.memory_space<vmem>>, vector<128x512xf32>
    %cst_12 = arith.constant 0.000000e+00 : f32
    %11 = vector.broadcast %cst_12 : f32 to vector<2x128xf32>
    %cst_13 = arith.constant 0.000000e+00 : f32
    %12 = vector.broadcast %cst_13 : f32 to vector<2x128xf32>
    %c0_14 = arith.constant 0 : index
    %c0_15 = arith.constant 0 : index
    %13 = vector.load %arg9[%c0_14, %c0_15] : memref<16x512xf32, #tpu.memory_space<vmem>>, vector<2x512xf32>
    %c14 = arith.constant 14 : index
    %c0_16 = arith.constant 0 : index
    %14 = vector.load %arg10[%c14, %c0_16] : memref<16x512xf32, #tpu.memory_space<vmem>>, vector<2x512xf32>
    %15 = arith.addf %13, %14 : vector<2x512xf32>
    %cst_17 = arith.constant dense<0.000000e+00> : vector<2x512xf32>
    %16 = tpu.matmul %11, %10, %cst_17 {dimension_numbers = #tpu.dot_dimension_numbers<[1], [0], [0], [1], [0, 0, 1, 1], [], []>} : vector<2x128xf32>, vector<128x512xf32>, vector<2x512xf32> -> vector<2x512xf32>
    %17 = arith.addf %15, %16 : vector<2x512xf32>
    %18 = vector.extract_strided_slice %17 {offsets = [0, 0], sizes = [2, 384], strides = [1, 1]} : vector<2x512xf32> to vector<2x384xf32>
    %19 = arith.negf %18 : vector<2x384xf32>
    %20 = math.exp %19 : vector<2x384xf32>
    %cst_18 = arith.constant 1.000000e+00 : f32
    %21 = vector.broadcast %cst_18 : f32 to vector<2x384xf32>
    %22 = arith.addf %21, %20 : vector<2x384xf32>
    %23 = arith.divf %21, %22 : vector<2x384xf32>
    %24 = vector.extract_strided_slice %17 {offsets = [0, 384], sizes = [2, 128], strides = [1, 1]} : vector<2x512xf32> to vector<2x128xf32>
    %25 = math.tanh %24 : vector<2x128xf32>
    %26 = vector.extract_strided_slice %23 {offsets = [0, 128], sizes = [2, 128], strides = [1, 1]} : vector<2x384xf32> to vector<2x128xf32>
    %27 = arith.mulf %26, %12 : vector<2x128xf32>
    %28 = vector.extract_strided_slice %23 {offsets = [0, 0], sizes = [2, 128], strides = [1, 1]} : vector<2x384xf32> to vector<2x128xf32>
    %29 = arith.mulf %28, %25 : vector<2x128xf32>
    %30 = arith.addf %27, %29 : vector<2x128xf32>
    %31 = vector.extract_strided_slice %23 {offsets = [0, 256], sizes = [2, 128], strides = [1, 1]} : vector<2x384xf32> to vector<2x128xf32>
    %32 = math.tanh %30 : vector<2x128xf32>
    %33 = arith.mulf %31, %32 : vector<2x128xf32>
    %c0_19 = arith.constant 0 : index
    %c0_20 = arith.constant 0 : index
    %34 = vector.load %arg7[%c0_19, %c0_20] : memref<16x128xf32, #tpu.memory_space<vmem>>, vector<2x128xf32>
    tpu.vector_store %arg7[%c0_19, %c0_20], %33 {strides = array<i32>} : memref<16x128xf32, #tpu.memory_space<vmem>>, vector<2x128xf32>,
    %c2 = arith.constant 2 : index
    %c0_21 = arith.constant 0 : index
    %35 = vector.load %arg9[%c2, %c0_21] : memref<16x512xf32, #tpu.memory_space<vmem>>, vector<2x512xf32>
    %c12 = arith.constant 12 : index
    %c0_22 = arith.constant 0 : index
    %36 = vector.load %arg10[%c12, %c0_22] : memref<16x512xf32, #tpu.memory_space<vmem>>, vector<2x512xf32>
    %37 = arith.addf %35, %36 : vector<2x512xf32>
    %cst_23 = arith.constant dense<0.000000e+00> : vector<2x512xf32>
    %38 = tpu.matmul %33, %10, %cst_23 {dimension_numbers = #tpu.dot_dimension_numbers<[1], [0], [0], [1], [0, 0, 1, 1], [], []>} : vector<2x128xf32>, vector<128x512xf32>, vector<2x512xf32> -> vector<2x512xf32>
    %39 = arith.addf %37, %38 : vector<2x512xf32>
    %40 = vector.extract_strided_slice %39 {offsets = [0, 0], sizes = [2, 384], strides = [1, 1]} : vector<2x512xf32> to vector<2x384xf32>
    %41 = arith.negf %40 : vector<2x384xf32>
    %42 = math.exp %41 : vector<2x384xf32>
    %cst_24 = arith.constant 1.000000e+00 : f32
    %43 = vector.broadcast %cst_24 : f32 to vector<2x384xf32>
    %44 = arith.addf %43, %42 : vector<2x384xf32>
    %45 = arith.divf %43, %44 : vector<2x384xf32>
    %46 = vector.extract_strided_slice %39 {offsets = [0, 384], sizes = [2, 128], strides = [1, 1]} : vector<2x512xf32> to vector<2x128xf32>
    %47 = math.tanh %46 : vector<2x128xf32>
    %48 = vector.extract_strided_slice %45 {offsets = [0, 128], sizes = [2, 128], strides = [1, 1]} : vector<2x384xf32> to vector<2x128xf32>
    %49 = arith.mulf %48, %30 : vector<2x128xf32>
    %50 = vector.extract_strided_slice %45 {offsets = [0, 0], sizes = [2, 128], strides = [1, 1]} : vector<2x384xf32> to vector<2x128xf32>
    %51 = arith.mulf %50, %47 : vector<2x128xf32>
    %52 = arith.addf %49, %51 : vector<2x128xf32>
    %53 = vector.extract_strided_slice %45 {offsets = [0, 256], sizes = [2, 128], strides = [1, 1]} : vector<2x384xf32> to vector<2x128xf32>
    %54 = math.tanh %52 : vector<2x128xf32>
    %55 = arith.mulf %53, %54 : vector<2x128xf32>
    %c2_25 = arith.constant 2 : index
    %c0_26 = arith.constant 0 : index
    %56 = vector.load %arg7[%c2_25, %c0_26] : memref<16x128xf32, #tpu.memory_space<vmem>>, vector<2x128xf32>
    tpu.vector_store %arg7[%c2_25, %c0_26], %55 {strides = array<i32>} : memref<16x128xf32, #tpu.memory_space<vmem>>, vector<2x128xf32>,
    %c4 = arith.constant 4 : index
    %c0_27 = arith.constant 0 : index
    %57 = vector.load %arg9[%c4, %c0_27] : memref<16x512xf32, #tpu.memory_space<vmem>>, vector<2x512xf32>
    %c10 = arith.constant 10 : index
    %c0_28 = arith.constant 0 : index
    %58 = vector.load %arg10[%c10, %c0_28] : memref<16x512xf32, #tpu.memory_space<vmem>>, vector<2x512xf32>
    %59 = arith.addf %57, %58 : vector<2x512xf32>
    %cst_29 = arith.constant dense<0.000000e+00> : vector<2x512xf32>
    %60 = tpu.matmul %55, %10, %cst_29 {dimension_numbers = #tpu.dot_dimension_numbers<[1], [0], [0], [1], [0, 0, 1, 1], [], []>} : vector<2x128xf32>, vector<128x512xf32>, vector<2x512xf32> -> vector<2x512xf32>
    %61 = arith.addf %59, %60 : vector<2x512xf32>
    %62 = vector.extract_strided_slice %61 {offsets = [0, 0], sizes = [2, 384], strides = [1, 1]} : vector<2x512xf32> to vector<2x384xf32>
    %63 = arith.negf %62 : vector<2x384xf32>
    %64 = math.exp %63 : vector<2x384xf32>
    %cst_30 = arith.constant 1.000000e+00 : f32
    %65 = vector.broadcast %cst_30 : f32 to vector<2x384xf32>
    %66 = arith.addf %65, %64 : vector<2x384xf32>
    %67 = arith.divf %65, %66 : vector<2x384xf32>
    %68 = vector.extract_strided_slice %61 {offsets = [0, 384], sizes = [2, 128], strides = [1, 1]} : vector<2x512xf32> to vector<2x128xf32>
    %69 = math.tanh %68 : vector<2x128xf32>
    %70 = vector.extract_strided_slice %67 {offsets = [0, 128], sizes = [2, 128], strides = [1, 1]} : vector<2x384xf32> to vector<2x128xf32>
    %71 = arith.mulf %70, %52 : vector<2x128xf32>
    %72 = vector.extract_strided_slice %67 {offsets = [0, 0], sizes = [2, 128], strides = [1, 1]} : vector<2x384xf32> to vector<2x128xf32>
    %73 = arith.mulf %72, %69 : vector<2x128xf32>
    %74 = arith.addf %71, %73 : vector<2x128xf32>
    %75 = vector.extract_strided_slice %67 {offsets = [0, 256], sizes = [2, 128], strides = [1, 1]} : vector<2x384xf32> to vector<2x128xf32>
    %76 = math.tanh %74 : vector<2x128xf32>
    %77 = arith.mulf %75, %76 : vector<2x128xf32>
    %c4_31 = arith.constant 4 : index
    %c0_32 = arith.constant 0 : index
    %78 = vector.load %arg7[%c4_31, %c0_32] : memref<16x128xf32, #tpu.memory_space<vmem>>, vector<2x128xf32>
    tpu.vector_store %arg7[%c4_31, %c0_32], %77 {strides = array<i32>} : memref<16x128xf32, #tpu.memory_space<vmem>>, vector<2x128xf32>,
    %c6 = arith.constant 6 : index
    %c0_33 = arith.constant 0 : index
    %79 = vector.load %arg9[%c6, %c0_33] : memref<16x512xf32, #tpu.memory_space<vmem>>, vector<2x512xf32>
    %c8 = arith.constant 8 : index
    %c0_34 = arith.constant 0 : index
    %80 = vector.load %arg10[%c8, %c0_34] : memref<16x512xf32, #tpu.memory_space<vmem>>, vector<2x512xf32>
    %81 = arith.addf %79, %80 : vector<2x512xf32>
    %cst_35 = arith.constant dense<0.000000e+00> : vector<2x512xf32>
    %82 = tpu.matmul %77, %10, %cst_35 {dimension_numbers = #tpu.dot_dimension_numbers<[1], [0], [0], [1], [0, 0, 1, 1], [], []>} : vector<2x128xf32>, vector<128x512xf32>, vector<2x512xf32> -> vector<2x512xf32>
    %83 = arith.addf %81, %82 : vector<2x512xf32>
    %84 = vector.extract_strided_slice %83 {offsets = [0, 0], sizes = [2, 384], strides = [1, 1]} : vector<2x512xf32> to vector<2x384xf32>
    %85 = arith.negf %84 : vector<2x384xf32>
    %86 = math.exp %85 : vector<2x384xf32>
    %cst_36 = arith.constant 1.000000e+00 : f32
    %87 = vector.broadcast %cst_36 : f32 to vector<2x384xf32>
    %88 = arith.addf %87, %86 : vector<2x384xf32>
    %89 = arith.divf %87, %88 : vector<2x384xf32>
    %90 = vector.extract_strided_slice %83 {offsets = [0, 384], sizes = [2, 128], strides = [1, 1]} : vector<2x512xf32> to vector<2x128xf32>
    %91 = math.tanh %90 : vector<2x128xf32>
    %92 = vector.extract_strided_slice %89 {offsets = [0, 128], sizes = [2, 128], strides = [1, 1]} : vector<2x384xf32> to vector<2x128xf32>
    %93 = arith.mulf %92, %74 : vector<2x128xf32>
    %94 = vector.extract_strided_slice %89 {offsets = [0, 0], sizes = [2, 128], strides = [1, 1]} : vector<2x384xf32> to vector<2x128xf32>
    %95 = arith.mulf %94, %91 : vector<2x128xf32>
    %96 = arith.addf %93, %95 : vector<2x128xf32>
    %97 = vector.extract_strided_slice %89 {offsets = [0, 256], sizes = [2, 128], strides = [1, 1]} : vector<2x384xf32> to vector<2x128xf32>
    %98 = math.tanh %96 : vector<2x128xf32>
    %99 = arith.mulf %97, %98 : vector<2x128xf32>
    %c6_37 = arith.constant 6 : index
    %c0_38 = arith.constant 0 : index
    %100 = vector.load %arg7[%c6_37, %c0_38] : memref<16x128xf32, #tpu.memory_space<vmem>>, vector<2x128xf32>
    tpu.vector_store %arg7[%c6_37, %c0_38], %99 {strides = array<i32>} : memref<16x128xf32, #tpu.memory_space<vmem>>, vector<2x128xf32>,
    %c8_39 = arith.constant 8 : index
    %c0_40 = arith.constant 0 : index
    %101 = vector.load %arg9[%c8_39, %c0_40] : memref<16x512xf32, #tpu.memory_space<vmem>>, vector<2x512xf32>
    %c6_41 = arith.constant 6 : index
    %c0_42 = arith.constant 0 : index
    %102 = vector.load %arg10[%c6_41, %c0_42] : memref<16x512xf32, #tpu.memory_space<vmem>>, vector<2x512xf32>
    %103 = arith.addf %101, %102 : vector<2x512xf32>
    %cst_43 = arith.constant dense<0.000000e+00> : vector<2x512xf32>
    %104 = tpu.matmul %99, %10, %cst_43 {dimension_numbers = #tpu.dot_dimension_numbers<[1], [0], [0], [1], [0, 0, 1, 1], [], []>} : vector<2x128xf32>, vector<128x512xf32>, vector<2x512xf32> -> vector<2x512xf32>
    %105 = arith.addf %103, %104 : vector<2x512xf32>
    %106 = vector.extract_strided_slice %105 {offsets = [0, 0], sizes = [2, 384], strides = [1, 1]} : vector<2x512xf32> to vector<2x384xf32>
    %107 = arith.negf %106 : vector<2x384xf32>
    %108 = math.exp %107 : vector<2x384xf32>
    %cst_44 = arith.constant 1.000000e+00 : f32
    %109 = vector.broadcast %cst_44 : f32 to vector<2x384xf32>
    %110 = arith.addf %109, %108 : vector<2x384xf32>
    %111 = arith.divf %109, %110 : vector<2x384xf32>
    %112 = vector.extract_strided_slice %105 {offsets = [0, 384], sizes = [2, 128], strides = [1, 1]} : vector<2x512xf32> to vector<2x128xf32>
    %113 = math.tanh %112 : vector<2x128xf32>
    %114 = vector.extract_strided_slice %111 {offsets = [0, 128], sizes = [2, 128], strides = [1, 1]} : vector<2x384xf32> to vector<2x128xf32>
    %115 = arith.mulf %114, %96 : vector<2x128xf32>
    %116 = vector.extract_strided_slice %111 {offsets = [0, 0], sizes = [2, 128], strides = [1, 1]} : vector<2x384xf32> to vector<2x128xf32>
    %117 = arith.mulf %116, %113 : vector<2x128xf32>
    %118 = arith.addf %115, %117 : vector<2x128xf32>
    %119 = vector.extract_strided_slice %111 {offsets = [0, 256], sizes = [2, 128], strides = [1, 1]} : vector<2x384xf32> to vector<2x128xf32>
    %120 = math.tanh %118 : vector<2x128xf32>
    %121 = arith.mulf %119, %120 : vector<2x128xf32>
    %c8_45 = arith.constant 8 : index
    %c0_46 = arith.constant 0 : index
    %122 = vector.load %arg7[%c8_45, %c0_46] : memref<16x128xf32, #tpu.memory_space<vmem>>, vector<2x128xf32>
    tpu.vector_store %arg7[%c8_45, %c0_46], %121 {strides = array<i32>} : memref<16x128xf32, #tpu.memory_space<vmem>>, vector<2x128xf32>,
    %c10_47 = arith.constant 10 : index
    %c0_48 = arith.constant 0 : index
    %123 = vector.load %arg9[%c10_47, %c0_48] : memref<16x512xf32, #tpu.memory_space<vmem>>, vector<2x512xf32>
    %c4_49 = arith.constant 4 : index
    %c0_50 = arith.constant 0 : index
    %124 = vector.load %arg10[%c4_49, %c0_50] : memref<16x512xf32, #tpu.memory_space<vmem>>, vector<2x512xf32>
    %125 = arith.addf %123, %124 : vector<2x512xf32>
    %cst_51 = arith.constant dense<0.000000e+00> : vector<2x512xf32>
    %126 = tpu.matmul %121, %10, %cst_51 {dimension_numbers = #tpu.dot_dimension_numbers<[1], [0], [0], [1], [0, 0, 1, 1], [], []>} : vector<2x128xf32>, vector<128x512xf32>, vector<2x512xf32> -> vector<2x512xf32>
    %127 = arith.addf %125, %126 : vector<2x512xf32>
    %128 = vector.extract_strided_slice %127 {offsets = [0, 0], sizes = [2, 384], strides = [1, 1]} : vector<2x512xf32> to vector<2x384xf32>
    %129 = arith.negf %128 : vector<2x384xf32>
    %130 = math.exp %129 : vector<2x384xf32>
    %cst_52 = arith.constant 1.000000e+00 : f32
    %131 = vector.broadcast %cst_52 : f32 to vector<2x384xf32>
    %132 = arith.addf %131, %130 : vector<2x384xf32>
    %133 = arith.divf %131, %132 : vector<2x384xf32>
    %134 = vector.extract_strided_slice %127 {offsets = [0, 384], sizes = [2, 128], strides = [1, 1]} : vector<2x512xf32> to vector<2x128xf32>
    %135 = math.tanh %134 : vector<2x128xf32>
    %136 = vector.extract_strided_slice %133 {offsets = [0, 128], sizes = [2, 128], strides = [1, 1]} : vector<2x384xf32> to vector<2x128xf32>
    %137 = arith.mulf %136, %118 : vector<2x128xf32>
    %138 = vector.extract_strided_slice %133 {offsets = [0, 0], sizes = [2, 128], strides = [1, 1]} : vector<2x384xf32> to vector<2x128xf32>
    %139 = arith.mulf %138, %135 : vector<2x128xf32>
    %140 = arith.addf %137, %139 : vector<2x128xf32>
    %141 = vector.extract_strided_slice %133 {offsets = [0, 256], sizes = [2, 128], strides = [1, 1]} : vector<2x384xf32> to vector<2x128xf32>
    %142 = math.tanh %140 : vector<2x128xf32>
    %143 = arith.mulf %141, %142 : vector<2x128xf32>
    %c10_53 = arith.constant 10 : index
    %c0_54 = arith.constant 0 : index
    %144 = vector.load %arg7[%c10_53, %c0_54] : memref<16x128xf32, #tpu.memory_space<vmem>>, vector<2x128xf32>
    tpu.vector_store %arg7[%c10_53, %c0_54], %143 {strides = array<i32>} : memref<16x128xf32, #tpu.memory_space<vmem>>, vector<2x128xf32>,
    %c12_55 = arith.constant 12 : index
    %c0_56 = arith.constant 0 : index
    %145 = vector.load %arg9[%c12_55, %c0_56] : memref<16x512xf32, #tpu.memory_space<vmem>>, vector<2x512xf32>
    %c2_57 = arith.constant 2 : index
    %c0_58 = arith.constant 0 : index
    %146 = vector.load %arg10[%c2_57, %c0_58] : memref<16x512xf32, #tpu.memory_space<vmem>>, vector<2x512xf32>
    %147 = arith.addf %145, %146 : vector<2x512xf32>
    %cst_59 = arith.constant dense<0.000000e+00> : vector<2x512xf32>
    %148 = tpu.matmul %143, %10, %cst_59 {dimension_numbers = #tpu.dot_dimension_numbers<[1], [0], [0], [1], [0, 0, 1, 1], [], []>} : vector<2x128xf32>, vector<128x512xf32>, vector<2x512xf32> -> vector<2x512xf32>
    %149 = arith.addf %147, %148 : vector<2x512xf32>
    %150 = vector.extract_strided_slice %149 {offsets = [0, 0], sizes = [2, 384], strides = [1, 1]} : vector<2x512xf32> to vector<2x384xf32>
    %151 = arith.negf %150 : vector<2x384xf32>
    %152 = math.exp %151 : vector<2x384xf32>
    %cst_60 = arith.constant 1.000000e+00 : f32
    %153 = vector.broadcast %cst_60 : f32 to vector<2x384xf32>
    %154 = arith.addf %153, %152 : vector<2x384xf32>
    %155 = arith.divf %153, %154 : vector<2x384xf32>
    %156 = vector.extract_strided_slice %149 {offsets = [0, 384], sizes = [2, 128], strides = [1, 1]} : vector<2x512xf32> to vector<2x128xf32>
    %157 = math.tanh %156 : vector<2x128xf32>
    %158 = vector.extract_strided_slice %155 {offsets = [0, 128], sizes = [2, 128], strides = [1, 1]} : vector<2x384xf32> to vector<2x128xf32>
    %159 = arith.mulf %158, %140 : vector<2x128xf32>
    %160 = vector.extract_strided_slice %155 {offsets = [0, 0], sizes = [2, 128], strides = [1, 1]} : vector<2x384xf32> to vector<2x128xf32>
    %161 = arith.mulf %160, %157 : vector<2x128xf32>
    %162 = arith.addf %159, %161 : vector<2x128xf32>
    %163 = vector.extract_strided_slice %155 {offsets = [0, 256], sizes = [2, 128], strides = [1, 1]} : vector<2x384xf32> to vector<2x128xf32>
    %164 = math.tanh %162 : vector<2x128xf32>
    %165 = arith.mulf %163, %164 : vector<2x128xf32>
    %c12_61 = arith.constant 12 : index
    %c0_62 = arith.constant 0 : index
    %166 = vector.load %arg7[%c12_61, %c0_62] : memref<16x128xf32, #tpu.memory_space<vmem>>, vector<2x128xf32>
    tpu.vector_store %arg7[%c12_61, %c0_62], %165 {strides = array<i32>} : memref<16x128xf32, #tpu.memory_space<vmem>>, vector<2x128xf32>,
    %c14_63 = arith.constant 14 : index
    %c0_64 = arith.constant 0 : index
    %167 = vector.load %arg9[%c14_63, %c0_64] : memref<16x512xf32, #tpu.memory_space<vmem>>, vector<2x512xf32>
    %c0_65 = arith.constant 0 : index
    %c0_66 = arith.constant 0 : index
    %168 = vector.load %arg10[%c0_65, %c0_66] : memref<16x512xf32, #tpu.memory_space<vmem>>, vector<2x512xf32>
    %169 = arith.addf %167, %168 : vector<2x512xf32>
    %cst_67 = arith.constant dense<0.000000e+00> : vector<2x512xf32>
    %170 = tpu.matmul %165, %10, %cst_67 {dimension_numbers = #tpu.dot_dimension_numbers<[1], [0], [0], [1], [0, 0, 1, 1], [], []>} : vector<2x128xf32>, vector<128x512xf32>, vector<2x512xf32> -> vector<2x512xf32>
    %171 = arith.addf %169, %170 : vector<2x512xf32>
    %172 = vector.extract_strided_slice %171 {offsets = [0, 0], sizes = [2, 384], strides = [1, 1]} : vector<2x512xf32> to vector<2x384xf32>
    %173 = arith.negf %172 : vector<2x384xf32>
    %174 = math.exp %173 : vector<2x384xf32>
    %cst_68 = arith.constant 1.000000e+00 : f32
    %175 = vector.broadcast %cst_68 : f32 to vector<2x384xf32>
    %176 = arith.addf %175, %174 : vector<2x384xf32>
    %177 = arith.divf %175, %176 : vector<2x384xf32>
    %178 = vector.extract_strided_slice %171 {offsets = [0, 384], sizes = [2, 128], strides = [1, 1]} : vector<2x512xf32> to vector<2x128xf32>
    %179 = math.tanh %178 : vector<2x128xf32>
    %180 = vector.extract_strided_slice %177 {offsets = [0, 128], sizes = [2, 128], strides = [1, 1]} : vector<2x384xf32> to vector<2x128xf32>
    %181 = arith.mulf %180, %162 : vector<2x128xf32>
    %182 = vector.extract_strided_slice %177 {offsets = [0, 0], sizes = [2, 128], strides = [1, 1]} : vector<2x384xf32> to vector<2x128xf32>
    %183 = arith.mulf %182, %179 : vector<2x128xf32>
    %184 = arith.addf %181, %183 : vector<2x128xf32>
    %185 = vector.extract_strided_slice %177 {offsets = [0, 256], sizes = [2, 128], strides = [1, 1]} : vector<2x384xf32> to vector<2x128xf32>
    %186 = math.tanh %184 : vector<2x128xf32>
    %187 = arith.mulf %185, %186 : vector<2x128xf32>
    %c14_69 = arith.constant 14 : index
    %c0_70 = arith.constant 0 : index
    %188 = vector.load %arg7[%c14_69, %c0_70] : memref<16x128xf32, #tpu.memory_space<vmem>>, vector<2x128xf32>
    tpu.vector_store %arg7[%c14_69, %c0_70], %187 {strides = array<i32>} : memref<16x128xf32, #tpu.memory_space<vmem>>, vector<2x128xf32>,
    %c0_71 = arith.constant 0 : index
    %c0_72 = arith.constant 0 : index
    %189 = vector.load %arg7[%c0_71, %c0_72] : memref<16x128xf32, #tpu.memory_space<vmem>>, vector<16x128xf32>
    %c256 = arith.constant 256 : index
    %c0_73 = arith.constant 0 : index
    %190 = vector.load %arg1[%c256, %c0_73] : memref<1024x512xf32, #tpu.memory_space<vmem>>, vector<128x512xf32>
    %cst_74 = arith.constant dense<0.000000e+00> : vector<16x512xf32>
    %191 = tpu.matmul %189, %190, %cst_74 {dimension_numbers = #tpu.dot_dimension_numbers<[1], [0], [0], [1], [0, 0, 1, 1], [], []>} : vector<16x128xf32>, vector<128x512xf32>, vector<16x512xf32> -> vector<16x512xf32>
    %c1 = arith.constant 1 : index
    %c0_75 = arith.constant 0 : index
    %192 = vector.load %arg2[%c1, %c0_75] : memref<3x512xf32, #tpu.memory_space<vmem>>, vector<1x512xf32>
    %193 = vector.broadcast %192 : vector<1x512xf32> to vector<16x512xf32>
    %194 = arith.addf %191, %193 : vector<16x512xf32>
    %c0_76 = arith.constant 0 : index
    %c0_77 = arith.constant 0 : index
    %195 = vector.load %arg9[%c0_76, %c0_77] : memref<16x512xf32, #tpu.memory_space<vmem>>, vector<16x512xf32>
    tpu.vector_store %arg9[%c0_76, %c0_77], %194 {strides = array<i32>} : memref<16x512xf32, #tpu.memory_space<vmem>>, vector<16x512xf32>,
    %c384 = arith.constant 384 : index
    %c0_78 = arith.constant 0 : index
    %196 = vector.load %arg1[%c384, %c0_78] : memref<1024x512xf32, #tpu.memory_space<vmem>>, vector<128x512xf32>
    %cst_79 = arith.constant dense<0.000000e+00> : vector<16x512xf32>
    %197 = tpu.matmul %189, %196, %cst_79 {dimension_numbers = #tpu.dot_dimension_numbers<[1], [0], [0], [1], [0, 0, 1, 1], [], []>} : vector<16x128xf32>, vector<128x512xf32>, vector<16x512xf32> -> vector<16x512xf32>
    %c0_80 = arith.constant 0 : index
    %c0_81 = arith.constant 0 : index
    %198 = vector.load %arg10[%c0_80, %c0_81] : memref<16x512xf32, #tpu.memory_space<vmem>>, vector<16x512xf32>
    tpu.vector_store %arg10[%c0_80, %c0_81], %197 {strides = array<i32>} : memref<16x512xf32, #tpu.memory_space<vmem>>, vector<16x512xf32>,
    %c512 = arith.constant 512 : index
    %c0_82 = arith.constant 0 : index
    %199 = vector.load %arg1[%c512, %c0_82] : memref<1024x512xf32, #tpu.memory_space<vmem>>, vector<128x512xf32>
    %cst_83 = arith.constant 0.000000e+00 : f32
    %200 = vector.broadcast %cst_83 : f32 to vector<2x128xf32>
    %cst_84 = arith.constant 0.000000e+00 : f32
    %201 = vector.broadcast %cst_84 : f32 to vector<2x128xf32>
    %c0_85 = arith.constant 0 : index
    %c0_86 = arith.constant 0 : index
    %202 = vector.load %arg9[%c0_85, %c0_86] : memref<16x512xf32, #tpu.memory_space<vmem>>, vector<2x512xf32>
    %c14_87 = arith.constant 14 : index
    %c0_88 = arith.constant 0 : index
    %203 = vector.load %arg10[%c14_87, %c0_88] : memref<16x512xf32, #tpu.memory_space<vmem>>, vector<2x512xf32>
    %204 = arith.addf %202, %203 : vector<2x512xf32>
    %cst_89 = arith.constant dense<0.000000e+00> : vector<2x512xf32>
    %205 = tpu.matmul %200, %199, %cst_89 {dimension_numbers = #tpu.dot_dimension_numbers<[1], [0], [0], [1], [0, 0, 1, 1], [], []>} : vector<2x128xf32>, vector<128x512xf32>, vector<2x512xf32> -> vector<2x512xf32>
    %206 = arith.addf %204, %205 : vector<2x512xf32>
    %207 = vector.extract_strided_slice %206 {offsets = [0, 0], sizes = [2, 384], strides = [1, 1]} : vector<2x512xf32> to vector<2x384xf32>
    %208 = arith.negf %207 : vector<2x384xf32>
    %209 = math.exp %208 : vector<2x384xf32>
    %cst_90 = arith.constant 1.000000e+00 : f32
    %210 = vector.broadcast %cst_90 : f32 to vector<2x384xf32>
    %211 = arith.addf %210, %209 : vector<2x384xf32>
    %212 = arith.divf %210, %211 : vector<2x384xf32>
    %213 = vector.extract_strided_slice %206 {offsets = [0, 384], sizes = [2, 128], strides = [1, 1]} : vector<2x512xf32> to vector<2x128xf32>
    %214 = math.tanh %213 : vector<2x128xf32>
    %215 = vector.extract_strided_slice %212 {offsets = [0, 128], sizes = [2, 128], strides = [1, 1]} : vector<2x384xf32> to vector<2x128xf32>
    %216 = arith.mulf %215, %201 : vector<2x128xf32>
    %217 = vector.extract_strided_slice %212 {offsets = [0, 0], sizes = [2, 128], strides = [1, 1]} : vector<2x384xf32> to vector<2x128xf32>
    %218 = arith.mulf %217, %214 : vector<2x128xf32>
    %219 = arith.addf %216, %218 : vector<2x128xf32>
    %220 = vector.extract_strided_slice %212 {offsets = [0, 256], sizes = [2, 128], strides = [1, 1]} : vector<2x384xf32> to vector<2x128xf32>
    %221 = math.tanh %219 : vector<2x128xf32>
    %222 = arith.mulf %220, %221 : vector<2x128xf32>
    %c0_91 = arith.constant 0 : index
    %c0_92 = arith.constant 0 : index
    %223 = vector.load %arg8[%c0_91, %c0_92] : memref<16x128xf32, #tpu.memory_space<vmem>>, vector<2x128xf32>
    tpu.vector_store %arg8[%c0_91, %c0_92], %222 {strides = array<i32>} : memref<16x128xf32, #tpu.memory_space<vmem>>, vector<2x128xf32>,
    %c2_93 = arith.constant 2 : index
    %c0_94 = arith.constant 0 : index
    %224 = vector.load %arg9[%c2_93, %c0_94] : memref<16x512xf32, #tpu.memory_space<vmem>>, vector<2x512xf32>
    %c12_95 = arith.constant 12 : index
    %c0_96 = arith.constant 0 : index
    %225 = vector.load %arg10[%c12_95, %c0_96] : memref<16x512xf32, #tpu.memory_space<vmem>>, vector<2x512xf32>
    %226 = arith.addf %224, %225 : vector<2x512xf32>
    %cst_97 = arith.constant dense<0.000000e+00> : vector<2x512xf32>
    %227 = tpu.matmul %222, %199, %cst_97 {dimension_numbers = #tpu.dot_dimension_numbers<[1], [0], [0], [1], [0, 0, 1, 1], [], []>} : vector<2x128xf32>, vector<128x512xf32>, vector<2x512xf32> -> vector<2x512xf32>
    %228 = arith.addf %226, %227 : vector<2x512xf32>
    %229 = vector.extract_strided_slice %228 {offsets = [0, 0], sizes = [2, 384], strides = [1, 1]} : vector<2x512xf32> to vector<2x384xf32>
    %230 = arith.negf %229 : vector<2x384xf32>
    %231 = math.exp %230 : vector<2x384xf32>
    %cst_98 = arith.constant 1.000000e+00 : f32
    %232 = vector.broadcast %cst_98 : f32 to vector<2x384xf32>
    %233 = arith.addf %232, %231 : vector<2x384xf32>
    %234 = arith.divf %232, %233 : vector<2x384xf32>
    %235 = vector.extract_strided_slice %228 {offsets = [0, 384], sizes = [2, 128], strides = [1, 1]} : vector<2x512xf32> to vector<2x128xf32>
    %236 = math.tanh %235 : vector<2x128xf32>
    %237 = vector.extract_strided_slice %234 {offsets = [0, 128], sizes = [2, 128], strides = [1, 1]} : vector<2x384xf32> to vector<2x128xf32>
    %238 = arith.mulf %237, %219 : vector<2x128xf32>
    %239 = vector.extract_strided_slice %234 {offsets = [0, 0], sizes = [2, 128], strides = [1, 1]} : vector<2x384xf32> to vector<2x128xf32>
    %240 = arith.mulf %239, %236 : vector<2x128xf32>
    %241 = arith.addf %238, %240 : vector<2x128xf32>
    %242 = vector.extract_strided_slice %234 {offsets = [0, 256], sizes = [2, 128], strides = [1, 1]} : vector<2x384xf32> to vector<2x128xf32>
    %243 = math.tanh %241 : vector<2x128xf32>
    %244 = arith.mulf %242, %243 : vector<2x128xf32>
    %c2_99 = arith.constant 2 : index
    %c0_100 = arith.constant 0 : index
    %245 = vector.load %arg8[%c2_99, %c0_100] : memref<16x128xf32, #tpu.memory_space<vmem>>, vector<2x128xf32>
    tpu.vector_store %arg8[%c2_99, %c0_100], %244 {strides = array<i32>} : memref<16x128xf32, #tpu.memory_space<vmem>>, vector<2x128xf32>,
    %c4_101 = arith.constant 4 : index
    %c0_102 = arith.constant 0 : index
    %246 = vector.load %arg9[%c4_101, %c0_102] : memref<16x512xf32, #tpu.memory_space<vmem>>, vector<2x512xf32>
    %c10_103 = arith.constant 10 : index
    %c0_104 = arith.constant 0 : index
    %247 = vector.load %arg10[%c10_103, %c0_104] : memref<16x512xf32, #tpu.memory_space<vmem>>, vector<2x512xf32>
    %248 = arith.addf %246, %247 : vector<2x512xf32>
    %cst_105 = arith.constant dense<0.000000e+00> : vector<2x512xf32>
    %249 = tpu.matmul %244, %199, %cst_105 {dimension_numbers = #tpu.dot_dimension_numbers<[1], [0], [0], [1], [0, 0, 1, 1], [], []>} : vector<2x128xf32>, vector<128x512xf32>, vector<2x512xf32> -> vector<2x512xf32>
    %250 = arith.addf %248, %249 : vector<2x512xf32>
    %251 = vector.extract_strided_slice %250 {offsets = [0, 0], sizes = [2, 384], strides = [1, 1]} : vector<2x512xf32> to vector<2x384xf32>
    %252 = arith.negf %251 : vector<2x384xf32>
    %253 = math.exp %252 : vector<2x384xf32>
    %cst_106 = arith.constant 1.000000e+00 : f32
    %254 = vector.broadcast %cst_106 : f32 to vector<2x384xf32>
    %255 = arith.addf %254, %253 : vector<2x384xf32>
    %256 = arith.divf %254, %255 : vector<2x384xf32>
    %257 = vector.extract_strided_slice %250 {offsets = [0, 384], sizes = [2, 128], strides = [1, 1]} : vector<2x512xf32> to vector<2x128xf32>
    %258 = math.tanh %257 : vector<2x128xf32>
    %259 = vector.extract_strided_slice %256 {offsets = [0, 128], sizes = [2, 128], strides = [1, 1]} : vector<2x384xf32> to vector<2x128xf32>
    %260 = arith.mulf %259, %241 : vector<2x128xf32>
    %261 = vector.extract_strided_slice %256 {offsets = [0, 0], sizes = [2, 128], strides = [1, 1]} : vector<2x384xf32> to vector<2x128xf32>
    %262 = arith.mulf %261, %258 : vector<2x128xf32>
    %263 = arith.addf %260, %262 : vector<2x128xf32>
    %264 = vector.extract_strided_slice %256 {offsets = [0, 256], sizes = [2, 128], strides = [1, 1]} : vector<2x384xf32> to vector<2x128xf32>
    %265 = math.tanh %263 : vector<2x128xf32>
    %266 = arith.mulf %264, %265 : vector<2x128xf32>
    %c4_107 = arith.constant 4 : index
    %c0_108 = arith.constant 0 : index
    %267 = vector.load %arg8[%c4_107, %c0_108] : memref<16x128xf32, #tpu.memory_space<vmem>>, vector<2x128xf32>
    tpu.vector_store %arg8[%c4_107, %c0_108], %266 {strides = array<i32>} : memref<16x128xf32, #tpu.memory_space<vmem>>, vector<2x128xf32>,
    %c6_109 = arith.constant 6 : index
    %c0_110 = arith.constant 0 : index
    %268 = vector.load %arg9[%c6_109, %c0_110] : memref<16x512xf32, #tpu.memory_space<vmem>>, vector<2x512xf32>
    %c8_111 = arith.constant 8 : index
    %c0_112 = arith.constant 0 : index
    %269 = vector.load %arg10[%c8_111, %c0_112] : memref<16x512xf32, #tpu.memory_space<vmem>>, vector<2x512xf32>
    %270 = arith.addf %268, %269 : vector<2x512xf32>
    %cst_113 = arith.constant dense<0.000000e+00> : vector<2x512xf32>
    %271 = tpu.matmul %266, %199, %cst_113 {dimension_numbers = #tpu.dot_dimension_numbers<[1], [0], [0], [1], [0, 0, 1, 1], [], []>} : vector<2x128xf32>, vector<128x512xf32>, vector<2x512xf32> -> vector<2x512xf32>
    %272 = arith.addf %270, %271 : vector<2x512xf32>
    %273 = vector.extract_strided_slice %272 {offsets = [0, 0], sizes = [2, 384], strides = [1, 1]} : vector<2x512xf32> to vector<2x384xf32>
    %274 = arith.negf %273 : vector<2x384xf32>
    %275 = math.exp %274 : vector<2x384xf32>
    %cst_114 = arith.constant 1.000000e+00 : f32
    %276 = vector.broadcast %cst_114 : f32 to vector<2x384xf32>
    %277 = arith.addf %276, %275 : vector<2x384xf32>
    %278 = arith.divf %276, %277 : vector<2x384xf32>
    %279 = vector.extract_strided_slice %272 {offsets = [0, 384], sizes = [2, 128], strides = [1, 1]} : vector<2x512xf32> to vector<2x128xf32>
    %280 = math.tanh %279 : vector<2x128xf32>
    %281 = vector.extract_strided_slice %278 {offsets = [0, 128], sizes = [2, 128], strides = [1, 1]} : vector<2x384xf32> to vector<2x128xf32>
    %282 = arith.mulf %281, %263 : vector<2x128xf32>
    %283 = vector.extract_strided_slice %278 {offsets = [0, 0], sizes = [2, 128], strides = [1, 1]} : vector<2x384xf32> to vector<2x128xf32>
    %284 = arith.mulf %283, %280 : vector<2x128xf32>
    %285 = arith.addf %282, %284 : vector<2x128xf32>
    %286 = vector.extract_strided_slice %278 {offsets = [0, 256], sizes = [2, 128], strides = [1, 1]} : vector<2x384xf32> to vector<2x128xf32>
    %287 = math.tanh %285 : vector<2x128xf32>
    %288 = arith.mulf %286, %287 : vector<2x128xf32>
    %c6_115 = arith.constant 6 : index
    %c0_116 = arith.constant 0 : index
    %289 = vector.load %arg8[%c6_115, %c0_116] : memref<16x128xf32, #tpu.memory_space<vmem>>, vector<2x128xf32>
    tpu.vector_store %arg8[%c6_115, %c0_116], %288 {strides = array<i32>} : memref<16x128xf32, #tpu.memory_space<vmem>>, vector<2x128xf32>,
    %c8_117 = arith.constant 8 : index
    %c0_118 = arith.constant 0 : index
    %290 = vector.load %arg9[%c8_117, %c0_118] : memref<16x512xf32, #tpu.memory_space<vmem>>, vector<2x512xf32>
    %c6_119 = arith.constant 6 : index
    %c0_120 = arith.constant 0 : index
    %291 = vector.load %arg10[%c6_119, %c0_120] : memref<16x512xf32, #tpu.memory_space<vmem>>, vector<2x512xf32>
    %292 = arith.addf %290, %291 : vector<2x512xf32>
    %cst_121 = arith.constant dense<0.000000e+00> : vector<2x512xf32>
    %293 = tpu.matmul %288, %199, %cst_121 {dimension_numbers = #tpu.dot_dimension_numbers<[1], [0], [0], [1], [0, 0, 1, 1], [], []>} : vector<2x128xf32>, vector<128x512xf32>, vector<2x512xf32> -> vector<2x512xf32>
    %294 = arith.addf %292, %293 : vector<2x512xf32>
    %295 = vector.extract_strided_slice %294 {offsets = [0, 0], sizes = [2, 384], strides = [1, 1]} : vector<2x512xf32> to vector<2x384xf32>
    %296 = arith.negf %295 : vector<2x384xf32>
    %297 = math.exp %296 : vector<2x384xf32>
    %cst_122 = arith.constant 1.000000e+00 : f32
    %298 = vector.broadcast %cst_122 : f32 to vector<2x384xf32>
    %299 = arith.addf %298, %297 : vector<2x384xf32>
    %300 = arith.divf %298, %299 : vector<2x384xf32>
    %301 = vector.extract_strided_slice %294 {offsets = [0, 384], sizes = [2, 128], strides = [1, 1]} : vector<2x512xf32> to vector<2x128xf32>
    %302 = math.tanh %301 : vector<2x128xf32>
    %303 = vector.extract_strided_slice %300 {offsets = [0, 128], sizes = [2, 128], strides = [1, 1]} : vector<2x384xf32> to vector<2x128xf32>
    %304 = arith.mulf %303, %285 : vector<2x128xf32>
    %305 = vector.extract_strided_slice %300 {offsets = [0, 0], sizes = [2, 128], strides = [1, 1]} : vector<2x384xf32> to vector<2x128xf32>
    %306 = arith.mulf %305, %302 : vector<2x128xf32>
    %307 = arith.addf %304, %306 : vector<2x128xf32>
    %308 = vector.extract_strided_slice %300 {offsets = [0, 256], sizes = [2, 128], strides = [1, 1]} : vector<2x384xf32> to vector<2x128xf32>
    %309 = math.tanh %307 : vector<2x128xf32>
    %310 = arith.mulf %308, %309 : vector<2x128xf32>
    %c8_123 = arith.constant 8 : index
    %c0_124 = arith.constant 0 : index
    %311 = vector.load %arg8[%c8_123, %c0_124] : memref<16x128xf32, #tpu.memory_space<vmem>>, vector<2x128xf32>
    tpu.vector_store %arg8[%c8_123, %c0_124], %310 {strides = array<i32>} : memref<16x128xf32, #tpu.memory_space<vmem>>, vector<2x128xf32>,
    %c10_125 = arith.constant 10 : index
    %c0_126 = arith.constant 0 : index
    %312 = vector.load %arg9[%c10_125, %c0_126] : memref<16x512xf32, #tpu.memory_space<vmem>>, vector<2x512xf32>
    %c4_127 = arith.constant 4 : index
    %c0_128 = arith.constant 0 : index
    %313 = vector.load %arg10[%c4_127, %c0_128] : memref<16x512xf32, #tpu.memory_space<vmem>>, vector<2x512xf32>
    %314 = arith.addf %312, %313 : vector<2x512xf32>
    %cst_129 = arith.constant dense<0.000000e+00> : vector<2x512xf32>
    %315 = tpu.matmul %310, %199, %cst_129 {dimension_numbers = #tpu.dot_dimension_numbers<[1], [0], [0], [1], [0, 0, 1, 1], [], []>} : vector<2x128xf32>, vector<128x512xf32>, vector<2x512xf32> -> vector<2x512xf32>
    %316 = arith.addf %314, %315 : vector<2x512xf32>
    %317 = vector.extract_strided_slice %316 {offsets = [0, 0], sizes = [2, 384], strides = [1, 1]} : vector<2x512xf32> to vector<2x384xf32>
    %318 = arith.negf %317 : vector<2x384xf32>
    %319 = math.exp %318 : vector<2x384xf32>
    %cst_130 = arith.constant 1.000000e+00 : f32
    %320 = vector.broadcast %cst_130 : f32 to vector<2x384xf32>
    %321 = arith.addf %320, %319 : vector<2x384xf32>
    %322 = arith.divf %320, %321 : vector<2x384xf32>
    %323 = vector.extract_strided_slice %316 {offsets = [0, 384], sizes = [2, 128], strides = [1, 1]} : vector<2x512xf32> to vector<2x128xf32>
    %324 = math.tanh %323 : vector<2x128xf32>
    %325 = vector.extract_strided_slice %322 {offsets = [0, 128], sizes = [2, 128], strides = [1, 1]} : vector<2x384xf32> to vector<2x128xf32>
    %326 = arith.mulf %325, %307 : vector<2x128xf32>
    %327 = vector.extract_strided_slice %322 {offsets = [0, 0], sizes = [2, 128], strides = [1, 1]} : vector<2x384xf32> to vector<2x128xf32>
    %328 = arith.mulf %327, %324 : vector<2x128xf32>
    %329 = arith.addf %326, %328 : vector<2x128xf32>
    %330 = vector.extract_strided_slice %322 {offsets = [0, 256], sizes = [2, 128], strides = [1, 1]} : vector<2x384xf32> to vector<2x128xf32>
    %331 = math.tanh %329 : vector<2x128xf32>
    %332 = arith.mulf %330, %331 : vector<2x128xf32>
    %c10_131 = arith.constant 10 : index
    %c0_132 = arith.constant 0 : index
    %333 = vector.load %arg8[%c10_131, %c0_132] : memref<16x128xf32, #tpu.memory_space<vmem>>, vector<2x128xf32>
    tpu.vector_store %arg8[%c10_131, %c0_132], %332 {strides = array<i32>} : memref<16x128xf32, #tpu.memory_space<vmem>>, vector<2x128xf32>,
    %c12_133 = arith.constant 12 : index
    %c0_134 = arith.constant 0 : index
    %334 = vector.load %arg9[%c12_133, %c0_134] : memref<16x512xf32, #tpu.memory_space<vmem>>, vector<2x512xf32>
    %c2_135 = arith.constant 2 : index
    %c0_136 = arith.constant 0 : index
    %335 = vector.load %arg10[%c2_135, %c0_136] : memref<16x512xf32, #tpu.memory_space<vmem>>, vector<2x512xf32>
    %336 = arith.addf %334, %335 : vector<2x512xf32>
    %cst_137 = arith.constant dense<0.000000e+00> : vector<2x512xf32>
    %337 = tpu.matmul %332, %199, %cst_137 {dimension_numbers = #tpu.dot_dimension_numbers<[1], [0], [0], [1], [0, 0, 1, 1], [], []>} : vector<2x128xf32>, vector<128x512xf32>, vector<2x512xf32> -> vector<2x512xf32>
    %338 = arith.addf %336, %337 : vector<2x512xf32>
    %339 = vector.extract_strided_slice %338 {offsets = [0, 0], sizes = [2, 384], strides = [1, 1]} : vector<2x512xf32> to vector<2x384xf32>
    %340 = arith.negf %339 : vector<2x384xf32>
    %341 = math.exp %340 : vector<2x384xf32>
    %cst_138 = arith.constant 1.000000e+00 : f32
    %342 = vector.broadcast %cst_138 : f32 to vector<2x384xf32>
    %343 = arith.addf %342, %341 : vector<2x384xf32>
    %344 = arith.divf %342, %343 : vector<2x384xf32>
    %345 = vector.extract_strided_slice %338 {offsets = [0, 384], sizes = [2, 128], strides = [1, 1]} : vector<2x512xf32> to vector<2x128xf32>
    %346 = math.tanh %345 : vector<2x128xf32>
    %347 = vector.extract_strided_slice %344 {offsets = [0, 128], sizes = [2, 128], strides = [1, 1]} : vector<2x384xf32> to vector<2x128xf32>
    %348 = arith.mulf %347, %329 : vector<2x128xf32>
    %349 = vector.extract_strided_slice %344 {offsets = [0, 0], sizes = [2, 128], strides = [1, 1]} : vector<2x384xf32> to vector<2x128xf32>
    %350 = arith.mulf %349, %346 : vector<2x128xf32>
    %351 = arith.addf %348, %350 : vector<2x128xf32>
    %352 = vector.extract_strided_slice %344 {offsets = [0, 256], sizes = [2, 128], strides = [1, 1]} : vector<2x384xf32> to vector<2x128xf32>
    %353 = math.tanh %351 : vector<2x128xf32>
    %354 = arith.mulf %352, %353 : vector<2x128xf32>
    %c12_139 = arith.constant 12 : index
    %c0_140 = arith.constant 0 : index
    %355 = vector.load %arg8[%c12_139, %c0_140] : memref<16x128xf32, #tpu.memory_space<vmem>>, vector<2x128xf32>
    tpu.vector_store %arg8[%c12_139, %c0_140], %354 {strides = array<i32>} : memref<16x128xf32, #tpu.memory_space<vmem>>, vector<2x128xf32>,
    %c14_141 = arith.constant 14 : index
    %c0_142 = arith.constant 0 : index
    %356 = vector.load %arg9[%c14_141, %c0_142] : memref<16x512xf32, #tpu.memory_space<vmem>>, vector<2x512xf32>
    %c0_143 = arith.constant 0 : index
    %c0_144 = arith.constant 0 : index
    %357 = vector.load %arg10[%c0_143, %c0_144] : memref<16x512xf32, #tpu.memory_space<vmem>>, vector<2x512xf32>
    %358 = arith.addf %356, %357 : vector<2x512xf32>
    %cst_145 = arith.constant dense<0.000000e+00> : vector<2x512xf32>
    %359 = tpu.matmul %354, %199, %cst_145 {dimension_numbers = #tpu.dot_dimension_numbers<[1], [0], [0], [1], [0, 0, 1, 1], [], []>} : vector<2x128xf32>, vector<128x512xf32>, vector<2x512xf32> -> vector<2x512xf32>
    %360 = arith.addf %358, %359 : vector<2x512xf32>
    %361 = vector.extract_strided_slice %360 {offsets = [0, 0], sizes = [2, 384], strides = [1, 1]} : vector<2x512xf32> to vector<2x384xf32>
    %362 = arith.negf %361 : vector<2x384xf32>
    %363 = math.exp %362 : vector<2x384xf32>
    %cst_146 = arith.constant 1.000000e+00 : f32
    %364 = vector.broadcast %cst_146 : f32 to vector<2x384xf32>
    %365 = arith.addf %364, %363 : vector<2x384xf32>
    %366 = arith.divf %364, %365 : vector<2x384xf32>
    %367 = vector.extract_strided_slice %360 {offsets = [0, 384], sizes = [2, 128], strides = [1, 1]} : vector<2x512xf32> to vector<2x128xf32>
    %368 = math.tanh %367 : vector<2x128xf32>
    %369 = vector.extract_strided_slice %366 {offsets = [0, 128], sizes = [2, 128], strides = [1, 1]} : vector<2x384xf32> to vector<2x128xf32>
    %370 = arith.mulf %369, %351 : vector<2x128xf32>
    %371 = vector.extract_strided_slice %366 {offsets = [0, 0], sizes = [2, 128], strides = [1, 1]} : vector<2x384xf32> to vector<2x128xf32>
    %372 = arith.mulf %371, %368 : vector<2x128xf32>
    %373 = arith.addf %370, %372 : vector<2x128xf32>
    %374 = vector.extract_strided_slice %366 {offsets = [0, 256], sizes = [2, 128], strides = [1, 1]} : vector<2x384xf32> to vector<2x128xf32>
    %375 = math.tanh %373 : vector<2x128xf32>
    %376 = arith.mulf %374, %375 : vector<2x128xf32>
    %c14_147 = arith.constant 14 : index
    %c0_148 = arith.constant 0 : index
    %377 = vector.load %arg8[%c14_147, %c0_148] : memref<16x128xf32, #tpu.memory_space<vmem>>, vector<2x128xf32>
    tpu.vector_store %arg8[%c14_147, %c0_148], %376 {strides = array<i32>} : memref<16x128xf32, #tpu.memory_space<vmem>>, vector<2x128xf32>,
    %cst_149 = arith.constant 0.000000e+00 : f32
    %378 = vector.broadcast %cst_149 : f32 to vector<4x128xf32>
    %c0_150 = arith.constant 0 : index
    %c0_151 = arith.constant 0 : index
    %379 = vector.load %arg11[%c0_150, %c0_151] : memref<24x128xf32, #tpu.memory_space<vmem>>, vector<4x128xf32>
    tpu.vector_store %arg11[%c0_150, %c0_151], %378 {strides = array<i32>} : memref<24x128xf32, #tpu.memory_space<vmem>>, vector<4x128xf32>,
    %cst_152 = arith.constant 0.000000e+00 : f32
    %380 = vector.broadcast %cst_152 : f32 to vector<4x128xf32>
    %c20 = arith.constant 20 : index
    %c0_153 = arith.constant 0 : index
    %381 = vector.load %arg11[%c20, %c0_153] : memref<24x128xf32, #tpu.memory_space<vmem>>, vector<4x128xf32>
    tpu.vector_store %arg11[%c20, %c0_153], %380 {strides = array<i32>} : memref<24x128xf32, #tpu.memory_space<vmem>>, vector<4x128xf32>,
    %c0_154 = arith.constant 0 : index
    %c0_155 = arith.constant 0 : index
    %382 = vector.load %arg8[%c0_154, %c0_155] : memref<16x128xf32, #tpu.memory_space<vmem>>, vector<16x128xf32>
    %c640 = arith.constant 640 : index
    %c0_156 = arith.constant 0 : index
    %383 = vector.load %arg1[%c640, %c0_156] : memref<1024x512xf32, #tpu.memory_space<vmem>>, vector<128x512xf32>
    %cst_157 = arith.constant dense<0.000000e+00> : vector<16x512xf32>
    %384 = tpu.matmul %382, %383, %cst_157 {dimension_numbers = #tpu.dot_dimension_numbers<[1], [0], [0], [1], [0, 0, 1, 1], [], []>} : vector<16x128xf32>, vector<128x512xf32>, vector<16x512xf32> -> vector<16x512xf32>
    %c2_158 = arith.constant 2 : index
    %c0_159 = arith.constant 0 : index
    %385 = vector.load %arg2[%c2_158, %c0_159] : memref<3x512xf32, #tpu.memory_space<vmem>>, vector<1x512xf32>
    %386 = vector.broadcast %385 : vector<1x512xf32> to vector<16x512xf32>
    %387 = arith.addf %384, %386 : vector<16x512xf32>
    %c0_160 = arith.constant 0 : index
    %c0_161 = arith.constant 0 : index
    %388 = vector.load %arg9[%c0_160, %c0_161] : memref<16x512xf32, #tpu.memory_space<vmem>>, vector<16x512xf32>
    tpu.vector_store %arg9[%c0_160, %c0_161], %387 {strides = array<i32>} : memref<16x512xf32, #tpu.memory_space<vmem>>, vector<16x512xf32>,
    %c768 = arith.constant 768 : index
    %c0_162 = arith.constant 0 : index
    %389 = vector.load %arg1[%c768, %c0_162] : memref<1024x512xf32, #tpu.memory_space<vmem>>, vector<128x512xf32>
    %cst_163 = arith.constant dense<0.000000e+00> : vector<16x512xf32>
    %390 = tpu.matmul %382, %389, %cst_163 {dimension_numbers = #tpu.dot_dimension_numbers<[1], [0], [0], [1], [0, 0, 1, 1], [], []>} : vector<16x128xf32>, vector<128x512xf32>, vector<16x512xf32> -> vector<16x512xf32>
    %c0_164 = arith.constant 0 : index
    %c0_165 = arith.constant 0 : index
    %391 = vector.load %arg10[%c0_164, %c0_165] : memref<16x512xf32, #tpu.memory_space<vmem>>, vector<16x512xf32>
    tpu.vector_store %arg10[%c0_164, %c0_165], %390 {strides = array<i32>} : memref<16x512xf32, #tpu.memory_space<vmem>>, vector<16x512xf32>,
    %c896 = arith.constant 896 : index
    %c0_166 = arith.constant 0 : index
    %392 = vector.load %arg1[%c896, %c0_166] : memref<1024x512xf32, #tpu.memory_space<vmem>>, vector<128x512xf32>
    %cst_167 = arith.constant 0.000000e+00 : f32
    %393 = vector.broadcast %cst_167 : f32 to vector<2x128xf32>
    %cst_168 = arith.constant 0.000000e+00 : f32
    %394 = vector.broadcast %cst_168 : f32 to vector<2x128xf32>
    %c0_169 = arith.constant 0 : index
    %c0_170 = arith.constant 0 : index
    %395 = vector.load %arg9[%c0_169, %c0_170] : memref<16x512xf32, #tpu.memory_space<vmem>>, vector<2x512xf32>
    %c14_171 = arith.constant 14 : index
    %c0_172 = arith.constant 0 : index
    %396 = vector.load %arg10[%c14_171, %c0_172] : memref<16x512xf32, #tpu.memory_space<vmem>>, vector<2x512xf32>
    %397 = arith.addf %395, %396 : vector<2x512xf32>
    %cst_173 = arith.constant dense<0.000000e+00> : vector<2x512xf32>
    %398 = tpu.matmul %393, %392, %cst_173 {dimension_numbers = #tpu.dot_dimension_numbers<[1], [0], [0], [1], [0, 0, 1, 1], [], []>} : vector<2x128xf32>, vector<128x512xf32>, vector<2x512xf32> -> vector<2x512xf32>
    %399 = arith.addf %397, %398 : vector<2x512xf32>
    %400 = vector.extract_strided_slice %399 {offsets = [0, 0], sizes = [2, 384], strides = [1, 1]} : vector<2x512xf32> to vector<2x384xf32>
    %401 = arith.negf %400 : vector<2x384xf32>
    %402 = math.exp %401 : vector<2x384xf32>
    %cst_174 = arith.constant 1.000000e+00 : f32
    %403 = vector.broadcast %cst_174 : f32 to vector<2x384xf32>
    %404 = arith.addf %403, %402 : vector<2x384xf32>
    %405 = arith.divf %403, %404 : vector<2x384xf32>
    %406 = vector.extract_strided_slice %399 {offsets = [0, 384], sizes = [2, 128], strides = [1, 1]} : vector<2x512xf32> to vector<2x128xf32>
    %407 = math.tanh %406 : vector<2x128xf32>
    %408 = vector.extract_strided_slice %405 {offsets = [0, 128], sizes = [2, 128], strides = [1, 1]} : vector<2x384xf32> to vector<2x128xf32>
    %409 = arith.mulf %408, %394 : vector<2x128xf32>
    %410 = vector.extract_strided_slice %405 {offsets = [0, 0], sizes = [2, 128], strides = [1, 1]} : vector<2x384xf32> to vector<2x128xf32>
    %411 = arith.mulf %410, %407 : vector<2x128xf32>
    %412 = arith.addf %409, %411 : vector<2x128xf32>
    %413 = vector.extract_strided_slice %405 {offsets = [0, 256], sizes = [2, 128], strides = [1, 1]} : vector<2x384xf32> to vector<2x128xf32>
    %414 = math.tanh %412 : vector<2x128xf32>
    %415 = arith.mulf %413, %414 : vector<2x128xf32>
    %416 = vector.extract_strided_slice %415 {offsets = [0, 0], sizes = [2, 64], strides = [1, 1]} : vector<2x128xf32> to vector<2x64xf32>
    %c4_175 = arith.constant 4 : index
    %c0_176 = arith.constant 0 : index
    %417 = vector.load %arg11[%c4_175, %c0_176] : memref<24x128xf32, #tpu.memory_space<vmem>>, vector<2x64xf32>
    tpu.vector_store %arg11[%c4_175, %c0_176], %416 {strides = array<i32>} : memref<24x128xf32, #tpu.memory_space<vmem>>, vector<2x64xf32>,
    %418 = vector.extract_strided_slice %415 {offsets = [0, 64], sizes = [2, 64], strides = [1, 1]} : vector<2x128xf32> to vector<2x64xf32>
    %c18 = arith.constant 18 : index
    %c64_177 = arith.constant 64 : index
    %419 = vector.load %arg11[%c18, %c64_177] : memref<24x128xf32, #tpu.memory_space<vmem>>, vector<2x64xf32>
    tpu.vector_store %arg11[%c18, %c64_177], %418 {strides = array<i32>} : memref<24x128xf32, #tpu.memory_space<vmem>>, vector<2x64xf32>,
    %c2_178 = arith.constant 2 : index
    %c0_179 = arith.constant 0 : index
    %420 = vector.load %arg9[%c2_178, %c0_179] : memref<16x512xf32, #tpu.memory_space<vmem>>, vector<2x512xf32>
    %c12_180 = arith.constant 12 : index
    %c0_181 = arith.constant 0 : index
    %421 = vector.load %arg10[%c12_180, %c0_181] : memref<16x512xf32, #tpu.memory_space<vmem>>, vector<2x512xf32>
    %422 = arith.addf %420, %421 : vector<2x512xf32>
    %cst_182 = arith.constant dense<0.000000e+00> : vector<2x512xf32>
    %423 = tpu.matmul %415, %392, %cst_182 {dimension_numbers = #tpu.dot_dimension_numbers<[1], [0], [0], [1], [0, 0, 1, 1], [], []>} : vector<2x128xf32>, vector<128x512xf32>, vector<2x512xf32> -> vector<2x512xf32>
    %424 = arith.addf %422, %423 : vector<2x512xf32>
    %425 = vector.extract_strided_slice %424 {offsets = [0, 0], sizes = [2, 384], strides = [1, 1]} : vector<2x512xf32> to vector<2x384xf32>
    %426 = arith.negf %425 : vector<2x384xf32>
    %427 = math.exp %426 : vector<2x384xf32>
    %cst_183 = arith.constant 1.000000e+00 : f32
    %428 = vector.broadcast %cst_183 : f32 to vector<2x384xf32>
    %429 = arith.addf %428, %427 : vector<2x384xf32>
    %430 = arith.divf %428, %429 : vector<2x384xf32>
    %431 = vector.extract_strided_slice %424 {offsets = [0, 384], sizes = [2, 128], strides = [1, 1]} : vector<2x512xf32> to vector<2x128xf32>
    %432 = math.tanh %431 : vector<2x128xf32>
    %433 = vector.extract_strided_slice %430 {offsets = [0, 128], sizes = [2, 128], strides = [1, 1]} : vector<2x384xf32> to vector<2x128xf32>
    %434 = arith.mulf %433, %412 : vector<2x128xf32>
    %435 = vector.extract_strided_slice %430 {offsets = [0, 0], sizes = [2, 128], strides = [1, 1]} : vector<2x384xf32> to vector<2x128xf32>
    %436 = arith.mulf %435, %432 : vector<2x128xf32>
    %437 = arith.addf %434, %436 : vector<2x128xf32>
    %438 = vector.extract_strided_slice %430 {offsets = [0, 256], sizes = [2, 128], strides = [1, 1]} : vector<2x384xf32> to vector<2x128xf32>
    %439 = math.tanh %437 : vector<2x128xf32>
    %440 = arith.mulf %438, %439 : vector<2x128xf32>
    %441 = vector.extract_strided_slice %440 {offsets = [0, 0], sizes = [2, 64], strides = [1, 1]} : vector<2x128xf32> to vector<2x64xf32>
    %c6_184 = arith.constant 6 : index
    %c0_185 = arith.constant 0 : index
    %442 = vector.load %arg11[%c6_184, %c0_185] : memref<24x128xf32, #tpu.memory_space<vmem>>, vector<2x64xf32>
    tpu.vector_store %arg11[%c6_184, %c0_185], %441 {strides = array<i32>} : memref<24x128xf32, #tpu.memory_space<vmem>>, vector<2x64xf32>,
    %443 = vector.extract_strided_slice %440 {offsets = [0, 64], sizes = [2, 64], strides = [1, 1]} : vector<2x128xf32> to vector<2x64xf32>
    %c16 = arith.constant 16 : index
    %c64_186 = arith.constant 64 : index
    %444 = vector.load %arg11[%c16, %c64_186] : memref<24x128xf32, #tpu.memory_space<vmem>>, vector<2x64xf32>
    tpu.vector_store %arg11[%c16, %c64_186], %443 {strides = array<i32>} : memref<24x128xf32, #tpu.memory_space<vmem>>, vector<2x64xf32>,
    %c4_187 = arith.constant 4 : index
    %c0_188 = arith.constant 0 : index
    %445 = vector.load %arg9[%c4_187, %c0_188] : memref<16x512xf32, #tpu.memory_space<vmem>>, vector<2x512xf32>
    %c10_189 = arith.constant 10 : index
    %c0_190 = arith.constant 0 : index
    %446 = vector.load %arg10[%c10_189, %c0_190] : memref<16x512xf32, #tpu.memory_space<vmem>>, vector<2x512xf32>
    %447 = arith.addf %445, %446 : vector<2x512xf32>
    %cst_191 = arith.constant dense<0.000000e+00> : vector<2x512xf32>
    %448 = tpu.matmul %440, %392, %cst_191 {dimension_numbers = #tpu.dot_dimension_numbers<[1], [0], [0], [1], [0, 0, 1, 1], [], []>} : vector<2x128xf32>, vector<128x512xf32>, vector<2x512xf32> -> vector<2x512xf32>
    %449 = arith.addf %447, %448 : vector<2x512xf32>
    %450 = vector.extract_strided_slice %449 {offsets = [0, 0], sizes = [2, 384], strides = [1, 1]} : vector<2x512xf32> to vector<2x384xf32>
    %451 = arith.negf %450 : vector<2x384xf32>
    %452 = math.exp %451 : vector<2x384xf32>
    %cst_192 = arith.constant 1.000000e+00 : f32
    %453 = vector.broadcast %cst_192 : f32 to vector<2x384xf32>
    %454 = arith.addf %453, %452 : vector<2x384xf32>
    %455 = arith.divf %453, %454 : vector<2x384xf32>
    %456 = vector.extract_strided_slice %449 {offsets = [0, 384], sizes = [2, 128], strides = [1, 1]} : vector<2x512xf32> to vector<2x128xf32>
    %457 = math.tanh %456 : vector<2x128xf32>
    %458 = vector.extract_strided_slice %455 {offsets = [0, 128], sizes = [2, 128], strides = [1, 1]} : vector<2x384xf32> to vector<2x128xf32>
    %459 = arith.mulf %458, %437 : vector<2x128xf32>
    %460 = vector.extract_strided_slice %455 {offsets = [0, 0], sizes = [2, 128], strides = [1, 1]} : vector<2x384xf32> to vector<2x128xf32>
    %461 = arith.mulf %460, %457 : vector<2x128xf32>
    %462 = arith.addf %459, %461 : vector<2x128xf32>
    %463 = vector.extract_strided_slice %455 {offsets = [0, 256], sizes = [2, 128], strides = [1, 1]} : vector<2x384xf32> to vector<2x128xf32>
    %464 = math.tanh %462 : vector<2x128xf32>
    %465 = arith.mulf %463, %464 : vector<2x128xf32>
    %466 = vector.extract_strided_slice %465 {offsets = [0, 0], sizes = [2, 64], strides = [1, 1]} : vector<2x128xf32> to vector<2x64xf32>
    %c8_193 = arith.constant 8 : index
    %c0_194 = arith.constant 0 : index
    %467 = vector.load %arg11[%c8_193, %c0_194] : memref<24x128xf32, #tpu.memory_space<vmem>>, vector<2x64xf32>
    tpu.vector_store %arg11[%c8_193, %c0_194], %466 {strides = array<i32>} : memref<24x128xf32, #tpu.memory_space<vmem>>, vector<2x64xf32>,
    %468 = vector.extract_strided_slice %465 {offsets = [0, 64], sizes = [2, 64], strides = [1, 1]} : vector<2x128xf32> to vector<2x64xf32>
    %c14_195 = arith.constant 14 : index
    %c64_196 = arith.constant 64 : index
    %469 = vector.load %arg11[%c14_195, %c64_196] : memref<24x128xf32, #tpu.memory_space<vmem>>, vector<2x64xf32>
    tpu.vector_store %arg11[%c14_195, %c64_196], %468 {strides = array<i32>} : memref<24x128xf32, #tpu.memory_space<vmem>>, vector<2x64xf32>,
    %c6_197 = arith.constant 6 : index
    %c0_198 = arith.constant 0 : index
    %470 = vector.load %arg9[%c6_197, %c0_198] : memref<16x512xf32, #tpu.memory_space<vmem>>, vector<2x512xf32>
    %c8_199 = arith.constant 8 : index
    %c0_200 = arith.constant 0 : index
    %471 = vector.load %arg10[%c8_199, %c0_200] : memref<16x512xf32, #tpu.memory_space<vmem>>, vector<2x512xf32>
    %472 = arith.addf %470, %471 : vector<2x512xf32>
    %cst_201 = arith.constant dense<0.000000e+00> : vector<2x512xf32>
    %473 = tpu.matmul %465, %392, %cst_201 {dimension_numbers = #tpu.dot_dimension_numbers<[1], [0], [0], [1], [0, 0, 1, 1], [], []>} : vector<2x128xf32>, vector<128x512xf32>, vector<2x512xf32> -> vector<2x512xf32>
    %474 = arith.addf %472, %473 : vector<2x512xf32>
    %475 = vector.extract_strided_slice %474 {offsets = [0, 0], sizes = [2, 384], strides = [1, 1]} : vector<2x512xf32> to vector<2x384xf32>
    %476 = arith.negf %475 : vector<2x384xf32>
    %477 = math.exp %476 : vector<2x384xf32>
    %cst_202 = arith.constant 1.000000e+00 : f32
    %478 = vector.broadcast %cst_202 : f32 to vector<2x384xf32>
    %479 = arith.addf %478, %477 : vector<2x384xf32>
    %480 = arith.divf %478, %479 : vector<2x384xf32>
    %481 = vector.extract_strided_slice %474 {offsets = [0, 384], sizes = [2, 128], strides = [1, 1]} : vector<2x512xf32> to vector<2x128xf32>
    %482 = math.tanh %481 : vector<2x128xf32>
    %483 = vector.extract_strided_slice %480 {offsets = [0, 128], sizes = [2, 128], strides = [1, 1]} : vector<2x384xf32> to vector<2x128xf32>
    %484 = arith.mulf %483, %462 : vector<2x128xf32>
    %485 = vector.extract_strided_slice %480 {offsets = [0, 0], sizes = [2, 128], strides = [1, 1]} : vector<2x384xf32> to vector<2x128xf32>
    %486 = arith.mulf %485, %482 : vector<2x128xf32>
    %487 = arith.addf %484, %486 : vector<2x128xf32>
    %488 = vector.extract_strided_slice %480 {offsets = [0, 256], sizes = [2, 128], strides = [1, 1]} : vector<2x384xf32> to vector<2x128xf32>
    %489 = math.tanh %487 : vector<2x128xf32>
    %490 = arith.mulf %488, %489 : vector<2x128xf32>
    %491 = vector.extract_strided_slice %490 {offsets = [0, 0], sizes = [2, 64], strides = [1, 1]} : vector<2x128xf32> to vector<2x64xf32>
    %c10_203 = arith.constant 10 : index
    %c0_204 = arith.constant 0 : index
    %492 = vector.load %arg11[%c10_203, %c0_204] : memref<24x128xf32, #tpu.memory_space<vmem>>, vector<2x64xf32>
    tpu.vector_store %arg11[%c10_203, %c0_204], %491 {strides = array<i32>} : memref<24x128xf32, #tpu.memory_space<vmem>>, vector<2x64xf32>,
    %493 = vector.extract_strided_slice %490 {offsets = [0, 64], sizes = [2, 64], strides = [1, 1]} : vector<2x128xf32> to vector<2x64xf32>
    %c12_205 = arith.constant 12 : index
    %c64_206 = arith.constant 64 : index
    %494 = vector.load %arg11[%c12_205, %c64_206] : memref<24x128xf32, #tpu.memory_space<vmem>>, vector<2x64xf32>
    tpu.vector_store %arg11[%c12_205, %c64_206], %493 {strides = array<i32>} : memref<24x128xf32, #tpu.memory_space<vmem>>, vector<2x64xf32>,
    %c8_207 = arith.constant 8 : index
    %c0_208 = arith.constant 0 : index
    %495 = vector.load %arg9[%c8_207, %c0_208] : memref<16x512xf32, #tpu.memory_space<vmem>>, vector<2x512xf32>
    %c6_209 = arith.constant 6 : index
    %c0_210 = arith.constant 0 : index
    %496 = vector.load %arg10[%c6_209, %c0_210] : memref<16x512xf32, #tpu.memory_space<vmem>>, vector<2x512xf32>
    %497 = arith.addf %495, %496 : vector<2x512xf32>
    %cst_211 = arith.constant dense<0.000000e+00> : vector<2x512xf32>
    %498 = tpu.matmul %490, %392, %cst_211 {dimension_numbers = #tpu.dot_dimension_numbers<[1], [0], [0], [1], [0, 0, 1, 1], [], []>} : vector<2x128xf32>, vector<128x512xf32>, vector<2x512xf32> -> vector<2x512xf32>
    %499 = arith.addf %497, %498 : vector<2x512xf32>
    %500 = vector.extract_strided_slice %499 {offsets = [0, 0], sizes = [2, 384], strides = [1, 1]} : vector<2x512xf32> to vector<2x384xf32>
    %501 = arith.negf %500 : vector<2x384xf32>
    %502 = math.exp %501 : vector<2x384xf32>
    %cst_212 = arith.constant 1.000000e+00 : f32
    %503 = vector.broadcast %cst_212 : f32 to vector<2x384xf32>
    %504 = arith.addf %503, %502 : vector<2x384xf32>
    %505 = arith.divf %503, %504 : vector<2x384xf32>
    %506 = vector.extract_strided_slice %499 {offsets = [0, 384], sizes = [2, 128], strides = [1, 1]} : vector<2x512xf32> to vector<2x128xf32>
    %507 = math.tanh %506 : vector<2x128xf32>
    %508 = vector.extract_strided_slice %505 {offsets = [0, 128], sizes = [2, 128], strides = [1, 1]} : vector<2x384xf32> to vector<2x128xf32>
    %509 = arith.mulf %508, %487 : vector<2x128xf32>
    %510 = vector.extract_strided_slice %505 {offsets = [0, 0], sizes = [2, 128], strides = [1, 1]} : vector<2x384xf32> to vector<2x128xf32>
    %511 = arith.mulf %510, %507 : vector<2x128xf32>
    %512 = arith.addf %509, %511 : vector<2x128xf32>
    %513 = vector.extract_strided_slice %505 {offsets = [0, 256], sizes = [2, 128], strides = [1, 1]} : vector<2x384xf32> to vector<2x128xf32>
    %514 = math.tanh %512 : vector<2x128xf32>
    %515 = arith.mulf %513, %514 : vector<2x128xf32>
    %516 = vector.extract_strided_slice %515 {offsets = [0, 0], sizes = [2, 64], strides = [1, 1]} : vector<2x128xf32> to vector<2x64xf32>
    %c12_213 = arith.constant 12 : index
    %c0_214 = arith.constant 0 : index
    %517 = vector.load %arg11[%c12_213, %c0_214] : memref<24x128xf32, #tpu.memory_space<vmem>>, vector<2x64xf32>
    tpu.vector_store %arg11[%c12_213, %c0_214], %516 {strides = array<i32>} : memref<24x128xf32, #tpu.memory_space<vmem>>, vector<2x64xf32>,
    %518 = vector.extract_strided_slice %515 {offsets = [0, 64], sizes = [2, 64], strides = [1, 1]} : vector<2x128xf32> to vector<2x64xf32>
    %c10_215 = arith.constant 10 : index
    %c64_216 = arith.constant 64 : index
    %519 = vector.load %arg11[%c10_215, %c64_216] : memref<24x128xf32, #tpu.memory_space<vmem>>, vector<2x64xf32>
    tpu.vector_store %arg11[%c10_215, %c64_216], %518 {strides = array<i32>} : memref<24x128xf32, #tpu.memory_space<vmem>>, vector<2x64xf32>,
    %c10_217 = arith.constant 10 : index
    %c0_218 = arith.constant 0 : index
    %520 = vector.load %arg9[%c10_217, %c0_218] : memref<16x512xf32, #tpu.memory_space<vmem>>, vector<2x512xf32>
    %c4_219 = arith.constant 4 : index
    %c0_220 = arith.constant 0 : index
    %521 = vector.load %arg10[%c4_219, %c0_220] : memref<16x512xf32, #tpu.memory_space<vmem>>, vector<2x512xf32>
    %522 = arith.addf %520, %521 : vector<2x512xf32>
    %cst_221 = arith.constant dense<0.000000e+00> : vector<2x512xf32>
    %523 = tpu.matmul %515, %392, %cst_221 {dimension_numbers = #tpu.dot_dimension_numbers<[1], [0], [0], [1], [0, 0, 1, 1], [], []>} : vector<2x128xf32>, vector<128x512xf32>, vector<2x512xf32> -> vector<2x512xf32>
    %524 = arith.addf %522, %523 : vector<2x512xf32>
    %525 = vector.extract_strided_slice %524 {offsets = [0, 0], sizes = [2, 384], strides = [1, 1]} : vector<2x512xf32> to vector<2x384xf32>
    %526 = arith.negf %525 : vector<2x384xf32>
    %527 = math.exp %526 : vector<2x384xf32>
    %cst_222 = arith.constant 1.000000e+00 : f32
    %528 = vector.broadcast %cst_222 : f32 to vector<2x384xf32>
    %529 = arith.addf %528, %527 : vector<2x384xf32>
    %530 = arith.divf %528, %529 : vector<2x384xf32>
    %531 = vector.extract_strided_slice %524 {offsets = [0, 384], sizes = [2, 128], strides = [1, 1]} : vector<2x512xf32> to vector<2x128xf32>
    %532 = math.tanh %531 : vector<2x128xf32>
    %533 = vector.extract_strided_slice %530 {offsets = [0, 128], sizes = [2, 128], strides = [1, 1]} : vector<2x384xf32> to vector<2x128xf32>
    %534 = arith.mulf %533, %512 : vector<2x128xf32>
    %535 = vector.extract_strided_slice %530 {offsets = [0, 0], sizes = [2, 128], strides = [1, 1]} : vector<2x384xf32> to vector<2x128xf32>
    %536 = arith.mulf %535, %532 : vector<2x128xf32>
    %537 = arith.addf %534, %536 : vector<2x128xf32>
    %538 = vector.extract_strided_slice %530 {offsets = [0, 256], sizes = [2, 128], strides = [1, 1]} : vector<2x384xf32> to vector<2x128xf32>
    %539 = math.tanh %537 : vector<2x128xf32>
    %540 = arith.mulf %538, %539 : vector<2x128xf32>
    %541 = vector.extract_strided_slice %540 {offsets = [0, 0], sizes = [2, 64], strides = [1, 1]} : vector<2x128xf32> to vector<2x64xf32>
    %c14_223 = arith.constant 14 : index
    %c0_224 = arith.constant 0 : index
    %542 = vector.load %arg11[%c14_223, %c0_224] : memref<24x128xf32, #tpu.memory_space<vmem>>, vector<2x64xf32>
    tpu.vector_store %arg11[%c14_223, %c0_224], %541 {strides = array<i32>} : memref<24x128xf32, #tpu.memory_space<vmem>>, vector<2x64xf32>,
    %543 = vector.extract_strided_slice %540 {offsets = [0, 64], sizes = [2, 64], strides = [1, 1]} : vector<2x128xf32> to vector<2x64xf32>
    %c8_225 = arith.constant 8 : index
    %c64_226 = arith.constant 64 : index
    %544 = vector.load %arg11[%c8_225, %c64_226] : memref<24x128xf32, #tpu.memory_space<vmem>>, vector<2x64xf32>
    tpu.vector_store %arg11[%c8_225, %c64_226], %543 {strides = array<i32>} : memref<24x128xf32, #tpu.memory_space<vmem>>, vector<2x64xf32>,
    %c12_227 = arith.constant 12 : index
    %c0_228 = arith.constant 0 : index
    %545 = vector.load %arg9[%c12_227, %c0_228] : memref<16x512xf32, #tpu.memory_space<vmem>>, vector<2x512xf32>
    %c2_229 = arith.constant 2 : index
    %c0_230 = arith.constant 0 : index
    %546 = vector.load %arg10[%c2_229, %c0_230] : memref<16x512xf32, #tpu.memory_space<vmem>>, vector<2x512xf32>
    %547 = arith.addf %545, %546 : vector<2x512xf32>
    %cst_231 = arith.constant dense<0.000000e+00> : vector<2x512xf32>
    %548 = tpu.matmul %540, %392, %cst_231 {dimension_numbers = #tpu.dot_dimension_numbers<[1], [0], [0], [1], [0, 0, 1, 1], [], []>} : vector<2x128xf32>, vector<128x512xf32>, vector<2x512xf32> -> vector<2x512xf32>
    %549 = arith.addf %547, %548 : vector<2x512xf32>
    %550 = vector.extract_strided_slice %549 {offsets = [0, 0], sizes = [2, 384], strides = [1, 1]} : vector<2x512xf32> to vector<2x384xf32>
    %551 = arith.negf %550 : vector<2x384xf32>
    %552 = math.exp %551 : vector<2x384xf32>
    %cst_232 = arith.constant 1.000000e+00 : f32
    %553 = vector.broadcast %cst_232 : f32 to vector<2x384xf32>
    %554 = arith.addf %553, %552 : vector<2x384xf32>
    %555 = arith.divf %553, %554 : vector<2x384xf32>
    %556 = vector.extract_strided_slice %549 {offsets = [0, 384], sizes = [2, 128], strides = [1, 1]} : vector<2x512xf32> to vector<2x128xf32>
    %557 = math.tanh %556 : vector<2x128xf32>
    %558 = vector.extract_strided_slice %555 {offsets = [0, 128], sizes = [2, 128], strides = [1, 1]} : vector<2x384xf32> to vector<2x128xf32>
    %559 = arith.mulf %558, %537 : vector<2x128xf32>
    %560 = vector.extract_strided_slice %555 {offsets = [0, 0], sizes = [2, 128], strides = [1, 1]} : vector<2x384xf32> to vector<2x128xf32>
    %561 = arith.mulf %560, %557 : vector<2x128xf32>
    %562 = arith.addf %559, %561 : vector<2x128xf32>
    %563 = vector.extract_strided_slice %555 {offsets = [0, 256], sizes = [2, 128], strides = [1, 1]} : vector<2x384xf32> to vector<2x128xf32>
    %564 = math.tanh %562 : vector<2x128xf32>
    %565 = arith.mulf %563, %564 : vector<2x128xf32>
    %566 = vector.extract_strided_slice %565 {offsets = [0, 0], sizes = [2, 64], strides = [1, 1]} : vector<2x128xf32> to vector<2x64xf32>
    %c16_233 = arith.constant 16 : index
    %c0_234 = arith.constant 0 : index
    %567 = vector.load %arg11[%c16_233, %c0_234] : memref<24x128xf32, #tpu.memory_space<vmem>>, vector<2x64xf32>
    tpu.vector_store %arg11[%c16_233, %c0_234], %566 {strides = array<i32>} : memref<24x128xf32, #tpu.memory_space<vmem>>, vector<2x64xf32>,
    %568 = vector.extract_strided_slice %565 {offsets = [0, 64], sizes = [2, 64], strides = [1, 1]} : vector<2x128xf32> to vector<2x64xf32>
    %c6_235 = arith.constant 6 : index
    %c64_236 = arith.constant 64 : index
    %569 = vector.load %arg11[%c6_235, %c64_236] : memref<24x128xf32, #tpu.memory_space<vmem>>, vector<2x64xf32>
    tpu.vector_store %arg11[%c6_235, %c64_236], %568 {strides = array<i32>} : memref<24x128xf32, #tpu.memory_space<vmem>>, vector<2x64xf32>,
    %c14_237 = arith.constant 14 : index
    %c0_238 = arith.constant 0 : index
    %570 = vector.load %arg9[%c14_237, %c0_238] : memref<16x512xf32, #tpu.memory_space<vmem>>, vector<2x512xf32>
    %c0_239 = arith.constant 0 : index
    %c0_240 = arith.constant 0 : index
    %571 = vector.load %arg10[%c0_239, %c0_240] : memref<16x512xf32, #tpu.memory_space<vmem>>, vector<2x512xf32>
    %572 = arith.addf %570, %571 : vector<2x512xf32>
    %cst_241 = arith.constant dense<0.000000e+00> : vector<2x512xf32>
    %573 = tpu.matmul %565, %392, %cst_241 {dimension_numbers = #tpu.dot_dimension_numbers<[1], [0], [0], [1], [0, 0, 1, 1], [], []>} : vector<2x128xf32>, vector<128x512xf32>, vector<2x512xf32> -> vector<2x512xf32>
    %574 = arith.addf %572, %573 : vector<2x512xf32>
    %575 = vector.extract_strided_slice %574 {offsets = [0, 0], sizes = [2, 384], strides = [1, 1]} : vector<2x512xf32> to vector<2x384xf32>
    %576 = arith.negf %575 : vector<2x384xf32>
    %577 = math.exp %576 : vector<2x384xf32>
    %cst_242 = arith.constant 1.000000e+00 : f32
    %578 = vector.broadcast %cst_242 : f32 to vector<2x384xf32>
    %579 = arith.addf %578, %577 : vector<2x384xf32>
    %580 = arith.divf %578, %579 : vector<2x384xf32>
    %581 = vector.extract_strided_slice %574 {offsets = [0, 384], sizes = [2, 128], strides = [1, 1]} : vector<2x512xf32> to vector<2x128xf32>
    %582 = math.tanh %581 : vector<2x128xf32>
    %583 = vector.extract_strided_slice %580 {offsets = [0, 128], sizes = [2, 128], strides = [1, 1]} : vector<2x384xf32> to vector<2x128xf32>
    %584 = arith.mulf %583, %562 : vector<2x128xf32>
    %585 = vector.extract_strided_slice %580 {offsets = [0, 0], sizes = [2, 128], strides = [1, 1]} : vector<2x384xf32> to vector<2x128xf32>
    %586 = arith.mulf %585, %582 : vector<2x128xf32>
    %587 = arith.addf %584, %586 : vector<2x128xf32>
    %588 = vector.extract_strided_slice %580 {offsets = [0, 256], sizes = [2, 128], strides = [1, 1]} : vector<2x384xf32> to vector<2x128xf32>
    %589 = math.tanh %587 : vector<2x128xf32>
    %590 = arith.mulf %588, %589 : vector<2x128xf32>
    %591 = vector.extract_strided_slice %590 {offsets = [0, 0], sizes = [2, 64], strides = [1, 1]} : vector<2x128xf32> to vector<2x64xf32>
    %c18_243 = arith.constant 18 : index
    %c0_244 = arith.constant 0 : index
    %592 = vector.load %arg11[%c18_243, %c0_244] : memref<24x128xf32, #tpu.memory_space<vmem>>, vector<2x64xf32>
    tpu.vector_store %arg11[%c18_243, %c0_244], %591 {strides = array<i32>} : memref<24x128xf32, #tpu.memory_space<vmem>>, vector<2x64xf32>,
    %593 = vector.extract_strided_slice %590 {offsets = [0, 64], sizes = [2, 64], strides = [1, 1]} : vector<2x128xf32> to vector<2x64xf32>
    %c4_245 = arith.constant 4 : index
    %c64_246 = arith.constant 64 : index
    %594 = vector.load %arg11[%c4_245, %c64_246] : memref<24x128xf32, #tpu.memory_space<vmem>>, vector<2x64xf32>
    tpu.vector_store %arg11[%c4_245, %c64_246], %593 {strides = array<i32>} : memref<24x128xf32, #tpu.memory_space<vmem>>, vector<2x64xf32>,
    %cst_247 = arith.constant 0.000000e+00 : f32
    %595 = vector.broadcast %cst_247 : f32 to vector<16x64xf32>
    %c0_248 = arith.constant 0 : index
    %c0_249 = arith.constant 0 : index
    %596 = vector.load %arg5[%c0_248, %c0_249] : memref<2x64xf32, #tpu.memory_space<vmem>>, vector<1x64xf32>
    %597 = vector.broadcast %596 : vector<1x64xf32> to vector<16x64xf32>
    %598 = arith.addf %595, %597 : vector<16x64xf32>
    %c0_250 = arith.constant 0 : index
    %c0_251 = arith.constant 0 : index
    %599 = vector.load %arg11[%c0_250, %c0_251] : memref<24x128xf32, #tpu.memory_space<vmem>>, vector<16x128xf32>
    %c0_252 = arith.constant 0 : index
    %c0_253 = arith.constant 0 : index
    %600 = vector.load %arg3[%c0_252, %c0_253] : memref<640x64xf32, #tpu.memory_space<vmem>>, vector<128x64xf32>
    %cst_254 = arith.constant dense<0.000000e+00> : vector<16x64xf32>
    %601 = tpu.matmul %599, %600, %cst_254 {dimension_numbers = #tpu.dot_dimension_numbers<[1], [0], [0], [1], [0, 0, 1, 1], [], []>} : vector<16x128xf32>, vector<128x64xf32>, vector<16x64xf32> -> vector<16x64xf32>
    %602 = arith.addf %598, %601 : vector<16x64xf32>
    %c2_255 = arith.constant 2 : index
    %c0_256 = arith.constant 0 : index
    %603 = vector.load %arg11[%c2_255, %c0_256] : memref<24x128xf32, #tpu.memory_space<vmem>>, vector<16x128xf32>
    %c128_257 = arith.constant 128 : index
    %c0_258 = arith.constant 0 : index
    %604 = vector.load %arg3[%c128_257, %c0_258] : memref<640x64xf32, #tpu.memory_space<vmem>>, vector<128x64xf32>
    %cst_259 = arith.constant dense<0.000000e+00> : vector<16x64xf32>
    %605 = tpu.matmul %603, %604, %cst_259 {dimension_numbers = #tpu.dot_dimension_numbers<[1], [0], [0], [1], [0, 0, 1, 1], [], []>} : vector<16x128xf32>, vector<128x64xf32>, vector<16x64xf32> -> vector<16x64xf32>
    %606 = arith.addf %602, %605 : vector<16x64xf32>
    %c4_260 = arith.constant 4 : index
    %c0_261 = arith.constant 0 : index
    %607 = vector.load %arg11[%c4_260, %c0_261] : memref<24x128xf32, #tpu.memory_space<vmem>>, vector<16x128xf32>
    %c256_262 = arith.constant 256 : index
    %c0_263 = arith.constant 0 : index
    %608 = vector.load %arg3[%c256_262, %c0_263] : memref<640x64xf32, #tpu.memory_space<vmem>>, vector<128x64xf32>
    %cst_264 = arith.constant dense<0.000000e+00> : vector<16x64xf32>
    %609 = tpu.matmul %607, %608, %cst_264 {dimension_numbers = #tpu.dot_dimension_numbers<[1], [0], [0], [1], [0, 0, 1, 1], [], []>} : vector<16x128xf32>, vector<128x64xf32>, vector<16x64xf32> -> vector<16x64xf32>
    %610 = arith.addf %606, %609 : vector<16x64xf32>
    %c6_265 = arith.constant 6 : index
    %c0_266 = arith.constant 0 : index
    %611 = vector.load %arg11[%c6_265, %c0_266] : memref<24x128xf32, #tpu.memory_space<vmem>>, vector<16x128xf32>
    %c384_267 = arith.constant 384 : index
    %c0_268 = arith.constant 0 : index
    %612 = vector.load %arg3[%c384_267, %c0_268] : memref<640x64xf32, #tpu.memory_space<vmem>>, vector<128x64xf32>
    %cst_269 = arith.constant dense<0.000000e+00> : vector<16x64xf32>
    %613 = tpu.matmul %611, %612, %cst_269 {dimension_numbers = #tpu.dot_dimension_numbers<[1], [0], [0], [1], [0, 0, 1, 1], [], []>} : vector<16x128xf32>, vector<128x64xf32>, vector<16x64xf32> -> vector<16x64xf32>
    %614 = arith.addf %610, %613 : vector<16x64xf32>
    %c8_270 = arith.constant 8 : index
    %c0_271 = arith.constant 0 : index
    %615 = vector.load %arg11[%c8_270, %c0_271] : memref<24x128xf32, #tpu.memory_space<vmem>>, vector<16x128xf32>
    %c512_272 = arith.constant 512 : index
    %c0_273 = arith.constant 0 : index
    %616 = vector.load %arg3[%c512_272, %c0_273] : memref<640x64xf32, #tpu.memory_space<vmem>>, vector<128x64xf32>
    %cst_274 = arith.constant dense<0.000000e+00> : vector<16x64xf32>
    %617 = tpu.matmul %615, %616, %cst_274 {dimension_numbers = #tpu.dot_dimension_numbers<[1], [0], [0], [1], [0, 0, 1, 1], [], []>} : vector<16x128xf32>, vector<128x64xf32>, vector<16x64xf32> -> vector<16x64xf32>
    %618 = arith.addf %614, %617 : vector<16x64xf32>
    %cst_275 = arith.constant 0.000000e+00 : f32
    %619 = vector.broadcast %cst_275 : f32 to vector<16x64xf32>
    %620 = arith.maximumf %618, %619 : vector<16x64xf32>
    %c0_276 = arith.constant 0 : index
    %c0_277 = arith.constant 0 : index
    %621 = vector.load %arg4[%c0_276, %c0_277] : memref<64x2xf32, #tpu.memory_space<vmem>>, vector<64x2xf32>
    %cst_278 = arith.constant dense<0.000000e+00> : vector<16x2xf32>
    %622 = tpu.matmul %620, %621, %cst_278 {dimension_numbers = #tpu.dot_dimension_numbers<[1], [0], [0], [1], [0, 0, 1, 1], [], []>} : vector<16x64xf32>, vector<64x2xf32>, vector<16x2xf32> -> vector<16x2xf32>
    %c1_279 = arith.constant 1 : index
    %c0_280 = arith.constant 0 : index
    %623 = vector.load %arg5[%c1_279, %c0_280] : memref<2x64xf32, #tpu.memory_space<vmem>>, vector<1x2xf32>
    %624 = vector.broadcast %623 : vector<1x2xf32> to vector<16x2xf32>
    %625 = arith.addf %622, %624 : vector<16x2xf32>
    %c0_281 = arith.constant 0 : index
    %c0_282 = arith.constant 0 : index
    %626 = vector.load %arg6[%c0_281, %c0_282] : memref<16x2xf32, #tpu.memory_space<vmem>>, vector<16x2xf32>
    tpu.vector_store %arg6[%c0_281, %c0_282], %625 {strides = array<i32>} : memref<16x2xf32, #tpu.memory_space<vmem>>, vector<16x2xf32>,
    return
  }
}

</mosaic_0001>

<llo_original>
// kernel: forward.1
$region0: #{forward.1}
  #allocation0 [shape = 'u32[]', space=smem, size = 0x4, offset = 0x4, fixed_abs, tag = 'smem constant byte address 0x4 - core index']
  #allocation1 [shape = 'u32[72,128]{1,0:T(1,128)}', space=vmem, size = 0x9000, scoped, tag = 'internal scratch']
  #allocation2 [shape = 'f32[16,128]{1,0:T(8,128)}', space=vmem, size = 0x2000, scoped, tag = 'scratch operand']
  #allocation3 [shape = 'f32[16,128]{1,0:T(8,128)}', space=vmem, size = 0x2000, scoped, tag = 'scratch operand']
  #allocation4 [shape = 'f32[16,512]{1,0:T(8,128)}', space=vmem, size = 0x8000, scoped, tag = 'scratch operand']
  #allocation5 [shape = 'f32[16,512]{1,0:T(8,128)}', space=vmem, size = 0x8000, scoped, tag = 'scratch operand']
  #allocation6 [shape = 'f32[24,128]{1,0:T(8,128)}', space=vmem, size = 0x3000, scoped, tag = 'scratch operand']
  %s0 = inlined_call_operand.vmem [shape: f32[16,64], index: 0, kind: input, shape index: {}]
  %s1 = inlined_call_operand.hbm [shape: f32[1024,512], index: 1, kind: input, shape index: {}]
  %s2 = inlined_call_operand.hbm [shape: f32[3,512], index: 2, kind: input, shape index: {}]
  %s3 = inlined_call_operand.vmem [shape: f32[640,64], index: 3, kind: input, shape index: {}]
  %s4 = inlined_call_operand.vmem [shape: f32[64,2], index: 4, kind: input, shape index: {}]
  %s5 = inlined_call_operand.hbm [shape: f32[2,64], index: 5, kind: input, shape index: {}]
  %s6 = inlined_call_operand.vmem [shape: f32[16,2], index: 6, kind: output, shape index: {}]
  %s7 = sld [smem:[#allocation0]]
  $region46: #{forward.1} parent=0
    _
  %s9 = ssub.s32 1, %s7
  %s10 = scalar_select 0, %s9, %s7
  $region1: #{forward.1} parent=0
    #allocation7 [shape = 'u8[2097152]{0}', space=vmem, size = 0x200000, scoped, tag = 'input window, operand 1, single buffered']
    #allocation8 [shape = 's32[1]{0}', space=sflag, size = 0x4, scoped, tag = 'scoped memory for forward.1']
    #allocation9 [shape = 'u8[8192]{0}', space=vmem, size = 0x2000, scoped, tag = 'input window, operand 2, single buffered']
    #allocation10 [shape = 's32[1]{0}', space=sflag, size = 0x4, scoped, tag = 'scoped memory for forward.1']
    #allocation11 [shape = 'u8[1024]{0}', space=vmem, size = 0x400, scoped, tag = 'input window, operand 5, single buffered']
    %11 = vsyncpa [#allocation8], 0
    %12 = vsyncpa [#allocation10], 0
    // Predicated region
    $region2: #{forward.1} parent=1 // pred_check
      _
    $region3: #{forward.1} parent=1 // pred_check_branch
      %14 = sbr.rel (0) target = $region5
    $region4: #{forward.1} parent=1 // pred_region
      _
    $region5: #{forward.1} parent=1 // pred_fallthru
      _
    // Predicated region
    $region6: #{forward.1} parent=1 // pred_check
      _
    $region7: #{forward.1} parent=1 // pred_check_branch
      %16 = sbr.rel (0) target = $region9
    $region8: #{forward.1} parent=1 // pred_region
      %18 = vsyncadd [#allocation8], 0
      %s19 = sshll.u32 %s1, 4
      %s20 = int_to_ptr.hbm [resolvable:$true] %s19
      %s21 = sshll.u32 [#allocation7], 4
      %s22 = int_to_ptr.vmem [resolvable:$true] %s21
      %27 = dma.hbm_to_vmem [thread:$0]  %s20, 65536, %s22, [#allocation8], 512, 512, 32
    $region9: #{forward.1} parent=1 // pred_fallthru
      _
    // Predicated region
    $region10: #{forward.1} parent=1 // pred_check
      _
    $region11: #{forward.1} parent=1 // pred_check_branch
      %29 = sbr.rel (0) target = $region13
    $region12: #{forward.1} parent=1 // pred_region
      %31 = vsyncadd [#allocation10], 0
      %s33 = sshll.u32 %s2, 4
      %s34 = int_to_ptr.hbm [resolvable:$true] %s33
      %s35 = sshll.u32 [#allocation9], 4
      %s36 = int_to_ptr.vmem [resolvable:$true] %s35
      %38 = dma.hbm_to_vmem [thread:$0]  %s34, 256, %s36, [#allocation10]
    $region13: #{forward.1} parent=1 // pred_fallthru
      _
    // Predicated region
    $region14: #{forward.1} parent=1 // pred_check
      _
    $region15: #{forward.1} parent=1 // pred_check_branch
      %40 = sbr.rel (0) target = $region17
    $region16: #{forward.1} parent=1 // pred_region
      _
    $region17: #{forward.1} parent=1 // pred_fallthru
      _
    // Predicated region
    $region18: #{forward.1} parent=1 // pred_check
      _
    $region19: #{forward.1} parent=1 // pred_check_branch
      %42 = sbr.rel (0) target = $region21
    $region20: #{forward.1} parent=1 // pred_region
      _
    $region21: #{forward.1} parent=1 // pred_fallthru
      _
    // Predicated region
    $region22: #{forward.1} parent=1 // pred_check
      _
    $region23: #{forward.1} parent=1 // pred_check_branch
      %44 = sbr.rel (0) target = $region25
    $region24: #{forward.1} parent=1 // pred_region
      %46 = vsyncadd [#allocation10], 0
      %s48 = sshll.u32 %s5, 4
      %s49 = int_to_ptr.hbm [resolvable:$true] %s48
      %s50 = sshll.u32 [#allocation11], 4
      %s51 = int_to_ptr.vmem [resolvable:$true] %s50
      %53 = dma.hbm_to_vmem [thread:$0]  %s49, 32, %s51, [#allocation10]
    $region25: #{forward.1} parent=1 // pred_fallthru
      _
    // Predicated region
    $region26: #{forward.1} parent=1 // pred_check
      _
    $region27: #{forward.1} parent=1 // pred_check_branch
      %55 = sbr.rel (0) target = $region29
    $region28: #{forward.1} parent=1 // pred_region
      %57 = dma.done [#allocation8], 65536
    $region29: #{forward.1} parent=1 // pred_fallthru
      _
    // Predicated region
    $region30: #{forward.1} parent=1 // pred_check
      _
    $region31: #{forward.1} parent=1 // pred_check_branch
      %59 = sbr.rel (0) target = $region33
    $region32: #{forward.1} parent=1 // pred_region
      %61 = dma.done [#allocation10], 256
    $region33: #{forward.1} parent=1 // pred_fallthru
      _
    // Predicated region
    $region34: #{forward.1} parent=1 // pred_check
      _
    $region35: #{forward.1} parent=1 // pred_check_branch
      %63 = sbr.rel (0) target = $region37
    $region36: #{forward.1} parent=1 // pred_region
      %65 = dma.done [#allocation10], 32
    $region37: #{forward.1} parent=1 // pred_fallthru
      _
    %v66 = vld [vmem:[%s0] sm:$0xff]
    %v67 = vld [vmem:[%s0 + $0x8] sm:$0xff]
    %v68 = vld [vmem:[#allocation7] sm:$0xff]
    %v69 = vld [vmem:[#allocation7 + $0x8] sm:$0xff]
    %v70 = vld [vmem:[#allocation7 + $0x10] sm:$0xff]
    %v71 = vld [vmem:[#allocation7 + $0x18] sm:$0xff]
    %v72 = vld [vmem:[#allocation7 + $0x20] sm:$0xff]
    %v73 = vld [vmem:[#allocation7 + $0x28] sm:$0xff]
    %v74 = vld [vmem:[#allocation7 + $0x30] sm:$0xff]
    %v75 = vld [vmem:[#allocation7 + $0x38] sm:$0xff]
    %v76 = vld [vmem:[#allocation7 + $0x40] sm:$0xff]
    %v77 = vld [vmem:[#allocation7 + $0x48] sm:$0xff]
    %v78 = vld [vmem:[#allocation7 + $0x50] sm:$0xff]
    %v79 = vld [vmem:[#allocation7 + $0x58] sm:$0xff]
    %v80 = vld [vmem:[#allocation7 + $0x60] sm:$0xff]
    %v81 = vld [vmem:[#allocation7 + $0x68] sm:$0xff]
    %v82 = vld [vmem:[#allocation7 + $0x70] sm:$0xff]
    %v83 = vld [vmem:[#allocation7 + $0x78] sm:$0xff]
    %v84 = vld [vmem:[#allocation7 + $0x80] sm:$0xff]
    %v85 = vld [vmem:[#allocation7 + $0x88] sm:$0xff]
    %v86 = vld [vmem:[#allocation7 + $0x90] sm:$0xff]
    %v87 = vld [vmem:[#allocation7 + $0x98] sm:$0xff]
    %v88 = vld [vmem:[#allocation7 + $0xa0] sm:$0xff]
    %v89 = vld [vmem:[#allocation7 + $0xa8] sm:$0xff]
    %v90 = vld [vmem:[#allocation7 + $0xb0] sm:$0xff]
    %v91 = vld [vmem:[#allocation7 + $0xb8] sm:$0xff]
    %v92 = vld [vmem:[#allocation7 + $0xc0] sm:$0xff]
    %v93 = vld [vmem:[#allocation7 + $0xc8] sm:$0xff]
    %v94 = vld [vmem:[#allocation7 + $0xd0] sm:$0xff]
    %v95 = vld [vmem:[#allocation7 + $0xd8] sm:$0xff]
    %v96 = vld [vmem:[#allocation7 + $0xe0] sm:$0xff]
    %v97 = vld [vmem:[#allocation7 + $0xe8] sm:$0xff]
    %v98 = vld [vmem:[#allocation7 + $0xf0] sm:$0xff]
    %v99 = vld [vmem:[#allocation7 + $0xf8] sm:$0xff]
    %v100 = vld [vmem:[#allocation9] ss:$4 sm:$0xf]
    %v102 = vperm.slane %v100, 0
    %v103 = vperm.slane %v100, 1
    %v104 = vperm.slane %v100, 2
    %v105 = vperm.slane %v100, 3
    %vm110 = vcmask 523264
    %v112 = vsel %vm110, %v66, 0
    %v115 = vsel %vm110, %v67, 0
    %117 = vmatpush.msra.mxu0 0.0
    %118 = vmatpush.msra.mxu0 0.0
    %119 = vmatpush.msra.mxu0 0.0
    %120 = vmatpush.msra.mxu0 0.0
    %121 = vmatpush.msra.mxu0 0.0
    %122 = vmatpush.msra.mxu0 0.0
    %123 = vmatpush.msra.mxu0 0.0
    %124 = vmatpush.msra.mxu0 0.0
    %125 = vmatpush.msra.mxu0 %v96
    %126 = vmatpush.msra.mxu0 %v92
    %127 = vmatpush.msra.mxu0 %v88
    %128 = vmatpush.msra.mxu0 %v84
    %129 = vmatpush.msra.mxu0 %v80
    %130 = vmatpush.msra.mxu0 %v76
    %131 = vmatpush.msra.mxu0 %v72
    %132 = vmatpush.msra.mxu0 %v68
    %133 = vmatmul.f32.gmra.mxu0 %v112
    %v134 = vpop.f32.mrf.mxu0
    %v135 = vadd.f32 %v102, %v134
    %136 = vmatmul.f32.gmra.mxu0 %v115
    %v137 = vpop.f32.mrf.mxu0
    %v138 = vadd.f32 %v102, %v137
    %139 = vdwg.mxu0
    %140 = vmatpush.msra.mxu0 0.0
    %141 = vmatpush.msra.mxu0 0.0
    %142 = vmatpush.msra.mxu0 0.0
    %143 = vmatpush.msra.mxu0 0.0
    %144 = vmatpush.msra.mxu0 0.0
    %145 = vmatpush.msra.mxu0 0.0
    %146 = vmatpush.msra.mxu0 0.0
    %147 = vmatpush.msra.mxu0 0.0
    %148 = vmatpush.msra.mxu0 %v97
    %149 = vmatpush.msra.mxu0 %v93
    %150 = vmatpush.msra.mxu0 %v89
    %151 = vmatpush.msra.mxu0 %v85
    %152 = vmatpush.msra.mxu0 %v81
    %153 = vmatpush.msra.mxu0 %v77
    %154 = vmatpush.msra.mxu0 %v73
    %155 = vmatpush.msra.mxu0 %v69
    %156 = vmatmul.f32.gmra.mxu0 %v112
    %v157 = vpop.f32.mrf.mxu0
    %v158 = vadd.f32 %v103, %v157
    %159 = vmatmul.f32.gmra.mxu0 %v115
    %v160 = vpop.f32.mrf.mxu0
    %v161 = vadd.f32 %v103, %v160
    %162 = vdwg.mxu0
    %163 = vmatpush.msra.mxu0 0.0
    %164 = vmatpush.msra.mxu0 0.0
    %165 = vmatpush.msra.mxu0 0.0
    %166 = vmatpush.msra.mxu0 0.0
    %167 = vmatpush.msra.mxu0 0.0
    %168 = vmatpush.msra.mxu0 0.0
    %169 = vmatpush.msra.mxu0 0.0
    %170 = vmatpush.msra.mxu0 0.0
    %171 = vmatpush.msra.mxu0 %v98
    %172 = vmatpush.msra.mxu0 %v94
    %173 = vmatpush.msra.mxu0 %v90
    %174 = vmatpush.msra.mxu0 %v86
    %175 = vmatpush.msra.mxu0 %v82
    %176 = vmatpush.msra.mxu0 %v78
    %177 = vmatpush.msra.mxu0 %v74
    %178 = vmatpush.msra.mxu0 %v70
    %179 = vmatmul.f32.gmra.mxu0 %v112
    %v180 = vpop.f32.mrf.mxu0
    %v181 = vadd.f32 %v104, %v180
    %182 = vmatmul.f32.gmra.mxu0 %v115
    %v183 = vpop.f32.mrf.mxu0
    %v184 = vadd.f32 %v104, %v183
    %185 = vdwg.mxu0
    %186 = vmatpush.msra.mxu0 0.0
    %187 = vmatpush.msra.mxu0 0.0
    %188 = vmatpush.msra.mxu0 0.0
    %189 = vmatpush.msra.mxu0 0.0
    %190 = vmatpush.msra.mxu0 0.0
    %191 = vmatpush.msra.mxu0 0.0
    %192 = vmatpush.msra.mxu0 0.0
    %193 = vmatpush.msra.mxu0 0.0
    %194 = vmatpush.msra.mxu0 %v99
    %195 = vmatpush.msra.mxu0 %v95
    %196 = vmatpush.msra.mxu0 %v91
    %197 = vmatpush.msra.mxu0 %v87
    %198 = vmatpush.msra.mxu0 %v83
    %199 = vmatpush.msra.mxu0 %v79
    %200 = vmatpush.msra.mxu0 %v75
    %201 = vmatpush.msra.mxu0 %v71
    %202 = vmatmul.f32.gmra.mxu0 %v112
    %v203 = vpop.f32.mrf.mxu0
    %v204 = vadd.f32 %v105, %v203
    %205 = vmatmul.f32.gmra.mxu0 %v115
    %v206 = vpop.f32.mrf.mxu0
    %v207 = vadd.f32 %v105, %v206
    %208 = vdwg.mxu0
    %209 = vst [vmem:[#allocation4] sm:$0xff] %v135
    %210 = vst [vmem:[#allocation4 + $0x8] sm:$0xff] %v158
    %211 = vst [vmem:[#allocation4 + $0x10] sm:$0xff] %v181
    %212 = vst [vmem:[#allocation4 + $0x18] sm:$0xff] %v204
    %213 = vst [vmem:[#allocation4 + $0x20] sm:$0xff] %v138
    %214 = vst [vmem:[#allocation4 + $0x28] sm:$0xff] %v161
    %215 = vst [vmem:[#allocation4 + $0x30] sm:$0xff] %v184
    %216 = vst [vmem:[#allocation4 + $0x38] sm:$0xff] %v207
    %v217 = vld [vmem:[#allocation7 + $0x100] sm:$0xff]
    %v218 = vld [vmem:[#allocation7 + $0x108] sm:$0xff]
    %v219 = vld [vmem:[#allocation7 + $0x110] sm:$0xff]
    %v220 = vld [vmem:[#allocation7 + $0x118] sm:$0xff]
    %v221 = vld [vmem:[#allocation7 + $0x120] sm:$0xff]
    %v222 = vld [vmem:[#allocation7 + $0x128] sm:$0xff]
    %v223 = vld [vmem:[#allocation7 + $0x130] sm:$0xff]
    %v224 = vld [vmem:[#allocation7 + $0x138] sm:$0xff]
    %v225 = vld [vmem:[#allocation7 + $0x140] sm:$0xff]
    %v226 = vld [vmem:[#allocation7 + $0x148] sm:$0xff]
    %v227 = vld [vmem:[#allocation7 + $0x150] sm:$0xff]
    %v228 = vld [vmem:[#allocation7 + $0x158] sm:$0xff]
    %v229 = vld [vmem:[#allocation7 + $0x160] sm:$0xff]
    %v230 = vld [vmem:[#allocation7 + $0x168] sm:$0xff]
    %v231 = vld [vmem:[#allocation7 + $0x170] sm:$0xff]
    %v232 = vld [vmem:[#allocation7 + $0x178] sm:$0xff]
    %v233 = vld [vmem:[#allocation7 + $0x180] sm:$0xff]
    %v234 = vld [vmem:[#allocation7 + $0x188] sm:$0xff]
    %v235 = vld [vmem:[#allocation7 + $0x190] sm:$0xff]
    %v236 = vld [vmem:[#allocation7 + $0x198] sm:$0xff]
    %v237 = vld [vmem:[#allocation7 + $0x1a0] sm:$0xff]
    %v238 = vld [vmem:[#allocation7 + $0x1a8] sm:$0xff]
    %v239 = vld [vmem:[#allocation7 + $0x1b0] sm:$0xff]
    %v240 = vld [vmem:[#allocation7 + $0x1b8] sm:$0xff]
    %v241 = vld [vmem:[#allocation7 + $0x1c0] sm:$0xff]
    %v242 = vld [vmem:[#allocation7 + $0x1c8] sm:$0xff]
    %v243 = vld [vmem:[#allocation7 + $0x1d0] sm:$0xff]
    %v244 = vld [vmem:[#allocation7 + $0x1d8] sm:$0xff]
    %v245 = vld [vmem:[#allocation7 + $0x1e0] sm:$0xff]
    %v246 = vld [vmem:[#allocation7 + $0x1e8] sm:$0xff]
    %v247 = vld [vmem:[#allocation7 + $0x1f0] sm:$0xff]
    %v248 = vld [vmem:[#allocation7 + $0x1f8] sm:$0xff]
    %249 = vmatpush.msra.mxu0 0.0
    %250 = vmatpush.msra.mxu0 0.0
    %251 = vmatpush.msra.mxu0 0.0
    %252 = vmatpush.msra.mxu0 0.0
    %253 = vmatpush.msra.mxu0 0.0
    %254 = vmatpush.msra.mxu0 0.0
    %255 = vmatpush.msra.mxu0 0.0
    %256 = vmatpush.msra.mxu0 0.0
    %257 = vmatpush.msra.mxu0 %v245
    %258 = vmatpush.msra.mxu0 %v241
    %259 = vmatpush.msra.mxu0 %v237
    %260 = vmatpush.msra.mxu0 %v233
    %261 = vmatpush.msra.mxu0 %v229
    %262 = vmatpush.msra.mxu0 %v225
    %263 = vmatpush.msra.mxu0 %v221
    %264 = vmatpush.msra.mxu0 %v217
    %265 = vmatmul.f32.gmra.mxu0 %v112
    %v266 = vpop.f32.mrf.mxu0
    %v267 = vadd.f32 0.0, %v266
    %268 = vmatmul.f32.gmra.mxu0 %v115
    %v269 = vpop.f32.mrf.mxu0
    %v270 = vadd.f32 0.0, %v269
    %271 = vdwg.mxu0
    %272 = vmatpush.msra.mxu0 0.0
    %273 = vmatpush.msra.mxu0 0.0
    %274 = vmatpush.msra.mxu0 0.0
    %275 = vmatpush.msra.mxu0 0.0
    %276 = vmatpush.msra.mxu0 0.0
    %277 = vmatpush.msra.mxu0 0.0
    %278 = vmatpush.msra.mxu0 0.0
    %279 = vmatpush.msra.mxu0 0.0
    %280 = vmatpush.msra.mxu0 %v246
    %281 = vmatpush.msra.mxu0 %v242
    %282 = vmatpush.msra.mxu0 %v238
    %283 = vmatpush.msra.mxu0 %v234
    %284 = vmatpush.msra.mxu0 %v230
    %285 = vmatpush.msra.mxu0 %v226
    %286 = vmatpush.msra.mxu0 %v222
    %287 = vmatpush.msra.mxu0 %v218
    %288 = vmatmul.f32.gmra.mxu0 %v112
    %v289 = vpop.f32.mrf.mxu0
    %v290 = vadd.f32 0.0, %v289
    %291 = vmatmul.f32.gmra.mxu0 %v115
    %v292 = vpop.f32.mrf.mxu0
    %v293 = vadd.f32 0.0, %v292
    %294 = vdwg.mxu0
    %295 = vmatpush.msra.mxu0 0.0
    %296 = vmatpush.msra.mxu0 0.0
    %297 = vmatpush.msra.mxu0 0.0
    %298 = vmatpush.msra.mxu0 0.0
    %299 = vmatpush.msra.mxu0 0.0
    %300 = vmatpush.msra.mxu0 0.0
    %301 = vmatpush.msra.mxu0 0.0
    %302 = vmatpush.msra.mxu0 0.0
    %303 = vmatpush.msra.mxu0 %v247
    %304 = vmatpush.msra.mxu0 %v243
    %305 = vmatpush.msra.mxu0 %v239
    %306 = vmatpush.msra.mxu0 %v235
    %307 = vmatpush.msra.mxu0 %v231
    %308 = vmatpush.msra.mxu0 %v227
    %309 = vmatpush.msra.mxu0 %v223
    %310 = vmatpush.msra.mxu0 %v219
    %311 = vmatmul.f32.gmra.mxu0 %v112
    %v312 = vpop.f32.mrf.mxu0
    %v313 = vadd.f32 0.0, %v312
    %314 = vmatmul.f32.gmra.mxu0 %v115
    %v315 = vpop.f32.mrf.mxu0
    %v316 = vadd.f32 0.0, %v315
    %317 = vdwg.mxu0
    %318 = vmatpush.msra.mxu0 0.0
    %319 = vmatpush.msra.mxu0 0.0
    %320 = vmatpush.msra.mxu0 0.0
    %321 = vmatpush.msra.mxu0 0.0
    %322 = vmatpush.msra.mxu0 0.0
    %323 = vmatpush.msra.mxu0 0.0
    %324 = vmatpush.msra.mxu0 0.0
    %325 = vmatpush.msra.mxu0 0.0
    %326 = vmatpush.msra.mxu0 %v248
    %327 = vmatpush.msra.mxu0 %v244
    %328 = vmatpush.msra.mxu0 %v240
    %329 = vmatpush.msra.mxu0 %v236
    %330 = vmatpush.msra.mxu0 %v232
    %331 = vmatpush.msra.mxu0 %v228
    %332 = vmatpush.msra.mxu0 %v224
    %333 = vmatpush.msra.mxu0 %v220
    %334 = vmatmul.f32.gmra.mxu0 %v112
    %v335 = vpop.f32.mrf.mxu0
    %v336 = vadd.f32 0.0, %v335
    %337 = vmatmul.f32.gmra.mxu0 %v115
    %v338 = vpop.f32.mrf.mxu0
    %v339 = vadd.f32 0.0, %v338
    %340 = vdwg.mxu0
    %341 = vst [vmem:[#allocation5] sm:$0xff] %v267
    %342 = vst [vmem:[#allocation5 + $0x8] sm:$0xff] %v290
    %343 = vst [vmem:[#allocation5 + $0x10] sm:$0xff] %v313
    %344 = vst [vmem:[#allocation5 + $0x18] sm:$0xff] %v336
    %345 = vst [vmem:[#allocation5 + $0x20] sm:$0xff] %v270
    %346 = vst [vmem:[#allocation5 + $0x28] sm:$0xff] %v293
    %347 = vst [vmem:[#allocation5 + $0x30] sm:$0xff] %v316
    %348 = vst [vmem:[#allocation5 + $0x38] sm:$0xff] %v339
    %v349 = vld [vmem:[#allocation7 + $0x200] sm:$0xff]
    %v350 = vld [vmem:[#allocation7 + $0x208] sm:$0xff]
    %v351 = vld [vmem:[#allocation7 + $0x210] sm:$0xff]
    %v352 = vld [vmem:[#allocation7 + $0x218] sm:$0xff]
    %v353 = vld [vmem:[#allocation7 + $0x220] sm:$0xff]
    %v354 = vld [vmem:[#allocation7 + $0x228] sm:$0xff]
    %v355 = vld [vmem:[#allocation7 + $0x230] sm:$0xff]
    %v356 = vld [vmem:[#allocation7 + $0x238] sm:$0xff]
    %v357 = vld [vmem:[#allocation7 + $0x240] sm:$0xff]
    %v358 = vld [vmem:[#allocation7 + $0x248] sm:$0xff]
    %v359 = vld [vmem:[#allocation7 + $0x250] sm:$0xff]
    %v360 = vld [vmem:[#allocation7 + $0x258] sm:$0xff]
    %v361 = vld [vmem:[#allocation7 + $0x260] sm:$0xff]
    %v362 = vld [vmem:[#allocation7 + $0x268] sm:$0xff]
    %v363 = vld [vmem:[#allocation7 + $0x270] sm:$0xff]
    %v364 = vld [vmem:[#allocation7 + $0x278] sm:$0xff]
    %v365 = vld [vmem:[#allocation7 + $0x280] sm:$0xff]
    %v366 = vld [vmem:[#allocation7 + $0x288] sm:$0xff]
    %v367 = vld [vmem:[#allocation7 + $0x290] sm:$0xff]
    %v368 = vld [vmem:[#allocation7 + $0x298] sm:$0xff]
    %v369 = vld [vmem:[#allocation7 + $0x2a0] sm:$0xff]
    %v370 = vld [vmem:[#allocation7 + $0x2a8] sm:$0xff]
    %v371 = vld [vmem:[#allocation7 + $0x2b0] sm:$0xff]
    %v372 = vld [vmem:[#allocation7 + $0x2b8] sm:$0xff]
    %v373 = vld [vmem:[#allocation7 + $0x2c0] sm:$0xff]
    %v374 = vld [vmem:[#allocation7 + $0x2c8] sm:$0xff]
    %v375 = vld [vmem:[#allocation7 + $0x2d0] sm:$0xff]
    %v376 = vld [vmem:[#allocation7 + $0x2d8] sm:$0xff]
    %v377 = vld [vmem:[#allocation7 + $0x2e0] sm:$0xff]
    %v378 = vld [vmem:[#allocation7 + $0x2e8] sm:$0xff]
    %v379 = vld [vmem:[#allocation7 + $0x2f0] sm:$0xff]
    %v380 = vld [vmem:[#allocation7 + $0x2f8] sm:$0xff]
    %v381 = vld [vmem:[#allocation7 + $0x300] sm:$0xff]
    %v382 = vld [vmem:[#allocation7 + $0x308] sm:$0xff]
    %v383 = vld [vmem:[#allocation7 + $0x310] sm:$0xff]
    %v384 = vld [vmem:[#allocation7 + $0x318] sm:$0xff]
    %v385 = vld [vmem:[#allocation7 + $0x320] sm:$0xff]
    %v386 = vld [vmem:[#allocation7 + $0x328] sm:$0xff]
    %v387 = vld [vmem:[#allocation7 + $0x330] sm:$0xff]
    %v388 = vld [vmem:[#allocation7 + $0x338] sm:$0xff]
    %v389 = vld [vmem:[#allocation7 + $0x340] sm:$0xff]
    %v390 = vld [vmem:[#allocation7 + $0x348] sm:$0xff]
    %v391 = vld [vmem:[#allocation7 + $0x350] sm:$0xff]
    %v392 = vld [vmem:[#allocation7 + $0x358] sm:$0xff]
    %v393 = vld [vmem:[#allocation7 + $0x360] sm:$0xff]
    %v394 = vld [vmem:[#allocation7 + $0x368] sm:$0xff]
    %v395 = vld [vmem:[#allocation7 + $0x370] sm:$0xff]
    %v396 = vld [vmem:[#allocation7 + $0x378] sm:$0xff]
    %v397 = vld [vmem:[#allocation7 + $0x380] sm:$0xff]
    %v398 = vld [vmem:[#allocation7 + $0x388] sm:$0xff]
    %v399 = vld [vmem:[#allocation7 + $0x390] sm:$0xff]
    %v400 = vld [vmem:[#allocation7 + $0x398] sm:$0xff]
    %v401 = vld [vmem:[#allocation7 + $0x3a0] sm:$0xff]
    %v402 = vld [vmem:[#allocation7 + $0x3a8] sm:$0xff]
    %v403 = vld [vmem:[#allocation7 + $0x3b0] sm:$0xff]
    %v404 = vld [vmem:[#allocation7 + $0x3b8] sm:$0xff]
    %v405 = vld [vmem:[#allocation7 + $0x3c0] sm:$0xff]
    %v406 = vld [vmem:[#allocation7 + $0x3c8] sm:$0xff]
    %v407 = vld [vmem:[#allocation7 + $0x3d0] sm:$0xff]
    %v408 = vld [vmem:[#allocation7 + $0x3d8] sm:$0xff]
    %v409 = vld [vmem:[#allocation7 + $0x3e0] sm:$0xff]
    %v410 = vld [vmem:[#allocation7 + $0x3e8] sm:$0xff]
    %v411 = vld [vmem:[#allocation7 + $0x3f0] sm:$0xff]
    %v412 = vld [vmem:[#allocation7 + $0x3f8] sm:$0xff]
    %v413 = vld [vmem:[#allocation4] sm:$0x3]
    %v414 = vld [vmem:[#allocation4 + $0x8] sm:$0x3]
    %v415 = vld [vmem:[#allocation4 + $0x10] sm:$0x3]
    %v416 = vld [vmem:[#allocation4 + $0x18] sm:$0x3]
    %v417 = vld [vmem:[#allocation5 + $0x20] sm:$0xc0]
    %v418 = vld [vmem:[#allocation5 + $0x28] sm:$0xc0]
    %v419 = vld [vmem:[#allocation5 + $0x30] sm:$0xc0]
    %v420 = vld [vmem:[#allocation5 + $0x38] sm:$0xc0]
    %v425 = vrot.slane %v417, 6
    %v426 = vrot.slane %v418, 6
    %v427 = vrot.slane %v419, 6
    %v428 = vrot.slane %v420, 6
    %v433 = vadd.f32 %v413, %v425
    %v434 = vadd.f32 %v414, %v426
    %v435 = vadd.f32 %v415, %v427
    %v436 = vadd.f32 %v416, %v428
    %437 = vmatpush.msra.mxu0 %v409
    %438 = vmatpush.msra.mxu0 %v405
    %439 = vmatpush.msra.mxu0 %v401
    %440 = vmatpush.msra.mxu0 %v397
    %441 = vmatpush.msra.mxu0 %v393
    %442 = vmatpush.msra.mxu0 %v389
    %443 = vmatpush.msra.mxu0 %v385
    %444 = vmatpush.msra.mxu0 %v381
    %445 = vmatpush.msra.mxu0 %v377
    %446 = vmatpush.msra.mxu0 %v373
    %447 = vmatpush.msra.mxu0 %v369
    %448 = vmatpush.msra.mxu0 %v365
    %449 = vmatpush.msra.mxu0 %v361
    %450 = vmatpush.msra.mxu0 %v357
    %451 = vmatpush.msra.mxu0 %v353
    %452 = vmatpush.msra.mxu0 %v349
    %453 = vmatmul.f32.gmra.mxu0 0.0
    %v454 = vpop.f32.mrf.mxu0
    %v455 = vadd.f32 0.0, %v454
    %456 = vdwg.mxu0
    %457 = vmatpush.msra.mxu0 %v410
    %458 = vmatpush.msra.mxu0 %v406
    %459 = vmatpush.msra.mxu0 %v402
    %460 = vmatpush.msra.mxu0 %v398
    %461 = vmatpush.msra.mxu0 %v394
    %462 = vmatpush.msra.mxu0 %v390
    %463 = vmatpush.msra.mxu0 %v386
    %464 = vmatpush.msra.mxu0 %v382
    %465 = vmatpush.msra.mxu0 %v378
    %466 = vmatpush.msra.mxu0 %v374
    %467 = vmatpush.msra.mxu0 %v370
    %468 = vmatpush.msra.mxu0 %v366
    %469 = vmatpush.msra.mxu0 %v362
    %470 = vmatpush.msra.mxu0 %v358
    %471 = vmatpush.msra.mxu0 %v354
    %472 = vmatpush.msra.mxu0 %v350
    %473 = vmatmul.f32.gmra.mxu0 0.0
    %v474 = vpop.f32.mrf.mxu0
    %v475 = vadd.f32 0.0, %v474
    %476 = vdwg.mxu0
    %477 = vmatpush.msra.mxu0 %v411
    %478 = vmatpush.msra.mxu0 %v407
    %479 = vmatpush.msra.mxu0 %v403
    %480 = vmatpush.msra.mxu0 %v399
    %481 = vmatpush.msra.mxu0 %v395
    %482 = vmatpush.msra.mxu0 %v391
    %483 = vmatpush.msra.mxu0 %v387
    %484 = vmatpush.msra.mxu0 %v383
    %485 = vmatpush.msra.mxu0 %v379
    %486 = vmatpush.msra.mxu0 %v375
    %487 = vmatpush.msra.mxu0 %v371
    %488 = vmatpush.msra.mxu0 %v367
    %489 = vmatpush.msra.mxu0 %v363
    %490 = vmatpush.msra.mxu0 %v359
    %491 = vmatpush.msra.mxu0 %v355
    %492 = vmatpush.msra.mxu0 %v351
    %493 = vmatmul.f32.gmra.mxu0 0.0
    %v494 = vpop.f32.mrf.mxu0
    %v495 = vadd.f32 0.0, %v494
    %496 = vdwg.mxu0
    %497 = vmatpush.msra.mxu0 %v412
    %498 = vmatpush.msra.mxu0 %v408
    %499 = vmatpush.msra.mxu0 %v404
    %500 = vmatpush.msra.mxu0 %v400
    %501 = vmatpush.msra.mxu0 %v396
    %502 = vmatpush.msra.mxu0 %v392
    %503 = vmatpush.msra.mxu0 %v388
    %504 = vmatpush.msra.mxu0 %v384
    %505 = vmatpush.msra.mxu0 %v380
    %506 = vmatpush.msra.mxu0 %v376
    %507 = vmatpush.msra.mxu0 %v372
    %508 = vmatpush.msra.mxu0 %v368
    %509 = vmatpush.msra.mxu0 %v364
    %510 = vmatpush.msra.mxu0 %v360
    %511 = vmatpush.msra.mxu0 %v356
    %512 = vmatpush.msra.mxu0 %v352
    %513 = vmatmul.f32.gmra.mxu0 0.0
    %v514 = vpop.f32.mrf.mxu0
    %v515 = vadd.f32 0.0, %v514
    %516 = vdwg.mxu0
    %v517 = vadd.f32 %v433, %v455
    %v518 = vadd.f32 %v434, %v475
    %v519 = vadd.f32 %v435, %v495
    %v520 = vadd.f32 %v436, %v515
    %v521 = vxor.u32 %v517, 2147483648
    %v522 = vxor.u32 %v518, 2147483648
    %v523 = vxor.u32 %v519, 2147483648
    %v524 = vmul.f32 %v521, 1.442695
    %v525 = vpow.pop %v524
    %v526 = vmul.f32 %v522, 1.442695
    %v527 = vpow.pop %v526
    %v528 = vmul.f32 %v523, 1.442695
    %v529 = vpow.pop %v528
    %v530 = vadd.f32 %v525, 1.0
    %v531 = vadd.f32 %v527, 1.0
    %v532 = vadd.f32 %v529, 1.0
    %v533 = vrcp.pop %v530
    %v534 = vmul.f32 %v530, %v533
    %v535 = vsub.f32 1.0, %v534
    %v536 = vmul.f32 %v533, %v535
    %v537 = vadd.f32 %v533, %v536
    %vm538 = vweird.f32 %v530
    %vm539 = vweird.f32 %v533
    %vm540 = vmor %vm538, %vm539
    %v541 = vsel %vm540, %v533, %v537
    %v542 = vand.u32 2147483647, %v530
    %vm543 = vcmp.eq.f32.partialorder %v542, 8.507059e+37
    %v544 = vand.u32 %v530, 2147483648
    %v545 = vor.u32 1.1754944e-38, %v544
    %v546 = vsel %vm543, %v545, %v541
    %v547 = vmul.f32 1.0, %v546
    %v548 = vrcp.pop %v531
    %v549 = vmul.f32 %v531, %v548
    %v550 = vsub.f32 1.0, %v549
    %v551 = vmul.f32 %v548, %v550
    %v552 = vadd.f32 %v548, %v551
    %vm553 = vweird.f32 %v531
    %vm554 = vweird.f32 %v548
    %vm555 = vmor %vm553, %vm554
    %v556 = vsel %vm555, %v548, %v552
    %v557 = vand.u32 2147483647, %v531
    %vm558 = vcmp.eq.f32.partialorder %v557, 8.507059e+37
    %v559 = vand.u32 %v531, 2147483648
    %v560 = vor.u32 1.1754944e-38, %v559
    %v561 = vsel %vm558, %v560, %v556
    %v562 = vmul.f32 1.0, %v561
    %v563 = vrcp.pop %v532
    %v564 = vmul.f32 %v532, %v563
    %v565 = vsub.f32 1.0, %v564
    %v566 = vmul.f32 %v563, %v565
    %v567 = vadd.f32 %v563, %v566
    %vm568 = vweird.f32 %v532
    %vm569 = vweird.f32 %v563
    %vm570 = vmor %vm568, %vm569
    %v571 = vsel %vm570, %v563, %v567
    %v572 = vand.u32 2147483647, %v532
    %vm573 = vcmp.eq.f32.partialorder %v572, 8.507059e+37
    %v574 = vand.u32 %v532, 2147483648
    %v575 = vor.u32 1.1754944e-38, %v574
    %v576 = vsel %vm573, %v575, %v571
    %v577 = vmul.f32 1.0, %v576
    %v578 = vtanh.pop %v520
    %v579 = vmul.f32 %v562, 0.0
    %v580 = vmul.f32 %v547, %v578
    %v581 = vadd.f32 %v579, %v580
    %v582 = vtanh.pop %v581
    %v583 = vmul.f32 %v577, %v582
    %584 = vst [vmem:[#allocation2] sm:$0x3] %v583
    %v585 = vld [vmem:[#allocation4] sm:$0xc]
    %v586 = vld [vmem:[#allocation4 + $0x8] sm:$0xc]
    %v587 = vld [vmem:[#allocation4 + $0x10] sm:$0xc]
    %v588 = vld [vmem:[#allocation4 + $0x18] sm:$0xc]
    %v589 = vld [vmem:[#allocation5 + $0x20] sm:$0x30]
    %v590 = vld [vmem:[#allocation5 + $0x28] sm:$0x30]
    %v591 = vld [vmem:[#allocation5 + $0x30] sm:$0x30]
    %v592 = vld [vmem:[#allocation5 + $0x38] sm:$0x30]
    %v597 = vrot.slane %v589, 2
    %v598 = vrot.slane %v590, 2
    %v599 = vrot.slane %v591, 2
    %v600 = vrot.slane %v592, 2
    %v605 = vadd.f32 %v585, %v597
    %v606 = vadd.f32 %v586, %v598
    %v607 = vadd.f32 %v587, %v599
    %v608 = vadd.f32 %v588, %v600
    %609 = vmatpush.msra.mxu0 %v409
    %610 = vmatpush.msra.mxu0 %v405
    %611 = vmatpush.msra.mxu0 %v401
    %612 = vmatpush.msra.mxu0 %v397
    %613 = vmatpush.msra.mxu0 %v393
    %614 = vmatpush.msra.mxu0 %v389
    %615 = vmatpush.msra.mxu0 %v385
    %616 = vmatpush.msra.mxu0 %v381
    %617 = vmatpush.msra.mxu0 %v377
    %618 = vmatpush.msra.mxu0 %v373
    %619 = vmatpush.msra.mxu0 %v369
    %620 = vmatpush.msra.mxu0 %v365
    %621 = vmatpush.msra.mxu0 %v361
    %622 = vmatpush.msra.mxu0 %v357
    %623 = vmatpush.msra.mxu0 %v353
    %624 = vmatpush.msra.mxu0 %v349
    %625 = vmatmul.f32.gmra.mxu0 %v583
    %v626 = vpop.f32.mrf.mxu0
    %v627 = vadd.f32 0.0, %v626
    %628 = vdwg.mxu0
    %629 = vmatpush.msra.mxu0 %v410
    %630 = vmatpush.msra.mxu0 %v406
    %631 = vmatpush.msra.mxu0 %v402
    %632 = vmatpush.msra.mxu0 %v398
    %633 = vmatpush.msra.mxu0 %v394
    %634 = vmatpush.msra.mxu0 %v390
    %635 = vmatpush.msra.mxu0 %v386
    %636 = vmatpush.msra.mxu0 %v382
    %637 = vmatpush.msra.mxu0 %v378
    %638 = vmatpush.msra.mxu0 %v374
    %639 = vmatpush.msra.mxu0 %v370
    %640 = vmatpush.msra.mxu0 %v366
    %641 = vmatpush.msra.mxu0 %v362
    %642 = vmatpush.msra.mxu0 %v358
    %643 = vmatpush.msra.mxu0 %v354
    %644 = vmatpush.msra.mxu0 %v350
    %645 = vmatmul.f32.gmra.mxu0 %v583
    %v646 = vpop.f32.mrf.mxu0
    %v647 = vadd.f32 0.0, %v646
    %648 = vdwg.mxu0
    %649 = vmatpush.msra.mxu0 %v411
    %650 = vmatpush.msra.mxu0 %v407
    %651 = vmatpush.msra.mxu0 %v403
    %652 = vmatpush.msra.mxu0 %v399
    %653 = vmatpush.msra.mxu0 %v395
    %654 = vmatpush.msra.mxu0 %v391
    %655 = vmatpush.msra.mxu0 %v387
    %656 = vmatpush.msra.mxu0 %v383
    %657 = vmatpush.msra.mxu0 %v379
    %658 = vmatpush.msra.mxu0 %v375
    %659 = vmatpush.msra.mxu0 %v371
    %660 = vmatpush.msra.mxu0 %v367
    %661 = vmatpush.msra.mxu0 %v363
    %662 = vmatpush.msra.mxu0 %v359
    %663 = vmatpush.msra.mxu0 %v355
    %664 = vmatpush.msra.mxu0 %v351
    %665 = vmatmul.f32.gmra.mxu0 %v583
    %v666 = vpop.f32.mrf.mxu0
    %v667 = vadd.f32 0.0, %v666
    %668 = vdwg.mxu0
    %669 = vmatpush.msra.mxu0 %v412
    %670 = vmatpush.msra.mxu0 %v408
    %671 = vmatpush.msra.mxu0 %v404
    %672 = vmatpush.msra.mxu0 %v400
    %673 = vmatpush.msra.mxu0 %v396
    %674 = vmatpush.msra.mxu0 %v392
    %675 = vmatpush.msra.mxu0 %v388
    %676 = vmatpush.msra.mxu0 %v384
    %677 = vmatpush.msra.mxu0 %v380
    %678 = vmatpush.msra.mxu0 %v376
    %679 = vmatpush.msra.mxu0 %v372
    %680 = vmatpush.msra.mxu0 %v368
    %681 = vmatpush.msra.mxu0 %v364
    %682 = vmatpush.msra.mxu0 %v360
    %683 = vmatpush.msra.mxu0 %v356
    %684 = vmatpush.msra.mxu0 %v352
    %685 = vmatmul.f32.gmra.mxu0 %v583
    %v686 = vpop.f32.mrf.mxu0
    %v687 = vadd.f32 0.0, %v686
    %688 = vdwg.mxu0
    %v693 = vrot.slane %v627, 6
    %v694 = vrot.slane %v647, 6
    %v695 = vrot.slane %v667, 6
    %v696 = vrot.slane %v687, 6
    %v701 = vadd.f32 %v605, %v693
    %v702 = vadd.f32 %v606, %v694
    %v703 = vadd.f32 %v607, %v695
    %v704 = vadd.f32 %v608, %v696
    %v705 = vxor.u32 %v701, 2147483648
    %v706 = vxor.u32 %v702, 2147483648
    %v707 = vxor.u32 %v703, 2147483648
    %v708 = vmul.f32 %v705, 1.442695
    %v709 = vpow.pop %v708
    %v710 = vmul.f32 %v706, 1.442695
    %v711 = vpow.pop %v710
    %v712 = vmul.f32 %v707, 1.442695
    %v713 = vpow.pop %v712
    %v714 = vadd.f32 %v709, 1.0
    %v715 = vadd.f32 %v711, 1.0
    %v716 = vadd.f32 %v713, 1.0
    %v717 = vrcp.pop %v714
    %v718 = vmul.f32 %v714, %v717
    %v719 = vsub.f32 1.0, %v718
    %v720 = vmul.f32 %v717, %v719
    %v721 = vadd.f32 %v717, %v720
    %vm722 = vweird.f32 %v714
    %vm723 = vweird.f32 %v717
    %vm724 = vmor %vm722, %vm723
    %v725 = vsel %vm724, %v717, %v721
    %v726 = vand.u32 2147483647, %v714
    %vm727 = vcmp.eq.f32.partialorder %v726, 8.507059e+37
    %v728 = vand.u32 %v714, 2147483648
    %v729 = vor.u32 1.1754944e-38, %v728
    %v730 = vsel %vm727, %v729, %v725
    %v731 = vmul.f32 1.0, %v730
    %v732 = vrcp.pop %v715
    %v733 = vmul.f32 %v715, %v732
    %v734 = vsub.f32 1.0, %v733
    %v735 = vmul.f32 %v732, %v734
    %v736 = vadd.f32 %v732, %v735
    %vm737 = vweird.f32 %v715
    %vm738 = vweird.f32 %v732
    %vm739 = vmor %vm737, %vm738
    %v740 = vsel %vm739, %v732, %v736
    %v741 = vand.u32 2147483647, %v715
    %vm742 = vcmp.eq.f32.partialorder %v741, 8.507059e+37
    %v743 = vand.u32 %v715, 2147483648
    %v744 = vor.u32 1.1754944e-38, %v743
    %v745 = vsel %vm742, %v744, %v740
    %v746 = vmul.f32 1.0, %v745
    %v747 = vrcp.pop %v716
    %v748 = vmul.f32 %v716, %v747
    %v749 = vsub.f32 1.0, %v748
    %v750 = vmul.f32 %v747, %v749
    %v751 = vadd.f32 %v747, %v750
    %vm752 = vweird.f32 %v716
    %vm753 = vweird.f32 %v747
    %vm754 = vmor %vm752, %vm753
    %v755 = vsel %vm754, %v747, %v751
    %v756 = vand.u32 2147483647, %v716
    %vm757 = vcmp.eq.f32.partialorder %v756, 8.507059e+37
    %v758 = vand.u32 %v716, 2147483648
    %v759 = vor.u32 1.1754944e-38, %v758
    %v760 = vsel %vm757, %v759, %v755
    %v761 = vmul.f32 1.0, %v760
    %v762 = vtanh.pop %v704
    %v764 = vrot.slane %v581, 6
    %v766 = vmul.f32 %v746, %v764
    %v767 = vmul.f32 %v731, %v762
    %v768 = vadd.f32 %v766, %v767
    %v769 = vtanh.pop %v768
    %v770 = vmul.f32 %v761, %v769
    %771 = vst [vmem:[#allocation2] sm:$0xc] %v770
    %v772 = vld [vmem:[#allocation4] sm:$0x30]
    %v773 = vld [vmem:[#allocation4 + $0x8] sm:$0x30]
    %v774 = vld [vmem:[#allocation4 + $0x10] sm:$0x30]
    %v775 = vld [vmem:[#allocation4 + $0x18] sm:$0x30]
    %v776 = vld [vmem:[#allocation5 + $0x20] sm:$0xc]
    %v777 = vld [vmem:[#allocation5 + $0x28] sm:$0xc]
    %v778 = vld [vmem:[#allocation5 + $0x30] sm:$0xc]
    %v779 = vld [vmem:[#allocation5 + $0x38] sm:$0xc]
    %v784 = vrot.slane %v776, 6
    %v785 = vrot.slane %v777, 6
    %v786 = vrot.slane %v778, 6
    %v787 = vrot.slane %v779, 6
    %v792 = vadd.f32 %v772, %v784
    %v793 = vadd.f32 %v773, %v785
    %v794 = vadd.f32 %v774, %v786
    %v795 = vadd.f32 %v775, %v787
    %v797 = vrot.slane %v770, 2
    %799 = vmatpush.msra.mxu0 %v409
    %800 = vmatpush.msra.mxu0 %v405
    %801 = vmatpush.msra.mxu0 %v401
    %802 = vmatpush.msra.mxu0 %v397
    %803 = vmatpush.msra.mxu0 %v393
    %804 = vmatpush.msra.mxu0 %v389
    %805 = vmatpush.msra.mxu0 %v385
    %806 = vmatpush.msra.mxu0 %v381
    %807 = vmatpush.msra.mxu0 %v377
    %808 = vmatpush.msra.mxu0 %v373
    %809 = vmatpush.msra.mxu0 %v369
    %810 = vmatpush.msra.mxu0 %v365
    %811 = vmatpush.msra.mxu0 %v361
    %812 = vmatpush.msra.mxu0 %v357
    %813 = vmatpush.msra.mxu0 %v353
    %814 = vmatpush.msra.mxu0 %v349
    %815 = vmatmul.f32.gmra.mxu0 %v797
    %v816 = vpop.f32.mrf.mxu0
    %v817 = vadd.f32 0.0, %v816
    %818 = vdwg.mxu0
    %819 = vmatpush.msra.mxu0 %v410
    %820 = vmatpush.msra.mxu0 %v406
    %821 = vmatpush.msra.mxu0 %v402
    %822 = vmatpush.msra.mxu0 %v398
    %823 = vmatpush.msra.mxu0 %v394
    %824 = vmatpush.msra.mxu0 %v390
    %825 = vmatpush.msra.mxu0 %v386
    %826 = vmatpush.msra.mxu0 %v382
    %827 = vmatpush.msra.mxu0 %v378
    %828 = vmatpush.msra.mxu0 %v374
    %829 = vmatpush.msra.mxu0 %v370
    %830 = vmatpush.msra.mxu0 %v366
    %831 = vmatpush.msra.mxu0 %v362
    %832 = vmatpush.msra.mxu0 %v358
    %833 = vmatpush.msra.mxu0 %v354
    %834 = vmatpush.msra.mxu0 %v350
    %835 = vmatmul.f32.gmra.mxu0 %v797
    %v836 = vpop.f32.mrf.mxu0
    %v837 = vadd.f32 0.0, %v836
    %838 = vdwg.mxu0
    %839 = vmatpush.msra.mxu0 %v411
    %840 = vmatpush.msra.mxu0 %v407
    %841 = vmatpush.msra.mxu0 %v403
    %842 = vmatpush.msra.mxu0 %v399
    %843 = vmatpush.msra.mxu0 %v395
    %844 = vmatpush.msra.mxu0 %v391
    %845 = vmatpush.msra.mxu0 %v387
    %846 = vmatpush.msra.mxu0 %v383
    %847 = vmatpush.msra.mxu0 %v379
    %848 = vmatpush.msra.mxu0 %v375
    %849 = vmatpush.msra.mxu0 %v371
    %850 = vmatpush.msra.mxu0 %v367
    %851 = vmatpush.msra.mxu0 %v363
    %852 = vmatpush.msra.mxu0 %v359
    %853 = vmatpush.msra.mxu0 %v355
    %854 = vmatpush.msra.mxu0 %v351
    %855 = vmatmul.f32.gmra.mxu0 %v797
    %v856 = vpop.f32.mrf.mxu0
    %v857 = vadd.f32 0.0, %v856
    %858 = vdwg.mxu0
    %859 = vmatpush.msra.mxu0 %v412
    %860 = vmatpush.msra.mxu0 %v408
    %861 = vmatpush.msra.mxu0 %v404
    %862 = vmatpush.msra.mxu0 %v400
    %863 = vmatpush.msra.mxu0 %v396
    %864 = vmatpush.msra.mxu0 %v392
    %865 = vmatpush.msra.mxu0 %v388
    %866 = vmatpush.msra.mxu0 %v384
    %867 = vmatpush.msra.mxu0 %v380
    %868 = vmatpush.msra.mxu0 %v376
    %869 = vmatpush.msra.mxu0 %v372
    %870 = vmatpush.msra.mxu0 %v368
    %871 = vmatpush.msra.mxu0 %v364
    %872 = vmatpush.msra.mxu0 %v360
    %873 = vmatpush.msra.mxu0 %v356
    %874 = vmatpush.msra.mxu0 %v352
    %875 = vmatmul.f32.gmra.mxu0 %v797
    %v876 = vpop.f32.mrf.mxu0
    %v877 = vadd.f32 0.0, %v876
    %878 = vdwg.mxu0
    %v883 = vrot.slane %v817, 4
    %v884 = vrot.slane %v837, 4
    %v885 = vrot.slane %v857, 4
    %v886 = vrot.slane %v877, 4
    %v891 = vadd.f32 %v792, %v883
    %v892 = vadd.f32 %v793, %v884
    %v893 = vadd.f32 %v794, %v885
    %v894 = vadd.f32 %v795, %v886
    %v895 = vxor.u32 %v891, 2147483648
    %v896 = vxor.u32 %v892, 2147483648
    %v897 = vxor.u32 %v893, 2147483648
    %v898 = vmul.f32 %v895, 1.442695
    %v899 = vpow.pop %v898
    %v900 = vmul.f32 %v896, 1.442695
    %v901 = vpow.pop %v900
    %v902 = vmul.f32 %v897, 1.442695
    %v903 = vpow.pop %v902
    %v904 = vadd.f32 %v899, 1.0
    %v905 = vadd.f32 %v901, 1.0
    %v906 = vadd.f32 %v903, 1.0
    %v907 = vrcp.pop %v904
    %v908 = vmul.f32 %v904, %v907
    %v909 = vsub.f32 1.0, %v908
    %v910 = vmul.f32 %v907, %v909
    %v911 = vadd.f32 %v907, %v910
    %vm912 = vweird.f32 %v904
    %vm913 = vweird.f32 %v907
    %vm914 = vmor %vm912, %vm913
    %v915 = vsel %vm914, %v907, %v911
    %v916 = vand.u32 2147483647, %v904
    %vm917 = vcmp.eq.f32.partialorder %v916, 8.507059e+37
    %v918 = vand.u32 %v904, 2147483648
    %v919 = vor.u32 1.1754944e-38, %v918
    %v920 = vsel %vm917, %v919, %v915
    %v921 = vmul.f32 1.0, %v920
    %v922 = vrcp.pop %v905
    %v923 = vmul.f32 %v905, %v922
    %v924 = vsub.f32 1.0, %v923
    %v925 = vmul.f32 %v922, %v924
    %v926 = vadd.f32 %v922, %v925
    %vm927 = vweird.f32 %v905
    %vm928 = vweird.f32 %v922
    %vm929 = vmor %vm927, %vm928
    %v930 = vsel %vm929, %v922, %v926
    %v931 = vand.u32 2147483647, %v905
    %vm932 = vcmp.eq.f32.partialorder %v931, 8.507059e+37
    %v933 = vand.u32 %v905, 2147483648
    %v934 = vor.u32 1.1754944e-38, %v933
    %v935 = vsel %vm932, %v934, %v930
    %v936 = vmul.f32 1.0, %v935
    %v937 = vrcp.pop %v906
    %v938 = vmul.f32 %v906, %v937
    %v939 = vsub.f32 1.0, %v938
    %v940 = vmul.f32 %v937, %v939
    %v941 = vadd.f32 %v937, %v940
    %vm942 = vweird.f32 %v906
    %vm943 = vweird.f32 %v937
    %vm944 = vmor %vm942, %vm943
    %v945 = vsel %vm944, %v937, %v941
    %v946 = vand.u32 2147483647, %v906
    %vm947 = vcmp.eq.f32.partialorder %v946, 8.507059e+37
    %v948 = vand.u32 %v906, 2147483648
    %v949 = vor.u32 1.1754944e-38, %v948
    %v950 = vsel %vm947, %v949, %v945
    %v951 = vmul.f32 1.0, %v950
    %v952 = vtanh.pop %v894
    %v954 = vrot.slane %v768, 6
    %v956 = vmul.f32 %v936, %v954
    %v957 = vmul.f32 %v921, %v952
    %v958 = vadd.f32 %v956, %v957
    %v959 = vtanh.pop %v958
    %v960 = vmul.f32 %v951, %v959
    %961 = vst [vmem:[#allocation2] sm:$0x30] %v960
    %v962 = vld [vmem:[#allocation4] sm:$0xc0]
    %v963 = vld [vmem:[#allocation4 + $0x8] sm:$0xc0]
    %v964 = vld [vmem:[#allocation4 + $0x10] sm:$0xc0]
    %v965 = vld [vmem:[#allocation4 + $0x18] sm:$0xc0]
    %v966 = vld [vmem:[#allocation5 + $0x20] sm:$0x3]
    %v967 = vld [vmem:[#allocation5 + $0x28] sm:$0x3]
    %v968 = vld [vmem:[#allocation5 + $0x30] sm:$0x3]
    %v969 = vld [vmem:[#allocation5 + $0x38] sm:$0x3]
    %v974 = vrot.slane %v966, 2
    %v975 = vrot.slane %v967, 2
    %v976 = vrot.slane %v968, 2
    %v977 = vrot.slane %v969, 2
    %v982 = vadd.f32 %v962, %v974
    %v983 = vadd.f32 %v963, %v975
    %v984 = vadd.f32 %v964, %v976
    %v985 = vadd.f32 %v965, %v977
    %v987 = vrot.slane %v960, 4
    %989 = vmatpush.msra.mxu0 %v409
    %990 = vmatpush.msra.mxu0 %v405
    %991 = vmatpush.msra.mxu0 %v401
    %992 = vmatpush.msra.mxu0 %v397
    %993 = vmatpush.msra.mxu0 %v393
    %994 = vmatpush.msra.mxu0 %v389
    %995 = vmatpush.msra.mxu0 %v385
    %996 = vmatpush.msra.mxu0 %v381
    %997 = vmatpush.msra.mxu0 %v377
    %998 = vmatpush.msra.mxu0 %v373
    %999 = vmatpush.msra.mxu0 %v369
    %1000 = vmatpush.msra.mxu0 %v365
    %1001 = vmatpush.msra.mxu0 %v361
    %1002 = vmatpush.msra.mxu0 %v357
    %1003 = vmatpush.msra.mxu0 %v353
    %1004 = vmatpush.msra.mxu0 %v349
    %1005 = vmatmul.f32.gmra.mxu0 %v987
    %v1006 = vpop.f32.mrf.mxu0
    %v1007 = vadd.f32 0.0, %v1006
    %1008 = vdwg.mxu0
    %1009 = vmatpush.msra.mxu0 %v410
    %1010 = vmatpush.msra.mxu0 %v406
    %1011 = vmatpush.msra.mxu0 %v402
    %1012 = vmatpush.msra.mxu0 %v398
    %1013 = vmatpush.msra.mxu0 %v394
    %1014 = vmatpush.msra.mxu0 %v390
    %1015 = vmatpush.msra.mxu0 %v386
    %1016 = vmatpush.msra.mxu0 %v382
    %1017 = vmatpush.msra.mxu0 %v378
    %1018 = vmatpush.msra.mxu0 %v374
    %1019 = vmatpush.msra.mxu0 %v370
    %1020 = vmatpush.msra.mxu0 %v366
    %1021 = vmatpush.msra.mxu0 %v362
    %1022 = vmatpush.msra.mxu0 %v358
    %1023 = vmatpush.msra.mxu0 %v354
    %1024 = vmatpush.msra.mxu0 %v350
    %1025 = vmatmul.f32.gmra.mxu0 %v987
    %v1026 = vpop.f32.mrf.mxu0
    %v1027 = vadd.f32 0.0, %v1026
    %1028 = vdwg.mxu0
    %1029 = vmatpush.msra.mxu0 %v411
    %1030 = vmatpush.msra.mxu0 %v407
    %1031 = vmatpush.msra.mxu0 %v403
    %1032 = vmatpush.msra.mxu0 %v399
    %1033 = vmatpush.msra.mxu0 %v395
    %1034 = vmatpush.msra.mxu0 %v391
    %1035 = vmatpush.msra.mxu0 %v387
    %1036 = vmatpush.msra.mxu0 %v383
    %1037 = vmatpush.msra.mxu0 %v379
    %1038 = vmatpush.msra.mxu0 %v375
    %1039 = vmatpush.msra.mxu0 %v371
    %1040 = vmatpush.msra.mxu0 %v367
    %1041 = vmatpush.msra.mxu0 %v363
    %1042 = vmatpush.msra.mxu0 %v359
    %1043 = vmatpush.msra.mxu0 %v355
    %1044 = vmatpush.msra.mxu0 %v351
    %1045 = vmatmul.f32.gmra.mxu0 %v987
    %v1046 = vpop.f32.mrf.mxu0
    %v1047 = vadd.f32 0.0, %v1046
    %1048 = vdwg.mxu0
    %1049 = vmatpush.msra.mxu0 %v412
    %1050 = vmatpush.msra.mxu0 %v408
    %1051 = vmatpush.msra.mxu0 %v404
    %1052 = vmatpush.msra.mxu0 %v400
    %1053 = vmatpush.msra.mxu0 %v396
    %1054 = vmatpush.msra.mxu0 %v392
    %1055 = vmatpush.msra.mxu0 %v388
    %1056 = vmatpush.msra.mxu0 %v384
    %1057 = vmatpush.msra.mxu0 %v380
    %1058 = vmatpush.msra.mxu0 %v376
    %1059 = vmatpush.msra.mxu0 %v372
    %1060 = vmatpush.msra.mxu0 %v368
    %1061 = vmatpush.msra.mxu0 %v364
    %1062 = vmatpush.msra.mxu0 %v360
    %1063 = vmatpush.msra.mxu0 %v356
    %1064 = vmatpush.msra.mxu0 %v352
    %1065 = vmatmul.f32.gmra.mxu0 %v987
    %v1066 = vpop.f32.mrf.mxu0
    %v1067 = vadd.f32 0.0, %v1066
    %1068 = vdwg.mxu0
    %v1073 = vrot.slane %v1007, 2
    %v1074 = vrot.slane %v1027, 2
    %v1075 = vrot.slane %v1047, 2
    %v1076 = vrot.slane %v1067, 2
    %v1081 = vadd.f32 %v982, %v1073
    %v1082 = vadd.f32 %v983, %v1074
    %v1083 = vadd.f32 %v984, %v1075
    %v1084 = vadd.f32 %v985, %v1076
    %v1085 = vxor.u32 %v1081, 2147483648
    %v1086 = vxor.u32 %v1082, 2147483648
    %v1087 = vxor.u32 %v1083, 2147483648
    %v1088 = vmul.f32 %v1085, 1.442695
    %v1089 = vpow.pop %v1088
    %v1090 = vmul.f32 %v1086, 1.442695
    %v1091 = vpow.pop %v1090
    %v1092 = vmul.f32 %v1087, 1.442695
    %v1093 = vpow.pop %v1092
    %v1094 = vadd.f32 %v1089, 1.0
    %v1095 = vadd.f32 %v1091, 1.0
    %v1096 = vadd.f32 %v1093, 1.0
    %v1097 = vrcp.pop %v1094
    %v1098 = vmul.f32 %v1094, %v1097
    %v1099 = vsub.f32 1.0, %v1098
    %v1100 = vmul.f32 %v1097, %v1099
    %v1101 = vadd.f32 %v1097, %v1100
    %vm1102 = vweird.f32 %v1094
    %vm1103 = vweird.f32 %v1097
    %vm1104 = vmor %vm1102, %vm1103
    %v1105 = vsel %vm1104, %v1097, %v1101
    %v1106 = vand.u32 2147483647, %v1094
    %vm1107 = vcmp.eq.f32.partialorder %v1106, 8.507059e+37
    %v1108 = vand.u32 %v1094, 2147483648
    %v1109 = vor.u32 1.1754944e-38, %v1108
    %v1110 = vsel %vm1107, %v1109, %v1105
    %v1111 = vmul.f32 1.0, %v1110
    %v1112 = vrcp.pop %v1095
    %v1113 = vmul.f32 %v1095, %v1112
    %v1114 = vsub.f32 1.0, %v1113
    %v1115 = vmul.f32 %v1112, %v1114
    %v1116 = vadd.f32 %v1112, %v1115
    %vm1117 = vweird.f32 %v1095
    %vm1118 = vweird.f32 %v1112
    %vm1119 = vmor %vm1117, %vm1118
    %v1120 = vsel %vm1119, %v1112, %v1116
    %v1121 = vand.u32 2147483647, %v1095
    %vm1122 = vcmp.eq.f32.partialorder %v1121, 8.507059e+37
    %v1123 = vand.u32 %v1095, 2147483648
    %v1124 = vor.u32 1.1754944e-38, %v1123
    %v1125 = vsel %vm1122, %v1124, %v1120
    %v1126 = vmul.f32 1.0, %v1125
    %v1127 = vrcp.pop %v1096
    %v1128 = vmul.f32 %v1096, %v1127
    %v1129 = vsub.f32 1.0, %v1128
    %v1130 = vmul.f32 %v1127, %v1129
    %v1131 = vadd.f32 %v1127, %v1130
    %vm1132 = vweird.f32 %v1096
    %vm1133 = vweird.f32 %v1127
    %vm1134 = vmor %vm1132, %vm1133
    %v1135 = vsel %vm1134, %v1127, %v1131
    %v1136 = vand.u32 2147483647, %v1096
    %vm1137 = vcmp.eq.f32.partialorder %v1136, 8.507059e+37
    %v1138 = vand.u32 %v1096, 2147483648
    %v1139 = vor.u32 1.1754944e-38, %v1138
    %v1140 = vsel %vm1137, %v1139, %v1135
    %v1141 = vmul.f32 1.0, %v1140
    %v1142 = vtanh.pop %v1084
    %v1144 = vrot.slane %v958, 6
    %v1146 = vmul.f32 %v1126, %v1144
    %v1147 = vmul.f32 %v1111, %v1142
    %v1148 = vadd.f32 %v1146, %v1147
    %v1149 = vtanh.pop %v1148
    %v1150 = vmul.f32 %v1141, %v1149
    %1151 = vst [vmem:[#allocation2] sm:$0xc0] %v1150
    %v1152 = vld [vmem:[#allocation4 + $0x20] sm:$0x3]
    %v1153 = vld [vmem:[#allocation4 + $0x28] sm:$0x3]
    %v1154 = vld [vmem:[#allocation4 + $0x30] sm:$0x3]
    %v1155 = vld [vmem:[#allocation4 + $0x38] sm:$0x3]
    %v1156 = vld [vmem:[#allocation5] sm:$0xc0]
    %v1157 = vld [vmem:[#allocation5 + $0x8] sm:$0xc0]
    %v1158 = vld [vmem:[#allocation5 + $0x10] sm:$0xc0]
    %v1159 = vld [vmem:[#allocation5 + $0x18] sm:$0xc0]
    %v1164 = vrot.slane %v1156, 6
    %v1165 = vrot.slane %v1157, 6
    %v1166 = vrot.slane %v1158, 6
    %v1167 = vrot.slane %v1159, 6
    %v1172 = vadd.f32 %v1152, %v1164
    %v1173 = vadd.f32 %v1153, %v1165
    %v1174 = vadd.f32 %v1154, %v1166
    %v1175 = vadd.f32 %v1155, %v1167
    %v1177 = vrot.slane %v1150, 6
    %1179 = vmatpush.msra.mxu0 %v409
    %1180 = vmatpush.msra.mxu0 %v405
    %1181 = vmatpush.msra.mxu0 %v401
    %1182 = vmatpush.msra.mxu0 %v397
    %1183 = vmatpush.msra.mxu0 %v393
    %1184 = vmatpush.msra.mxu0 %v389
    %1185 = vmatpush.msra.mxu0 %v385
    %1186 = vmatpush.msra.mxu0 %v381
    %1187 = vmatpush.msra.mxu0 %v377
    %1188 = vmatpush.msra.mxu0 %v373
    %1189 = vmatpush.msra.mxu0 %v369
    %1190 = vmatpush.msra.mxu0 %v365
    %1191 = vmatpush.msra.mxu0 %v361
    %1192 = vmatpush.msra.mxu0 %v357
    %1193 = vmatpush.msra.mxu0 %v353
    %1194 = vmatpush.msra.mxu0 %v349
    %1195 = vmatmul.f32.gmra.mxu0 %v1177
    %v1196 = vpop.f32.mrf.mxu0
    %v1197 = vadd.f32 0.0, %v1196
    %1198 = vdwg.mxu0
    %1199 = vmatpush.msra.mxu0 %v410
    %1200 = vmatpush.msra.mxu0 %v406
    %1201 = vmatpush.msra.mxu0 %v402
    %1202 = vmatpush.msra.mxu0 %v398
    %1203 = vmatpush.msra.mxu0 %v394
    %1204 = vmatpush.msra.mxu0 %v390
    %1205 = vmatpush.msra.mxu0 %v386
    %1206 = vmatpush.msra.mxu0 %v382
    %1207 = vmatpush.msra.mxu0 %v378
    %1208 = vmatpush.msra.mxu0 %v374
    %1209 = vmatpush.msra.mxu0 %v370
    %1210 = vmatpush.msra.mxu0 %v366
    %1211 = vmatpush.msra.mxu0 %v362
    %1212 = vmatpush.msra.mxu0 %v358
    %1213 = vmatpush.msra.mxu0 %v354
    %1214 = vmatpush.msra.mxu0 %v350
    %1215 = vmatmul.f32.gmra.mxu0 %v1177
    %v1216 = vpop.f32.mrf.mxu0
    %v1217 = vadd.f32 0.0, %v1216
    %1218 = vdwg.mxu0
    %1219 = vmatpush.msra.mxu0 %v411
    %1220 = vmatpush.msra.mxu0 %v407
    %1221 = vmatpush.msra.mxu0 %v403
    %1222 = vmatpush.msra.mxu0 %v399
    %1223 = vmatpush.msra.mxu0 %v395
    %1224 = vmatpush.msra.mxu0 %v391
    %1225 = vmatpush.msra.mxu0 %v387
    %1226 = vmatpush.msra.mxu0 %v383
    %1227 = vmatpush.msra.mxu0 %v379
    %1228 = vmatpush.msra.mxu0 %v375
    %1229 = vmatpush.msra.mxu0 %v371
    %1230 = vmatpush.msra.mxu0 %v367
    %1231 = vmatpush.msra.mxu0 %v363
    %1232 = vmatpush.msra.mxu0 %v359
    %1233 = vmatpush.msra.mxu0 %v355
    %1234 = vmatpush.msra.mxu0 %v351
    %1235 = vmatmul.f32.gmra.mxu0 %v1177
    %v1236 = vpop.f32.mrf.mxu0
    %v1237 = vadd.f32 0.0, %v1236
    %1238 = vdwg.mxu0
    %1239 = vmatpush.msra.mxu0 %v412
    %1240 = vmatpush.msra.mxu0 %v408
    %1241 = vmatpush.msra.mxu0 %v404
    %1242 = vmatpush.msra.mxu0 %v400
    %1243 = vmatpush.msra.mxu0 %v396
    %1244 = vmatpush.msra.mxu0 %v392
    %1245 = vmatpush.msra.mxu0 %v388
    %1246 = vmatpush.msra.mxu0 %v384
    %1247 = vmatpush.msra.mxu0 %v380
    %1248 = vmatpush.msra.mxu0 %v376
    %1249 = vmatpush.msra.mxu0 %v372
    %1250 = vmatpush.msra.mxu0 %v368
    %1251 = vmatpush.msra.mxu0 %v364
    %1252 = vmatpush.msra.mxu0 %v360
    %1253 = vmatpush.msra.mxu0 %v356
    %1254 = vmatpush.msra.mxu0 %v352
    %1255 = vmatmul.f32.gmra.mxu0 %v1177
    %v1256 = vpop.f32.mrf.mxu0
    %v1257 = vadd.f32 0.0, %v1256
    %1258 = vdwg.mxu0
    %v1259 = vadd.f32 %v1172, %v1197
    %v1260 = vadd.f32 %v1173, %v1217
    %v1261 = vadd.f32 %v1174, %v1237
    %v1262 = vadd.f32 %v1175, %v1257
    %v1263 = vxor.u32 %v1259, 2147483648
    %v1264 = vxor.u32 %v1260, 2147483648
    %v1265 = vxor.u32 %v1261, 2147483648
    %v1266 = vmul.f32 %v1263, 1.442695
    %v1267 = vpow.pop %v1266
    %v1268 = vmul.f32 %v1264, 1.442695
    %v1269 = vpow.pop %v1268
    %v1270 = vmul.f32 %v1265, 1.442695
    %v1271 = vpow.pop %v1270
    %v1272 = vadd.f32 %v1267, 1.0
    %v1273 = vadd.f32 %v1269, 1.0
    %v1274 = vadd.f32 %v1271, 1.0
    %v1275 = vrcp.pop %v1272
    %v1276 = vmul.f32 %v1272, %v1275
    %v1277 = vsub.f32 1.0, %v1276
    %v1278 = vmul.f32 %v1275, %v1277
    %v1279 = vadd.f32 %v1275, %v1278
    %vm1280 = vweird.f32 %v1272
    %vm1281 = vweird.f32 %v1275
    %vm1282 = vmor %vm1280, %vm1281
    %v1283 = vsel %vm1282, %v1275, %v1279
    %v1284 = vand.u32 2147483647, %v1272
    %vm1285 = vcmp.eq.f32.partialorder %v1284, 8.507059e+37
    %v1286 = vand.u32 %v1272, 2147483648
    %v1287 = vor.u32 1.1754944e-38, %v1286
    %v1288 = vsel %vm1285, %v1287, %v1283
    %v1289 = vmul.f32 1.0, %v1288
    %v1290 = vrcp.pop %v1273
    %v1291 = vmul.f32 %v1273, %v1290
    %v1292 = vsub.f32 1.0, %v1291
    %v1293 = vmul.f32 %v1290, %v1292
    %v1294 = vadd.f32 %v1290, %v1293
    %vm1295 = vweird.f32 %v1273
    %vm1296 = vweird.f32 %v1290
    %vm1297 = vmor %vm1295, %vm1296
    %v1298 = vsel %vm1297, %v1290, %v1294
    %v1299 = vand.u32 2147483647, %v1273
    %vm1300 = vcmp.eq.f32.partialorder %v1299, 8.507059e+37
    %v1301 = vand.u32 %v1273, 2147483648
    %v1302 = vor.u32 1.1754944e-38, %v1301
    %v1303 = vsel %vm1300, %v1302, %v1298
    %v1304 = vmul.f32 1.0, %v1303
    %v1305 = vrcp.pop %v1274
    %v1306 = vmul.f32 %v1274, %v1305
    %v1307 = vsub.f32 1.0, %v1306
    %v1308 = vmul.f32 %v1305, %v1307
    %v1309 = vadd.f32 %v1305, %v1308
    %vm1310 = vweird.f32 %v1274
    %vm1311 = vweird.f32 %v1305
    %vm1312 = vmor %vm1310, %vm1311
    %v1313 = vsel %vm1312, %v1305, %v1309
    %v1314 = vand.u32 2147483647, %v1274
    %vm1315 = vcmp.eq.f32.partialorder %v1314, 8.507059e+37
    %v1316 = vand.u32 %v1274, 2147483648
    %v1317 = vor.u32 1.1754944e-38, %v1316
    %v1318 = vsel %vm1315, %v1317, %v1313
    %v1319 = vmul.f32 1.0, %v1318
    %v1320 = vtanh.pop %v1262
    %v1322 = vrot.slane %v1148, 6
    %v1324 = vmul.f32 %v1304, %v1322
    %v1325 = vmul.f32 %v1289, %v1320
    %v1326 = vadd.f32 %v1324, %v1325
    %v1327 = vtanh.pop %v1326
    %v1328 = vmul.f32 %v1319, %v1327
    %1329 = vst [vmem:[#allocation2 + $0x8] sm:$0x3] %v1328
    %v1330 = vld [vmem:[#allocation4 + $0x20] sm:$0xc]
    %v1331 = vld [vmem:[#allocation4 + $0x28] sm:$0xc]
    %v1332 = vld [vmem:[#allocation4 + $0x30] sm:$0xc]
    %v1333 = vld [vmem:[#allocation4 + $0x38] sm:$0xc]
    %v1334 = vld [vmem:[#allocation5] sm:$0x30]
    %v1335 = vld [vmem:[#allocation5 + $0x8] sm:$0x30]
    %v1336 = vld [vmem:[#allocation5 + $0x10] sm:$0x30]
    %v1337 = vld [vmem:[#allocation5 + $0x18] sm:$0x30]
    %v1342 = vrot.slane %v1334, 2
    %v1343 = vrot.slane %v1335, 2
    %v1344 = vrot.slane %v1336, 2
    %v1345 = vrot.slane %v1337, 2
    %v1350 = vadd.f32 %v1330, %v1342
    %v1351 = vadd.f32 %v1331, %v1343
    %v1352 = vadd.f32 %v1332, %v1344
    %v1353 = vadd.f32 %v1333, %v1345
    %1354 = vmatpush.msra.mxu0 %v409
    %1355 = vmatpush.msra.mxu0 %v405
    %1356 = vmatpush.msra.mxu0 %v401
    %1357 = vmatpush.msra.mxu0 %v397
    %1358 = vmatpush.msra.mxu0 %v393
    %1359 = vmatpush.msra.mxu0 %v389
    %1360 = vmatpush.msra.mxu0 %v385
    %1361 = vmatpush.msra.mxu0 %v381
    %1362 = vmatpush.msra.mxu0 %v377
    %1363 = vmatpush.msra.mxu0 %v373
    %1364 = vmatpush.msra.mxu0 %v369
    %1365 = vmatpush.msra.mxu0 %v365
    %1366 = vmatpush.msra.mxu0 %v361
    %1367 = vmatpush.msra.mxu0 %v357
    %1368 = vmatpush.msra.mxu0 %v353
    %1369 = vmatpush.msra.mxu0 %v349
    %1370 = vmatmul.f32.gmra.mxu0 %v1328
    %v1371 = vpop.f32.mrf.mxu0
    %v1372 = vadd.f32 0.0, %v1371
    %1373 = vdwg.mxu0
    %1374 = vmatpush.msra.mxu0 %v410
    %1375 = vmatpush.msra.mxu0 %v406
    %1376 = vmatpush.msra.mxu0 %v402
    %1377 = vmatpush.msra.mxu0 %v398
    %1378 = vmatpush.msra.mxu0 %v394
    %1379 = vmatpush.msra.mxu0 %v390
    %1380 = vmatpush.msra.mxu0 %v386
    %1381 = vmatpush.msra.mxu0 %v382
    %1382 = vmatpush.msra.mxu0 %v378
    %1383 = vmatpush.msra.mxu0 %v374
    %1384 = vmatpush.msra.mxu0 %v370
    %1385 = vmatpush.msra.mxu0 %v366
    %1386 = vmatpush.msra.mxu0 %v362
    %1387 = vmatpush.msra.mxu0 %v358
    %1388 = vmatpush.msra.mxu0 %v354
    %1389 = vmatpush.msra.mxu0 %v350
    %1390 = vmatmul.f32.gmra.mxu0 %v1328
    %v1391 = vpop.f32.mrf.mxu0
    %v1392 = vadd.f32 0.0, %v1391
    %1393 = vdwg.mxu0
    %1394 = vmatpush.msra.mxu0 %v411
    %1395 = vmatpush.msra.mxu0 %v407
    %1396 = vmatpush.msra.mxu0 %v403
    %1397 = vmatpush.msra.mxu0 %v399
    %1398 = vmatpush.msra.mxu0 %v395
    %1399 = vmatpush.msra.mxu0 %v391
    %1400 = vmatpush.msra.mxu0 %v387
    %1401 = vmatpush.msra.mxu0 %v383
    %1402 = vmatpush.msra.mxu0 %v379
    %1403 = vmatpush.msra.mxu0 %v375
    %1404 = vmatpush.msra.mxu0 %v371
    %1405 = vmatpush.msra.mxu0 %v367
    %1406 = vmatpush.msra.mxu0 %v363
    %1407 = vmatpush.msra.mxu0 %v359
    %1408 = vmatpush.msra.mxu0 %v355
    %1409 = vmatpush.msra.mxu0 %v351
    %1410 = vmatmul.f32.gmra.mxu0 %v1328
    %v1411 = vpop.f32.mrf.mxu0
    %v1412 = vadd.f32 0.0, %v1411
    %1413 = vdwg.mxu0
    %1414 = vmatpush.msra.mxu0 %v412
    %1415 = vmatpush.msra.mxu0 %v408
    %1416 = vmatpush.msra.mxu0 %v404
    %1417 = vmatpush.msra.mxu0 %v400
    %1418 = vmatpush.msra.mxu0 %v396
    %1419 = vmatpush.msra.mxu0 %v392
    %1420 = vmatpush.msra.mxu0 %v388
    %1421 = vmatpush.msra.mxu0 %v384
    %1422 = vmatpush.msra.mxu0 %v380
    %1423 = vmatpush.msra.mxu0 %v376
    %1424 = vmatpush.msra.mxu0 %v372
    %1425 = vmatpush.msra.mxu0 %v368
    %1426 = vmatpush.msra.mxu0 %v364
    %1427 = vmatpush.msra.mxu0 %v360
    %1428 = vmatpush.msra.mxu0 %v356
    %1429 = vmatpush.msra.mxu0 %v352
    %1430 = vmatmul.f32.gmra.mxu0 %v1328
    %v1431 = vpop.f32.mrf.mxu0
    %v1432 = vadd.f32 0.0, %v1431
    %1433 = vdwg.mxu0
    %v1438 = vrot.slane %v1372, 6
    %v1439 = vrot.slane %v1392, 6
    %v1440 = vrot.slane %v1412, 6
    %v1441 = vrot.slane %v1432, 6
    %v1446 = vadd.f32 %v1350, %v1438
    %v1447 = vadd.f32 %v1351, %v1439
    %v1448 = vadd.f32 %v1352, %v1440
    %v1449 = vadd.f32 %v1353, %v1441
    %v1450 = vxor.u32 %v1446, 2147483648
    %v1451 = vxor.u32 %v1447, 2147483648
    %v1452 = vxor.u32 %v1448, 2147483648
    %v1453 = vmul.f32 %v1450, 1.442695
    %v1454 = vpow.pop %v1453
    %v1455 = vmul.f32 %v1451, 1.442695
    %v1456 = vpow.pop %v1455
    %v1457 = vmul.f32 %v1452, 1.442695
    %v1458 = vpow.pop %v1457
    %v1459 = vadd.f32 %v1454, 1.0
    %v1460 = vadd.f32 %v1456, 1.0
    %v1461 = vadd.f32 %v1458, 1.0
    %v1462 = vrcp.pop %v1459
    %v1463 = vmul.f32 %v1459, %v1462
    %v1464 = vsub.f32 1.0, %v1463
    %v1465 = vmul.f32 %v1462, %v1464
    %v1466 = vadd.f32 %v1462, %v1465
    %vm1467 = vweird.f32 %v1459
    %vm1468 = vweird.f32 %v1462
    %vm1469 = vmor %vm1467, %vm1468
    %v1470 = vsel %vm1469, %v1462, %v1466
    %v1471 = vand.u32 2147483647, %v1459
    %vm1472 = vcmp.eq.f32.partialorder %v1471, 8.507059e+37
    %v1473 = vand.u32 %v1459, 2147483648
    %v1474 = vor.u32 1.1754944e-38, %v1473
    %v1475 = vsel %vm1472, %v1474, %v1470
    %v1476 = vmul.f32 1.0, %v1475
    %v1477 = vrcp.pop %v1460
    %v1478 = vmul.f32 %v1460, %v1477
    %v1479 = vsub.f32 1.0, %v1478
    %v1480 = vmul.f32 %v1477, %v1479
    %v1481 = vadd.f32 %v1477, %v1480
    %vm1482 = vweird.f32 %v1460
    %vm1483 = vweird.f32 %v1477
    %vm1484 = vmor %vm1482, %vm1483
    %v1485 = vsel %vm1484, %v1477, %v1481
    %v1486 = vand.u32 2147483647, %v1460
    %vm1487 = vcmp.eq.f32.partialorder %v1486, 8.507059e+37
    %v1488 = vand.u32 %v1460, 2147483648
    %v1489 = vor.u32 1.1754944e-38, %v1488
    %v1490 = vsel %vm1487, %v1489, %v1485
    %v1491 = vmul.f32 1.0, %v1490
    %v1492 = vrcp.pop %v1461
    %v1493 = vmul.f32 %v1461, %v1492
    %v1494 = vsub.f32 1.0, %v1493
    %v1495 = vmul.f32 %v1492, %v1494
    %v1496 = vadd.f32 %v1492, %v1495
    %vm1497 = vweird.f32 %v1461
    %vm1498 = vweird.f32 %v1492
    %vm1499 = vmor %vm1497, %vm1498
    %v1500 = vsel %vm1499, %v1492, %v1496
    %v1501 = vand.u32 2147483647, %v1461
    %vm1502 = vcmp.eq.f32.partialorder %v1501, 8.507059e+37
    %v1503 = vand.u32 %v1461, 2147483648
    %v1504 = vor.u32 1.1754944e-38, %v1503
    %v1505 = vsel %vm1502, %v1504, %v1500
    %v1506 = vmul.f32 1.0, %v1505
    %v1507 = vtanh.pop %v1449
    %v1509 = vrot.slane %v1326, 6
    %v1511 = vmul.f32 %v1491, %v1509
    %v1512 = vmul.f32 %v1476, %v1507
    %v1513 = vadd.f32 %v1511, %v1512
    %v1514 = vtanh.pop %v1513
    %v1515 = vmul.f32 %v1506, %v1514
    %1516 = vst [vmem:[#allocation2 + $0x8] sm:$0xc] %v1515
    %v1517 = vld [vmem:[#allocation4 + $0x20] sm:$0x30]
    %v1518 = vld [vmem:[#allocation4 + $0x28] sm:$0x30]
    %v1519 = vld [vmem:[#allocation4 + $0x30] sm:$0x30]
    %v1520 = vld [vmem:[#allocation4 + $0x38] sm:$0x30]
    %v1521 = vld [vmem:[#allocation5] sm:$0xc]
    %v1522 = vld [vmem:[#allocation5 + $0x8] sm:$0xc]
    %v1523 = vld [vmem:[#allocation5 + $0x10] sm:$0xc]
    %v1524 = vld [vmem:[#allocation5 + $0x18] sm:$0xc]
    %v1529 = vrot.slane %v1521, 6
    %v1530 = vrot.slane %v1522, 6
    %v1531 = vrot.slane %v1523, 6
    %v1532 = vrot.slane %v1524, 6
    %v1537 = vadd.f32 %v1517, %v1529
    %v1538 = vadd.f32 %v1518, %v1530
    %v1539 = vadd.f32 %v1519, %v1531
    %v1540 = vadd.f32 %v1520, %v1532
    %v1542 = vrot.slane %v1515, 2
    %1544 = vmatpush.msra.mxu0 %v409
    %1545 = vmatpush.msra.mxu0 %v405
    %1546 = vmatpush.msra.mxu0 %v401
    %1547 = vmatpush.msra.mxu0 %v397
    %1548 = vmatpush.msra.mxu0 %v393
    %1549 = vmatpush.msra.mxu0 %v389
    %1550 = vmatpush.msra.mxu0 %v385
    %1551 = vmatpush.msra.mxu0 %v381
    %1552 = vmatpush.msra.mxu0 %v377
    %1553 = vmatpush.msra.mxu0 %v373
    %1554 = vmatpush.msra.mxu0 %v369
    %1555 = vmatpush.msra.mxu0 %v365
    %1556 = vmatpush.msra.mxu0 %v361
    %1557 = vmatpush.msra.mxu0 %v357
    %1558 = vmatpush.msra.mxu0 %v353
    %1559 = vmatpush.msra.mxu0 %v349
    %1560 = vmatmul.f32.gmra.mxu0 %v1542
    %v1561 = vpop.f32.mrf.mxu0
    %v1562 = vadd.f32 0.0, %v1561
    %1563 = vdwg.mxu0
    %1564 = vmatpush.msra.mxu0 %v410
    %1565 = vmatpush.msra.mxu0 %v406
    %1566 = vmatpush.msra.mxu0 %v402
    %1567 = vmatpush.msra.mxu0 %v398
    %1568 = vmatpush.msra.mxu0 %v394
    %1569 = vmatpush.msra.mxu0 %v390
    %1570 = vmatpush.msra.mxu0 %v386
    %1571 = vmatpush.msra.mxu0 %v382
    %1572 = vmatpush.msra.mxu0 %v378
    %1573 = vmatpush.msra.mxu0 %v374
    %1574 = vmatpush.msra.mxu0 %v370
    %1575 = vmatpush.msra.mxu0 %v366
    %1576 = vmatpush.msra.mxu0 %v362
    %1577 = vmatpush.msra.mxu0 %v358
    %1578 = vmatpush.msra.mxu0 %v354
    %1579 = vmatpush.msra.mxu0 %v350
    %1580 = vmatmul.f32.gmra.mxu0 %v1542
    %v1581 = vpop.f32.mrf.mxu0
    %v1582 = vadd.f32 0.0, %v1581
    %1583 = vdwg.mxu0
    %1584 = vmatpush.msra.mxu0 %v411
    %1585 = vmatpush.msra.mxu0 %v407
    %1586 = vmatpush.msra.mxu0 %v403
    %1587 = vmatpush.msra.mxu0 %v399
    %1588 = vmatpush.msra.mxu0 %v395
    %1589 = vmatpush.msra.mxu0 %v391
    %1590 = vmatpush.msra.mxu0 %v387
    %1591 = vmatpush.msra.mxu0 %v383
    %1592 = vmatpush.msra.mxu0 %v379
    %1593 = vmatpush.msra.mxu0 %v375
    %1594 = vmatpush.msra.mxu0 %v371
    %1595 = vmatpush.msra.mxu0 %v367
    %1596 = vmatpush.msra.mxu0 %v363
    %1597 = vmatpush.msra.mxu0 %v359
    %1598 = vmatpush.msra.mxu0 %v355
    %1599 = vmatpush.msra.mxu0 %v351
    %1600 = vmatmul.f32.gmra.mxu0 %v1542
    %v1601 = vpop.f32.mrf.mxu0
    %v1602 = vadd.f32 0.0, %v1601
    %1603 = vdwg.mxu0
    %1604 = vmatpush.msra.mxu0 %v412
    %1605 = vmatpush.msra.mxu0 %v408
    %1606 = vmatpush.msra.mxu0 %v404
    %1607 = vmatpush.msra.mxu0 %v400
    %1608 = vmatpush.msra.mxu0 %v396
    %1609 = vmatpush.msra.mxu0 %v392
    %1610 = vmatpush.msra.mxu0 %v388
    %1611 = vmatpush.msra.mxu0 %v384
    %1612 = vmatpush.msra.mxu0 %v380
    %1613 = vmatpush.msra.mxu0 %v376
    %1614 = vmatpush.msra.mxu0 %v372
    %1615 = vmatpush.msra.mxu0 %v368
    %1616 = vmatpush.msra.mxu0 %v364
    %1617 = vmatpush.msra.mxu0 %v360
    %1618 = vmatpush.msra.mxu0 %v356
    %1619 = vmatpush.msra.mxu0 %v352
    %1620 = vmatmul.f32.gmra.mxu0 %v1542
    %v1621 = vpop.f32.mrf.mxu0
    %v1622 = vadd.f32 0.0, %v1621
    %1623 = vdwg.mxu0
    %v1628 = vrot.slane %v1562, 4
    %v1629 = vrot.slane %v1582, 4
    %v1630 = vrot.slane %v1602, 4
    %v1631 = vrot.slane %v1622, 4
    %v1636 = vadd.f32 %v1537, %v1628
    %v1637 = vadd.f32 %v1538, %v1629
    %v1638 = vadd.f32 %v1539, %v1630
    %v1639 = vadd.f32 %v1540, %v1631
    %v1640 = vxor.u32 %v1636, 2147483648
    %v1641 = vxor.u32 %v1637, 2147483648
    %v1642 = vxor.u32 %v1638, 2147483648
    %v1643 = vmul.f32 %v1640, 1.442695
    %v1644 = vpow.pop %v1643
    %v1645 = vmul.f32 %v1641, 1.442695
    %v1646 = vpow.pop %v1645
    %v1647 = vmul.f32 %v1642, 1.442695
    %v1648 = vpow.pop %v1647
    %v1649 = vadd.f32 %v1644, 1.0
    %v1650 = vadd.f32 %v1646, 1.0
    %v1651 = vadd.f32 %v1648, 1.0
    %v1652 = vrcp.pop %v1649
    %v1653 = vmul.f32 %v1649, %v1652
    %v1654 = vsub.f32 1.0, %v1653
    %v1655 = vmul.f32 %v1652, %v1654
    %v1656 = vadd.f32 %v1652, %v1655
    %vm1657 = vweird.f32 %v1649
    %vm1658 = vweird.f32 %v1652
    %vm1659 = vmor %vm1657, %vm1658
    %v1660 = vsel %vm1659, %v1652, %v1656
    %v1661 = vand.u32 2147483647, %v1649
    %vm1662 = vcmp.eq.f32.partialorder %v1661, 8.507059e+37
    %v1663 = vand.u32 %v1649, 2147483648
    %v1664 = vor.u32 1.1754944e-38, %v1663
    %v1665 = vsel %vm1662, %v1664, %v1660
    %v1666 = vmul.f32 1.0, %v1665
    %v1667 = vrcp.pop %v1650
    %v1668 = vmul.f32 %v1650, %v1667
    %v1669 = vsub.f32 1.0, %v1668
    %v1670 = vmul.f32 %v1667, %v1669
    %v1671 = vadd.f32 %v1667, %v1670
    %vm1672 = vweird.f32 %v1650
    %vm1673 = vweird.f32 %v1667
    %vm1674 = vmor %vm1672, %vm1673
    %v1675 = vsel %vm1674, %v1667, %v1671
    %v1676 = vand.u32 2147483647, %v1650
    %vm1677 = vcmp.eq.f32.partialorder %v1676, 8.507059e+37
    %v1678 = vand.u32 %v1650, 2147483648
    %v1679 = vor.u32 1.1754944e-38, %v1678
    %v1680 = vsel %vm1677, %v1679, %v1675
    %v1681 = vmul.f32 1.0, %v1680
    %v1682 = vrcp.pop %v1651
    %v1683 = vmul.f32 %v1651, %v1682
    %v1684 = vsub.f32 1.0, %v1683
    %v1685 = vmul.f32 %v1682, %v1684
    %v1686 = vadd.f32 %v1682, %v1685
    %vm1687 = vweird.f32 %v1651
    %vm1688 = vweird.f32 %v1682
    %vm1689 = vmor %vm1687, %vm1688
    %v1690 = vsel %vm1689, %v1682, %v1686
    %v1691 = vand.u32 2147483647, %v1651
    %vm1692 = vcmp.eq.f32.partialorder %v1691, 8.507059e+37
    %v1693 = vand.u32 %v1651, 2147483648
    %v1694 = vor.u32 1.1754944e-38, %v1693
    %v1695 = vsel %vm1692, %v1694, %v1690
    %v1696 = vmul.f32 1.0, %v1695
    %v1697 = vtanh.pop %v1639
    %v1699 = vrot.slane %v1513, 6
    %v1701 = vmul.f32 %v1681, %v1699
    %v1702 = vmul.f32 %v1666, %v1697
    %v1703 = vadd.f32 %v1701, %v1702
    %v1704 = vtanh.pop %v1703
    %v1705 = vmul.f32 %v1696, %v1704
    %1706 = vst [vmem:[#allocation2 + $0x8] sm:$0x30] %v1705
    %v1707 = vld [vmem:[#allocation4 + $0x20] sm:$0xc0]
    %v1708 = vld [vmem:[#allocation4 + $0x28] sm:$0xc0]
    %v1709 = vld [vmem:[#allocation4 + $0x30] sm:$0xc0]
    %v1710 = vld [vmem:[#allocation4 + $0x38] sm:$0xc0]
    %v1711 = vld [vmem:[#allocation5] sm:$0x3]
    %v1712 = vld [vmem:[#allocation5 + $0x8] sm:$0x3]
    %v1713 = vld [vmem:[#allocation5 + $0x10] sm:$0x3]
    %v1714 = vld [vmem:[#allocation5 + $0x18] sm:$0x3]
    %v1719 = vrot.slane %v1711, 2
    %v1720 = vrot.slane %v1712, 2
    %v1721 = vrot.slane %v1713, 2
    %v1722 = vrot.slane %v1714, 2
    %v1727 = vadd.f32 %v1707, %v1719
    %v1728 = vadd.f32 %v1708, %v1720
    %v1729 = vadd.f32 %v1709, %v1721
    %v1730 = vadd.f32 %v1710, %v1722
    %v1732 = vrot.slane %v1705, 4
    %1734 = vmatpush.msra.mxu0 %v409
    %1735 = vmatpush.msra.mxu0 %v405
    %1736 = vmatpush.msra.mxu0 %v401
    %1737 = vmatpush.msra.mxu0 %v397
    %1738 = vmatpush.msra.mxu0 %v393
    %1739 = vmatpush.msra.mxu0 %v389
    %1740 = vmatpush.msra.mxu0 %v385
    %1741 = vmatpush.msra.mxu0 %v381
    %1742 = vmatpush.msra.mxu0 %v377
    %1743 = vmatpush.msra.mxu0 %v373
    %1744 = vmatpush.msra.mxu0 %v369
    %1745 = vmatpush.msra.mxu0 %v365
    %1746 = vmatpush.msra.mxu0 %v361
    %1747 = vmatpush.msra.mxu0 %v357
    %1748 = vmatpush.msra.mxu0 %v353
    %1749 = vmatpush.msra.mxu0 %v349
    %1750 = vmatmul.f32.gmra.mxu0 %v1732
    %v1751 = vpop.f32.mrf.mxu0
    %v1752 = vadd.f32 0.0, %v1751
    %1753 = vdwg.mxu0
    %1754 = vmatpush.msra.mxu0 %v410
    %1755 = vmatpush.msra.mxu0 %v406
    %1756 = vmatpush.msra.mxu0 %v402
    %1757 = vmatpush.msra.mxu0 %v398
    %1758 = vmatpush.msra.mxu0 %v394
    %1759 = vmatpush.msra.mxu0 %v390
    %1760 = vmatpush.msra.mxu0 %v386
    %1761 = vmatpush.msra.mxu0 %v382
    %1762 = vmatpush.msra.mxu0 %v378
    %1763 = vmatpush.msra.mxu0 %v374
    %1764 = vmatpush.msra.mxu0 %v370
    %1765 = vmatpush.msra.mxu0 %v366
    %1766 = vmatpush.msra.mxu0 %v362
    %1767 = vmatpush.msra.mxu0 %v358
    %1768 = vmatpush.msra.mxu0 %v354
    %1769 = vmatpush.msra.mxu0 %v350
    %1770 = vmatmul.f32.gmra.mxu0 %v1732
    %v1771 = vpop.f32.mrf.mxu0
    %v1772 = vadd.f32 0.0, %v1771
    %1773 = vdwg.mxu0
    %1774 = vmatpush.msra.mxu0 %v411
    %1775 = vmatpush.msra.mxu0 %v407
    %1776 = vmatpush.msra.mxu0 %v403
    %1777 = vmatpush.msra.mxu0 %v399
    %1778 = vmatpush.msra.mxu0 %v395
    %1779 = vmatpush.msra.mxu0 %v391
    %1780 = vmatpush.msra.mxu0 %v387
    %1781 = vmatpush.msra.mxu0 %v383
    %1782 = vmatpush.msra.mxu0 %v379
    %1783 = vmatpush.msra.mxu0 %v375
    %1784 = vmatpush.msra.mxu0 %v371
    %1785 = vmatpush.msra.mxu0 %v367
    %1786 = vmatpush.msra.mxu0 %v363
    %1787 = vmatpush.msra.mxu0 %v359
    %1788 = vmatpush.msra.mxu0 %v355
    %1789 = vmatpush.msra.mxu0 %v351
    %1790 = vmatmul.f32.gmra.mxu0 %v1732
    %v1791 = vpop.f32.mrf.mxu0
    %v1792 = vadd.f32 0.0, %v1791
    %1793 = vdwg.mxu0
    %1794 = vmatpush.msra.mxu0 %v412
    %1795 = vmatpush.msra.mxu0 %v408
    %1796 = vmatpush.msra.mxu0 %v404
    %1797 = vmatpush.msra.mxu0 %v400
    %1798 = vmatpush.msra.mxu0 %v396
    %1799 = vmatpush.msra.mxu0 %v392
    %1800 = vmatpush.msra.mxu0 %v388
    %1801 = vmatpush.msra.mxu0 %v384
    %1802 = vmatpush.msra.mxu0 %v380
    %1803 = vmatpush.msra.mxu0 %v376
    %1804 = vmatpush.msra.mxu0 %v372
    %1805 = vmatpush.msra.mxu0 %v368
    %1806 = vmatpush.msra.mxu0 %v364
    %1807 = vmatpush.msra.mxu0 %v360
    %1808 = vmatpush.msra.mxu0 %v356
    %1809 = vmatpush.msra.mxu0 %v352
    %1810 = vmatmul.f32.gmra.mxu0 %v1732
    %v1811 = vpop.f32.mrf.mxu0
    %v1812 = vadd.f32 0.0, %v1811
    %1813 = vdwg.mxu0
    %v1818 = vrot.slane %v1752, 2
    %v1819 = vrot.slane %v1772, 2
    %v1820 = vrot.slane %v1792, 2
    %v1821 = vrot.slane %v1812, 2
    %v1826 = vadd.f32 %v1727, %v1818
    %v1827 = vadd.f32 %v1728, %v1819
    %v1828 = vadd.f32 %v1729, %v1820
    %v1829 = vadd.f32 %v1730, %v1821
    %v1830 = vxor.u32 %v1826, 2147483648
    %v1831 = vxor.u32 %v1827, 2147483648
    %v1832 = vxor.u32 %v1828, 2147483648
    %v1833 = vmul.f32 %v1830, 1.442695
    %v1834 = vpow.pop %v1833
    %v1835 = vmul.f32 %v1831, 1.442695
    %v1836 = vpow.pop %v1835
    %v1837 = vmul.f32 %v1832, 1.442695
    %v1838 = vpow.pop %v1837
    %v1839 = vadd.f32 %v1834, 1.0
    %v1840 = vadd.f32 %v1836, 1.0
    %v1841 = vadd.f32 %v1838, 1.0
    %v1842 = vrcp.pop %v1839
    %v1843 = vmul.f32 %v1839, %v1842
    %v1844 = vsub.f32 1.0, %v1843
    %v1845 = vmul.f32 %v1842, %v1844
    %v1846 = vadd.f32 %v1842, %v1845
    %vm1847 = vweird.f32 %v1839
    %vm1848 = vweird.f32 %v1842
    %vm1849 = vmor %vm1847, %vm1848
    %v1850 = vsel %vm1849, %v1842, %v1846
    %v1851 = vand.u32 2147483647, %v1839
    %vm1852 = vcmp.eq.f32.partialorder %v1851, 8.507059e+37
    %v1853 = vand.u32 %v1839, 2147483648
    %v1854 = vor.u32 1.1754944e-38, %v1853
    %v1855 = vsel %vm1852, %v1854, %v1850
    %v1856 = vmul.f32 1.0, %v1855
    %v1857 = vrcp.pop %v1840
    %v1858 = vmul.f32 %v1840, %v1857
    %v1859 = vsub.f32 1.0, %v1858
    %v1860 = vmul.f32 %v1857, %v1859
    %v1861 = vadd.f32 %v1857, %v1860
    %vm1862 = vweird.f32 %v1840
    %vm1863 = vweird.f32 %v1857
    %vm1864 = vmor %vm1862, %vm1863
    %v1865 = vsel %vm1864, %v1857, %v1861
    %v1866 = vand.u32 2147483647, %v1840
    %vm1867 = vcmp.eq.f32.partialorder %v1866, 8.507059e+37
    %v1868 = vand.u32 %v1840, 2147483648
    %v1869 = vor.u32 1.1754944e-38, %v1868
    %v1870 = vsel %vm1867, %v1869, %v1865
    %v1871 = vmul.f32 1.0, %v1870
    %v1872 = vrcp.pop %v1841
    %v1873 = vmul.f32 %v1841, %v1872
    %v1874 = vsub.f32 1.0, %v1873
    %v1875 = vmul.f32 %v1872, %v1874
    %v1876 = vadd.f32 %v1872, %v1875
    %vm1877 = vweird.f32 %v1841
    %vm1878 = vweird.f32 %v1872
    %vm1879 = vmor %vm1877, %vm1878
    %v1880 = vsel %vm1879, %v1872, %v1876
    %v1881 = vand.u32 2147483647, %v1841
    %vm1882 = vcmp.eq.f32.partialorder %v1881, 8.507059e+37
    %v1883 = vand.u32 %v1841, 2147483648
    %v1884 = vor.u32 1.1754944e-38, %v1883
    %v1885 = vsel %vm1882, %v1884, %v1880
    %v1886 = vmul.f32 1.0, %v1885
    %v1887 = vtanh.pop %v1829
    %v1889 = vrot.slane %v1703, 6
    %v1891 = vmul.f32 %v1871, %v1889
    %v1892 = vmul.f32 %v1856, %v1887
    %v1893 = vadd.f32 %v1891, %v1892
    %v1894 = vtanh.pop %v1893
    %v1895 = vmul.f32 %v1886, %v1894
    %1896 = vst [vmem:[#allocation2 + $0x8] sm:$0xc0] %v1895
    %v1897 = vld [vmem:[#allocation2] sm:$0xff]
    %v1898 = vld [vmem:[#allocation2 + $0x8] sm:$0xff]
    %v1899 = vld [vmem:[#allocation7 + $0x400] sm:$0xff]
    %v1900 = vld [vmem:[#allocation7 + $0x408] sm:$0xff]
    %v1901 = vld [vmem:[#allocation7 + $0x410] sm:$0xff]
    %v1902 = vld [vmem:[#allocation7 + $0x418] sm:$0xff]
    %v1903 = vld [vmem:[#allocation7 + $0x420] sm:$0xff]
    %v1904 = vld [vmem:[#allocation7 + $0x428] sm:$0xff]
    %v1905 = vld [vmem:[#allocation7 + $0x430] sm:$0xff]
    %v1906 = vld [vmem:[#allocation7 + $0x438] sm:$0xff]
    %v1907 = vld [vmem:[#allocation7 + $0x440] sm:$0xff]
    %v1908 = vld [vmem:[#allocation7 + $0x448] sm:$0xff]
    %v1909 = vld [vmem:[#allocation7 + $0x450] sm:$0xff]
    %v1910 = vld [vmem:[#allocation7 + $0x458] sm:$0xff]
    %v1911 = vld [vmem:[#allocation7 + $0x460] sm:$0xff]
    %v1912 = vld [vmem:[#allocation7 + $0x468] sm:$0xff]
    %v1913 = vld [vmem:[#allocation7 + $0x470] sm:$0xff]
    %v1914 = vld [vmem:[#allocation7 + $0x478] sm:$0xff]
    %v1915 = vld [vmem:[#allocation7 + $0x480] sm:$0xff]
    %v1916 = vld [vmem:[#allocation7 + $0x488] sm:$0xff]
    %v1917 = vld [vmem:[#allocation7 + $0x490] sm:$0xff]
    %v1918 = vld [vmem:[#allocation7 + $0x498] sm:$0xff]
    %v1919 = vld [vmem:[#allocation7 + $0x4a0] sm:$0xff]
    %v1920 = vld [vmem:[#allocation7 + $0x4a8] sm:$0xff]
    %v1921 = vld [vmem:[#allocation7 + $0x4b0] sm:$0xff]
    %v1922 = vld [vmem:[#allocation7 + $0x4b8] sm:$0xff]
    %v1923 = vld [vmem:[#allocation7 + $0x4c0] sm:$0xff]
    %v1924 = vld [vmem:[#allocation7 + $0x4c8] sm:$0xff]
    %v1925 = vld [vmem:[#allocation7 + $0x4d0] sm:$0xff]
    %v1926 = vld [vmem:[#allocation7 + $0x4d8] sm:$0xff]
    %v1927 = vld [vmem:[#allocation7 + $0x4e0] sm:$0xff]
    %v1928 = vld [vmem:[#allocation7 + $0x4e8] sm:$0xff]
    %v1929 = vld [vmem:[#allocation7 + $0x4f0] sm:$0xff]
    %v1930 = vld [vmem:[#allocation7 + $0x4f8] sm:$0xff]
    %v1931 = vld [vmem:[#allocation7 + $0x500] sm:$0xff]
    %v1932 = vld [vmem:[#allocation7 + $0x508] sm:$0xff]
    %v1933 = vld [vmem:[#allocation7 + $0x510] sm:$0xff]
    %v1934 = vld [vmem:[#allocation7 + $0x518] sm:$0xff]
    %v1935 = vld [vmem:[#allocation7 + $0x520] sm:$0xff]
    %v1936 = vld [vmem:[#allocation7 + $0x528] sm:$0xff]
    %v1937 = vld [vmem:[#allocation7 + $0x530] sm:$0xff]
    %v1938 = vld [vmem:[#allocation7 + $0x538] sm:$0xff]
    %v1939 = vld [vmem:[#allocation7 + $0x540] sm:$0xff]
    %v1940 = vld [vmem:[#allocation7 + $0x548] sm:$0xff]
    %v1941 = vld [vmem:[#allocation7 + $0x550] sm:$0xff]
    %v1942 = vld [vmem:[#allocation7 + $0x558] sm:$0xff]
    %v1943 = vld [vmem:[#allocation7 + $0x560] sm:$0xff]
    %v1944 = vld [vmem:[#allocation7 + $0x568] sm:$0xff]
    %v1945 = vld [vmem:[#allocation7 + $0x570] sm:$0xff]
    %v1946 = vld [vmem:[#allocation7 + $0x578] sm:$0xff]
    %v1947 = vld [vmem:[#allocation7 + $0x580] sm:$0xff]
    %v1948 = vld [vmem:[#allocation7 + $0x588] sm:$0xff]
    %v1949 = vld [vmem:[#allocation7 + $0x590] sm:$0xff]
    %v1950 = vld [vmem:[#allocation7 + $0x598] sm:$0xff]
    %v1951 = vld [vmem:[#allocation7 + $0x5a0] sm:$0xff]
    %v1952 = vld [vmem:[#allocation7 + $0x5a8] sm:$0xff]
    %v1953 = vld [vmem:[#allocation7 + $0x5b0] sm:$0xff]
    %v1954 = vld [vmem:[#allocation7 + $0x5b8] sm:$0xff]
    %v1955 = vld [vmem:[#allocation7 + $0x5c0] sm:$0xff]
    %v1956 = vld [vmem:[#allocation7 + $0x5c8] sm:$0xff]
    %v1957 = vld [vmem:[#allocation7 + $0x5d0] sm:$0xff]
    %v1958 = vld [vmem:[#allocation7 + $0x5d8] sm:$0xff]
    %v1959 = vld [vmem:[#allocation7 + $0x5e0] sm:$0xff]
    %v1960 = vld [vmem:[#allocation7 + $0x5e8] sm:$0xff]
    %v1961 = vld [vmem:[#allocation7 + $0x5f0] sm:$0xff]
    %v1962 = vld [vmem:[#allocation7 + $0x5f8] sm:$0xff]
    %s1963 = scalar_lea.vmem [#allocation9], 1
    %v1964 = vld [vmem:[%s1963] ss:$4 sm:$0xf]
    %v1966 = vperm.slane %v1964, 0
    %v1967 = vperm.slane %v1964, 1
    %v1968 = vperm.slane %v1964, 2
    %v1969 = vperm.slane %v1964, 3
    %1974 = vmatpush.msra.mxu0 %v1959
    %1975 = vmatpush.msra.mxu0 %v1955
    %1976 = vmatpush.msra.mxu0 %v1951
    %1977 = vmatpush.msra.mxu0 %v1947
    %1978 = vmatpush.msra.mxu0 %v1943
    %1979 = vmatpush.msra.mxu0 %v1939
    %1980 = vmatpush.msra.mxu0 %v1935
    %1981 = vmatpush.msra.mxu0 %v1931
    %1982 = vmatpush.msra.mxu0 %v1927
    %1983 = vmatpush.msra.mxu0 %v1923
    %1984 = vmatpush.msra.mxu0 %v1919
    %1985 = vmatpush.msra.mxu0 %v1915
    %1986 = vmatpush.msra.mxu0 %v1911
    %1987 = vmatpush.msra.mxu0 %v1907
    %1988 = vmatpush.msra.mxu0 %v1903
    %1989 = vmatpush.msra.mxu0 %v1899
    %1990 = vmatmul.f32.gmra.mxu0 %v1897
    %v1991 = vpop.f32.mrf.mxu0
    %v1992 = vadd.f32 %v1966, %v1991
    %1993 = vmatmul.f32.gmra.mxu0 %v1898
    %v1994 = vpop.f32.mrf.mxu0
    %v1995 = vadd.f32 %v1966, %v1994
    %1996 = vdwg.mxu0
    %1997 = vmatpush.msra.mxu0 %v1960
    %1998 = vmatpush.msra.mxu0 %v1956
    %1999 = vmatpush.msra.mxu0 %v1952
    %2000 = vmatpush.msra.mxu0 %v1948
    %2001 = vmatpush.msra.mxu0 %v1944
    %2002 = vmatpush.msra.mxu0 %v1940
    %2003 = vmatpush.msra.mxu0 %v1936
    %2004 = vmatpush.msra.mxu0 %v1932
    %2005 = vmatpush.msra.mxu0 %v1928
    %2006 = vmatpush.msra.mxu0 %v1924
    %2007 = vmatpush.msra.mxu0 %v1920
    %2008 = vmatpush.msra.mxu0 %v1916
    %2009 = vmatpush.msra.mxu0 %v1912
    %2010 = vmatpush.msra.mxu0 %v1908
    %2011 = vmatpush.msra.mxu0 %v1904
    %2012 = vmatpush.msra.mxu0 %v1900
    %2013 = vmatmul.f32.gmra.mxu0 %v1897
    %v2014 = vpop.f32.mrf.mxu0
    %v2015 = vadd.f32 %v1967, %v2014
    %2016 = vmatmul.f32.gmra.mxu0 %v1898
    %v2017 = vpop.f32.mrf.mxu0
    %v2018 = vadd.f32 %v1967, %v2017
    %2019 = vdwg.mxu0
    %2020 = vmatpush.msra.mxu0 %v1961
    %2021 = vmatpush.msra.mxu0 %v1957
    %2022 = vmatpush.msra.mxu0 %v1953
    %2023 = vmatpush.msra.mxu0 %v1949
    %2024 = vmatpush.msra.mxu0 %v1945
    %2025 = vmatpush.msra.mxu0 %v1941
    %2026 = vmatpush.msra.mxu0 %v1937
    %2027 = vmatpush.msra.mxu0 %v1933
    %2028 = vmatpush.msra.mxu0 %v1929
    %2029 = vmatpush.msra.mxu0 %v1925
    %2030 = vmatpush.msra.mxu0 %v1921
    %2031 = vmatpush.msra.mxu0 %v1917
    %2032 = vmatpush.msra.mxu0 %v1913
    %2033 = vmatpush.msra.mxu0 %v1909
    %2034 = vmatpush.msra.mxu0 %v1905
    %2035 = vmatpush.msra.mxu0 %v1901
    %2036 = vmatmul.f32.gmra.mxu0 %v1897
    %v2037 = vpop.f32.mrf.mxu0
    %v2038 = vadd.f32 %v1968, %v2037
    %2039 = vmatmul.f32.gmra.mxu0 %v1898
    %v2040 = vpop.f32.mrf.mxu0
    %v2041 = vadd.f32 %v1968, %v2040
    %2042 = vdwg.mxu0
    %2043 = vmatpush.msra.mxu0 %v1962
    %2044 = vmatpush.msra.mxu0 %v1958
    %2045 = vmatpush.msra.mxu0 %v1954
    %2046 = vmatpush.msra.mxu0 %v1950
    %2047 = vmatpush.msra.mxu0 %v1946
    %2048 = vmatpush.msra.mxu0 %v1942
    %2049 = vmatpush.msra.mxu0 %v1938
    %2050 = vmatpush.msra.mxu0 %v1934
    %2051 = vmatpush.msra.mxu0 %v1930
    %2052 = vmatpush.msra.mxu0 %v1926
    %2053 = vmatpush.msra.mxu0 %v1922
    %2054 = vmatpush.msra.mxu0 %v1918
    %2055 = vmatpush.msra.mxu0 %v1914
    %2056 = vmatpush.msra.mxu0 %v1910
    %2057 = vmatpush.msra.mxu0 %v1906
    %2058 = vmatpush.msra.mxu0 %v1902
    %2059 = vmatmul.f32.gmra.mxu0 %v1897
    %v2060 = vpop.f32.mrf.mxu0
    %v2061 = vadd.f32 %v1969, %v2060
    %2062 = vmatmul.f32.gmra.mxu0 %v1898
    %v2063 = vpop.f32.mrf.mxu0
    %v2064 = vadd.f32 %v1969, %v2063
    %2065 = vdwg.mxu0
    %2066 = vst [vmem:[#allocation4] sm:$0xff] %v1992
    %2067 = vst [vmem:[#allocation4 + $0x8] sm:$0xff] %v2015
    %2068 = vst [vmem:[#allocation4 + $0x10] sm:$0xff] %v2038
    %2069 = vst [vmem:[#allocation4 + $0x18] sm:$0xff] %v2061
    %2070 = vst [vmem:[#allocation4 + $0x20] sm:$0xff] %v1995
    %2071 = vst [vmem:[#allocation4 + $0x28] sm:$0xff] %v2018
    %2072 = vst [vmem:[#allocation4 + $0x30] sm:$0xff] %v2041
    %2073 = vst [vmem:[#allocation4 + $0x38] sm:$0xff] %v2064
    %v2074 = vld [vmem:[#allocation7 + $0x600] sm:$0xff]
    %v2075 = vld [vmem:[#allocation7 + $0x608] sm:$0xff]
    %v2076 = vld [vmem:[#allocation7 + $0x610] sm:$0xff]
    %v2077 = vld [vmem:[#allocation7 + $0x618] sm:$0xff]
    %v2078 = vld [vmem:[#allocation7 + $0x620] sm:$0xff]
    %v2079 = vld [vmem:[#allocation7 + $0x628] sm:$0xff]
    %v2080 = vld [vmem:[#allocation7 + $0x630] sm:$0xff]
    %v2081 = vld [vmem:[#allocation7 + $0x638] sm:$0xff]
    %v2082 = vld [vmem:[#allocation7 + $0x640] sm:$0xff]
    %v2083 = vld [vmem:[#allocation7 + $0x648] sm:$0xff]
    %v2084 = vld [vmem:[#allocation7 + $0x650] sm:$0xff]
    %v2085 = vld [vmem:[#allocation7 + $0x658] sm:$0xff]
    %v2086 = vld [vmem:[#allocation7 + $0x660] sm:$0xff]
    %v2087 = vld [vmem:[#allocation7 + $0x668] sm:$0xff]
    %v2088 = vld [vmem:[#allocation7 + $0x670] sm:$0xff]
    %v2089 = vld [vmem:[#allocation7 + $0x678] sm:$0xff]
    %v2090 = vld [vmem:[#allocation7 + $0x680] sm:$0xff]
    %v2091 = vld [vmem:[#allocation7 + $0x688] sm:$0xff]
    %v2092 = vld [vmem:[#allocation7 + $0x690] sm:$0xff]
    %v2093 = vld [vmem:[#allocation7 + $0x698] sm:$0xff]
    %v2094 = vld [vmem:[#allocation7 + $0x6a0] sm:$0xff]
    %v2095 = vld [vmem:[#allocation7 + $0x6a8] sm:$0xff]
    %v2096 = vld [vmem:[#allocation7 + $0x6b0] sm:$0xff]
    %v2097 = vld [vmem:[#allocation7 + $0x6b8] sm:$0xff]
    %v2098 = vld [vmem:[#allocation7 + $0x6c0] sm:$0xff]
    %v2099 = vld [vmem:[#allocation7 + $0x6c8] sm:$0xff]
    %v2100 = vld [vmem:[#allocation7 + $0x6d0] sm:$0xff]
    %v2101 = vld [vmem:[#allocation7 + $0x6d8] sm:$0xff]
    %v2102 = vld [vmem:[#allocation7 + $0x6e0] sm:$0xff]
    %v2103 = vld [vmem:[#allocation7 + $0x6e8] sm:$0xff]
    %v2104 = vld [vmem:[#allocation7 + $0x6f0] sm:$0xff]
    %v2105 = vld [vmem:[#allocation7 + $0x6f8] sm:$0xff]
    %v2106 = vld [vmem:[#allocation7 + $0x700] sm:$0xff]
    %v2107 = vld [vmem:[#allocation7 + $0x708] sm:$0xff]
    %v2108 = vld [vmem:[#allocation7 + $0x710] sm:$0xff]
    %v2109 = vld [vmem:[#allocation7 + $0x718] sm:$0xff]
    %v2110 = vld [vmem:[#allocation7 + $0x720] sm:$0xff]
    %v2111 = vld [vmem:[#allocation7 + $0x728] sm:$0xff]
    %v2112 = vld [vmem:[#allocation7 + $0x730] sm:$0xff]
    %v2113 = vld [vmem:[#allocation7 + $0x738] sm:$0xff]
    %v2114 = vld [vmem:[#allocation7 + $0x740] sm:$0xff]
    %v2115 = vld [vmem:[#allocation7 + $0x748] sm:$0xff]
    %v2116 = vld [vmem:[#allocation7 + $0x750] sm:$0xff]
    %v2117 = vld [vmem:[#allocation7 + $0x758] sm:$0xff]
    %v2118 = vld [vmem:[#allocation7 + $0x760] sm:$0xff]
    %v2119 = vld [vmem:[#allocation7 + $0x768] sm:$0xff]
    %v2120 = vld [vmem:[#allocation7 + $0x770] sm:$0xff]
    %v2121 = vld [vmem:[#allocation7 + $0x778] sm:$0xff]
    %v2122 = vld [vmem:[#allocation7 + $0x780] sm:$0xff]
    %v2123 = vld [vmem:[#allocation7 + $0x788] sm:$0xff]
    %v2124 = vld [vmem:[#allocation7 + $0x790] sm:$0xff]
    %v2125 = vld [vmem:[#allocation7 + $0x798] sm:$0xff]
    %v2126 = vld [vmem:[#allocation7 + $0x7a0] sm:$0xff]
    %v2127 = vld [vmem:[#allocation7 + $0x7a8] sm:$0xff]
    %v2128 = vld [vmem:[#allocation7 + $0x7b0] sm:$0xff]
    %v2129 = vld [vmem:[#allocation7 + $0x7b8] sm:$0xff]
    %v2130 = vld [vmem:[#allocation7 + $0x7c0] sm:$0xff]
    %v2131 = vld [vmem:[#allocation7 + $0x7c8] sm:$0xff]
    %v2132 = vld [vmem:[#allocation7 + $0x7d0] sm:$0xff]
    %v2133 = vld [vmem:[#allocation7 + $0x7d8] sm:$0xff]
    %v2134 = vld [vmem:[#allocation7 + $0x7e0] sm:$0xff]
    %v2135 = vld [vmem:[#allocation7 + $0x7e8] sm:$0xff]
    %v2136 = vld [vmem:[#allocation7 + $0x7f0] sm:$0xff]
    %v2137 = vld [vmem:[#allocation7 + $0x7f8] sm:$0xff]
    %2138 = vmatpush.msra.mxu0 %v2134
    %2139 = vmatpush.msra.mxu0 %v2130
    %2140 = vmatpush.msra.mxu0 %v2126
    %2141 = vmatpush.msra.mxu0 %v2122
    %2142 = vmatpush.msra.mxu0 %v2118
    %2143 = vmatpush.msra.mxu0 %v2114
    %2144 = vmatpush.msra.mxu0 %v2110
    %2145 = vmatpush.msra.mxu0 %v2106
    %2146 = vmatpush.msra.mxu0 %v2102
    %2147 = vmatpush.msra.mxu0 %v2098
    %2148 = vmatpush.msra.mxu0 %v2094
    %2149 = vmatpush.msra.mxu0 %v2090
    %2150 = vmatpush.msra.mxu0 %v2086
    %2151 = vmatpush.msra.mxu0 %v2082
    %2152 = vmatpush.msra.mxu0 %v2078
    %2153 = vmatpush.msra.mxu0 %v2074
    %2154 = vmatmul.f32.gmra.mxu0 %v1897
    %v2155 = vpop.f32.mrf.mxu0
    %v2156 = vadd.f32 0.0, %v2155
    %2157 = vmatmul.f32.gmra.mxu0 %v1898
    %v2158 = vpop.f32.mrf.mxu0
    %v2159 = vadd.f32 0.0, %v2158
    %2160 = vdwg.mxu0
    %2161 = vmatpush.msra.mxu0 %v2135
    %2162 = vmatpush.msra.mxu0 %v2131
    %2163 = vmatpush.msra.mxu0 %v2127
    %2164 = vmatpush.msra.mxu0 %v2123
    %2165 = vmatpush.msra.mxu0 %v2119
    %2166 = vmatpush.msra.mxu0 %v2115
    %2167 = vmatpush.msra.mxu0 %v2111
    %2168 = vmatpush.msra.mxu0 %v2107
    %2169 = vmatpush.msra.mxu0 %v2103
    %2170 = vmatpush.msra.mxu0 %v2099
    %2171 = vmatpush.msra.mxu0 %v2095
    %2172 = vmatpush.msra.mxu0 %v2091
    %2173 = vmatpush.msra.mxu0 %v2087
    %2174 = vmatpush.msra.mxu0 %v2083
    %2175 = vmatpush.msra.mxu0 %v2079
    %2176 = vmatpush.msra.mxu0 %v2075
    %2177 = vmatmul.f32.gmra.mxu0 %v1897
    %v2178 = vpop.f32.mrf.mxu0
    %v2179 = vadd.f32 0.0, %v2178
    %2180 = vmatmul.f32.gmra.mxu0 %v1898
    %v2181 = vpop.f32.mrf.mxu0
    %v2182 = vadd.f32 0.0, %v2181
    %2183 = vdwg.mxu0
    %2184 = vmatpush.msra.mxu0 %v2136
    %2185 = vmatpush.msra.mxu0 %v2132
    %2186 = vmatpush.msra.mxu0 %v2128
    %2187 = vmatpush.msra.mxu0 %v2124
    %2188 = vmatpush.msra.mxu0 %v2120
    %2189 = vmatpush.msra.mxu0 %v2116
    %2190 = vmatpush.msra.mxu0 %v2112
    %2191 = vmatpush.msra.mxu0 %v2108
    %2192 = vmatpush.msra.mxu0 %v2104
    %2193 = vmatpush.msra.mxu0 %v2100
    %2194 = vmatpush.msra.mxu0 %v2096
    %2195 = vmatpush.msra.mxu0 %v2092
    %2196 = vmatpush.msra.mxu0 %v2088
    %2197 = vmatpush.msra.mxu0 %v2084
    %2198 = vmatpush.msra.mxu0 %v2080
    %2199 = vmatpush.msra.mxu0 %v2076
    %2200 = vmatmul.f32.gmra.mxu0 %v1897
    %v2201 = vpop.f32.mrf.mxu0
    %v2202 = vadd.f32 0.0, %v2201
    %2203 = vmatmul.f32.gmra.mxu0 %v1898
    %v2204 = vpop.f32.mrf.mxu0
    %v2205 = vadd.f32 0.0, %v2204
    %2206 = vdwg.mxu0
    %2207 = vmatpush.msra.mxu0 %v2137
    %2208 = vmatpush.msra.mxu0 %v2133
    %2209 = vmatpush.msra.mxu0 %v2129
    %2210 = vmatpush.msra.mxu0 %v2125
    %2211 = vmatpush.msra.mxu0 %v2121
    %2212 = vmatpush.msra.mxu0 %v2117
    %2213 = vmatpush.msra.mxu0 %v2113
    %2214 = vmatpush.msra.mxu0 %v2109
    %2215 = vmatpush.msra.mxu0 %v2105
    %2216 = vmatpush.msra.mxu0 %v2101
    %2217 = vmatpush.msra.mxu0 %v2097
    %2218 = vmatpush.msra.mxu0 %v2093
    %2219 = vmatpush.msra.mxu0 %v2089
    %2220 = vmatpush.msra.mxu0 %v2085
    %2221 = vmatpush.msra.mxu0 %v2081
    %2222 = vmatpush.msra.mxu0 %v2077
    %2223 = vmatmul.f32.gmra.mxu0 %v1897
    %v2224 = vpop.f32.mrf.mxu0
    %v2225 = vadd.f32 0.0, %v2224
    %2226 = vmatmul.f32.gmra.mxu0 %v1898
    %v2227 = vpop.f32.mrf.mxu0
    %v2228 = vadd.f32 0.0, %v2227
    %2229 = vdwg.mxu0
    %2230 = vst [vmem:[#allocation5] sm:$0xff] %v2156
    %2231 = vst [vmem:[#allocation5 + $0x8] sm:$0xff] %v2179
    %2232 = vst [vmem:[#allocation5 + $0x10] sm:$0xff] %v2202
    %2233 = vst [vmem:[#allocation5 + $0x18] sm:$0xff] %v2225
    %2234 = vst [vmem:[#allocation5 + $0x20] sm:$0xff] %v2159
    %2235 = vst [vmem:[#allocation5 + $0x28] sm:$0xff] %v2182
    %2236 = vst [vmem:[#allocation5 + $0x30] sm:$0xff] %v2205
    %2237 = vst [vmem:[#allocation5 + $0x38] sm:$0xff] %v2228
    %v2238 = vld [vmem:[#allocation7 + $0x800] sm:$0xff]
    %v2239 = vld [vmem:[#allocation7 + $0x808] sm:$0xff]
    %v2240 = vld [vmem:[#allocation7 + $0x810] sm:$0xff]
    %v2241 = vld [vmem:[#allocation7 + $0x818] sm:$0xff]
    %v2242 = vld [vmem:[#allocation7 + $0x820] sm:$0xff]
    %v2243 = vld [vmem:[#allocation7 + $0x828] sm:$0xff]
    %v2244 = vld [vmem:[#allocation7 + $0x830] sm:$0xff]
    %v2245 = vld [vmem:[#allocation7 + $0x838] sm:$0xff]
    %v2246 = vld [vmem:[#allocation7 + $0x840] sm:$0xff]
    %v2247 = vld [vmem:[#allocation7 + $0x848] sm:$0xff]
    %v2248 = vld [vmem:[#allocation7 + $0x850] sm:$0xff]
    %v2249 = vld [vmem:[#allocation7 + $0x858] sm:$0xff]
    %v2250 = vld [vmem:[#allocation7 + $0x860] sm:$0xff]
    %v2251 = vld [vmem:[#allocation7 + $0x868] sm:$0xff]
    %v2252 = vld [vmem:[#allocation7 + $0x870] sm:$0xff]
    %v2253 = vld [vmem:[#allocation7 + $0x878] sm:$0xff]
    %v2254 = vld [vmem:[#allocation7 + $0x880] sm:$0xff]
    %v2255 = vld [vmem:[#allocation7 + $0x888] sm:$0xff]
    %v2256 = vld [vmem:[#allocation7 + $0x890] sm:$0xff]
    %v2257 = vld [vmem:[#allocation7 + $0x898] sm:$0xff]
    %v2258 = vld [vmem:[#allocation7 + $0x8a0] sm:$0xff]
    %v2259 = vld [vmem:[#allocation7 + $0x8a8] sm:$0xff]
    %v2260 = vld [vmem:[#allocation7 + $0x8b0] sm:$0xff]
    %v2261 = vld [vmem:[#allocation7 + $0x8b8] sm:$0xff]
    %v2262 = vld [vmem:[#allocation7 + $0x8c0] sm:$0xff]
    %v2263 = vld [vmem:[#allocation7 + $0x8c8] sm:$0xff]
    %v2264 = vld [vmem:[#allocation7 + $0x8d0] sm:$0xff]
    %v2265 = vld [vmem:[#allocation7 + $0x8d8] sm:$0xff]
    %v2266 = vld [vmem:[#allocation7 + $0x8e0] sm:$0xff]
    %v2267 = vld [vmem:[#allocation7 + $0x8e8] sm:$0xff]
    %v2268 = vld [vmem:[#allocation7 + $0x8f0] sm:$0xff]
    %v2269 = vld [vmem:[#allocation7 + $0x8f8] sm:$0xff]
    %v2270 = vld [vmem:[#allocation7 + $0x900] sm:$0xff]
    %v2271 = vld [vmem:[#allocation7 + $0x908] sm:$0xff]
    %v2272 = vld [vmem:[#allocation7 + $0x910] sm:$0xff]
    %v2273 = vld [vmem:[#allocation7 + $0x918] sm:$0xff]
    %v2274 = vld [vmem:[#allocation7 + $0x920] sm:$0xff]
    %v2275 = vld [vmem:[#allocation7 + $0x928] sm:$0xff]
    %v2276 = vld [vmem:[#allocation7 + $0x930] sm:$0xff]
    %v2277 = vld [vmem:[#allocation7 + $0x938] sm:$0xff]
    %v2278 = vld [vmem:[#allocation7 + $0x940] sm:$0xff]
    %v2279 = vld [vmem:[#allocation7 + $0x948] sm:$0xff]
    %v2280 = vld [vmem:[#allocation7 + $0x950] sm:$0xff]
    %v2281 = vld [vmem:[#allocation7 + $0x958] sm:$0xff]
    %v2282 = vld [vmem:[#allocation7 + $0x960] sm:$0xff]
    %v2283 = vld [vmem:[#allocation7 + $0x968] sm:$0xff]
    %v2284 = vld [vmem:[#allocation7 + $0x970] sm:$0xff]
    %v2285 = vld [vmem:[#allocation7 + $0x978] sm:$0xff]
    %v2286 = vld [vmem:[#allocation7 + $0x980] sm:$0xff]
    %v2287 = vld [vmem:[#allocation7 + $0x988] sm:$0xff]
    %v2288 = vld [vmem:[#allocation7 + $0x990] sm:$0xff]
    %v2289 = vld [vmem:[#allocation7 + $0x998] sm:$0xff]
    %v2290 = vld [vmem:[#allocation7 + $0x9a0] sm:$0xff]
    %v2291 = vld [vmem:[#allocation7 + $0x9a8] sm:$0xff]
    %v2292 = vld [vmem:[#allocation7 + $0x9b0] sm:$0xff]
    %v2293 = vld [vmem:[#allocation7 + $0x9b8] sm:$0xff]
    %v2294 = vld [vmem:[#allocation7 + $0x9c0] sm:$0xff]
    %v2295 = vld [vmem:[#allocation7 + $0x9c8] sm:$0xff]
    %v2296 = vld [vmem:[#allocation7 + $0x9d0] sm:$0xff]
    %v2297 = vld [vmem:[#allocation7 + $0x9d8] sm:$0xff]
    %v2298 = vld [vmem:[#allocation7 + $0x9e0] sm:$0xff]
    %v2299 = vld [vmem:[#allocation7 + $0x9e8] sm:$0xff]
    %v2300 = vld [vmem:[#allocation7 + $0x9f0] sm:$0xff]
    %v2301 = vld [vmem:[#allocation7 + $0x9f8] sm:$0xff]
    %v2302 = vld [vmem:[#allocation4] sm:$0x3]
    %v2303 = vld [vmem:[#allocation4 + $0x8] sm:$0x3]
    %v2304 = vld [vmem:[#allocation4 + $0x10] sm:$0x3]
    %v2305 = vld [vmem:[#allocation4 + $0x18] sm:$0x3]
    %v2306 = vld [vmem:[#allocation5 + $0x20] sm:$0xc0]
    %v2307 = vld [vmem:[#allocation5 + $0x28] sm:$0xc0]
    %v2308 = vld [vmem:[#allocation5 + $0x30] sm:$0xc0]
    %v2309 = vld [vmem:[#allocation5 + $0x38] sm:$0xc0]
    %v2314 = vrot.slane %v2306, 6
    %v2315 = vrot.slane %v2307, 6
    %v2316 = vrot.slane %v2308, 6
    %v2317 = vrot.slane %v2309, 6
    %v2322 = vadd.f32 %v2302, %v2314
    %v2323 = vadd.f32 %v2303, %v2315
    %v2324 = vadd.f32 %v2304, %v2316
    %v2325 = vadd.f32 %v2305, %v2317
    %2326 = vmatpush.msra.mxu0 %v2298
    %2327 = vmatpush.msra.mxu0 %v2294
    %2328 = vmatpush.msra.mxu0 %v2290
    %2329 = vmatpush.msra.mxu0 %v2286
    %2330 = vmatpush.msra.mxu0 %v2282
    %2331 = vmatpush.msra.mxu0 %v2278
    %2332 = vmatpush.msra.mxu0 %v2274
    %2333 = vmatpush.msra.mxu0 %v2270
    %2334 = vmatpush.msra.mxu0 %v2266
    %2335 = vmatpush.msra.mxu0 %v2262
    %2336 = vmatpush.msra.mxu0 %v2258
    %2337 = vmatpush.msra.mxu0 %v2254
    %2338 = vmatpush.msra.mxu0 %v2250
    %2339 = vmatpush.msra.mxu0 %v2246
    %2340 = vmatpush.msra.mxu0 %v2242
    %2341 = vmatpush.msra.mxu0 %v2238
    %2342 = vmatmul.f32.gmra.mxu0 0.0
    %v2343 = vpop.f32.mrf.mxu0
    %v2344 = vadd.f32 0.0, %v2343
    %2345 = vdwg.mxu0
    %2346 = vmatpush.msra.mxu0 %v2299
    %2347 = vmatpush.msra.mxu0 %v2295
    %2348 = vmatpush.msra.mxu0 %v2291
    %2349 = vmatpush.msra.mxu0 %v2287
    %2350 = vmatpush.msra.mxu0 %v2283
    %2351 = vmatpush.msra.mxu0 %v2279
    %2352 = vmatpush.msra.mxu0 %v2275
    %2353 = vmatpush.msra.mxu0 %v2271
    %2354 = vmatpush.msra.mxu0 %v2267
    %2355 = vmatpush.msra.mxu0 %v2263
    %2356 = vmatpush.msra.mxu0 %v2259
    %2357 = vmatpush.msra.mxu0 %v2255
    %2358 = vmatpush.msra.mxu0 %v2251
    %2359 = vmatpush.msra.mxu0 %v2247
    %2360 = vmatpush.msra.mxu0 %v2243
    %2361 = vmatpush.msra.mxu0 %v2239
    %2362 = vmatmul.f32.gmra.mxu0 0.0
    %v2363 = vpop.f32.mrf.mxu0
    %v2364 = vadd.f32 0.0, %v2363
    %2365 = vdwg.mxu0
    %2366 = vmatpush.msra.mxu0 %v2300
    %2367 = vmatpush.msra.mxu0 %v2296
    %2368 = vmatpush.msra.mxu0 %v2292
    %2369 = vmatpush.msra.mxu0 %v2288
    %2370 = vmatpush.msra.mxu0 %v2284
    %2371 = vmatpush.msra.mxu0 %v2280
    %2372 = vmatpush.msra.mxu0 %v2276
    %2373 = vmatpush.msra.mxu0 %v2272
    %2374 = vmatpush.msra.mxu0 %v2268
    %2375 = vmatpush.msra.mxu0 %v2264
    %2376 = vmatpush.msra.mxu0 %v2260
    %2377 = vmatpush.msra.mxu0 %v2256
    %2378 = vmatpush.msra.mxu0 %v2252
    %2379 = vmatpush.msra.mxu0 %v2248
    %2380 = vmatpush.msra.mxu0 %v2244
    %2381 = vmatpush.msra.mxu0 %v2240
    %2382 = vmatmul.f32.gmra.mxu0 0.0
    %v2383 = vpop.f32.mrf.mxu0
    %v2384 = vadd.f32 0.0, %v2383
    %2385 = vdwg.mxu0
    %2386 = vmatpush.msra.mxu0 %v2301
    %2387 = vmatpush.msra.mxu0 %v2297
    %2388 = vmatpush.msra.mxu0 %v2293
    %2389 = vmatpush.msra.mxu0 %v2289
    %2390 = vmatpush.msra.mxu0 %v2285
    %2391 = vmatpush.msra.mxu0 %v2281
    %2392 = vmatpush.msra.mxu0 %v2277
    %2393 = vmatpush.msra.mxu0 %v2273
    %2394 = vmatpush.msra.mxu0 %v2269
    %2395 = vmatpush.msra.mxu0 %v2265
    %2396 = vmatpush.msra.mxu0 %v2261
    %2397 = vmatpush.msra.mxu0 %v2257
    %2398 = vmatpush.msra.mxu0 %v2253
    %2399 = vmatpush.msra.mxu0 %v2249
    %2400 = vmatpush.msra.mxu0 %v2245
    %2401 = vmatpush.msra.mxu0 %v2241
    %2402 = vmatmul.f32.gmra.mxu0 0.0
    %v2403 = vpop.f32.mrf.mxu0
    %v2404 = vadd.f32 0.0, %v2403
    %2405 = vdwg.mxu0
    %v2406 = vadd.f32 %v2322, %v2344
    %v2407 = vadd.f32 %v2323, %v2364
    %v2408 = vadd.f32 %v2324, %v2384
    %v2409 = vadd.f32 %v2325, %v2404
    %v2410 = vxor.u32 %v2406, 2147483648
    %v2411 = vxor.u32 %v2407, 2147483648
    %v2412 = vxor.u32 %v2408, 2147483648
    %v2413 = vmul.f32 %v2410, 1.442695
    %v2414 = vpow.pop %v2413
    %v2415 = vmul.f32 %v2411, 1.442695
    %v2416 = vpow.pop %v2415
    %v2417 = vmul.f32 %v2412, 1.442695
    %v2418 = vpow.pop %v2417
    %v2419 = vadd.f32 %v2414, 1.0
    %v2420 = vadd.f32 %v2416, 1.0
    %v2421 = vadd.f32 %v2418, 1.0
    %v2422 = vrcp.pop %v2419
    %v2423 = vmul.f32 %v2419, %v2422
    %v2424 = vsub.f32 1.0, %v2423
    %v2425 = vmul.f32 %v2422, %v2424
    %v2426 = vadd.f32 %v2422, %v2425
    %vm2427 = vweird.f32 %v2419
    %vm2428 = vweird.f32 %v2422
    %vm2429 = vmor %vm2427, %vm2428
    %v2430 = vsel %vm2429, %v2422, %v2426
    %v2431 = vand.u32 2147483647, %v2419
    %vm2432 = vcmp.eq.f32.partialorder %v2431, 8.507059e+37
    %v2433 = vand.u32 %v2419, 2147483648
    %v2434 = vor.u32 1.1754944e-38, %v2433
    %v2435 = vsel %vm2432, %v2434, %v2430
    %v2436 = vmul.f32 1.0, %v2435
    %v2437 = vrcp.pop %v2420
    %v2438 = vmul.f32 %v2420, %v2437
    %v2439 = vsub.f32 1.0, %v2438
    %v2440 = vmul.f32 %v2437, %v2439
    %v2441 = vadd.f32 %v2437, %v2440
    %vm2442 = vweird.f32 %v2420
    %vm2443 = vweird.f32 %v2437
    %vm2444 = vmor %vm2442, %vm2443
    %v2445 = vsel %vm2444, %v2437, %v2441
    %v2446 = vand.u32 2147483647, %v2420
    %vm2447 = vcmp.eq.f32.partialorder %v2446, 8.507059e+37
    %v2448 = vand.u32 %v2420, 2147483648
    %v2449 = vor.u32 1.1754944e-38, %v2448
    %v2450 = vsel %vm2447, %v2449, %v2445
    %v2451 = vmul.f32 1.0, %v2450
    %v2452 = vrcp.pop %v2421
    %v2453 = vmul.f32 %v2421, %v2452
    %v2454 = vsub.f32 1.0, %v2453
    %v2455 = vmul.f32 %v2452, %v2454
    %v2456 = vadd.f32 %v2452, %v2455
    %vm2457 = vweird.f32 %v2421
    %vm2458 = vweird.f32 %v2452
    %vm2459 = vmor %vm2457, %vm2458
    %v2460 = vsel %vm2459, %v2452, %v2456
    %v2461 = vand.u32 2147483647, %v2421
    %vm2462 = vcmp.eq.f32.partialorder %v2461, 8.507059e+37
    %v2463 = vand.u32 %v2421, 2147483648
    %v2464 = vor.u32 1.1754944e-38, %v2463
    %v2465 = vsel %vm2462, %v2464, %v2460
    %v2466 = vmul.f32 1.0, %v2465
    %v2467 = vtanh.pop %v2409
    %v2468 = vmul.f32 %v2451, 0.0
    %v2469 = vmul.f32 %v2436, %v2467
    %v2470 = vadd.f32 %v2468, %v2469
    %v2471 = vtanh.pop %v2470
    %v2472 = vmul.f32 %v2466, %v2471
    %2473 = vst [vmem:[#allocation3] sm:$0x3] %v2472
    %v2474 = vld [vmem:[#allocation4] sm:$0xc]
    %v2475 = vld [vmem:[#allocation4 + $0x8] sm:$0xc]
    %v2476 = vld [vmem:[#allocation4 + $0x10] sm:$0xc]
    %v2477 = vld [vmem:[#allocation4 + $0x18] sm:$0xc]
    %v2478 = vld [vmem:[#allocation5 + $0x20] sm:$0x30]
    %v2479 = vld [vmem:[#allocation5 + $0x28] sm:$0x30]
    %v2480 = vld [vmem:[#allocation5 + $0x30] sm:$0x30]
    %v2481 = vld [vmem:[#allocation5 + $0x38] sm:$0x30]
    %v2486 = vrot.slane %v2478, 2
    %v2487 = vrot.slane %v2479, 2
    %v2488 = vrot.slane %v2480, 2
    %v2489 = vrot.slane %v2481, 2
    %v2494 = vadd.f32 %v2474, %v2486
    %v2495 = vadd.f32 %v2475, %v2487
    %v2496 = vadd.f32 %v2476, %v2488
    %v2497 = vadd.f32 %v2477, %v2489
    %2498 = vmatpush.msra.mxu0 %v2298
    %2499 = vmatpush.msra.mxu0 %v2294
    %2500 = vmatpush.msra.mxu0 %v2290
    %2501 = vmatpush.msra.mxu0 %v2286
    %2502 = vmatpush.msra.mxu0 %v2282
    %2503 = vmatpush.msra.mxu0 %v2278
    %2504 = vmatpush.msra.mxu0 %v2274
    %2505 = vmatpush.msra.mxu0 %v2270
    %2506 = vmatpush.msra.mxu0 %v2266
    %2507 = vmatpush.msra.mxu0 %v2262
    %2508 = vmatpush.msra.mxu0 %v2258
    %2509 = vmatpush.msra.mxu0 %v2254
    %2510 = vmatpush.msra.mxu0 %v2250
    %2511 = vmatpush.msra.mxu0 %v2246
    %2512 = vmatpush.msra.mxu0 %v2242
    %2513 = vmatpush.msra.mxu0 %v2238
    %2514 = vmatmul.f32.gmra.mxu0 %v2472
    %v2515 = vpop.f32.mrf.mxu0
    %v2516 = vadd.f32 0.0, %v2515
    %2517 = vdwg.mxu0
    %2518 = vmatpush.msra.mxu0 %v2299
    %2519 = vmatpush.msra.mxu0 %v2295
    %2520 = vmatpush.msra.mxu0 %v2291
    %2521 = vmatpush.msra.mxu0 %v2287
    %2522 = vmatpush.msra.mxu0 %v2283
    %2523 = vmatpush.msra.mxu0 %v2279
    %2524 = vmatpush.msra.mxu0 %v2275
    %2525 = vmatpush.msra.mxu0 %v2271
    %2526 = vmatpush.msra.mxu0 %v2267
    %2527 = vmatpush.msra.mxu0 %v2263
    %2528 = vmatpush.msra.mxu0 %v2259
    %2529 = vmatpush.msra.mxu0 %v2255
    %2530 = vmatpush.msra.mxu0 %v2251
    %2531 = vmatpush.msra.mxu0 %v2247
    %2532 = vmatpush.msra.mxu0 %v2243
    %2533 = vmatpush.msra.mxu0 %v2239
    %2534 = vmatmul.f32.gmra.mxu0 %v2472
    %v2535 = vpop.f32.mrf.mxu0
    %v2536 = vadd.f32 0.0, %v2535
    %2537 = vdwg.mxu0
    %2538 = vmatpush.msra.mxu0 %v2300
    %2539 = vmatpush.msra.mxu0 %v2296
    %2540 = vmatpush.msra.mxu0 %v2292
    %2541 = vmatpush.msra.mxu0 %v2288
    %2542 = vmatpush.msra.mxu0 %v2284
    %2543 = vmatpush.msra.mxu0 %v2280
    %2544 = vmatpush.msra.mxu0 %v2276
    %2545 = vmatpush.msra.mxu0 %v2272
    %2546 = vmatpush.msra.mxu0 %v2268
    %2547 = vmatpush.msra.mxu0 %v2264
    %2548 = vmatpush.msra.mxu0 %v2260
    %2549 = vmatpush.msra.mxu0 %v2256
    %2550 = vmatpush.msra.mxu0 %v2252
    %2551 = vmatpush.msra.mxu0 %v2248
    %2552 = vmatpush.msra.mxu0 %v2244
    %2553 = vmatpush.msra.mxu0 %v2240
    %2554 = vmatmul.f32.gmra.mxu0 %v2472
    %v2555 = vpop.f32.mrf.mxu0
    %v2556 = vadd.f32 0.0, %v2555
    %2557 = vdwg.mxu0
    %2558 = vmatpush.msra.mxu0 %v2301
    %2559 = vmatpush.msra.mxu0 %v2297
    %2560 = vmatpush.msra.mxu0 %v2293
    %2561 = vmatpush.msra.mxu0 %v2289
    %2562 = vmatpush.msra.mxu0 %v2285
    %2563 = vmatpush.msra.mxu0 %v2281
    %2564 = vmatpush.msra.mxu0 %v2277
    %2565 = vmatpush.msra.mxu0 %v2273
    %2566 = vmatpush.msra.mxu0 %v2269
    %2567 = vmatpush.msra.mxu0 %v2265
    %2568 = vmatpush.msra.mxu0 %v2261
    %2569 = vmatpush.msra.mxu0 %v2257
    %2570 = vmatpush.msra.mxu0 %v2253
    %2571 = vmatpush.msra.mxu0 %v2249
    %2572 = vmatpush.msra.mxu0 %v2245
    %2573 = vmatpush.msra.mxu0 %v2241
    %2574 = vmatmul.f32.gmra.mxu0 %v2472
    %v2575 = vpop.f32.mrf.mxu0
    %v2576 = vadd.f32 0.0, %v2575
    %2577 = vdwg.mxu0
    %v2582 = vrot.slane %v2516, 6
    %v2583 = vrot.slane %v2536, 6
    %v2584 = vrot.slane %v2556, 6
    %v2585 = vrot.slane %v2576, 6
    %v2590 = vadd.f32 %v2494, %v2582
    %v2591 = vadd.f32 %v2495, %v2583
    %v2592 = vadd.f32 %v2496, %v2584
    %v2593 = vadd.f32 %v2497, %v2585
    %v2594 = vxor.u32 %v2590, 2147483648
    %v2595 = vxor.u32 %v2591, 2147483648
    %v2596 = vxor.u32 %v2592, 2147483648
    %v2597 = vmul.f32 %v2594, 1.442695
    %v2598 = vpow.pop %v2597
    %v2599 = vmul.f32 %v2595, 1.442695
    %v2600 = vpow.pop %v2599
    %v2601 = vmul.f32 %v2596, 1.442695
    %v2602 = vpow.pop %v2601
    %v2603 = vadd.f32 %v2598, 1.0
    %v2604 = vadd.f32 %v2600, 1.0
    %v2605 = vadd.f32 %v2602, 1.0
    %v2606 = vrcp.pop %v2603
    %v2607 = vmul.f32 %v2603, %v2606
    %v2608 = vsub.f32 1.0, %v2607
    %v2609 = vmul.f32 %v2606, %v2608
    %v2610 = vadd.f32 %v2606, %v2609
    %vm2611 = vweird.f32 %v2603
    %vm2612 = vweird.f32 %v2606
    %vm2613 = vmor %vm2611, %vm2612
    %v2614 = vsel %vm2613, %v2606, %v2610
    %v2615 = vand.u32 2147483647, %v2603
    %vm2616 = vcmp.eq.f32.partialorder %v2615, 8.507059e+37
    %v2617 = vand.u32 %v2603, 2147483648
    %v2618 = vor.u32 1.1754944e-38, %v2617
    %v2619 = vsel %vm2616, %v2618, %v2614
    %v2620 = vmul.f32 1.0, %v2619
    %v2621 = vrcp.pop %v2604
    %v2622 = vmul.f32 %v2604, %v2621
    %v2623 = vsub.f32 1.0, %v2622
    %v2624 = vmul.f32 %v2621, %v2623
    %v2625 = vadd.f32 %v2621, %v2624
    %vm2626 = vweird.f32 %v2604
    %vm2627 = vweird.f32 %v2621
    %vm2628 = vmor %vm2626, %vm2627
    %v2629 = vsel %vm2628, %v2621, %v2625
    %v2630 = vand.u32 2147483647, %v2604
    %vm2631 = vcmp.eq.f32.partialorder %v2630, 8.507059e+37
    %v2632 = vand.u32 %v2604, 2147483648
    %v2633 = vor.u32 1.1754944e-38, %v2632
    %v2634 = vsel %vm2631, %v2633, %v2629
    %v2635 = vmul.f32 1.0, %v2634
    %v2636 = vrcp.pop %v2605
    %v2637 = vmul.f32 %v2605, %v2636
    %v2638 = vsub.f32 1.0, %v2637
    %v2639 = vmul.f32 %v2636, %v2638
    %v2640 = vadd.f32 %v2636, %v2639
    %vm2641 = vweird.f32 %v2605
    %vm2642 = vweird.f32 %v2636
    %vm2643 = vmor %vm2641, %vm2642
    %v2644 = vsel %vm2643, %v2636, %v2640
    %v2645 = vand.u32 2147483647, %v2605
    %vm2646 = vcmp.eq.f32.partialorder %v2645, 8.507059e+37
    %v2647 = vand.u32 %v2605, 2147483648
    %v2648 = vor.u32 1.1754944e-38, %v2647
    %v2649 = vsel %vm2646, %v2648, %v2644
    %v2650 = vmul.f32 1.0, %v2649
    %v2651 = vtanh.pop %v2593
    %v2653 = vrot.slane %v2470, 6
    %v2655 = vmul.f32 %v2635, %v2653
    %v2656 = vmul.f32 %v2620, %v2651
    %v2657 = vadd.f32 %v2655, %v2656
    %v2658 = vtanh.pop %v2657
    %v2659 = vmul.f32 %v2650, %v2658
    %2660 = vst [vmem:[#allocation3] sm:$0xc] %v2659
    %v2661 = vld [vmem:[#allocation4] sm:$0x30]
    %v2662 = vld [vmem:[#allocation4 + $0x8] sm:$0x30]
    %v2663 = vld [vmem:[#allocation4 + $0x10] sm:$0x30]
    %v2664 = vld [vmem:[#allocation4 + $0x18] sm:$0x30]
    %v2665 = vld [vmem:[#allocation5 + $0x20] sm:$0xc]
    %v2666 = vld [vmem:[#allocation5 + $0x28] sm:$0xc]
    %v2667 = vld [vmem:[#allocation5 + $0x30] sm:$0xc]
    %v2668 = vld [vmem:[#allocation5 + $0x38] sm:$0xc]
    %v2673 = vrot.slane %v2665, 6
    %v2674 = vrot.slane %v2666, 6
    %v2675 = vrot.slane %v2667, 6
    %v2676 = vrot.slane %v2668, 6
    %v2681 = vadd.f32 %v2661, %v2673
    %v2682 = vadd.f32 %v2662, %v2674
    %v2683 = vadd.f32 %v2663, %v2675
    %v2684 = vadd.f32 %v2664, %v2676
    %v2686 = vrot.slane %v2659, 2
    %2688 = vmatpush.msra.mxu0 %v2298
    %2689 = vmatpush.msra.mxu0 %v2294
    %2690 = vmatpush.msra.mxu0 %v2290
    %2691 = vmatpush.msra.mxu0 %v2286
    %2692 = vmatpush.msra.mxu0 %v2282
    %2693 = vmatpush.msra.mxu0 %v2278
    %2694 = vmatpush.msra.mxu0 %v2274
    %2695 = vmatpush.msra.mxu0 %v2270
    %2696 = vmatpush.msra.mxu0 %v2266
    %2697 = vmatpush.msra.mxu0 %v2262
    %2698 = vmatpush.msra.mxu0 %v2258
    %2699 = vmatpush.msra.mxu0 %v2254
    %2700 = vmatpush.msra.mxu0 %v2250
    %2701 = vmatpush.msra.mxu0 %v2246
    %2702 = vmatpush.msra.mxu0 %v2242
    %2703 = vmatpush.msra.mxu0 %v2238
    %2704 = vmatmul.f32.gmra.mxu0 %v2686
    %v2705 = vpop.f32.mrf.mxu0
    %v2706 = vadd.f32 0.0, %v2705
    %2707 = vdwg.mxu0
    %2708 = vmatpush.msra.mxu0 %v2299
    %2709 = vmatpush.msra.mxu0 %v2295
    %2710 = vmatpush.msra.mxu0 %v2291
    %2711 = vmatpush.msra.mxu0 %v2287
    %2712 = vmatpush.msra.mxu0 %v2283
    %2713 = vmatpush.msra.mxu0 %v2279
    %2714 = vmatpush.msra.mxu0 %v2275
    %2715 = vmatpush.msra.mxu0 %v2271
    %2716 = vmatpush.msra.mxu0 %v2267
    %2717 = vmatpush.msra.mxu0 %v2263
    %2718 = vmatpush.msra.mxu0 %v2259
    %2719 = vmatpush.msra.mxu0 %v2255
    %2720 = vmatpush.msra.mxu0 %v2251
    %2721 = vmatpush.msra.mxu0 %v2247
    %2722 = vmatpush.msra.mxu0 %v2243
    %2723 = vmatpush.msra.mxu0 %v2239
    %2724 = vmatmul.f32.gmra.mxu0 %v2686
    %v2725 = vpop.f32.mrf.mxu0
    %v2726 = vadd.f32 0.0, %v2725
    %2727 = vdwg.mxu0
    %2728 = vmatpush.msra.mxu0 %v2300
    %2729 = vmatpush.msra.mxu0 %v2296
    %2730 = vmatpush.msra.mxu0 %v2292
    %2731 = vmatpush.msra.mxu0 %v2288
    %2732 = vmatpush.msra.mxu0 %v2284
    %2733 = vmatpush.msra.mxu0 %v2280
    %2734 = vmatpush.msra.mxu0 %v2276
    %2735 = vmatpush.msra.mxu0 %v2272
    %2736 = vmatpush.msra.mxu0 %v2268
    %2737 = vmatpush.msra.mxu0 %v2264
    %2738 = vmatpush.msra.mxu0 %v2260
    %2739 = vmatpush.msra.mxu0 %v2256
    %2740 = vmatpush.msra.mxu0 %v2252
    %2741 = vmatpush.msra.mxu0 %v2248
    %2742 = vmatpush.msra.mxu0 %v2244
    %2743 = vmatpush.msra.mxu0 %v2240
    %2744 = vmatmul.f32.gmra.mxu0 %v2686
    %v2745 = vpop.f32.mrf.mxu0
    %v2746 = vadd.f32 0.0, %v2745
    %2747 = vdwg.mxu0
    %2748 = vmatpush.msra.mxu0 %v2301
    %2749 = vmatpush.msra.mxu0 %v2297
    %2750 = vmatpush.msra.mxu0 %v2293
    %2751 = vmatpush.msra.mxu0 %v2289
    %2752 = vmatpush.msra.mxu0 %v2285
    %2753 = vmatpush.msra.mxu0 %v2281
    %2754 = vmatpush.msra.mxu0 %v2277
    %2755 = vmatpush.msra.mxu0 %v2273
    %2756 = vmatpush.msra.mxu0 %v2269
    %2757 = vmatpush.msra.mxu0 %v2265
    %2758 = vmatpush.msra.mxu0 %v2261
    %2759 = vmatpush.msra.mxu0 %v2257
    %2760 = vmatpush.msra.mxu0 %v2253
    %2761 = vmatpush.msra.mxu0 %v2249
    %2762 = vmatpush.msra.mxu0 %v2245
    %2763 = vmatpush.msra.mxu0 %v2241
    %2764 = vmatmul.f32.gmra.mxu0 %v2686
    %v2765 = vpop.f32.mrf.mxu0
    %v2766 = vadd.f32 0.0, %v2765
    %2767 = vdwg.mxu0
    %v2772 = vrot.slane %v2706, 4
    %v2773 = vrot.slane %v2726, 4
    %v2774 = vrot.slane %v2746, 4
    %v2775 = vrot.slane %v2766, 4
    %v2780 = vadd.f32 %v2681, %v2772
    %v2781 = vadd.f32 %v2682, %v2773
    %v2782 = vadd.f32 %v2683, %v2774
    %v2783 = vadd.f32 %v2684, %v2775
    %v2784 = vxor.u32 %v2780, 2147483648
    %v2785 = vxor.u32 %v2781, 2147483648
    %v2786 = vxor.u32 %v2782, 2147483648
    %v2787 = vmul.f32 %v2784, 1.442695
    %v2788 = vpow.pop %v2787
    %v2789 = vmul.f32 %v2785, 1.442695
    %v2790 = vpow.pop %v2789
    %v2791 = vmul.f32 %v2786, 1.442695
    %v2792 = vpow.pop %v2791
    %v2793 = vadd.f32 %v2788, 1.0
    %v2794 = vadd.f32 %v2790, 1.0
    %v2795 = vadd.f32 %v2792, 1.0
    %v2796 = vrcp.pop %v2793
    %v2797 = vmul.f32 %v2793, %v2796
    %v2798 = vsub.f32 1.0, %v2797
    %v2799 = vmul.f32 %v2796, %v2798
    %v2800 = vadd.f32 %v2796, %v2799
    %vm2801 = vweird.f32 %v2793
    %vm2802 = vweird.f32 %v2796
    %vm2803 = vmor %vm2801, %vm2802
    %v2804 = vsel %vm2803, %v2796, %v2800
    %v2805 = vand.u32 2147483647, %v2793
    %vm2806 = vcmp.eq.f32.partialorder %v2805, 8.507059e+37
    %v2807 = vand.u32 %v2793, 2147483648
    %v2808 = vor.u32 1.1754944e-38, %v2807
    %v2809 = vsel %vm2806, %v2808, %v2804
    %v2810 = vmul.f32 1.0, %v2809
    %v2811 = vrcp.pop %v2794
    %v2812 = vmul.f32 %v2794, %v2811
    %v2813 = vsub.f32 1.0, %v2812
    %v2814 = vmul.f32 %v2811, %v2813
    %v2815 = vadd.f32 %v2811, %v2814
    %vm2816 = vweird.f32 %v2794
    %vm2817 = vweird.f32 %v2811
    %vm2818 = vmor %vm2816, %vm2817
    %v2819 = vsel %vm2818, %v2811, %v2815
    %v2820 = vand.u32 2147483647, %v2794
    %vm2821 = vcmp.eq.f32.partialorder %v2820, 8.507059e+37
    %v2822 = vand.u32 %v2794, 2147483648
    %v2823 = vor.u32 1.1754944e-38, %v2822
    %v2824 = vsel %vm2821, %v2823, %v2819
    %v2825 = vmul.f32 1.0, %v2824
    %v2826 = vrcp.pop %v2795
    %v2827 = vmul.f32 %v2795, %v2826
    %v2828 = vsub.f32 1.0, %v2827
    %v2829 = vmul.f32 %v2826, %v2828
    %v2830 = vadd.f32 %v2826, %v2829
    %vm2831 = vweird.f32 %v2795
    %vm2832 = vweird.f32 %v2826
    %vm2833 = vmor %vm2831, %vm2832
    %v2834 = vsel %vm2833, %v2826, %v2830
    %v2835 = vand.u32 2147483647, %v2795
    %vm2836 = vcmp.eq.f32.partialorder %v2835, 8.507059e+37
    %v2837 = vand.u32 %v2795, 2147483648
    %v2838 = vor.u32 1.1754944e-38, %v2837
    %v2839 = vsel %vm2836, %v2838, %v2834
    %v2840 = vmul.f32 1.0, %v2839
    %v2841 = vtanh.pop %v2783
    %v2843 = vrot.slane %v2657, 6
    %v2845 = vmul.f32 %v2825, %v2843
    %v2846 = vmul.f32 %v2810, %v2841
    %v2847 = vadd.f32 %v2845, %v2846
    %v2848 = vtanh.pop %v2847
    %v2849 = vmul.f32 %v2840, %v2848
    %2850 = vst [vmem:[#allocation3] sm:$0x30] %v2849
    %v2851 = vld [vmem:[#allocation4] sm:$0xc0]
    %v2852 = vld [vmem:[#allocation4 + $0x8] sm:$0xc0]
    %v2853 = vld [vmem:[#allocation4 + $0x10] sm:$0xc0]
    %v2854 = vld [vmem:[#allocation4 + $0x18] sm:$0xc0]
    %v2855 = vld [vmem:[#allocation5 + $0x20] sm:$0x3]
    %v2856 = vld [vmem:[#allocation5 + $0x28] sm:$0x3]
    %v2857 = vld [vmem:[#allocation5 + $0x30] sm:$0x3]
    %v2858 = vld [vmem:[#allocation5 + $0x38] sm:$0x3]
    %v2863 = vrot.slane %v2855, 2
    %v2864 = vrot.slane %v2856, 2
    %v2865 = vrot.slane %v2857, 2
    %v2866 = vrot.slane %v2858, 2
    %v2871 = vadd.f32 %v2851, %v2863
    %v2872 = vadd.f32 %v2852, %v2864
    %v2873 = vadd.f32 %v2853, %v2865
    %v2874 = vadd.f32 %v2854, %v2866
    %v2876 = vrot.slane %v2849, 4
    %2878 = vmatpush.msra.mxu0 %v2298
    %2879 = vmatpush.msra.mxu0 %v2294
    %2880 = vmatpush.msra.mxu0 %v2290
    %2881 = vmatpush.msra.mxu0 %v2286
    %2882 = vmatpush.msra.mxu0 %v2282
    %2883 = vmatpush.msra.mxu0 %v2278
    %2884 = vmatpush.msra.mxu0 %v2274
    %2885 = vmatpush.msra.mxu0 %v2270
    %2886 = vmatpush.msra.mxu0 %v2266
    %2887 = vmatpush.msra.mxu0 %v2262
    %2888 = vmatpush.msra.mxu0 %v2258
    %2889 = vmatpush.msra.mxu0 %v2254
    %2890 = vmatpush.msra.mxu0 %v2250
    %2891 = vmatpush.msra.mxu0 %v2246
    %2892 = vmatpush.msra.mxu0 %v2242
    %2893 = vmatpush.msra.mxu0 %v2238
    %2894 = vmatmul.f32.gmra.mxu0 %v2876
    %v2895 = vpop.f32.mrf.mxu0
    %v2896 = vadd.f32 0.0, %v2895
    %2897 = vdwg.mxu0
    %2898 = vmatpush.msra.mxu0 %v2299
    %2899 = vmatpush.msra.mxu0 %v2295
    %2900 = vmatpush.msra.mxu0 %v2291
    %2901 = vmatpush.msra.mxu0 %v2287
    %2902 = vmatpush.msra.mxu0 %v2283
    %2903 = vmatpush.msra.mxu0 %v2279
    %2904 = vmatpush.msra.mxu0 %v2275
    %2905 = vmatpush.msra.mxu0 %v2271
    %2906 = vmatpush.msra.mxu0 %v2267
    %2907 = vmatpush.msra.mxu0 %v2263
    %2908 = vmatpush.msra.mxu0 %v2259
    %2909 = vmatpush.msra.mxu0 %v2255
    %2910 = vmatpush.msra.mxu0 %v2251
    %2911 = vmatpush.msra.mxu0 %v2247
    %2912 = vmatpush.msra.mxu0 %v2243
    %2913 = vmatpush.msra.mxu0 %v2239
    %2914 = vmatmul.f32.gmra.mxu0 %v2876
    %v2915 = vpop.f32.mrf.mxu0
    %v2916 = vadd.f32 0.0, %v2915
    %2917 = vdwg.mxu0
    %2918 = vmatpush.msra.mxu0 %v2300
    %2919 = vmatpush.msra.mxu0 %v2296
    %2920 = vmatpush.msra.mxu0 %v2292
    %2921 = vmatpush.msra.mxu0 %v2288
    %2922 = vmatpush.msra.mxu0 %v2284
    %2923 = vmatpush.msra.mxu0 %v2280
    %2924 = vmatpush.msra.mxu0 %v2276
    %2925 = vmatpush.msra.mxu0 %v2272
    %2926 = vmatpush.msra.mxu0 %v2268
    %2927 = vmatpush.msra.mxu0 %v2264
    %2928 = vmatpush.msra.mxu0 %v2260
    %2929 = vmatpush.msra.mxu0 %v2256
    %2930 = vmatpush.msra.mxu0 %v2252
    %2931 = vmatpush.msra.mxu0 %v2248
    %2932 = vmatpush.msra.mxu0 %v2244
    %2933 = vmatpush.msra.mxu0 %v2240
    %2934 = vmatmul.f32.gmra.mxu0 %v2876
    %v2935 = vpop.f32.mrf.mxu0
    %v2936 = vadd.f32 0.0, %v2935
    %2937 = vdwg.mxu0
    %2938 = vmatpush.msra.mxu0 %v2301
    %2939 = vmatpush.msra.mxu0 %v2297
    %2940 = vmatpush.msra.mxu0 %v2293
    %2941 = vmatpush.msra.mxu0 %v2289
    %2942 = vmatpush.msra.mxu0 %v2285
    %2943 = vmatpush.msra.mxu0 %v2281
    %2944 = vmatpush.msra.mxu0 %v2277
    %2945 = vmatpush.msra.mxu0 %v2273
    %2946 = vmatpush.msra.mxu0 %v2269
    %2947 = vmatpush.msra.mxu0 %v2265
    %2948 = vmatpush.msra.mxu0 %v2261
    %2949 = vmatpush.msra.mxu0 %v2257
    %2950 = vmatpush.msra.mxu0 %v2253
    %2951 = vmatpush.msra.mxu0 %v2249
    %2952 = vmatpush.msra.mxu0 %v2245
    %2953 = vmatpush.msra.mxu0 %v2241
    %2954 = vmatmul.f32.gmra.mxu0 %v2876
    %v2955 = vpop.f32.mrf.mxu0
    %v2956 = vadd.f32 0.0, %v2955
    %2957 = vdwg.mxu0
    %v2962 = vrot.slane %v2896, 2
    %v2963 = vrot.slane %v2916, 2
    %v2964 = vrot.slane %v2936, 2
    %v2965 = vrot.slane %v2956, 2
    %v2970 = vadd.f32 %v2871, %v2962
    %v2971 = vadd.f32 %v2872, %v2963
    %v2972 = vadd.f32 %v2873, %v2964
    %v2973 = vadd.f32 %v2874, %v2965
    %v2974 = vxor.u32 %v2970, 2147483648
    %v2975 = vxor.u32 %v2971, 2147483648
    %v2976 = vxor.u32 %v2972, 2147483648
    %v2977 = vmul.f32 %v2974, 1.442695
    %v2978 = vpow.pop %v2977
    %v2979 = vmul.f32 %v2975, 1.442695
    %v2980 = vpow.pop %v2979
    %v2981 = vmul.f32 %v2976, 1.442695
    %v2982 = vpow.pop %v2981
    %v2983 = vadd.f32 %v2978, 1.0
    %v2984 = vadd.f32 %v2980, 1.0
    %v2985 = vadd.f32 %v2982, 1.0
    %v2986 = vrcp.pop %v2983
    %v2987 = vmul.f32 %v2983, %v2986
    %v2988 = vsub.f32 1.0, %v2987
    %v2989 = vmul.f32 %v2986, %v2988
    %v2990 = vadd.f32 %v2986, %v2989
    %vm2991 = vweird.f32 %v2983
    %vm2992 = vweird.f32 %v2986
    %vm2993 = vmor %vm2991, %vm2992
    %v2994 = vsel %vm2993, %v2986, %v2990
    %v2995 = vand.u32 2147483647, %v2983
    %vm2996 = vcmp.eq.f32.partialorder %v2995, 8.507059e+37
    %v2997 = vand.u32 %v2983, 2147483648
    %v2998 = vor.u32 1.1754944e-38, %v2997
    %v2999 = vsel %vm2996, %v2998, %v2994
    %v3000 = vmul.f32 1.0, %v2999
    %v3001 = vrcp.pop %v2984
    %v3002 = vmul.f32 %v2984, %v3001
    %v3003 = vsub.f32 1.0, %v3002
    %v3004 = vmul.f32 %v3001, %v3003
    %v3005 = vadd.f32 %v3001, %v3004
    %vm3006 = vweird.f32 %v2984
    %vm3007 = vweird.f32 %v3001
    %vm3008 = vmor %vm3006, %vm3007
    %v3009 = vsel %vm3008, %v3001, %v3005
    %v3010 = vand.u32 2147483647, %v2984
    %vm3011 = vcmp.eq.f32.partialorder %v3010, 8.507059e+37
    %v3012 = vand.u32 %v2984, 2147483648
    %v3013 = vor.u32 1.1754944e-38, %v3012
    %v3014 = vsel %vm3011, %v3013, %v3009
    %v3015 = vmul.f32 1.0, %v3014
    %v3016 = vrcp.pop %v2985
    %v3017 = vmul.f32 %v2985, %v3016
    %v3018 = vsub.f32 1.0, %v3017
    %v3019 = vmul.f32 %v3016, %v3018
    %v3020 = vadd.f32 %v3016, %v3019
    %vm3021 = vweird.f32 %v2985
    %vm3022 = vweird.f32 %v3016
    %vm3023 = vmor %vm3021, %vm3022
    %v3024 = vsel %vm3023, %v3016, %v3020
    %v3025 = vand.u32 2147483647, %v2985
    %vm3026 = vcmp.eq.f32.partialorder %v3025, 8.507059e+37
    %v3027 = vand.u32 %v2985, 2147483648
    %v3028 = vor.u32 1.1754944e-38, %v3027
    %v3029 = vsel %vm3026, %v3028, %v3024
    %v3030 = vmul.f32 1.0, %v3029
    %v3031 = vtanh.pop %v2973
    %v3033 = vrot.slane %v2847, 6
    %v3035 = vmul.f32 %v3015, %v3033
    %v3036 = vmul.f32 %v3000, %v3031
    %v3037 = vadd.f32 %v3035, %v3036
    %v3038 = vtanh.pop %v3037
    %v3039 = vmul.f32 %v3030, %v3038
    %3040 = vst [vmem:[#allocation3] sm:$0xc0] %v3039
    %v3041 = vld [vmem:[#allocation4 + $0x20] sm:$0x3]
    %v3042 = vld [vmem:[#allocation4 + $0x28] sm:$0x3]
    %v3043 = vld [vmem:[#allocation4 + $0x30] sm:$0x3]
    %v3044 = vld [vmem:[#allocation4 + $0x38] sm:$0x3]
    %v3045 = vld [vmem:[#allocation5] sm:$0xc0]
    %v3046 = vld [vmem:[#allocation5 + $0x8] sm:$0xc0]
    %v3047 = vld [vmem:[#allocation5 + $0x10] sm:$0xc0]
    %v3048 = vld [vmem:[#allocation5 + $0x18] sm:$0xc0]
    %v3053 = vrot.slane %v3045, 6
    %v3054 = vrot.slane %v3046, 6
    %v3055 = vrot.slane %v3047, 6
    %v3056 = vrot.slane %v3048, 6
    %v3061 = vadd.f32 %v3041, %v3053
    %v3062 = vadd.f32 %v3042, %v3054
    %v3063 = vadd.f32 %v3043, %v3055
    %v3064 = vadd.f32 %v3044, %v3056
    %v3066 = vrot.slane %v3039, 6
    %3068 = vmatpush.msra.mxu0 %v2298
    %3069 = vmatpush.msra.mxu0 %v2294
    %3070 = vmatpush.msra.mxu0 %v2290
    %3071 = vmatpush.msra.mxu0 %v2286
    %3072 = vmatpush.msra.mxu0 %v2282
    %3073 = vmatpush.msra.mxu0 %v2278
    %3074 = vmatpush.msra.mxu0 %v2274
    %3075 = vmatpush.msra.mxu0 %v2270
    %3076 = vmatpush.msra.mxu0 %v2266
    %3077 = vmatpush.msra.mxu0 %v2262
    %3078 = vmatpush.msra.mxu0 %v2258
    %3079 = vmatpush.msra.mxu0 %v2254
    %3080 = vmatpush.msra.mxu0 %v2250
    %3081 = vmatpush.msra.mxu0 %v2246
    %3082 = vmatpush.msra.mxu0 %v2242
    %3083 = vmatpush.msra.mxu0 %v2238
    %3084 = vmatmul.f32.gmra.mxu0 %v3066
    %v3085 = vpop.f32.mrf.mxu0
    %v3086 = vadd.f32 0.0, %v3085
    %3087 = vdwg.mxu0
    %3088 = vmatpush.msra.mxu0 %v2299
    %3089 = vmatpush.msra.mxu0 %v2295
    %3090 = vmatpush.msra.mxu0 %v2291
    %3091 = vmatpush.msra.mxu0 %v2287
    %3092 = vmatpush.msra.mxu0 %v2283
    %3093 = vmatpush.msra.mxu0 %v2279
    %3094 = vmatpush.msra.mxu0 %v2275
    %3095 = vmatpush.msra.mxu0 %v2271
    %3096 = vmatpush.msra.mxu0 %v2267
    %3097 = vmatpush.msra.mxu0 %v2263
    %3098 = vmatpush.msra.mxu0 %v2259
    %3099 = vmatpush.msra.mxu0 %v2255
    %3100 = vmatpush.msra.mxu0 %v2251
    %3101 = vmatpush.msra.mxu0 %v2247
    %3102 = vmatpush.msra.mxu0 %v2243
    %3103 = vmatpush.msra.mxu0 %v2239
    %3104 = vmatmul.f32.gmra.mxu0 %v3066
    %v3105 = vpop.f32.mrf.mxu0
    %v3106 = vadd.f32 0.0, %v3105
    %3107 = vdwg.mxu0
    %3108 = vmatpush.msra.mxu0 %v2300
    %3109 = vmatpush.msra.mxu0 %v2296
    %3110 = vmatpush.msra.mxu0 %v2292
    %3111 = vmatpush.msra.mxu0 %v2288
    %3112 = vmatpush.msra.mxu0 %v2284
    %3113 = vmatpush.msra.mxu0 %v2280
    %3114 = vmatpush.msra.mxu0 %v2276
    %3115 = vmatpush.msra.mxu0 %v2272
    %3116 = vmatpush.msra.mxu0 %v2268
    %3117 = vmatpush.msra.mxu0 %v2264
    %3118 = vmatpush.msra.mxu0 %v2260
    %3119 = vmatpush.msra.mxu0 %v2256
    %3120 = vmatpush.msra.mxu0 %v2252
    %3121 = vmatpush.msra.mxu0 %v2248
    %3122 = vmatpush.msra.mxu0 %v2244
    %3123 = vmatpush.msra.mxu0 %v2240
    %3124 = vmatmul.f32.gmra.mxu0 %v3066
    %v3125 = vpop.f32.mrf.mxu0
    %v3126 = vadd.f32 0.0, %v3125
    %3127 = vdwg.mxu0
    %3128 = vmatpush.msra.mxu0 %v2301
    %3129 = vmatpush.msra.mxu0 %v2297
    %3130 = vmatpush.msra.mxu0 %v2293
    %3131 = vmatpush.msra.mxu0 %v2289
    %3132 = vmatpush.msra.mxu0 %v2285
    %3133 = vmatpush.msra.mxu0 %v2281
    %3134 = vmatpush.msra.mxu0 %v2277
    %3135 = vmatpush.msra.mxu0 %v2273
    %3136 = vmatpush.msra.mxu0 %v2269
    %3137 = vmatpush.msra.mxu0 %v2265
    %3138 = vmatpush.msra.mxu0 %v2261
    %3139 = vmatpush.msra.mxu0 %v2257
    %3140 = vmatpush.msra.mxu0 %v2253
    %3141 = vmatpush.msra.mxu0 %v2249
    %3142 = vmatpush.msra.mxu0 %v2245
    %3143 = vmatpush.msra.mxu0 %v2241
    %3144 = vmatmul.f32.gmra.mxu0 %v3066
    %v3145 = vpop.f32.mrf.mxu0
    %v3146 = vadd.f32 0.0, %v3145
    %3147 = vdwg.mxu0
    %v3148 = vadd.f32 %v3061, %v3086
    %v3149 = vadd.f32 %v3062, %v3106
    %v3150 = vadd.f32 %v3063, %v3126
    %v3151 = vadd.f32 %v3064, %v3146
    %v3152 = vxor.u32 %v3148, 2147483648
    %v3153 = vxor.u32 %v3149, 2147483648
    %v3154 = vxor.u32 %v3150, 2147483648
    %v3155 = vmul.f32 %v3152, 1.442695
    %v3156 = vpow.pop %v3155
    %v3157 = vmul.f32 %v3153, 1.442695
    %v3158 = vpow.pop %v3157
    %v3159 = vmul.f32 %v3154, 1.442695
    %v3160 = vpow.pop %v3159
    %v3161 = vadd.f32 %v3156, 1.0
    %v3162 = vadd.f32 %v3158, 1.0
    %v3163 = vadd.f32 %v3160, 1.0
    %v3164 = vrcp.pop %v3161
    %v3165 = vmul.f32 %v3161, %v3164
    %v3166 = vsub.f32 1.0, %v3165
    %v3167 = vmul.f32 %v3164, %v3166
    %v3168 = vadd.f32 %v3164, %v3167
    %vm3169 = vweird.f32 %v3161
    %vm3170 = vweird.f32 %v3164
    %vm3171 = vmor %vm3169, %vm3170
    %v3172 = vsel %vm3171, %v3164, %v3168
    %v3173 = vand.u32 2147483647, %v3161
    %vm3174 = vcmp.eq.f32.partialorder %v3173, 8.507059e+37
    %v3175 = vand.u32 %v3161, 2147483648
    %v3176 = vor.u32 1.1754944e-38, %v3175
    %v3177 = vsel %vm3174, %v3176, %v3172
    %v3178 = vmul.f32 1.0, %v3177
    %v3179 = vrcp.pop %v3162
    %v3180 = vmul.f32 %v3162, %v3179
    %v3181 = vsub.f32 1.0, %v3180
    %v3182 = vmul.f32 %v3179, %v3181
    %v3183 = vadd.f32 %v3179, %v3182
    %vm3184 = vweird.f32 %v3162
    %vm3185 = vweird.f32 %v3179
    %vm3186 = vmor %vm3184, %vm3185
    %v3187 = vsel %vm3186, %v3179, %v3183
    %v3188 = vand.u32 2147483647, %v3162
    %vm3189 = vcmp.eq.f32.partialorder %v3188, 8.507059e+37
    %v3190 = vand.u32 %v3162, 2147483648
    %v3191 = vor.u32 1.1754944e-38, %v3190
    %v3192 = vsel %vm3189, %v3191, %v3187
    %v3193 = vmul.f32 1.0, %v3192
    %v3194 = vrcp.pop %v3163
    %v3195 = vmul.f32 %v3163, %v3194
    %v3196 = vsub.f32 1.0, %v3195
    %v3197 = vmul.f32 %v3194, %v3196
    %v3198 = vadd.f32 %v3194, %v3197
    %vm3199 = vweird.f32 %v3163
    %vm3200 = vweird.f32 %v3194
    %vm3201 = vmor %vm3199, %vm3200
    %v3202 = vsel %vm3201, %v3194, %v3198
    %v3203 = vand.u32 2147483647, %v3163
    %vm3204 = vcmp.eq.f32.partialorder %v3203, 8.507059e+37
    %v3205 = vand.u32 %v3163, 2147483648
    %v3206 = vor.u32 1.1754944e-38, %v3205
    %v3207 = vsel %vm3204, %v3206, %v3202
    %v3208 = vmul.f32 1.0, %v3207
    %v3209 = vtanh.pop %v3151
    %v3211 = vrot.slane %v3037, 6
    %v3213 = vmul.f32 %v3193, %v3211
    %v3214 = vmul.f32 %v3178, %v3209
    %v3215 = vadd.f32 %v3213, %v3214
    %v3216 = vtanh.pop %v3215
    %v3217 = vmul.f32 %v3208, %v3216
    %3218 = vst [vmem:[#allocation3 + $0x8] sm:$0x3] %v3217
    %v3219 = vld [vmem:[#allocation4 + $0x20] sm:$0xc]
    %v3220 = vld [vmem:[#allocation4 + $0x28] sm:$0xc]
    %v3221 = vld [vmem:[#allocation4 + $0x30] sm:$0xc]
    %v3222 = vld [vmem:[#allocation4 + $0x38] sm:$0xc]
    %v3223 = vld [vmem:[#allocation5] sm:$0x30]
    %v3224 = vld [vmem:[#allocation5 + $0x8] sm:$0x30]
    %v3225 = vld [vmem:[#allocation5 + $0x10] sm:$0x30]
    %v3226 = vld [vmem:[#allocation5 + $0x18] sm:$0x30]
    %v3231 = vrot.slane %v3223, 2
    %v3232 = vrot.slane %v3224, 2
    %v3233 = vrot.slane %v3225, 2
    %v3234 = vrot.slane %v3226, 2
    %v3239 = vadd.f32 %v3219, %v3231
    %v3240 = vadd.f32 %v3220, %v3232
    %v3241 = vadd.f32 %v3221, %v3233
    %v3242 = vadd.f32 %v3222, %v3234
    %3243 = vmatpush.msra.mxu0 %v2298
    %3244 = vmatpush.msra.mxu0 %v2294
    %3245 = vmatpush.msra.mxu0 %v2290
    %3246 = vmatpush.msra.mxu0 %v2286
    %3247 = vmatpush.msra.mxu0 %v2282
    %3248 = vmatpush.msra.mxu0 %v2278
    %3249 = vmatpush.msra.mxu0 %v2274
    %3250 = vmatpush.msra.mxu0 %v2270
    %3251 = vmatpush.msra.mxu0 %v2266
    %3252 = vmatpush.msra.mxu0 %v2262
    %3253 = vmatpush.msra.mxu0 %v2258
    %3254 = vmatpush.msra.mxu0 %v2254
    %3255 = vmatpush.msra.mxu0 %v2250
    %3256 = vmatpush.msra.mxu0 %v2246
    %3257 = vmatpush.msra.mxu0 %v2242
    %3258 = vmatpush.msra.mxu0 %v2238
    %3259 = vmatmul.f32.gmra.mxu0 %v3217
    %v3260 = vpop.f32.mrf.mxu0
    %v3261 = vadd.f32 0.0, %v3260
    %3262 = vdwg.mxu0
    %3263 = vmatpush.msra.mxu0 %v2299
    %3264 = vmatpush.msra.mxu0 %v2295
    %3265 = vmatpush.msra.mxu0 %v2291
    %3266 = vmatpush.msra.mxu0 %v2287
    %3267 = vmatpush.msra.mxu0 %v2283
    %3268 = vmatpush.msra.mxu0 %v2279
    %3269 = vmatpush.msra.mxu0 %v2275
    %3270 = vmatpush.msra.mxu0 %v2271
    %3271 = vmatpush.msra.mxu0 %v2267
    %3272 = vmatpush.msra.mxu0 %v2263
    %3273 = vmatpush.msra.mxu0 %v2259
    %3274 = vmatpush.msra.mxu0 %v2255
    %3275 = vmatpush.msra.mxu0 %v2251
    %3276 = vmatpush.msra.mxu0 %v2247
    %3277 = vmatpush.msra.mxu0 %v2243
    %3278 = vmatpush.msra.mxu0 %v2239
    %3279 = vmatmul.f32.gmra.mxu0 %v3217
    %v3280 = vpop.f32.mrf.mxu0
    %v3281 = vadd.f32 0.0, %v3280
    %3282 = vdwg.mxu0
    %3283 = vmatpush.msra.mxu0 %v2300
    %3284 = vmatpush.msra.mxu0 %v2296
    %3285 = vmatpush.msra.mxu0 %v2292
    %3286 = vmatpush.msra.mxu0 %v2288
    %3287 = vmatpush.msra.mxu0 %v2284
    %3288 = vmatpush.msra.mxu0 %v2280
    %3289 = vmatpush.msra.mxu0 %v2276
    %3290 = vmatpush.msra.mxu0 %v2272
    %3291 = vmatpush.msra.mxu0 %v2268
    %3292 = vmatpush.msra.mxu0 %v2264
    %3293 = vmatpush.msra.mxu0 %v2260
    %3294 = vmatpush.msra.mxu0 %v2256
    %3295 = vmatpush.msra.mxu0 %v2252
    %3296 = vmatpush.msra.mxu0 %v2248
    %3297 = vmatpush.msra.mxu0 %v2244
    %3298 = vmatpush.msra.mxu0 %v2240
    %3299 = vmatmul.f32.gmra.mxu0 %v3217
    %v3300 = vpop.f32.mrf.mxu0
    %v3301 = vadd.f32 0.0, %v3300
    %3302 = vdwg.mxu0
    %3303 = vmatpush.msra.mxu0 %v2301
    %3304 = vmatpush.msra.mxu0 %v2297
    %3305 = vmatpush.msra.mxu0 %v2293
    %3306 = vmatpush.msra.mxu0 %v2289
    %3307 = vmatpush.msra.mxu0 %v2285
    %3308 = vmatpush.msra.mxu0 %v2281
    %3309 = vmatpush.msra.mxu0 %v2277
    %3310 = vmatpush.msra.mxu0 %v2273
    %3311 = vmatpush.msra.mxu0 %v2269
    %3312 = vmatpush.msra.mxu0 %v2265
    %3313 = vmatpush.msra.mxu0 %v2261
    %3314 = vmatpush.msra.mxu0 %v2257
    %3315 = vmatpush.msra.mxu0 %v2253
    %3316 = vmatpush.msra.mxu0 %v2249
    %3317 = vmatpush.msra.mxu0 %v2245
    %3318 = vmatpush.msra.mxu0 %v2241
    %3319 = vmatmul.f32.gmra.mxu0 %v3217
    %v3320 = vpop.f32.mrf.mxu0
    %v3321 = vadd.f32 0.0, %v3320
    %3322 = vdwg.mxu0
    %v3327 = vrot.slane %v3261, 6
    %v3328 = vrot.slane %v3281, 6
    %v3329 = vrot.slane %v3301, 6
    %v3330 = vrot.slane %v3321, 6
    %v3335 = vadd.f32 %v3239, %v3327
    %v3336 = vadd.f32 %v3240, %v3328
    %v3337 = vadd.f32 %v3241, %v3329
    %v3338 = vadd.f32 %v3242, %v3330
    %v3339 = vxor.u32 %v3335, 2147483648
    %v3340 = vxor.u32 %v3336, 2147483648
    %v3341 = vxor.u32 %v3337, 2147483648
    %v3342 = vmul.f32 %v3339, 1.442695
    %v3343 = vpow.pop %v3342
    %v3344 = vmul.f32 %v3340, 1.442695
    %v3345 = vpow.pop %v3344
    %v3346 = vmul.f32 %v3341, 1.442695
    %v3347 = vpow.pop %v3346
    %v3348 = vadd.f32 %v3343, 1.0
    %v3349 = vadd.f32 %v3345, 1.0
    %v3350 = vadd.f32 %v3347, 1.0
    %v3351 = vrcp.pop %v3348
    %v3352 = vmul.f32 %v3348, %v3351
    %v3353 = vsub.f32 1.0, %v3352
    %v3354 = vmul.f32 %v3351, %v3353
    %v3355 = vadd.f32 %v3351, %v3354
    %vm3356 = vweird.f32 %v3348
    %vm3357 = vweird.f32 %v3351
    %vm3358 = vmor %vm3356, %vm3357
    %v3359 = vsel %vm3358, %v3351, %v3355
    %v3360 = vand.u32 2147483647, %v3348
    %vm3361 = vcmp.eq.f32.partialorder %v3360, 8.507059e+37
    %v3362 = vand.u32 %v3348, 2147483648
    %v3363 = vor.u32 1.1754944e-38, %v3362
    %v3364 = vsel %vm3361, %v3363, %v3359
    %v3365 = vmul.f32 1.0, %v3364
    %v3366 = vrcp.pop %v3349
    %v3367 = vmul.f32 %v3349, %v3366
    %v3368 = vsub.f32 1.0, %v3367
    %v3369 = vmul.f32 %v3366, %v3368
    %v3370 = vadd.f32 %v3366, %v3369
    %vm3371 = vweird.f32 %v3349
    %vm3372 = vweird.f32 %v3366
    %vm3373 = vmor %vm3371, %vm3372
    %v3374 = vsel %vm3373, %v3366, %v3370
    %v3375 = vand.u32 2147483647, %v3349
    %vm3376 = vcmp.eq.f32.partialorder %v3375, 8.507059e+37
    %v3377 = vand.u32 %v3349, 2147483648
    %v3378 = vor.u32 1.1754944e-38, %v3377
    %v3379 = vsel %vm3376, %v3378, %v3374
    %v3380 = vmul.f32 1.0, %v3379
    %v3381 = vrcp.pop %v3350
    %v3382 = vmul.f32 %v3350, %v3381
    %v3383 = vsub.f32 1.0, %v3382
    %v3384 = vmul.f32 %v3381, %v3383
    %v3385 = vadd.f32 %v3381, %v3384
    %vm3386 = vweird.f32 %v3350
    %vm3387 = vweird.f32 %v3381
    %vm3388 = vmor %vm3386, %vm3387
    %v3389 = vsel %vm3388, %v3381, %v3385
    %v3390 = vand.u32 2147483647, %v3350
    %vm3391 = vcmp.eq.f32.partialorder %v3390, 8.507059e+37
    %v3392 = vand.u32 %v3350, 2147483648
    %v3393 = vor.u32 1.1754944e-38, %v3392
    %v3394 = vsel %vm3391, %v3393, %v3389
    %v3395 = vmul.f32 1.0, %v3394
    %v3396 = vtanh.pop %v3338
    %v3398 = vrot.slane %v3215, 6
    %v3400 = vmul.f32 %v3380, %v3398
    %v3401 = vmul.f32 %v3365, %v3396
    %v3402 = vadd.f32 %v3400, %v3401
    %v3403 = vtanh.pop %v3402
    %v3404 = vmul.f32 %v3395, %v3403
    %3405 = vst [vmem:[#allocation3 + $0x8] sm:$0xc] %v3404
    %v3406 = vld [vmem:[#allocation4 + $0x20] sm:$0x30]
    %v3407 = vld [vmem:[#allocation4 + $0x28] sm:$0x30]
    %v3408 = vld [vmem:[#allocation4 + $0x30] sm:$0x30]
    %v3409 = vld [vmem:[#allocation4 + $0x38] sm:$0x30]
    %v3410 = vld [vmem:[#allocation5] sm:$0xc]
    %v3411 = vld [vmem:[#allocation5 + $0x8] sm:$0xc]
    %v3412 = vld [vmem:[#allocation5 + $0x10] sm:$0xc]
    %v3413 = vld [vmem:[#allocation5 + $0x18] sm:$0xc]
    %v3418 = vrot.slane %v3410, 6
    %v3419 = vrot.slane %v3411, 6
    %v3420 = vrot.slane %v3412, 6
    %v3421 = vrot.slane %v3413, 6
    %v3426 = vadd.f32 %v3406, %v3418
    %v3427 = vadd.f32 %v3407, %v3419
    %v3428 = vadd.f32 %v3408, %v3420
    %v3429 = vadd.f32 %v3409, %v3421
    %v3431 = vrot.slane %v3404, 2
    %3433 = vmatpush.msra.mxu0 %v2298
    %3434 = vmatpush.msra.mxu0 %v2294
    %3435 = vmatpush.msra.mxu0 %v2290
    %3436 = vmatpush.msra.mxu0 %v2286
    %3437 = vmatpush.msra.mxu0 %v2282
    %3438 = vmatpush.msra.mxu0 %v2278
    %3439 = vmatpush.msra.mxu0 %v2274
    %3440 = vmatpush.msra.mxu0 %v2270
    %3441 = vmatpush.msra.mxu0 %v2266
    %3442 = vmatpush.msra.mxu0 %v2262
    %3443 = vmatpush.msra.mxu0 %v2258
    %3444 = vmatpush.msra.mxu0 %v2254
    %3445 = vmatpush.msra.mxu0 %v2250
    %3446 = vmatpush.msra.mxu0 %v2246
    %3447 = vmatpush.msra.mxu0 %v2242
    %3448 = vmatpush.msra.mxu0 %v2238
    %3449 = vmatmul.f32.gmra.mxu0 %v3431
    %v3450 = vpop.f32.mrf.mxu0
    %v3451 = vadd.f32 0.0, %v3450
    %3452 = vdwg.mxu0
    %3453 = vmatpush.msra.mxu0 %v2299
    %3454 = vmatpush.msra.mxu0 %v2295
    %3455 = vmatpush.msra.mxu0 %v2291
    %3456 = vmatpush.msra.mxu0 %v2287
    %3457 = vmatpush.msra.mxu0 %v2283
    %3458 = vmatpush.msra.mxu0 %v2279
    %3459 = vmatpush.msra.mxu0 %v2275
    %3460 = vmatpush.msra.mxu0 %v2271
    %3461 = vmatpush.msra.mxu0 %v2267
    %3462 = vmatpush.msra.mxu0 %v2263
    %3463 = vmatpush.msra.mxu0 %v2259
    %3464 = vmatpush.msra.mxu0 %v2255
    %3465 = vmatpush.msra.mxu0 %v2251
    %3466 = vmatpush.msra.mxu0 %v2247
    %3467 = vmatpush.msra.mxu0 %v2243
    %3468 = vmatpush.msra.mxu0 %v2239
    %3469 = vmatmul.f32.gmra.mxu0 %v3431
    %v3470 = vpop.f32.mrf.mxu0
    %v3471 = vadd.f32 0.0, %v3470
    %3472 = vdwg.mxu0
    %3473 = vmatpush.msra.mxu0 %v2300
    %3474 = vmatpush.msra.mxu0 %v2296
    %3475 = vmatpush.msra.mxu0 %v2292
    %3476 = vmatpush.msra.mxu0 %v2288
    %3477 = vmatpush.msra.mxu0 %v2284
    %3478 = vmatpush.msra.mxu0 %v2280
    %3479 = vmatpush.msra.mxu0 %v2276
    %3480 = vmatpush.msra.mxu0 %v2272
    %3481 = vmatpush.msra.mxu0 %v2268
    %3482 = vmatpush.msra.mxu0 %v2264
    %3483 = vmatpush.msra.mxu0 %v2260
    %3484 = vmatpush.msra.mxu0 %v2256
    %3485 = vmatpush.msra.mxu0 %v2252
    %3486 = vmatpush.msra.mxu0 %v2248
    %3487 = vmatpush.msra.mxu0 %v2244
    %3488 = vmatpush.msra.mxu0 %v2240
    %3489 = vmatmul.f32.gmra.mxu0 %v3431
    %v3490 = vpop.f32.mrf.mxu0
    %v3491 = vadd.f32 0.0, %v3490
    %3492 = vdwg.mxu0
    %3493 = vmatpush.msra.mxu0 %v2301
    %3494 = vmatpush.msra.mxu0 %v2297
    %3495 = vmatpush.msra.mxu0 %v2293
    %3496 = vmatpush.msra.mxu0 %v2289
    %3497 = vmatpush.msra.mxu0 %v2285
    %3498 = vmatpush.msra.mxu0 %v2281
    %3499 = vmatpush.msra.mxu0 %v2277
    %3500 = vmatpush.msra.mxu0 %v2273
    %3501 = vmatpush.msra.mxu0 %v2269
    %3502 = vmatpush.msra.mxu0 %v2265
    %3503 = vmatpush.msra.mxu0 %v2261
    %3504 = vmatpush.msra.mxu0 %v2257
    %3505 = vmatpush.msra.mxu0 %v2253
    %3506 = vmatpush.msra.mxu0 %v2249
    %3507 = vmatpush.msra.mxu0 %v2245
    %3508 = vmatpush.msra.mxu0 %v2241
    %3509 = vmatmul.f32.gmra.mxu0 %v3431
    %v3510 = vpop.f32.mrf.mxu0
    %v3511 = vadd.f32 0.0, %v3510
    %3512 = vdwg.mxu0
    %v3517 = vrot.slane %v3451, 4
    %v3518 = vrot.slane %v3471, 4
    %v3519 = vrot.slane %v3491, 4
    %v3520 = vrot.slane %v3511, 4
    %v3525 = vadd.f32 %v3426, %v3517
    %v3526 = vadd.f32 %v3427, %v3518
    %v3527 = vadd.f32 %v3428, %v3519
    %v3528 = vadd.f32 %v3429, %v3520
    %v3529 = vxor.u32 %v3525, 2147483648
    %v3530 = vxor.u32 %v3526, 2147483648
    %v3531 = vxor.u32 %v3527, 2147483648
    %v3532 = vmul.f32 %v3529, 1.442695
    %v3533 = vpow.pop %v3532
    %v3534 = vmul.f32 %v3530, 1.442695
    %v3535 = vpow.pop %v3534
    %v3536 = vmul.f32 %v3531, 1.442695
    %v3537 = vpow.pop %v3536
    %v3538 = vadd.f32 %v3533, 1.0
    %v3539 = vadd.f32 %v3535, 1.0
    %v3540 = vadd.f32 %v3537, 1.0
    %v3541 = vrcp.pop %v3538
    %v3542 = vmul.f32 %v3538, %v3541
    %v3543 = vsub.f32 1.0, %v3542
    %v3544 = vmul.f32 %v3541, %v3543
    %v3545 = vadd.f32 %v3541, %v3544
    %vm3546 = vweird.f32 %v3538
    %vm3547 = vweird.f32 %v3541
    %vm3548 = vmor %vm3546, %vm3547
    %v3549 = vsel %vm3548, %v3541, %v3545
    %v3550 = vand.u32 2147483647, %v3538
    %vm3551 = vcmp.eq.f32.partialorder %v3550, 8.507059e+37
    %v3552 = vand.u32 %v3538, 2147483648
    %v3553 = vor.u32 1.1754944e-38, %v3552
    %v3554 = vsel %vm3551, %v3553, %v3549
    %v3555 = vmul.f32 1.0, %v3554
    %v3556 = vrcp.pop %v3539
    %v3557 = vmul.f32 %v3539, %v3556
    %v3558 = vsub.f32 1.0, %v3557
    %v3559 = vmul.f32 %v3556, %v3558
    %v3560 = vadd.f32 %v3556, %v3559
    %vm3561 = vweird.f32 %v3539
    %vm3562 = vweird.f32 %v3556
    %vm3563 = vmor %vm3561, %vm3562
    %v3564 = vsel %vm3563, %v3556, %v3560
    %v3565 = vand.u32 2147483647, %v3539
    %vm3566 = vcmp.eq.f32.partialorder %v3565, 8.507059e+37
    %v3567 = vand.u32 %v3539, 2147483648
    %v3568 = vor.u32 1.1754944e-38, %v3567
    %v3569 = vsel %vm3566, %v3568, %v3564
    %v3570 = vmul.f32 1.0, %v3569
    %v3571 = vrcp.pop %v3540
    %v3572 = vmul.f32 %v3540, %v3571
    %v3573 = vsub.f32 1.0, %v3572
    %v3574 = vmul.f32 %v3571, %v3573
    %v3575 = vadd.f32 %v3571, %v3574
    %vm3576 = vweird.f32 %v3540
    %vm3577 = vweird.f32 %v3571
    %vm3578 = vmor %vm3576, %vm3577
    %v3579 = vsel %vm3578, %v3571, %v3575
    %v3580 = vand.u32 2147483647, %v3540
    %vm3581 = vcmp.eq.f32.partialorder %v3580, 8.507059e+37
    %v3582 = vand.u32 %v3540, 2147483648
    %v3583 = vor.u32 1.1754944e-38, %v3582
    %v3584 = vsel %vm3581, %v3583, %v3579
    %v3585 = vmul.f32 1.0, %v3584
    %v3586 = vtanh.pop %v3528
    %v3588 = vrot.slane %v3402, 6
    %v3590 = vmul.f32 %v3570, %v3588
    %v3591 = vmul.f32 %v3555, %v3586
    %v3592 = vadd.f32 %v3590, %v3591
    %v3593 = vtanh.pop %v3592
    %v3594 = vmul.f32 %v3585, %v3593
    %3595 = vst [vmem:[#allocation3 + $0x8] sm:$0x30] %v3594
    %v3596 = vld [vmem:[#allocation4 + $0x20] sm:$0xc0]
    %v3597 = vld [vmem:[#allocation4 + $0x28] sm:$0xc0]
    %v3598 = vld [vmem:[#allocation4 + $0x30] sm:$0xc0]
    %v3599 = vld [vmem:[#allocation4 + $0x38] sm:$0xc0]
    %v3600 = vld [vmem:[#allocation5] sm:$0x3]
    %v3601 = vld [vmem:[#allocation5 + $0x8] sm:$0x3]
    %v3602 = vld [vmem:[#allocation5 + $0x10] sm:$0x3]
    %v3603 = vld [vmem:[#allocation5 + $0x18] sm:$0x3]
    %v3608 = vrot.slane %v3600, 2
    %v3609 = vrot.slane %v3601, 2
    %v3610 = vrot.slane %v3602, 2
    %v3611 = vrot.slane %v3603, 2
    %v3616 = vadd.f32 %v3596, %v3608
    %v3617 = vadd.f32 %v3597, %v3609
    %v3618 = vadd.f32 %v3598, %v3610
    %v3619 = vadd.f32 %v3599, %v3611
    %v3621 = vrot.slane %v3594, 4
    %3623 = vmatpush.msra.mxu0 %v2298
    %3624 = vmatpush.msra.mxu0 %v2294
    %3625 = vmatpush.msra.mxu0 %v2290
    %3626 = vmatpush.msra.mxu0 %v2286
    %3627 = vmatpush.msra.mxu0 %v2282
    %3628 = vmatpush.msra.mxu0 %v2278
    %3629 = vmatpush.msra.mxu0 %v2274
    %3630 = vmatpush.msra.mxu0 %v2270
    %3631 = vmatpush.msra.mxu0 %v2266
    %3632 = vmatpush.msra.mxu0 %v2262
    %3633 = vmatpush.msra.mxu0 %v2258
    %3634 = vmatpush.msra.mxu0 %v2254
    %3635 = vmatpush.msra.mxu0 %v2250
    %3636 = vmatpush.msra.mxu0 %v2246
    %3637 = vmatpush.msra.mxu0 %v2242
    %3638 = vmatpush.msra.mxu0 %v2238
    %3639 = vmatmul.f32.gmra.mxu0 %v3621
    %v3640 = vpop.f32.mrf.mxu0
    %v3641 = vadd.f32 0.0, %v3640
    %3642 = vdwg.mxu0
    %3643 = vmatpush.msra.mxu0 %v2299
    %3644 = vmatpush.msra.mxu0 %v2295
    %3645 = vmatpush.msra.mxu0 %v2291
    %3646 = vmatpush.msra.mxu0 %v2287
    %3647 = vmatpush.msra.mxu0 %v2283
    %3648 = vmatpush.msra.mxu0 %v2279
    %3649 = vmatpush.msra.mxu0 %v2275
    %3650 = vmatpush.msra.mxu0 %v2271
    %3651 = vmatpush.msra.mxu0 %v2267
    %3652 = vmatpush.msra.mxu0 %v2263
    %3653 = vmatpush.msra.mxu0 %v2259
    %3654 = vmatpush.msra.mxu0 %v2255
    %3655 = vmatpush.msra.mxu0 %v2251
    %3656 = vmatpush.msra.mxu0 %v2247
    %3657 = vmatpush.msra.mxu0 %v2243
    %3658 = vmatpush.msra.mxu0 %v2239
    %3659 = vmatmul.f32.gmra.mxu0 %v3621
    %v3660 = vpop.f32.mrf.mxu0
    %v3661 = vadd.f32 0.0, %v3660
    %3662 = vdwg.mxu0
    %3663 = vmatpush.msra.mxu0 %v2300
    %3664 = vmatpush.msra.mxu0 %v2296
    %3665 = vmatpush.msra.mxu0 %v2292
    %3666 = vmatpush.msra.mxu0 %v2288
    %3667 = vmatpush.msra.mxu0 %v2284
    %3668 = vmatpush.msra.mxu0 %v2280
    %3669 = vmatpush.msra.mxu0 %v2276
    %3670 = vmatpush.msra.mxu0 %v2272
    %3671 = vmatpush.msra.mxu0 %v2268
    %3672 = vmatpush.msra.mxu0 %v2264
    %3673 = vmatpush.msra.mxu0 %v2260
    %3674 = vmatpush.msra.mxu0 %v2256
    %3675 = vmatpush.msra.mxu0 %v2252
    %3676 = vmatpush.msra.mxu0 %v2248
    %3677 = vmatpush.msra.mxu0 %v2244
    %3678 = vmatpush.msra.mxu0 %v2240
    %3679 = vmatmul.f32.gmra.mxu0 %v3621
    %v3680 = vpop.f32.mrf.mxu0
    %v3681 = vadd.f32 0.0, %v3680
    %3682 = vdwg.mxu0
    %3683 = vmatpush.msra.mxu0 %v2301
    %3684 = vmatpush.msra.mxu0 %v2297
    %3685 = vmatpush.msra.mxu0 %v2293
    %3686 = vmatpush.msra.mxu0 %v2289
    %3687 = vmatpush.msra.mxu0 %v2285
    %3688 = vmatpush.msra.mxu0 %v2281
    %3689 = vmatpush.msra.mxu0 %v2277
    %3690 = vmatpush.msra.mxu0 %v2273
    %3691 = vmatpush.msra.mxu0 %v2269
    %3692 = vmatpush.msra.mxu0 %v2265
    %3693 = vmatpush.msra.mxu0 %v2261
    %3694 = vmatpush.msra.mxu0 %v2257
    %3695 = vmatpush.msra.mxu0 %v2253
    %3696 = vmatpush.msra.mxu0 %v2249
    %3697 = vmatpush.msra.mxu0 %v2245
    %3698 = vmatpush.msra.mxu0 %v2241
    %3699 = vmatmul.f32.gmra.mxu0 %v3621
    %v3700 = vpop.f32.mrf.mxu0
    %v3701 = vadd.f32 0.0, %v3700
    %3702 = vdwg.mxu0
    %v3707 = vrot.slane %v3641, 2
    %v3708 = vrot.slane %v3661, 2
    %v3709 = vrot.slane %v3681, 2
    %v3710 = vrot.slane %v3701, 2
    %v3715 = vadd.f32 %v3616, %v3707
    %v3716 = vadd.f32 %v3617, %v3708
    %v3717 = vadd.f32 %v3618, %v3709
    %v3718 = vadd.f32 %v3619, %v3710
    %v3719 = vxor.u32 %v3715, 2147483648
    %v3720 = vxor.u32 %v3716, 2147483648
    %v3721 = vxor.u32 %v3717, 2147483648
    %v3722 = vmul.f32 %v3719, 1.442695
    %v3723 = vpow.pop %v3722
    %v3724 = vmul.f32 %v3720, 1.442695
    %v3725 = vpow.pop %v3724
    %v3726 = vmul.f32 %v3721, 1.442695
    %v3727 = vpow.pop %v3726
    %v3728 = vadd.f32 %v3723, 1.0
    %v3729 = vadd.f32 %v3725, 1.0
    %v3730 = vadd.f32 %v3727, 1.0
    %v3731 = vrcp.pop %v3728
    %v3732 = vmul.f32 %v3728, %v3731
    %v3733 = vsub.f32 1.0, %v3732
    %v3734 = vmul.f32 %v3731, %v3733
    %v3735 = vadd.f32 %v3731, %v3734
    %vm3736 = vweird.f32 %v3728
    %vm3737 = vweird.f32 %v3731
    %vm3738 = vmor %vm3736, %vm3737
    %v3739 = vsel %vm3738, %v3731, %v3735
    %v3740 = vand.u32 2147483647, %v3728
    %vm3741 = vcmp.eq.f32.partialorder %v3740, 8.507059e+37
    %v3742 = vand.u32 %v3728, 2147483648
    %v3743 = vor.u32 1.1754944e-38, %v3742
    %v3744 = vsel %vm3741, %v3743, %v3739
    %v3745 = vmul.f32 1.0, %v3744
    %v3746 = vrcp.pop %v3729
    %v3747 = vmul.f32 %v3729, %v3746
    %v3748 = vsub.f32 1.0, %v3747
    %v3749 = vmul.f32 %v3746, %v3748
    %v3750 = vadd.f32 %v3746, %v3749
    %vm3751 = vweird.f32 %v3729
    %vm3752 = vweird.f32 %v3746
    %vm3753 = vmor %vm3751, %vm3752
    %v3754 = vsel %vm3753, %v3746, %v3750
    %v3755 = vand.u32 2147483647, %v3729
    %vm3756 = vcmp.eq.f32.partialorder %v3755, 8.507059e+37
    %v3757 = vand.u32 %v3729, 2147483648
    %v3758 = vor.u32 1.1754944e-38, %v3757
    %v3759 = vsel %vm3756, %v3758, %v3754
    %v3760 = vmul.f32 1.0, %v3759
    %v3761 = vrcp.pop %v3730
    %v3762 = vmul.f32 %v3730, %v3761
    %v3763 = vsub.f32 1.0, %v3762
    %v3764 = vmul.f32 %v3761, %v3763
    %v3765 = vadd.f32 %v3761, %v3764
    %vm3766 = vweird.f32 %v3730
    %vm3767 = vweird.f32 %v3761
    %vm3768 = vmor %vm3766, %vm3767
    %v3769 = vsel %vm3768, %v3761, %v3765
    %v3770 = vand.u32 2147483647, %v3730
    %vm3771 = vcmp.eq.f32.partialorder %v3770, 8.507059e+37
    %v3772 = vand.u32 %v3730, 2147483648
    %v3773 = vor.u32 1.1754944e-38, %v3772
    %v3774 = vsel %vm3771, %v3773, %v3769
    %v3775 = vmul.f32 1.0, %v3774
    %v3776 = vtanh.pop %v3718
    %v3778 = vrot.slane %v3592, 6
    %v3780 = vmul.f32 %v3760, %v3778
    %v3781 = vmul.f32 %v3745, %v3776
    %v3782 = vadd.f32 %v3780, %v3781
    %v3783 = vtanh.pop %v3782
    %v3784 = vmul.f32 %v3775, %v3783
    %3785 = vst [vmem:[#allocation3 + $0x8] sm:$0xc0] %v3784
    %3786 = vst [vmem:[#allocation6] sm:$0xf] 0.0
    %3787 = vst [vmem:[#allocation6 + $0x14] sm:$0xf] 0.0
    %v3788 = vld [vmem:[#allocation3] sm:$0xff]
    %v3789 = vld [vmem:[#allocation3 + $0x8] sm:$0xff]
    %v3790 = vld [vmem:[#allocation7 + $0xa00] sm:$0xff]
    %v3791 = vld [vmem:[#allocation7 + $0xa08] sm:$0xff]
    %v3792 = vld [vmem:[#allocation7 + $0xa10] sm:$0xff]
    %v3793 = vld [vmem:[#allocation7 + $0xa18] sm:$0xff]
    %v3794 = vld [vmem:[#allocation7 + $0xa20] sm:$0xff]
    %v3795 = vld [vmem:[#allocation7 + $0xa28] sm:$0xff]
    %v3796 = vld [vmem:[#allocation7 + $0xa30] sm:$0xff]
    %v3797 = vld [vmem:[#allocation7 + $0xa38] sm:$0xff]
    %v3798 = vld [vmem:[#allocation7 + $0xa40] sm:$0xff]
    %v3799 = vld [vmem:[#allocation7 + $0xa48] sm:$0xff]
    %v3800 = vld [vmem:[#allocation7 + $0xa50] sm:$0xff]
    %v3801 = vld [vmem:[#allocation7 + $0xa58] sm:$0xff]
    %v3802 = vld [vmem:[#allocation7 + $0xa60] sm:$0xff]
    %v3803 = vld [vmem:[#allocation7 + $0xa68] sm:$0xff]
    %v3804 = vld [vmem:[#allocation7 + $0xa70] sm:$0xff]
    %v3805 = vld [vmem:[#allocation7 + $0xa78] sm:$0xff]
    %v3806 = vld [vmem:[#allocation7 + $0xa80] sm:$0xff]
    %v3807 = vld [vmem:[#allocation7 + $0xa88] sm:$0xff]
    %v3808 = vld [vmem:[#allocation7 + $0xa90] sm:$0xff]
    %v3809 = vld [vmem:[#allocation7 + $0xa98] sm:$0xff]
    %v3810 = vld [vmem:[#allocation7 + $0xaa0] sm:$0xff]
    %v3811 = vld [vmem:[#allocation7 + $0xaa8] sm:$0xff]
    %v3812 = vld [vmem:[#allocation7 + $0xab0] sm:$0xff]
    %v3813 = vld [vmem:[#allocation7 + $0xab8] sm:$0xff]
    %v3814 = vld [vmem:[#allocation7 + $0xac0] sm:$0xff]
    %v3815 = vld [vmem:[#allocation7 + $0xac8] sm:$0xff]
    %v3816 = vld [vmem:[#allocation7 + $0xad0] sm:$0xff]
    %v3817 = vld [vmem:[#allocation7 + $0xad8] sm:$0xff]
    %v3818 = vld [vmem:[#allocation7 + $0xae0] sm:$0xff]
    %v3819 = vld [vmem:[#allocation7 + $0xae8] sm:$0xff]
    %v3820 = vld [vmem:[#allocation7 + $0xaf0] sm:$0xff]
    %v3821 = vld [vmem:[#allocation7 + $0xaf8] sm:$0xff]
    %v3822 = vld [vmem:[#allocation7 + $0xb00] sm:$0xff]
    %v3823 = vld [vmem:[#allocation7 + $0xb08] sm:$0xff]
    %v3824 = vld [vmem:[#allocation7 + $0xb10] sm:$0xff]
    %v3825 = vld [vmem:[#allocation7 + $0xb18] sm:$0xff]
    %v3826 = vld [vmem:[#allocation7 + $0xb20] sm:$0xff]
    %v3827 = vld [vmem:[#allocation7 + $0xb28] sm:$0xff]
    %v3828 = vld [vmem:[#allocation7 + $0xb30] sm:$0xff]
    %v3829 = vld [vmem:[#allocation7 + $0xb38] sm:$0xff]
    %v3830 = vld [vmem:[#allocation7 + $0xb40] sm:$0xff]
    %v3831 = vld [vmem:[#allocation7 + $0xb48] sm:$0xff]
    %v3832 = vld [vmem:[#allocation7 + $0xb50] sm:$0xff]
    %v3833 = vld [vmem:[#allocation7 + $0xb58] sm:$0xff]
    %v3834 = vld [vmem:[#allocation7 + $0xb60] sm:$0xff]
    %v3835 = vld [vmem:[#allocation7 + $0xb68] sm:$0xff]
    %v3836 = vld [vmem:[#allocation7 + $0xb70] sm:$0xff]
    %v3837 = vld [vmem:[#allocation7 + $0xb78] sm:$0xff]
    %v3838 = vld [vmem:[#allocation7 + $0xb80] sm:$0xff]
    %v3839 = vld [vmem:[#allocation7 + $0xb88] sm:$0xff]
    %v3840 = vld [vmem:[#allocation7 + $0xb90] sm:$0xff]
    %v3841 = vld [vmem:[#allocation7 + $0xb98] sm:$0xff]
    %v3842 = vld [vmem:[#allocation7 + $0xba0] sm:$0xff]
    %v3843 = vld [vmem:[#allocation7 + $0xba8] sm:$0xff]
    %v3844 = vld [vmem:[#allocation7 + $0xbb0] sm:$0xff]
    %v3845 = vld [vmem:[#allocation7 + $0xbb8] sm:$0xff]
    %v3846 = vld [vmem:[#allocation7 + $0xbc0] sm:$0xff]
    %v3847 = vld [vmem:[#allocation7 + $0xbc8] sm:$0xff]
    %v3848 = vld [vmem:[#allocation7 + $0xbd0] sm:$0xff]
    %v3849 = vld [vmem:[#allocation7 + $0xbd8] sm:$0xff]
    %v3850 = vld [vmem:[#allocation7 + $0xbe0] sm:$0xff]
    %v3851 = vld [vmem:[#allocation7 + $0xbe8] sm:$0xff]
    %v3852 = vld [vmem:[#allocation7 + $0xbf0] sm:$0xff]
    %v3853 = vld [vmem:[#allocation7 + $0xbf8] sm:$0xff]
    %s3854 = scalar_lea.vmem [#allocation9], 2
    %v3855 = vld [vmem:[%s3854] ss:$4 sm:$0xf]
    %v3857 = vperm.slane %v3855, 0
    %v3858 = vperm.slane %v3855, 1
    %v3859 = vperm.slane %v3855, 2
    %v3860 = vperm.slane %v3855, 3
    %3865 = vmatpush.msra.mxu0 %v3850
    %3866 = vmatpush.msra.mxu0 %v3846
    %3867 = vmatpush.msra.mxu0 %v3842
    %3868 = vmatpush.msra.mxu0 %v3838
    %3869 = vmatpush.msra.mxu0 %v3834
    %3870 = vmatpush.msra.mxu0 %v3830
    %3871 = vmatpush.msra.mxu0 %v3826
    %3872 = vmatpush.msra.mxu0 %v3822
    %3873 = vmatpush.msra.mxu0 %v3818
    %3874 = vmatpush.msra.mxu0 %v3814
    %3875 = vmatpush.msra.mxu0 %v3810
    %3876 = vmatpush.msra.mxu0 %v3806
    %3877 = vmatpush.msra.mxu0 %v3802
    %3878 = vmatpush.msra.mxu0 %v3798
    %3879 = vmatpush.msra.mxu0 %v3794
    %3880 = vmatpush.msra.mxu0 %v3790
    %3881 = vmatmul.f32.gmra.mxu0 %v3788
    %v3882 = vpop.f32.mrf.mxu0
    %v3883 = vadd.f32 %v3857, %v3882
    %3884 = vmatmul.f32.gmra.mxu0 %v3789
    %v3885 = vpop.f32.mrf.mxu0
    %v3886 = vadd.f32 %v3857, %v3885
    %3887 = vdwg.mxu0
    %3888 = vmatpush.msra.mxu0 %v3851
    %3889 = vmatpush.msra.mxu0 %v3847
    %3890 = vmatpush.msra.mxu0 %v3843
    %3891 = vmatpush.msra.mxu0 %v3839
    %3892 = vmatpush.msra.mxu0 %v3835
    %3893 = vmatpush.msra.mxu0 %v3831
    %3894 = vmatpush.msra.mxu0 %v3827
    %3895 = vmatpush.msra.mxu0 %v3823
    %3896 = vmatpush.msra.mxu0 %v3819
    %3897 = vmatpush.msra.mxu0 %v3815
    %3898 = vmatpush.msra.mxu0 %v3811
    %3899 = vmatpush.msra.mxu0 %v3807
    %3900 = vmatpush.msra.mxu0 %v3803
    %3901 = vmatpush.msra.mxu0 %v3799
    %3902 = vmatpush.msra.mxu0 %v3795
    %3903 = vmatpush.msra.mxu0 %v3791
    %3904 = vmatmul.f32.gmra.mxu0 %v3788
    %v3905 = vpop.f32.mrf.mxu0
    %v3906 = vadd.f32 %v3858, %v3905
    %3907 = vmatmul.f32.gmra.mxu0 %v3789
    %v3908 = vpop.f32.mrf.mxu0
    %v3909 = vadd.f32 %v3858, %v3908
    %3910 = vdwg.mxu0
    %3911 = vmatpush.msra.mxu0 %v3852
    %3912 = vmatpush.msra.mxu0 %v3848
    %3913 = vmatpush.msra.mxu0 %v3844
    %3914 = vmatpush.msra.mxu0 %v3840
    %3915 = vmatpush.msra.mxu0 %v3836
    %3916 = vmatpush.msra.mxu0 %v3832
    %3917 = vmatpush.msra.mxu0 %v3828
    %3918 = vmatpush.msra.mxu0 %v3824
    %3919 = vmatpush.msra.mxu0 %v3820
    %3920 = vmatpush.msra.mxu0 %v3816
    %3921 = vmatpush.msra.mxu0 %v3812
    %3922 = vmatpush.msra.mxu0 %v3808
    %3923 = vmatpush.msra.mxu0 %v3804
    %3924 = vmatpush.msra.mxu0 %v3800
    %3925 = vmatpush.msra.mxu0 %v3796
    %3926 = vmatpush.msra.mxu0 %v3792
    %3927 = vmatmul.f32.gmra.mxu0 %v3788
    %v3928 = vpop.f32.mrf.mxu0
    %v3929 = vadd.f32 %v3859, %v3928
    %3930 = vmatmul.f32.gmra.mxu0 %v3789
    %v3931 = vpop.f32.mrf.mxu0
    %v3932 = vadd.f32 %v3859, %v3931
    %3933 = vdwg.mxu0
    %3934 = vmatpush.msra.mxu0 %v3853
    %3935 = vmatpush.msra.mxu0 %v3849
    %3936 = vmatpush.msra.mxu0 %v3845
    %3937 = vmatpush.msra.mxu0 %v3841
    %3938 = vmatpush.msra.mxu0 %v3837
    %3939 = vmatpush.msra.mxu0 %v3833
    %3940 = vmatpush.msra.mxu0 %v3829
    %3941 = vmatpush.msra.mxu0 %v3825
    %3942 = vmatpush.msra.mxu0 %v3821
    %3943 = vmatpush.msra.mxu0 %v3817
    %3944 = vmatpush.msra.mxu0 %v3813
    %3945 = vmatpush.msra.mxu0 %v3809
    %3946 = vmatpush.msra.mxu0 %v3805
    %3947 = vmatpush.msra.mxu0 %v3801
    %3948 = vmatpush.msra.mxu0 %v3797
    %3949 = vmatpush.msra.mxu0 %v3793
    %3950 = vmatmul.f32.gmra.mxu0 %v3788
    %v3951 = vpop.f32.mrf.mxu0
    %v3952 = vadd.f32 %v3860, %v3951
    %3953 = vmatmul.f32.gmra.mxu0 %v3789
    %v3954 = vpop.f32.mrf.mxu0
    %v3955 = vadd.f32 %v3860, %v3954
    %3956 = vdwg.mxu0
    %3957 = vst [vmem:[#allocation4] sm:$0xff] %v3883
    %3958 = vst [vmem:[#allocation4 + $0x8] sm:$0xff] %v3906
    %3959 = vst [vmem:[#allocation4 + $0x10] sm:$0xff] %v3929
    %3960 = vst [vmem:[#allocation4 + $0x18] sm:$0xff] %v3952
    %3961 = vst [vmem:[#allocation4 + $0x20] sm:$0xff] %v3886
    %3962 = vst [vmem:[#allocation4 + $0x28] sm:$0xff] %v3909
    %3963 = vst [vmem:[#allocation4 + $0x30] sm:$0xff] %v3932
    %3964 = vst [vmem:[#allocation4 + $0x38] sm:$0xff] %v3955
    %v3965 = vld [vmem:[#allocation7 + $0xc00] sm:$0xff]
    %v3966 = vld [vmem:[#allocation7 + $0xc08] sm:$0xff]
    %v3967 = vld [vmem:[#allocation7 + $0xc10] sm:$0xff]
    %v3968 = vld [vmem:[#allocation7 + $0xc18] sm:$0xff]
    %v3969 = vld [vmem:[#allocation7 + $0xc20] sm:$0xff]
    %v3970 = vld [vmem:[#allocation7 + $0xc28] sm:$0xff]
    %v3971 = vld [vmem:[#allocation7 + $0xc30] sm:$0xff]
    %v3972 = vld [vmem:[#allocation7 + $0xc38] sm:$0xff]
    %v3973 = vld [vmem:[#allocation7 + $0xc40] sm:$0xff]
    %v3974 = vld [vmem:[#allocation7 + $0xc48] sm:$0xff]
    %v3975 = vld [vmem:[#allocation7 + $0xc50] sm:$0xff]
    %v3976 = vld [vmem:[#allocation7 + $0xc58] sm:$0xff]
    %v3977 = vld [vmem:[#allocation7 + $0xc60] sm:$0xff]
    %v3978 = vld [vmem:[#allocation7 + $0xc68] sm:$0xff]
    %v3979 = vld [vmem:[#allocation7 + $0xc70] sm:$0xff]
    %v3980 = vld [vmem:[#allocation7 + $0xc78] sm:$0xff]
    %v3981 = vld [vmem:[#allocation7 + $0xc80] sm:$0xff]
    %v3982 = vld [vmem:[#allocation7 + $0xc88] sm:$0xff]
    %v3983 = vld [vmem:[#allocation7 + $0xc90] sm:$0xff]
    %v3984 = vld [vmem:[#allocation7 + $0xc98] sm:$0xff]
    %v3985 = vld [vmem:[#allocation7 + $0xca0] sm:$0xff]
    %v3986 = vld [vmem:[#allocation7 + $0xca8] sm:$0xff]
    %v3987 = vld [vmem:[#allocation7 + $0xcb0] sm:$0xff]
    %v3988 = vld [vmem:[#allocation7 + $0xcb8] sm:$0xff]
    %v3989 = vld [vmem:[#allocation7 + $0xcc0] sm:$0xff]
    %v3990 = vld [vmem:[#allocation7 + $0xcc8] sm:$0xff]
    %v3991 = vld [vmem:[#allocation7 + $0xcd0] sm:$0xff]
    %v3992 = vld [vmem:[#allocation7 + $0xcd8] sm:$0xff]
    %v3993 = vld [vmem:[#allocation7 + $0xce0] sm:$0xff]
    %v3994 = vld [vmem:[#allocation7 + $0xce8] sm:$0xff]
    %v3995 = vld [vmem:[#allocation7 + $0xcf0] sm:$0xff]
    %v3996 = vld [vmem:[#allocation7 + $0xcf8] sm:$0xff]
    %v3997 = vld [vmem:[#allocation7 + $0xd00] sm:$0xff]
    %v3998 = vld [vmem:[#allocation7 + $0xd08] sm:$0xff]
    %v3999 = vld [vmem:[#allocation7 + $0xd10] sm:$0xff]
    %v4000 = vld [vmem:[#allocation7 + $0xd18] sm:$0xff]
    %v4001 = vld [vmem:[#allocation7 + $0xd20] sm:$0xff]
    %v4002 = vld [vmem:[#allocation7 + $0xd28] sm:$0xff]
    %v4003 = vld [vmem:[#allocation7 + $0xd30] sm:$0xff]
    %v4004 = vld [vmem:[#allocation7 + $0xd38] sm:$0xff]
    %v4005 = vld [vmem:[#allocation7 + $0xd40] sm:$0xff]
    %v4006 = vld [vmem:[#allocation7 + $0xd48] sm:$0xff]
    %v4007 = vld [vmem:[#allocation7 + $0xd50] sm:$0xff]
    %v4008 = vld [vmem:[#allocation7 + $0xd58] sm:$0xff]
    %v4009 = vld [vmem:[#allocation7 + $0xd60] sm:$0xff]
    %v4010 = vld [vmem:[#allocation7 + $0xd68] sm:$0xff]
    %v4011 = vld [vmem:[#allocation7 + $0xd70] sm:$0xff]
    %v4012 = vld [vmem:[#allocation7 + $0xd78] sm:$0xff]
    %v4013 = vld [vmem:[#allocation7 + $0xd80] sm:$0xff]
    %v4014 = vld [vmem:[#allocation7 + $0xd88] sm:$0xff]
    %v4015 = vld [vmem:[#allocation7 + $0xd90] sm:$0xff]
    %v4016 = vld [vmem:[#allocation7 + $0xd98] sm:$0xff]
    %v4017 = vld [vmem:[#allocation7 + $0xda0] sm:$0xff]
    %v4018 = vld [vmem:[#allocation7 + $0xda8] sm:$0xff]
    %v4019 = vld [vmem:[#allocation7 + $0xdb0] sm:$0xff]
    %v4020 = vld [vmem:[#allocation7 + $0xdb8] sm:$0xff]
    %v4021 = vld [vmem:[#allocation7 + $0xdc0] sm:$0xff]
    %v4022 = vld [vmem:[#allocation7 + $0xdc8] sm:$0xff]
    %v4023 = vld [vmem:[#allocation7 + $0xdd0] sm:$0xff]
    %v4024 = vld [vmem:[#allocation7 + $0xdd8] sm:$0xff]
    %v4025 = vld [vmem:[#allocation7 + $0xde0] sm:$0xff]
    %v4026 = vld [vmem:[#allocation7 + $0xde8] sm:$0xff]
    %v4027 = vld [vmem:[#allocation7 + $0xdf0] sm:$0xff]
    %v4028 = vld [vmem:[#allocation7 + $0xdf8] sm:$0xff]
    %4029 = vmatpush.msra.mxu0 %v4025
    %4030 = vmatpush.msra.mxu0 %v4021
    %4031 = vmatpush.msra.mxu0 %v4017
    %4032 = vmatpush.msra.mxu0 %v4013
    %4033 = vmatpush.msra.mxu0 %v4009
    %4034 = vmatpush.msra.mxu0 %v4005
    %4035 = vmatpush.msra.mxu0 %v4001
    %4036 = vmatpush.msra.mxu0 %v3997
    %4037 = vmatpush.msra.mxu0 %v3993
    %4038 = vmatpush.msra.mxu0 %v3989
    %4039 = vmatpush.msra.mxu0 %v3985
    %4040 = vmatpush.msra.mxu0 %v3981
    %4041 = vmatpush.msra.mxu0 %v3977
    %4042 = vmatpush.msra.mxu0 %v3973
    %4043 = vmatpush.msra.mxu0 %v3969
    %4044 = vmatpush.msra.mxu0 %v3965
    %4045 = vmatmul.f32.gmra.mxu0 %v3788
    %v4046 = vpop.f32.mrf.mxu0
    %v4047 = vadd.f32 0.0, %v4046
    %4048 = vmatmul.f32.gmra.mxu0 %v3789
    %v4049 = vpop.f32.mrf.mxu0
    %v4050 = vadd.f32 0.0, %v4049
    %4051 = vdwg.mxu0
    %4052 = vmatpush.msra.mxu0 %v4026
    %4053 = vmatpush.msra.mxu0 %v4022
    %4054 = vmatpush.msra.mxu0 %v4018
    %4055 = vmatpush.msra.mxu0 %v4014
    %4056 = vmatpush.msra.mxu0 %v4010
    %4057 = vmatpush.msra.mxu0 %v4006
    %4058 = vmatpush.msra.mxu0 %v4002
    %4059 = vmatpush.msra.mxu0 %v3998
    %4060 = vmatpush.msra.mxu0 %v3994
    %4061 = vmatpush.msra.mxu0 %v3990
    %4062 = vmatpush.msra.mxu0 %v3986
    %4063 = vmatpush.msra.mxu0 %v3982
    %4064 = vmatpush.msra.mxu0 %v3978
    %4065 = vmatpush.msra.mxu0 %v3974
    %4066 = vmatpush.msra.mxu0 %v3970
    %4067 = vmatpush.msra.mxu0 %v3966
    %4068 = vmatmul.f32.gmra.mxu0 %v3788
    %v4069 = vpop.f32.mrf.mxu0
    %v4070 = vadd.f32 0.0, %v4069
    %4071 = vmatmul.f32.gmra.mxu0 %v3789
    %v4072 = vpop.f32.mrf.mxu0
    %v4073 = vadd.f32 0.0, %v4072
    %4074 = vdwg.mxu0
    %4075 = vmatpush.msra.mxu0 %v4027
    %4076 = vmatpush.msra.mxu0 %v4023
    %4077 = vmatpush.msra.mxu0 %v4019
    %4078 = vmatpush.msra.mxu0 %v4015
    %4079 = vmatpush.msra.mxu0 %v4011
    %4080 = vmatpush.msra.mxu0 %v4007
    %4081 = vmatpush.msra.mxu0 %v4003
    %4082 = vmatpush.msra.mxu0 %v3999
    %4083 = vmatpush.msra.mxu0 %v3995
    %4084 = vmatpush.msra.mxu0 %v3991
    %4085 = vmatpush.msra.mxu0 %v3987
    %4086 = vmatpush.msra.mxu0 %v3983
    %4087 = vmatpush.msra.mxu0 %v3979
    %4088 = vmatpush.msra.mxu0 %v3975
    %4089 = vmatpush.msra.mxu0 %v3971
    %4090 = vmatpush.msra.mxu0 %v3967
    %4091 = vmatmul.f32.gmra.mxu0 %v3788
    %v4092 = vpop.f32.mrf.mxu0
    %v4093 = vadd.f32 0.0, %v4092
    %4094 = vmatmul.f32.gmra.mxu0 %v3789
    %v4095 = vpop.f32.mrf.mxu0
    %v4096 = vadd.f32 0.0, %v4095
    %4097 = vdwg.mxu0
    %4098 = vmatpush.msra.mxu0 %v4028
    %4099 = vmatpush.msra.mxu0 %v4024
    %4100 = vmatpush.msra.mxu0 %v4020
    %4101 = vmatpush.msra.mxu0 %v4016
    %4102 = vmatpush.msra.mxu0 %v4012
    %4103 = vmatpush.msra.mxu0 %v4008
    %4104 = vmatpush.msra.mxu0 %v4004
    %4105 = vmatpush.msra.mxu0 %v4000
    %4106 = vmatpush.msra.mxu0 %v3996
    %4107 = vmatpush.msra.mxu0 %v3992
    %4108 = vmatpush.msra.mxu0 %v3988
    %4109 = vmatpush.msra.mxu0 %v3984
    %4110 = vmatpush.msra.mxu0 %v3980
    %4111 = vmatpush.msra.mxu0 %v3976
    %4112 = vmatpush.msra.mxu0 %v3972
    %4113 = vmatpush.msra.mxu0 %v3968
    %4114 = vmatmul.f32.gmra.mxu0 %v3788
    %v4115 = vpop.f32.mrf.mxu0
    %v4116 = vadd.f32 0.0, %v4115
    %4117 = vmatmul.f32.gmra.mxu0 %v3789
    %v4118 = vpop.f32.mrf.mxu0
    %v4119 = vadd.f32 0.0, %v4118
    %4120 = vdwg.mxu0
    %4121 = vst [vmem:[#allocation5] sm:$0xff] %v4047
    %4122 = vst [vmem:[#allocation5 + $0x8] sm:$0xff] %v4070
    %4123 = vst [vmem:[#allocation5 + $0x10] sm:$0xff] %v4093
    %4124 = vst [vmem:[#allocation5 + $0x18] sm:$0xff] %v4116
    %4125 = vst [vmem:[#allocation5 + $0x20] sm:$0xff] %v4050
    %4126 = vst [vmem:[#allocation5 + $0x28] sm:$0xff] %v4073
    %4127 = vst [vmem:[#allocation5 + $0x30] sm:$0xff] %v4096
    %4128 = vst [vmem:[#allocation5 + $0x38] sm:$0xff] %v4119
    %v4129 = vld [vmem:[#allocation7 + $0xe00] sm:$0xff]
    %v4130 = vld [vmem:[#allocation7 + $0xe08] sm:$0xff]
    %v4131 = vld [vmem:[#allocation7 + $0xe10] sm:$0xff]
    %v4132 = vld [vmem:[#allocation7 + $0xe18] sm:$0xff]
    %v4133 = vld [vmem:[#allocation7 + $0xe20] sm:$0xff]
    %v4134 = vld [vmem:[#allocation7 + $0xe28] sm:$0xff]
    %v4135 = vld [vmem:[#allocation7 + $0xe30] sm:$0xff]
    %v4136 = vld [vmem:[#allocation7 + $0xe38] sm:$0xff]
    %v4137 = vld [vmem:[#allocation7 + $0xe40] sm:$0xff]
    %v4138 = vld [vmem:[#allocation7 + $0xe48] sm:$0xff]
    %v4139 = vld [vmem:[#allocation7 + $0xe50] sm:$0xff]
    %v4140 = vld [vmem:[#allocation7 + $0xe58] sm:$0xff]
    %v4141 = vld [vmem:[#allocation7 + $0xe60] sm:$0xff]
    %v4142 = vld [vmem:[#allocation7 + $0xe68] sm:$0xff]
    %v4143 = vld [vmem:[#allocation7 + $0xe70] sm:$0xff]
    %v4144 = vld [vmem:[#allocation7 + $0xe78] sm:$0xff]
    %v4145 = vld [vmem:[#allocation7 + $0xe80] sm:$0xff]
    %v4146 = vld [vmem:[#allocation7 + $0xe88] sm:$0xff]
    %v4147 = vld [vmem:[#allocation7 + $0xe90] sm:$0xff]
    %v4148 = vld [vmem:[#allocation7 + $0xe98] sm:$0xff]
    %v4149 = vld [vmem:[#allocation7 + $0xea0] sm:$0xff]
    %v4150 = vld [vmem:[#allocation7 + $0xea8] sm:$0xff]
    %v4151 = vld [vmem:[#allocation7 + $0xeb0] sm:$0xff]
    %v4152 = vld [vmem:[#allocation7 + $0xeb8] sm:$0xff]
    %v4153 = vld [vmem:[#allocation7 + $0xec0] sm:$0xff]
    %v4154 = vld [vmem:[#allocation7 + $0xec8] sm:$0xff]
    %v4155 = vld [vmem:[#allocation7 + $0xed0] sm:$0xff]
    %v4156 = vld [vmem:[#allocation7 + $0xed8] sm:$0xff]
    %v4157 = vld [vmem:[#allocation7 + $0xee0] sm:$0xff]
    %v4158 = vld [vmem:[#allocation7 + $0xee8] sm:$0xff]
    %v4159 = vld [vmem:[#allocation7 + $0xef0] sm:$0xff]
    %v4160 = vld [vmem:[#allocation7 + $0xef8] sm:$0xff]
    %v4161 = vld [vmem:[#allocation7 + $0xf00] sm:$0xff]
    %v4162 = vld [vmem:[#allocation7 + $0xf08] sm:$0xff]
    %v4163 = vld [vmem:[#allocation7 + $0xf10] sm:$0xff]
    %v4164 = vld [vmem:[#allocation7 + $0xf18] sm:$0xff]
    %v4165 = vld [vmem:[#allocation7 + $0xf20] sm:$0xff]
    %v4166 = vld [vmem:[#allocation7 + $0xf28] sm:$0xff]
    %v4167 = vld [vmem:[#allocation7 + $0xf30] sm:$0xff]
    %v4168 = vld [vmem:[#allocation7 + $0xf38] sm:$0xff]
    %v4169 = vld [vmem:[#allocation7 + $0xf40] sm:$0xff]
    %v4170 = vld [vmem:[#allocation7 + $0xf48] sm:$0xff]
    %v4171 = vld [vmem:[#allocation7 + $0xf50] sm:$0xff]
    %v4172 = vld [vmem:[#allocation7 + $0xf58] sm:$0xff]
    %v4173 = vld [vmem:[#allocation7 + $0xf60] sm:$0xff]
    %v4174 = vld [vmem:[#allocation7 + $0xf68] sm:$0xff]
    %v4175 = vld [vmem:[#allocation7 + $0xf70] sm:$0xff]
    %v4176 = vld [vmem:[#allocation7 + $0xf78] sm:$0xff]
    %v4177 = vld [vmem:[#allocation7 + $0xf80] sm:$0xff]
    %v4178 = vld [vmem:[#allocation7 + $0xf88] sm:$0xff]
    %v4179 = vld [vmem:[#allocation7 + $0xf90] sm:$0xff]
    %v4180 = vld [vmem:[#allocation7 + $0xf98] sm:$0xff]
    %v4181 = vld [vmem:[#allocation7 + $0xfa0] sm:$0xff]
    %v4182 = vld [vmem:[#allocation7 + $0xfa8] sm:$0xff]
    %v4183 = vld [vmem:[#allocation7 + $0xfb0] sm:$0xff]
    %v4184 = vld [vmem:[#allocation7 + $0xfb8] sm:$0xff]
    %v4185 = vld [vmem:[#allocation7 + $0xfc0] sm:$0xff]
    %v4186 = vld [vmem:[#allocation7 + $0xfc8] sm:$0xff]
    %v4187 = vld [vmem:[#allocation7 + $0xfd0] sm:$0xff]
    %v4188 = vld [vmem:[#allocation7 + $0xfd8] sm:$0xff]
    %v4189 = vld [vmem:[#allocation7 + $0xfe0] sm:$0xff]
    %v4190 = vld [vmem:[#allocation7 + $0xfe8] sm:$0xff]
    %v4191 = vld [vmem:[#allocation7 + $0xff0] sm:$0xff]
    %v4192 = vld [vmem:[#allocation7 + $0xff8] sm:$0xff]
    %v4193 = vld [vmem:[#allocation4] sm:$0x3]
    %v4194 = vld [vmem:[#allocation4 + $0x8] sm:$0x3]
    %v4195 = vld [vmem:[#allocation4 + $0x10] sm:$0x3]
    %v4196 = vld [vmem:[#allocation4 + $0x18] sm:$0x3]
    %v4197 = vld [vmem:[#allocation5 + $0x20] sm:$0xc0]
    %v4198 = vld [vmem:[#allocation5 + $0x28] sm:$0xc0]
    %v4199 = vld [vmem:[#allocation5 + $0x30] sm:$0xc0]
    %v4200 = vld [vmem:[#allocation5 + $0x38] sm:$0xc0]
    %v4205 = vrot.slane %v4197, 6
    %v4206 = vrot.slane %v4198, 6
    %v4207 = vrot.slane %v4199, 6
    %v4208 = vrot.slane %v4200, 6
    %v4213 = vadd.f32 %v4193, %v4205
    %v4214 = vadd.f32 %v4194, %v4206
    %v4215 = vadd.f32 %v4195, %v4207
    %v4216 = vadd.f32 %v4196, %v4208
    %4217 = vmatpush.msra.mxu0 %v4189
    %4218 = vmatpush.msra.mxu0 %v4185
    %4219 = vmatpush.msra.mxu0 %v4181
    %4220 = vmatpush.msra.mxu0 %v4177
    %4221 = vmatpush.msra.mxu0 %v4173
    %4222 = vmatpush.msra.mxu0 %v4169
    %4223 = vmatpush.msra.mxu0 %v4165
    %4224 = vmatpush.msra.mxu0 %v4161
    %4225 = vmatpush.msra.mxu0 %v4157
    %4226 = vmatpush.msra.mxu0 %v4153
    %4227 = vmatpush.msra.mxu0 %v4149
    %4228 = vmatpush.msra.mxu0 %v4145
    %4229 = vmatpush.msra.mxu0 %v4141
    %4230 = vmatpush.msra.mxu0 %v4137
    %4231 = vmatpush.msra.mxu0 %v4133
    %4232 = vmatpush.msra.mxu0 %v4129
    %4233 = vmatmul.f32.gmra.mxu0 0.0
    %v4234 = vpop.f32.mrf.mxu0
    %v4235 = vadd.f32 0.0, %v4234
    %4236 = vdwg.mxu0
    %4237 = vmatpush.msra.mxu0 %v4190
    %4238 = vmatpush.msra.mxu0 %v4186
    %4239 = vmatpush.msra.mxu0 %v4182
    %4240 = vmatpush.msra.mxu0 %v4178
    %4241 = vmatpush.msra.mxu0 %v4174
    %4242 = vmatpush.msra.mxu0 %v4170
    %4243 = vmatpush.msra.mxu0 %v4166
    %4244 = vmatpush.msra.mxu0 %v4162
    %4245 = vmatpush.msra.mxu0 %v4158
    %4246 = vmatpush.msra.mxu0 %v4154
    %4247 = vmatpush.msra.mxu0 %v4150
    %4248 = vmatpush.msra.mxu0 %v4146
    %4249 = vmatpush.msra.mxu0 %v4142
    %4250 = vmatpush.msra.mxu0 %v4138
    %4251 = vmatpush.msra.mxu0 %v4134
    %4252 = vmatpush.msra.mxu0 %v4130
    %4253 = vmatmul.f32.gmra.mxu0 0.0
    %v4254 = vpop.f32.mrf.mxu0
    %v4255 = vadd.f32 0.0, %v4254
    %4256 = vdwg.mxu0
    %4257 = vmatpush.msra.mxu0 %v4191
    %4258 = vmatpush.msra.mxu0 %v4187
    %4259 = vmatpush.msra.mxu0 %v4183
    %4260 = vmatpush.msra.mxu0 %v4179
    %4261 = vmatpush.msra.mxu0 %v4175
    %4262 = vmatpush.msra.mxu0 %v4171
    %4263 = vmatpush.msra.mxu0 %v4167
    %4264 = vmatpush.msra.mxu0 %v4163
    %4265 = vmatpush.msra.mxu0 %v4159
    %4266 = vmatpush.msra.mxu0 %v4155
    %4267 = vmatpush.msra.mxu0 %v4151
    %4268 = vmatpush.msra.mxu0 %v4147
    %4269 = vmatpush.msra.mxu0 %v4143
    %4270 = vmatpush.msra.mxu0 %v4139
    %4271 = vmatpush.msra.mxu0 %v4135
    %4272 = vmatpush.msra.mxu0 %v4131
    %4273 = vmatmul.f32.gmra.mxu0 0.0
    %v4274 = vpop.f32.mrf.mxu0
    %v4275 = vadd.f32 0.0, %v4274
    %4276 = vdwg.mxu0
    %4277 = vmatpush.msra.mxu0 %v4192
    %4278 = vmatpush.msra.mxu0 %v4188
    %4279 = vmatpush.msra.mxu0 %v4184
    %4280 = vmatpush.msra.mxu0 %v4180
    %4281 = vmatpush.msra.mxu0 %v4176
    %4282 = vmatpush.msra.mxu0 %v4172
    %4283 = vmatpush.msra.mxu0 %v4168
    %4284 = vmatpush.msra.mxu0 %v4164
    %4285 = vmatpush.msra.mxu0 %v4160
    %4286 = vmatpush.msra.mxu0 %v4156
    %4287 = vmatpush.msra.mxu0 %v4152
    %4288 = vmatpush.msra.mxu0 %v4148
    %4289 = vmatpush.msra.mxu0 %v4144
    %4290 = vmatpush.msra.mxu0 %v4140
    %4291 = vmatpush.msra.mxu0 %v4136
    %4292 = vmatpush.msra.mxu0 %v4132
    %4293 = vmatmul.f32.gmra.mxu0 0.0
    %v4294 = vpop.f32.mrf.mxu0
    %v4295 = vadd.f32 0.0, %v4294
    %4296 = vdwg.mxu0
    %v4297 = vadd.f32 %v4213, %v4235
    %v4298 = vadd.f32 %v4214, %v4255
    %v4299 = vadd.f32 %v4215, %v4275
    %v4300 = vadd.f32 %v4216, %v4295
    %v4301 = vxor.u32 %v4297, 2147483648
    %v4302 = vxor.u32 %v4298, 2147483648
    %v4303 = vxor.u32 %v4299, 2147483648
    %v4304 = vmul.f32 %v4301, 1.442695
    %v4305 = vpow.pop %v4304
    %v4306 = vmul.f32 %v4302, 1.442695
    %v4307 = vpow.pop %v4306
    %v4308 = vmul.f32 %v4303, 1.442695
    %v4309 = vpow.pop %v4308
    %v4310 = vadd.f32 %v4305, 1.0
    %v4311 = vadd.f32 %v4307, 1.0
    %v4312 = vadd.f32 %v4309, 1.0
    %v4313 = vrcp.pop %v4310
    %v4314 = vmul.f32 %v4310, %v4313
    %v4315 = vsub.f32 1.0, %v4314
    %v4316 = vmul.f32 %v4313, %v4315
    %v4317 = vadd.f32 %v4313, %v4316
    %vm4318 = vweird.f32 %v4310
    %vm4319 = vweird.f32 %v4313
    %vm4320 = vmor %vm4318, %vm4319
    %v4321 = vsel %vm4320, %v4313, %v4317
    %v4322 = vand.u32 2147483647, %v4310
    %vm4323 = vcmp.eq.f32.partialorder %v4322, 8.507059e+37
    %v4324 = vand.u32 %v4310, 2147483648
    %v4325 = vor.u32 1.1754944e-38, %v4324
    %v4326 = vsel %vm4323, %v4325, %v4321
    %v4327 = vmul.f32 1.0, %v4326
    %v4328 = vrcp.pop %v4311
    %v4329 = vmul.f32 %v4311, %v4328
    %v4330 = vsub.f32 1.0, %v4329
    %v4331 = vmul.f32 %v4328, %v4330
    %v4332 = vadd.f32 %v4328, %v4331
    %vm4333 = vweird.f32 %v4311
    %vm4334 = vweird.f32 %v4328
    %vm4335 = vmor %vm4333, %vm4334
    %v4336 = vsel %vm4335, %v4328, %v4332
    %v4337 = vand.u32 2147483647, %v4311
    %vm4338 = vcmp.eq.f32.partialorder %v4337, 8.507059e+37
    %v4339 = vand.u32 %v4311, 2147483648
    %v4340 = vor.u32 1.1754944e-38, %v4339
    %v4341 = vsel %vm4338, %v4340, %v4336
    %v4342 = vmul.f32 1.0, %v4341
    %v4343 = vrcp.pop %v4312
    %v4344 = vmul.f32 %v4312, %v4343
    %v4345 = vsub.f32 1.0, %v4344
    %v4346 = vmul.f32 %v4343, %v4345
    %v4347 = vadd.f32 %v4343, %v4346
    %vm4348 = vweird.f32 %v4312
    %vm4349 = vweird.f32 %v4343
    %vm4350 = vmor %vm4348, %vm4349
    %v4351 = vsel %vm4350, %v4343, %v4347
    %v4352 = vand.u32 2147483647, %v4312
    %vm4353 = vcmp.eq.f32.partialorder %v4352, 8.507059e+37
    %v4354 = vand.u32 %v4312, 2147483648
    %v4355 = vor.u32 1.1754944e-38, %v4354
    %v4356 = vsel %vm4353, %v4355, %v4351
    %v4357 = vmul.f32 1.0, %v4356
    %v4358 = vtanh.pop %v4300
    %v4359 = vmul.f32 %v4342, 0.0
    %v4360 = vmul.f32 %v4327, %v4358
    %v4361 = vadd.f32 %v4359, %v4360
    %v4362 = vtanh.pop %v4361
    %v4363 = vmul.f32 %v4357, %v4362
    %vm4364 = vcmask 517120
    %4365 = vst.msk [vmem:[#allocation6 + $0x4] sm:$0x3] %vm4364, %v4363
    %vm4366 = vcmask 1041920
    %4367 = vst.msk [vmem:[#allocation6 + $0x12] sm:$0x3] %vm4366, %v4363
    %v4368 = vld [vmem:[#allocation4] sm:$0xc]
    %v4369 = vld [vmem:[#allocation4 + $0x8] sm:$0xc]
    %v4370 = vld [vmem:[#allocation4 + $0x10] sm:$0xc]
    %v4371 = vld [vmem:[#allocation4 + $0x18] sm:$0xc]
    %v4372 = vld [vmem:[#allocation5 + $0x20] sm:$0x30]
    %v4373 = vld [vmem:[#allocation5 + $0x28] sm:$0x30]
    %v4374 = vld [vmem:[#allocation5 + $0x30] sm:$0x30]
    %v4375 = vld [vmem:[#allocation5 + $0x38] sm:$0x30]
    %v4380 = vrot.slane %v4372, 2
    %v4381 = vrot.slane %v4373, 2
    %v4382 = vrot.slane %v4374, 2
    %v4383 = vrot.slane %v4375, 2
    %v4388 = vadd.f32 %v4368, %v4380
    %v4389 = vadd.f32 %v4369, %v4381
    %v4390 = vadd.f32 %v4370, %v4382
    %v4391 = vadd.f32 %v4371, %v4383
    %4392 = vmatpush.msra.mxu0 %v4189
    %4393 = vmatpush.msra.mxu0 %v4185
    %4394 = vmatpush.msra.mxu0 %v4181
    %4395 = vmatpush.msra.mxu0 %v4177
    %4396 = vmatpush.msra.mxu0 %v4173
    %4397 = vmatpush.msra.mxu0 %v4169
    %4398 = vmatpush.msra.mxu0 %v4165
    %4399 = vmatpush.msra.mxu0 %v4161
    %4400 = vmatpush.msra.mxu0 %v4157
    %4401 = vmatpush.msra.mxu0 %v4153
    %4402 = vmatpush.msra.mxu0 %v4149
    %4403 = vmatpush.msra.mxu0 %v4145
    %4404 = vmatpush.msra.mxu0 %v4141
    %4405 = vmatpush.msra.mxu0 %v4137
    %4406 = vmatpush.msra.mxu0 %v4133
    %4407 = vmatpush.msra.mxu0 %v4129
    %4408 = vmatmul.f32.gmra.mxu0 %v4363
    %v4409 = vpop.f32.mrf.mxu0
    %v4410 = vadd.f32 0.0, %v4409
    %4411 = vdwg.mxu0
    %4412 = vmatpush.msra.mxu0 %v4190
    %4413 = vmatpush.msra.mxu0 %v4186
    %4414 = vmatpush.msra.mxu0 %v4182
    %4415 = vmatpush.msra.mxu0 %v4178
    %4416 = vmatpush.msra.mxu0 %v4174
    %4417 = vmatpush.msra.mxu0 %v4170
    %4418 = vmatpush.msra.mxu0 %v4166
    %4419 = vmatpush.msra.mxu0 %v4162
    %4420 = vmatpush.msra.mxu0 %v4158
    %4421 = vmatpush.msra.mxu0 %v4154
    %4422 = vmatpush.msra.mxu0 %v4150
    %4423 = vmatpush.msra.mxu0 %v4146
    %4424 = vmatpush.msra.mxu0 %v4142
    %4425 = vmatpush.msra.mxu0 %v4138
    %4426 = vmatpush.msra.mxu0 %v4134
    %4427 = vmatpush.msra.mxu0 %v4130
    %4428 = vmatmul.f32.gmra.mxu0 %v4363
    %v4429 = vpop.f32.mrf.mxu0
    %v4430 = vadd.f32 0.0, %v4429
    %4431 = vdwg.mxu0
    %4432 = vmatpush.msra.mxu0 %v4191
    %4433 = vmatpush.msra.mxu0 %v4187
    %4434 = vmatpush.msra.mxu0 %v4183
    %4435 = vmatpush.msra.mxu0 %v4179
    %4436 = vmatpush.msra.mxu0 %v4175
    %4437 = vmatpush.msra.mxu0 %v4171
    %4438 = vmatpush.msra.mxu0 %v4167
    %4439 = vmatpush.msra.mxu0 %v4163
    %4440 = vmatpush.msra.mxu0 %v4159
    %4441 = vmatpush.msra.mxu0 %v4155
    %4442 = vmatpush.msra.mxu0 %v4151
    %4443 = vmatpush.msra.mxu0 %v4147
    %4444 = vmatpush.msra.mxu0 %v4143
    %4445 = vmatpush.msra.mxu0 %v4139
    %4446 = vmatpush.msra.mxu0 %v4135
    %4447 = vmatpush.msra.mxu0 %v4131
    %4448 = vmatmul.f32.gmra.mxu0 %v4363
    %v4449 = vpop.f32.mrf.mxu0
    %v4450 = vadd.f32 0.0, %v4449
    %4451 = vdwg.mxu0
    %4452 = vmatpush.msra.mxu0 %v4192
    %4453 = vmatpush.msra.mxu0 %v4188
    %4454 = vmatpush.msra.mxu0 %v4184
    %4455 = vmatpush.msra.mxu0 %v4180
    %4456 = vmatpush.msra.mxu0 %v4176
    %4457 = vmatpush.msra.mxu0 %v4172
    %4458 = vmatpush.msra.mxu0 %v4168
    %4459 = vmatpush.msra.mxu0 %v4164
    %4460 = vmatpush.msra.mxu0 %v4160
    %4461 = vmatpush.msra.mxu0 %v4156
    %4462 = vmatpush.msra.mxu0 %v4152
    %4463 = vmatpush.msra.mxu0 %v4148
    %4464 = vmatpush.msra.mxu0 %v4144
    %4465 = vmatpush.msra.mxu0 %v4140
    %4466 = vmatpush.msra.mxu0 %v4136
    %4467 = vmatpush.msra.mxu0 %v4132
    %4468 = vmatmul.f32.gmra.mxu0 %v4363
    %v4469 = vpop.f32.mrf.mxu0
    %v4470 = vadd.f32 0.0, %v4469
    %4471 = vdwg.mxu0
    %v4476 = vrot.slane %v4410, 6
    %v4477 = vrot.slane %v4430, 6
    %v4478 = vrot.slane %v4450, 6
    %v4479 = vrot.slane %v4470, 6
    %v4484 = vadd.f32 %v4388, %v4476
    %v4485 = vadd.f32 %v4389, %v4477
    %v4486 = vadd.f32 %v4390, %v4478
    %v4487 = vadd.f32 %v4391, %v4479
    %v4488 = vxor.u32 %v4484, 2147483648
    %v4489 = vxor.u32 %v4485, 2147483648
    %v4490 = vxor.u32 %v4486, 2147483648
    %v4491 = vmul.f32 %v4488, 1.442695
    %v4492 = vpow.pop %v4491
    %v4493 = vmul.f32 %v4489, 1.442695
    %v4494 = vpow.pop %v4493
    %v4495 = vmul.f32 %v4490, 1.442695
    %v4496 = vpow.pop %v4495
    %v4497 = vadd.f32 %v4492, 1.0
    %v4498 = vadd.f32 %v4494, 1.0
    %v4499 = vadd.f32 %v4496, 1.0
    %v4500 = vrcp.pop %v4497
    %v4501 = vmul.f32 %v4497, %v4500
    %v4502 = vsub.f32 1.0, %v4501
    %v4503 = vmul.f32 %v4500, %v4502
    %v4504 = vadd.f32 %v4500, %v4503
    %vm4505 = vweird.f32 %v4497
    %vm4506 = vweird.f32 %v4500
    %vm4507 = vmor %vm4505, %vm4506
    %v4508 = vsel %vm4507, %v4500, %v4504
    %v4509 = vand.u32 2147483647, %v4497
    %vm4510 = vcmp.eq.f32.partialorder %v4509, 8.507059e+37
    %v4511 = vand.u32 %v4497, 2147483648
    %v4512 = vor.u32 1.1754944e-38, %v4511
    %v4513 = vsel %vm4510, %v4512, %v4508
    %v4514 = vmul.f32 1.0, %v4513
    %v4515 = vrcp.pop %v4498
    %v4516 = vmul.f32 %v4498, %v4515
    %v4517 = vsub.f32 1.0, %v4516
    %v4518 = vmul.f32 %v4515, %v4517
    %v4519 = vadd.f32 %v4515, %v4518
    %vm4520 = vweird.f32 %v4498
    %vm4521 = vweird.f32 %v4515
    %vm4522 = vmor %vm4520, %vm4521
    %v4523 = vsel %vm4522, %v4515, %v4519
    %v4524 = vand.u32 2147483647, %v4498
    %vm4525 = vcmp.eq.f32.partialorder %v4524, 8.507059e+37
    %v4526 = vand.u32 %v4498, 2147483648
    %v4527 = vor.u32 1.1754944e-38, %v4526
    %v4528 = vsel %vm4525, %v4527, %v4523
    %v4529 = vmul.f32 1.0, %v4528
    %v4530 = vrcp.pop %v4499
    %v4531 = vmul.f32 %v4499, %v4530
    %v4532 = vsub.f32 1.0, %v4531
    %v4533 = vmul.f32 %v4530, %v4532
    %v4534 = vadd.f32 %v4530, %v4533
    %vm4535 = vweird.f32 %v4499
    %vm4536 = vweird.f32 %v4530
    %vm4537 = vmor %vm4535, %vm4536
    %v4538 = vsel %vm4537, %v4530, %v4534
    %v4539 = vand.u32 2147483647, %v4499
    %vm4540 = vcmp.eq.f32.partialorder %v4539, 8.507059e+37
    %v4541 = vand.u32 %v4499, 2147483648
    %v4542 = vor.u32 1.1754944e-38, %v4541
    %v4543 = vsel %vm4540, %v4542, %v4538
    %v4544 = vmul.f32 1.0, %v4543
    %v4545 = vtanh.pop %v4487
    %v4547 = vrot.slane %v4361, 6
    %v4549 = vmul.f32 %v4529, %v4547
    %v4550 = vmul.f32 %v4514, %v4545
    %v4551 = vadd.f32 %v4549, %v4550
    %v4552 = vtanh.pop %v4551
    %v4553 = vmul.f32 %v4544, %v4552
    %vm4554 = vcmask 519170
    %4555 = vst.msk [vmem:[#allocation6 + $0x4] sm:$0xc] %vm4554, %v4553
    %vm4556 = vcmask 1043970
    %4557 = vst.msk [vmem:[#allocation6 + $0xe] sm:$0xc] %vm4556, %v4553
    %v4558 = vld [vmem:[#allocation4] sm:$0x30]
    %v4559 = vld [vmem:[#allocation4 + $0x8] sm:$0x30]
    %v4560 = vld [vmem:[#allocation4 + $0x10] sm:$0x30]
    %v4561 = vld [vmem:[#allocation4 + $0x18] sm:$0x30]
    %v4562 = vld [vmem:[#allocation5 + $0x20] sm:$0xc]
    %v4563 = vld [vmem:[#allocation5 + $0x28] sm:$0xc]
    %v4564 = vld [vmem:[#allocation5 + $0x30] sm:$0xc]
    %v4565 = vld [vmem:[#allocation5 + $0x38] sm:$0xc]
    %v4570 = vrot.slane %v4562, 6
    %v4571 = vrot.slane %v4563, 6
    %v4572 = vrot.slane %v4564, 6
    %v4573 = vrot.slane %v4565, 6
    %v4578 = vadd.f32 %v4558, %v4570
    %v4579 = vadd.f32 %v4559, %v4571
    %v4580 = vadd.f32 %v4560, %v4572
    %v4581 = vadd.f32 %v4561, %v4573
    %v4583 = vrot.slane %v4553, 2
    %4585 = vmatpush.msra.mxu0 %v4189
    %4586 = vmatpush.msra.mxu0 %v4185
    %4587 = vmatpush.msra.mxu0 %v4181
    %4588 = vmatpush.msra.mxu0 %v4177
    %4589 = vmatpush.msra.mxu0 %v4173
    %4590 = vmatpush.msra.mxu0 %v4169
    %4591 = vmatpush.msra.mxu0 %v4165
    %4592 = vmatpush.msra.mxu0 %v4161
    %4593 = vmatpush.msra.mxu0 %v4157
    %4594 = vmatpush.msra.mxu0 %v4153
    %4595 = vmatpush.msra.mxu0 %v4149
    %4596 = vmatpush.msra.mxu0 %v4145
    %4597 = vmatpush.msra.mxu0 %v4141
    %4598 = vmatpush.msra.mxu0 %v4137
    %4599 = vmatpush.msra.mxu0 %v4133
    %4600 = vmatpush.msra.mxu0 %v4129
    %4601 = vmatmul.f32.gmra.mxu0 %v4583
    %v4602 = vpop.f32.mrf.mxu0
    %v4603 = vadd.f32 0.0, %v4602
    %4604 = vdwg.mxu0
    %4605 = vmatpush.msra.mxu0 %v4190
    %4606 = vmatpush.msra.mxu0 %v4186
    %4607 = vmatpush.msra.mxu0 %v4182
    %4608 = vmatpush.msra.mxu0 %v4178
    %4609 = vmatpush.msra.mxu0 %v4174
    %4610 = vmatpush.msra.mxu0 %v4170
    %4611 = vmatpush.msra.mxu0 %v4166
    %4612 = vmatpush.msra.mxu0 %v4162
    %4613 = vmatpush.msra.mxu0 %v4158
    %4614 = vmatpush.msra.mxu0 %v4154
    %4615 = vmatpush.msra.mxu0 %v4150
    %4616 = vmatpush.msra.mxu0 %v4146
    %4617 = vmatpush.msra.mxu0 %v4142
    %4618 = vmatpush.msra.mxu0 %v4138
    %4619 = vmatpush.msra.mxu0 %v4134
    %4620 = vmatpush.msra.mxu0 %v4130
    %4621 = vmatmul.f32.gmra.mxu0 %v4583
    %v4622 = vpop.f32.mrf.mxu0
    %v4623 = vadd.f32 0.0, %v4622
    %4624 = vdwg.mxu0
    %4625 = vmatpush.msra.mxu0 %v4191
    %4626 = vmatpush.msra.mxu0 %v4187
    %4627 = vmatpush.msra.mxu0 %v4183
    %4628 = vmatpush.msra.mxu0 %v4179
    %4629 = vmatpush.msra.mxu0 %v4175
    %4630 = vmatpush.msra.mxu0 %v4171
    %4631 = vmatpush.msra.mxu0 %v4167
    %4632 = vmatpush.msra.mxu0 %v4163
    %4633 = vmatpush.msra.mxu0 %v4159
    %4634 = vmatpush.msra.mxu0 %v4155
    %4635 = vmatpush.msra.mxu0 %v4151
    %4636 = vmatpush.msra.mxu0 %v4147
    %4637 = vmatpush.msra.mxu0 %v4143
    %4638 = vmatpush.msra.mxu0 %v4139
    %4639 = vmatpush.msra.mxu0 %v4135
    %4640 = vmatpush.msra.mxu0 %v4131
    %4641 = vmatmul.f32.gmra.mxu0 %v4583
    %v4642 = vpop.f32.mrf.mxu0
    %v4643 = vadd.f32 0.0, %v4642
    %4644 = vdwg.mxu0
    %4645 = vmatpush.msra.mxu0 %v4192
    %4646 = vmatpush.msra.mxu0 %v4188
    %4647 = vmatpush.msra.mxu0 %v4184
    %4648 = vmatpush.msra.mxu0 %v4180
    %4649 = vmatpush.msra.mxu0 %v4176
    %4650 = vmatpush.msra.mxu0 %v4172
    %4651 = vmatpush.msra.mxu0 %v4168
    %4652 = vmatpush.msra.mxu0 %v4164
    %4653 = vmatpush.msra.mxu0 %v4160
    %4654 = vmatpush.msra.mxu0 %v4156
    %4655 = vmatpush.msra.mxu0 %v4152
    %4656 = vmatpush.msra.mxu0 %v4148
    %4657 = vmatpush.msra.mxu0 %v4144
    %4658 = vmatpush.msra.mxu0 %v4140
    %4659 = vmatpush.msra.mxu0 %v4136
    %4660 = vmatpush.msra.mxu0 %v4132
    %4661 = vmatmul.f32.gmra.mxu0 %v4583
    %v4662 = vpop.f32.mrf.mxu0
    %v4663 = vadd.f32 0.0, %v4662
    %4664 = vdwg.mxu0
    %v4669 = vrot.slane %v4603, 4
    %v4670 = vrot.slane %v4623, 4
    %v4671 = vrot.slane %v4643, 4
    %v4672 = vrot.slane %v4663, 4
    %v4677 = vadd.f32 %v4578, %v4669
    %v4678 = vadd.f32 %v4579, %v4670
    %v4679 = vadd.f32 %v4580, %v4671
    %v4680 = vadd.f32 %v4581, %v4672
    %v4681 = vxor.u32 %v4677, 2147483648
    %v4682 = vxor.u32 %v4678, 2147483648
    %v4683 = vxor.u32 %v4679, 2147483648
    %v4684 = vmul.f32 %v4681, 1.442695
    %v4685 = vpow.pop %v4684
    %v4686 = vmul.f32 %v4682, 1.442695
    %v4687 = vpow.pop %v4686
    %v4688 = vmul.f32 %v4683, 1.442695
    %v4689 = vpow.pop %v4688
    %v4690 = vadd.f32 %v4685, 1.0
    %v4691 = vadd.f32 %v4687, 1.0
    %v4692 = vadd.f32 %v4689, 1.0
    %v4693 = vrcp.pop %v4690
    %v4694 = vmul.f32 %v4690, %v4693
    %v4695 = vsub.f32 1.0, %v4694
    %v4696 = vmul.f32 %v4693, %v4695
    %v4697 = vadd.f32 %v4693, %v4696
    %vm4698 = vweird.f32 %v4690
    %vm4699 = vweird.f32 %v4693
    %vm4700 = vmor %vm4698, %vm4699
    %v4701 = vsel %vm4700, %v4693, %v4697
    %v4702 = vand.u32 2147483647, %v4690
    %vm4703 = vcmp.eq.f32.partialorder %v4702, 8.507059e+37
    %v4704 = vand.u32 %v4690, 2147483648
    %v4705 = vor.u32 1.1754944e-38, %v4704
    %v4706 = vsel %vm4703, %v4705, %v4701
    %v4707 = vmul.f32 1.0, %v4706
    %v4708 = vrcp.pop %v4691
    %v4709 = vmul.f32 %v4691, %v4708
    %v4710 = vsub.f32 1.0, %v4709
    %v4711 = vmul.f32 %v4708, %v4710
    %v4712 = vadd.f32 %v4708, %v4711
    %vm4713 = vweird.f32 %v4691
    %vm4714 = vweird.f32 %v4708
    %vm4715 = vmor %vm4713, %vm4714
    %v4716 = vsel %vm4715, %v4708, %v4712
    %v4717 = vand.u32 2147483647, %v4691
    %vm4718 = vcmp.eq.f32.partialorder %v4717, 8.507059e+37
    %v4719 = vand.u32 %v4691, 2147483648
    %v4720 = vor.u32 1.1754944e-38, %v4719
    %v4721 = vsel %vm4718, %v4720, %v4716
    %v4722 = vmul.f32 1.0, %v4721
    %v4723 = vrcp.pop %v4692
    %v4724 = vmul.f32 %v4692, %v4723
    %v4725 = vsub.f32 1.0, %v4724
    %v4726 = vmul.f32 %v4723, %v4725
    %v4727 = vadd.f32 %v4723, %v4726
    %vm4728 = vweird.f32 %v4692
    %vm4729 = vweird.f32 %v4723
    %vm4730 = vmor %vm4728, %vm4729
    %v4731 = vsel %vm4730, %v4723, %v4727
    %v4732 = vand.u32 2147483647, %v4692
    %vm4733 = vcmp.eq.f32.partialorder %v4732, 8.507059e+37
    %v4734 = vand.u32 %v4692, 2147483648
    %v4735 = vor.u32 1.1754944e-38, %v4734
    %v4736 = vsel %vm4733, %v4735, %v4731
    %v4737 = vmul.f32 1.0, %v4736
    %v4738 = vtanh.pop %v4680
    %v4740 = vrot.slane %v4551, 6
    %v4742 = vmul.f32 %v4722, %v4740
    %v4743 = vmul.f32 %v4707, %v4738
    %v4744 = vadd.f32 %v4742, %v4743
    %v4745 = vtanh.pop %v4744
    %v4746 = vmul.f32 %v4737, %v4745
    %vm4747 = vcmask 521220
    %4748 = vst.msk [vmem:[#allocation6 + $0x4] sm:$0x30] %vm4747, %v4746
    %vm4749 = vcmask 1046020
    %4750 = vst.msk [vmem:[#allocation6 + $0xa] sm:$0x30] %vm4749, %v4746
    %v4751 = vld [vmem:[#allocation4] sm:$0xc0]
    %v4752 = vld [vmem:[#allocation4 + $0x8] sm:$0xc0]
    %v4753 = vld [vmem:[#allocation4 + $0x10] sm:$0xc0]
    %v4754 = vld [vmem:[#allocation4 + $0x18] sm:$0xc0]
    %v4755 = vld [vmem:[#allocation5 + $0x20] sm:$0x3]
    %v4756 = vld [vmem:[#allocation5 + $0x28] sm:$0x3]
    %v4757 = vld [vmem:[#allocation5 + $0x30] sm:$0x3]
    %v4758 = vld [vmem:[#allocation5 + $0x38] sm:$0x3]
    %v4763 = vrot.slane %v4755, 2
    %v4764 = vrot.slane %v4756, 2
    %v4765 = vrot.slane %v4757, 2
    %v4766 = vrot.slane %v4758, 2
    %v4771 = vadd.f32 %v4751, %v4763
    %v4772 = vadd.f32 %v4752, %v4764
    %v4773 = vadd.f32 %v4753, %v4765
    %v4774 = vadd.f32 %v4754, %v4766
    %v4776 = vrot.slane %v4746, 4
    %4778 = vmatpush.msra.mxu0 %v4189
    %4779 = vmatpush.msra.mxu0 %v4185
    %4780 = vmatpush.msra.mxu0 %v4181
    %4781 = vmatpush.msra.mxu0 %v4177
    %4782 = vmatpush.msra.mxu0 %v4173
    %4783 = vmatpush.msra.mxu0 %v4169
    %4784 = vmatpush.msra.mxu0 %v4165
    %4785 = vmatpush.msra.mxu0 %v4161
    %4786 = vmatpush.msra.mxu0 %v4157
    %4787 = vmatpush.msra.mxu0 %v4153
    %4788 = vmatpush.msra.mxu0 %v4149
    %4789 = vmatpush.msra.mxu0 %v4145
    %4790 = vmatpush.msra.mxu0 %v4141
    %4791 = vmatpush.msra.mxu0 %v4137
    %4792 = vmatpush.msra.mxu0 %v4133
    %4793 = vmatpush.msra.mxu0 %v4129
    %4794 = vmatmul.f32.gmra.mxu0 %v4776
    %v4795 = vpop.f32.mrf.mxu0
    %v4796 = vadd.f32 0.0, %v4795
    %4797 = vdwg.mxu0
    %4798 = vmatpush.msra.mxu0 %v4190
    %4799 = vmatpush.msra.mxu0 %v4186
    %4800 = vmatpush.msra.mxu0 %v4182
    %4801 = vmatpush.msra.mxu0 %v4178
    %4802 = vmatpush.msra.mxu0 %v4174
    %4803 = vmatpush.msra.mxu0 %v4170
    %4804 = vmatpush.msra.mxu0 %v4166
    %4805 = vmatpush.msra.mxu0 %v4162
    %4806 = vmatpush.msra.mxu0 %v4158
    %4807 = vmatpush.msra.mxu0 %v4154
    %4808 = vmatpush.msra.mxu0 %v4150
    %4809 = vmatpush.msra.mxu0 %v4146
    %4810 = vmatpush.msra.mxu0 %v4142
    %4811 = vmatpush.msra.mxu0 %v4138
    %4812 = vmatpush.msra.mxu0 %v4134
    %4813 = vmatpush.msra.mxu0 %v4130
    %4814 = vmatmul.f32.gmra.mxu0 %v4776
    %v4815 = vpop.f32.mrf.mxu0
    %v4816 = vadd.f32 0.0, %v4815
    %4817 = vdwg.mxu0
    %4818 = vmatpush.msra.mxu0 %v4191
    %4819 = vmatpush.msra.mxu0 %v4187
    %4820 = vmatpush.msra.mxu0 %v4183
    %4821 = vmatpush.msra.mxu0 %v4179
    %4822 = vmatpush.msra.mxu0 %v4175
    %4823 = vmatpush.msra.mxu0 %v4171
    %4824 = vmatpush.msra.mxu0 %v4167
    %4825 = vmatpush.msra.mxu0 %v4163
    %4826 = vmatpush.msra.mxu0 %v4159
    %4827 = vmatpush.msra.mxu0 %v4155
    %4828 = vmatpush.msra.mxu0 %v4151
    %4829 = vmatpush.msra.mxu0 %v4147
    %4830 = vmatpush.msra.mxu0 %v4143
    %4831 = vmatpush.msra.mxu0 %v4139
    %4832 = vmatpush.msra.mxu0 %v4135
    %4833 = vmatpush.msra.mxu0 %v4131
    %4834 = vmatmul.f32.gmra.mxu0 %v4776
    %v4835 = vpop.f32.mrf.mxu0
    %v4836 = vadd.f32 0.0, %v4835
    %4837 = vdwg.mxu0
    %4838 = vmatpush.msra.mxu0 %v4192
    %4839 = vmatpush.msra.mxu0 %v4188
    %4840 = vmatpush.msra.mxu0 %v4184
    %4841 = vmatpush.msra.mxu0 %v4180
    %4842 = vmatpush.msra.mxu0 %v4176
    %4843 = vmatpush.msra.mxu0 %v4172
    %4844 = vmatpush.msra.mxu0 %v4168
    %4845 = vmatpush.msra.mxu0 %v4164
    %4846 = vmatpush.msra.mxu0 %v4160
    %4847 = vmatpush.msra.mxu0 %v4156
    %4848 = vmatpush.msra.mxu0 %v4152
    %4849 = vmatpush.msra.mxu0 %v4148
    %4850 = vmatpush.msra.mxu0 %v4144
    %4851 = vmatpush.msra.mxu0 %v4140
    %4852 = vmatpush.msra.mxu0 %v4136
    %4853 = vmatpush.msra.mxu0 %v4132
    %4854 = vmatmul.f32.gmra.mxu0 %v4776
    %v4855 = vpop.f32.mrf.mxu0
    %v4856 = vadd.f32 0.0, %v4855
    %4857 = vdwg.mxu0
    %v4862 = vrot.slane %v4796, 2
    %v4863 = vrot.slane %v4816, 2
    %v4864 = vrot.slane %v4836, 2
    %v4865 = vrot.slane %v4856, 2
    %v4870 = vadd.f32 %v4771, %v4862
    %v4871 = vadd.f32 %v4772, %v4863
    %v4872 = vadd.f32 %v4773, %v4864
    %v4873 = vadd.f32 %v4774, %v4865
    %v4874 = vxor.u32 %v4870, 2147483648
    %v4875 = vxor.u32 %v4871, 2147483648
    %v4876 = vxor.u32 %v4872, 2147483648
    %v4877 = vmul.f32 %v4874, 1.442695
    %v4878 = vpow.pop %v4877
    %v4879 = vmul.f32 %v4875, 1.442695
    %v4880 = vpow.pop %v4879
    %v4881 = vmul.f32 %v4876, 1.442695
    %v4882 = vpow.pop %v4881
    %v4883 = vadd.f32 %v4878, 1.0
    %v4884 = vadd.f32 %v4880, 1.0
    %v4885 = vadd.f32 %v4882, 1.0
    %v4886 = vrcp.pop %v4883
    %v4887 = vmul.f32 %v4883, %v4886
    %v4888 = vsub.f32 1.0, %v4887
    %v4889 = vmul.f32 %v4886, %v4888
    %v4890 = vadd.f32 %v4886, %v4889
    %vm4891 = vweird.f32 %v4883
    %vm4892 = vweird.f32 %v4886
    %vm4893 = vmor %vm4891, %vm4892
    %v4894 = vsel %vm4893, %v4886, %v4890
    %v4895 = vand.u32 2147483647, %v4883
    %vm4896 = vcmp.eq.f32.partialorder %v4895, 8.507059e+37
    %v4897 = vand.u32 %v4883, 2147483648
    %v4898 = vor.u32 1.1754944e-38, %v4897
    %v4899 = vsel %vm4896, %v4898, %v4894
    %v4900 = vmul.f32 1.0, %v4899
    %v4901 = vrcp.pop %v4884
    %v4902 = vmul.f32 %v4884, %v4901
    %v4903 = vsub.f32 1.0, %v4902
    %v4904 = vmul.f32 %v4901, %v4903
    %v4905 = vadd.f32 %v4901, %v4904
    %vm4906 = vweird.f32 %v4884
    %vm4907 = vweird.f32 %v4901
    %vm4908 = vmor %vm4906, %vm4907
    %v4909 = vsel %vm4908, %v4901, %v4905
    %v4910 = vand.u32 2147483647, %v4884
    %vm4911 = vcmp.eq.f32.partialorder %v4910, 8.507059e+37
    %v4912 = vand.u32 %v4884, 2147483648
    %v4913 = vor.u32 1.1754944e-38, %v4912
    %v4914 = vsel %vm4911, %v4913, %v4909
    %v4915 = vmul.f32 1.0, %v4914
    %v4916 = vrcp.pop %v4885
    %v4917 = vmul.f32 %v4885, %v4916
    %v4918 = vsub.f32 1.0, %v4917
    %v4919 = vmul.f32 %v4916, %v4918
    %v4920 = vadd.f32 %v4916, %v4919
    %vm4921 = vweird.f32 %v4885
    %vm4922 = vweird.f32 %v4916
    %vm4923 = vmor %vm4921, %vm4922
    %v4924 = vsel %vm4923, %v4916, %v4920
    %v4925 = vand.u32 2147483647, %v4885
    %vm4926 = vcmp.eq.f32.partialorder %v4925, 8.507059e+37
    %v4927 = vand.u32 %v4885, 2147483648
    %v4928 = vor.u32 1.1754944e-38, %v4927
    %v4929 = vsel %vm4926, %v4928, %v4924
    %v4930 = vmul.f32 1.0, %v4929
    %v4931 = vtanh.pop %v4873
    %v4933 = vrot.slane %v4744, 6
    %v4935 = vmul.f32 %v4915, %v4933
    %v4936 = vmul.f32 %v4900, %v4931
    %v4937 = vadd.f32 %v4935, %v4936
    %v4938 = vtanh.pop %v4937
    %v4939 = vmul.f32 %v4930, %v4938
    %vm4940 = vcmask 523270
    %4941 = vst.msk [vmem:[#allocation6 + $0x4] sm:$0xc0] %vm4940, %v4939
    %vm4942 = vcmask 1048070
    %4943 = vst.msk [vmem:[#allocation6 + $0x6] sm:$0xc0] %vm4942, %v4939
    %v4944 = vld [vmem:[#allocation4 + $0x20] sm:$0x3]
    %v4945 = vld [vmem:[#allocation4 + $0x28] sm:$0x3]
    %v4946 = vld [vmem:[#allocation4 + $0x30] sm:$0x3]
    %v4947 = vld [vmem:[#allocation4 + $0x38] sm:$0x3]
    %v4948 = vld [vmem:[#allocation5] sm:$0xc0]
    %v4949 = vld [vmem:[#allocation5 + $0x8] sm:$0xc0]
    %v4950 = vld [vmem:[#allocation5 + $0x10] sm:$0xc0]
    %v4951 = vld [vmem:[#allocation5 + $0x18] sm:$0xc0]
    %v4956 = vrot.slane %v4948, 6
    %v4957 = vrot.slane %v4949, 6
    %v4958 = vrot.slane %v4950, 6
    %v4959 = vrot.slane %v4951, 6
    %v4964 = vadd.f32 %v4944, %v4956
    %v4965 = vadd.f32 %v4945, %v4957
    %v4966 = vadd.f32 %v4946, %v4958
    %v4967 = vadd.f32 %v4947, %v4959
    %v4969 = vrot.slane %v4939, 6
    %4971 = vmatpush.msra.mxu0 %v4189
    %4972 = vmatpush.msra.mxu0 %v4185
    %4973 = vmatpush.msra.mxu0 %v4181
    %4974 = vmatpush.msra.mxu0 %v4177
    %4975 = vmatpush.msra.mxu0 %v4173
    %4976 = vmatpush.msra.mxu0 %v4169
    %4977 = vmatpush.msra.mxu0 %v4165
    %4978 = vmatpush.msra.mxu0 %v4161
    %4979 = vmatpush.msra.mxu0 %v4157
    %4980 = vmatpush.msra.mxu0 %v4153
    %4981 = vmatpush.msra.mxu0 %v4149
    %4982 = vmatpush.msra.mxu0 %v4145
    %4983 = vmatpush.msra.mxu0 %v4141
    %4984 = vmatpush.msra.mxu0 %v4137
    %4985 = vmatpush.msra.mxu0 %v4133
    %4986 = vmatpush.msra.mxu0 %v4129
    %4987 = vmatmul.f32.gmra.mxu0 %v4969
    %v4988 = vpop.f32.mrf.mxu0
    %v4989 = vadd.f32 0.0, %v4988
    %4990 = vdwg.mxu0
    %4991 = vmatpush.msra.mxu0 %v4190
    %4992 = vmatpush.msra.mxu0 %v4186
    %4993 = vmatpush.msra.mxu0 %v4182
    %4994 = vmatpush.msra.mxu0 %v4178
    %4995 = vmatpush.msra.mxu0 %v4174
    %4996 = vmatpush.msra.mxu0 %v4170
    %4997 = vmatpush.msra.mxu0 %v4166
    %4998 = vmatpush.msra.mxu0 %v4162
    %4999 = vmatpush.msra.mxu0 %v4158
    %5000 = vmatpush.msra.mxu0 %v4154
    %5001 = vmatpush.msra.mxu0 %v4150
    %5002 = vmatpush.msra.mxu0 %v4146
    %5003 = vmatpush.msra.mxu0 %v4142
    %5004 = vmatpush.msra.mxu0 %v4138
    %5005 = vmatpush.msra.mxu0 %v4134
    %5006 = vmatpush.msra.mxu0 %v4130
    %5007 = vmatmul.f32.gmra.mxu0 %v4969
    %v5008 = vpop.f32.mrf.mxu0
    %v5009 = vadd.f32 0.0, %v5008
    %5010 = vdwg.mxu0
    %5011 = vmatpush.msra.mxu0 %v4191
    %5012 = vmatpush.msra.mxu0 %v4187
    %5013 = vmatpush.msra.mxu0 %v4183
    %5014 = vmatpush.msra.mxu0 %v4179
    %5015 = vmatpush.msra.mxu0 %v4175
    %5016 = vmatpush.msra.mxu0 %v4171
    %5017 = vmatpush.msra.mxu0 %v4167
    %5018 = vmatpush.msra.mxu0 %v4163
    %5019 = vmatpush.msra.mxu0 %v4159
    %5020 = vmatpush.msra.mxu0 %v4155
    %5021 = vmatpush.msra.mxu0 %v4151
    %5022 = vmatpush.msra.mxu0 %v4147
    %5023 = vmatpush.msra.mxu0 %v4143
    %5024 = vmatpush.msra.mxu0 %v4139
    %5025 = vmatpush.msra.mxu0 %v4135
    %5026 = vmatpush.msra.mxu0 %v4131
    %5027 = vmatmul.f32.gmra.mxu0 %v4969
    %v5028 = vpop.f32.mrf.mxu0
    %v5029 = vadd.f32 0.0, %v5028
    %5030 = vdwg.mxu0
    %5031 = vmatpush.msra.mxu0 %v4192
    %5032 = vmatpush.msra.mxu0 %v4188
    %5033 = vmatpush.msra.mxu0 %v4184
    %5034 = vmatpush.msra.mxu0 %v4180
    %5035 = vmatpush.msra.mxu0 %v4176
    %5036 = vmatpush.msra.mxu0 %v4172
    %5037 = vmatpush.msra.mxu0 %v4168
    %5038 = vmatpush.msra.mxu0 %v4164
    %5039 = vmatpush.msra.mxu0 %v4160
    %5040 = vmatpush.msra.mxu0 %v4156
    %5041 = vmatpush.msra.mxu0 %v4152
    %5042 = vmatpush.msra.mxu0 %v4148
    %5043 = vmatpush.msra.mxu0 %v4144
    %5044 = vmatpush.msra.mxu0 %v4140
    %5045 = vmatpush.msra.mxu0 %v4136
    %5046 = vmatpush.msra.mxu0 %v4132
    %5047 = vmatmul.f32.gmra.mxu0 %v4969
    %v5048 = vpop.f32.mrf.mxu0
    %v5049 = vadd.f32 0.0, %v5048
    %5050 = vdwg.mxu0
    %v5051 = vadd.f32 %v4964, %v4989
    %v5052 = vadd.f32 %v4965, %v5009
    %v5053 = vadd.f32 %v4966, %v5029
    %v5054 = vadd.f32 %v4967, %v5049
    %v5055 = vxor.u32 %v5051, 2147483648
    %v5056 = vxor.u32 %v5052, 2147483648
    %v5057 = vxor.u32 %v5053, 2147483648
    %v5058 = vmul.f32 %v5055, 1.442695
    %v5059 = vpow.pop %v5058
    %v5060 = vmul.f32 %v5056, 1.442695
    %v5061 = vpow.pop %v5060
    %v5062 = vmul.f32 %v5057, 1.442695
    %v5063 = vpow.pop %v5062
    %v5064 = vadd.f32 %v5059, 1.0
    %v5065 = vadd.f32 %v5061, 1.0
    %v5066 = vadd.f32 %v5063, 1.0
    %v5067 = vrcp.pop %v5064
    %v5068 = vmul.f32 %v5064, %v5067
    %v5069 = vsub.f32 1.0, %v5068
    %v5070 = vmul.f32 %v5067, %v5069
    %v5071 = vadd.f32 %v5067, %v5070
    %vm5072 = vweird.f32 %v5064
    %vm5073 = vweird.f32 %v5067
    %vm5074 = vmor %vm5072, %vm5073
    %v5075 = vsel %vm5074, %v5067, %v5071
    %v5076 = vand.u32 2147483647, %v5064
    %vm5077 = vcmp.eq.f32.partialorder %v5076, 8.507059e+37
    %v5078 = vand.u32 %v5064, 2147483648
    %v5079 = vor.u32 1.1754944e-38, %v5078
    %v5080 = vsel %vm5077, %v5079, %v5075
    %v5081 = vmul.f32 1.0, %v5080
    %v5082 = vrcp.pop %v5065
    %v5083 = vmul.f32 %v5065, %v5082
    %v5084 = vsub.f32 1.0, %v5083
    %v5085 = vmul.f32 %v5082, %v5084
    %v5086 = vadd.f32 %v5082, %v5085
    %vm5087 = vweird.f32 %v5065
    %vm5088 = vweird.f32 %v5082
    %vm5089 = vmor %vm5087, %vm5088
    %v5090 = vsel %vm5089, %v5082, %v5086
    %v5091 = vand.u32 2147483647, %v5065
    %vm5092 = vcmp.eq.f32.partialorder %v5091, 8.507059e+37
    %v5093 = vand.u32 %v5065, 2147483648
    %v5094 = vor.u32 1.1754944e-38, %v5093
    %v5095 = vsel %vm5092, %v5094, %v5090
    %v5096 = vmul.f32 1.0, %v5095
    %v5097 = vrcp.pop %v5066
    %v5098 = vmul.f32 %v5066, %v5097
    %v5099 = vsub.f32 1.0, %v5098
    %v5100 = vmul.f32 %v5097, %v5099
    %v5101 = vadd.f32 %v5097, %v5100
    %vm5102 = vweird.f32 %v5066
    %vm5103 = vweird.f32 %v5097
    %vm5104 = vmor %vm5102, %vm5103
    %v5105 = vsel %vm5104, %v5097, %v5101
    %v5106 = vand.u32 2147483647, %v5066
    %vm5107 = vcmp.eq.f32.partialorder %v5106, 8.507059e+37
    %v5108 = vand.u32 %v5066, 2147483648
    %v5109 = vor.u32 1.1754944e-38, %v5108
    %v5110 = vsel %vm5107, %v5109, %v5105
    %v5111 = vmul.f32 1.0, %v5110
    %v5112 = vtanh.pop %v5054
    %v5114 = vrot.slane %v4937, 6
    %v5116 = vmul.f32 %v5096, %v5114
    %v5117 = vmul.f32 %v5081, %v5112
    %v5118 = vadd.f32 %v5116, %v5117
    %v5119 = vtanh.pop %v5118
    %v5120 = vmul.f32 %v5111, %v5119
    %5121 = vst.msk [vmem:[#allocation6 + $0xc] sm:$0x3] %vm4364, %v5120
    %5122 = vst.msk [vmem:[#allocation6 + $0xa] sm:$0x3] %vm4366, %v5120
    %v5123 = vld [vmem:[#allocation4 + $0x20] sm:$0xc]
    %v5124 = vld [vmem:[#allocation4 + $0x28] sm:$0xc]
    %v5125 = vld [vmem:[#allocation4 + $0x30] sm:$0xc]
    %v5126 = vld [vmem:[#allocation4 + $0x38] sm:$0xc]
    %v5127 = vld [vmem:[#allocation5] sm:$0x30]
    %v5128 = vld [vmem:[#allocation5 + $0x8] sm:$0x30]
    %v5129 = vld [vmem:[#allocation5 + $0x10] sm:$0x30]
    %v5130 = vld [vmem:[#allocation5 + $0x18] sm:$0x30]
    %v5135 = vrot.slane %v5127, 2
    %v5136 = vrot.slane %v5128, 2
    %v5137 = vrot.slane %v5129, 2
    %v5138 = vrot.slane %v5130, 2
    %v5143 = vadd.f32 %v5123, %v5135
    %v5144 = vadd.f32 %v5124, %v5136
    %v5145 = vadd.f32 %v5125, %v5137
    %v5146 = vadd.f32 %v5126, %v5138
    %5147 = vmatpush.msra.mxu0 %v4189
    %5148 = vmatpush.msra.mxu0 %v4185
    %5149 = vmatpush.msra.mxu0 %v4181
    %5150 = vmatpush.msra.mxu0 %v4177
    %5151 = vmatpush.msra.mxu0 %v4173
    %5152 = vmatpush.msra.mxu0 %v4169
    %5153 = vmatpush.msra.mxu0 %v4165
    %5154 = vmatpush.msra.mxu0 %v4161
    %5155 = vmatpush.msra.mxu0 %v4157
    %5156 = vmatpush.msra.mxu0 %v4153
    %5157 = vmatpush.msra.mxu0 %v4149
    %5158 = vmatpush.msra.mxu0 %v4145
    %5159 = vmatpush.msra.mxu0 %v4141
    %5160 = vmatpush.msra.mxu0 %v4137
    %5161 = vmatpush.msra.mxu0 %v4133
    %5162 = vmatpush.msra.mxu0 %v4129
    %5163 = vmatmul.f32.gmra.mxu0 %v5120
    %v5164 = vpop.f32.mrf.mxu0
    %v5165 = vadd.f32 0.0, %v5164
    %5166 = vdwg.mxu0
    %5167 = vmatpush.msra.mxu0 %v4190
    %5168 = vmatpush.msra.mxu0 %v4186
    %5169 = vmatpush.msra.mxu0 %v4182
    %5170 = vmatpush.msra.mxu0 %v4178
    %5171 = vmatpush.msra.mxu0 %v4174
    %5172 = vmatpush.msra.mxu0 %v4170
    %5173 = vmatpush.msra.mxu0 %v4166
    %5174 = vmatpush.msra.mxu0 %v4162
    %5175 = vmatpush.msra.mxu0 %v4158
    %5176 = vmatpush.msra.mxu0 %v4154
    %5177 = vmatpush.msra.mxu0 %v4150
    %5178 = vmatpush.msra.mxu0 %v4146
    %5179 = vmatpush.msra.mxu0 %v4142
    %5180 = vmatpush.msra.mxu0 %v4138
    %5181 = vmatpush.msra.mxu0 %v4134
    %5182 = vmatpush.msra.mxu0 %v4130
    %5183 = vmatmul.f32.gmra.mxu0 %v5120
    %v5184 = vpop.f32.mrf.mxu0
    %v5185 = vadd.f32 0.0, %v5184
    %5186 = vdwg.mxu0
    %5187 = vmatpush.msra.mxu0 %v4191
    %5188 = vmatpush.msra.mxu0 %v4187
    %5189 = vmatpush.msra.mxu0 %v4183
    %5190 = vmatpush.msra.mxu0 %v4179
    %5191 = vmatpush.msra.mxu0 %v4175
    %5192 = vmatpush.msra.mxu0 %v4171
    %5193 = vmatpush.msra.mxu0 %v4167
    %5194 = vmatpush.msra.mxu0 %v4163
    %5195 = vmatpush.msra.mxu0 %v4159
    %5196 = vmatpush.msra.mxu0 %v4155
    %5197 = vmatpush.msra.mxu0 %v4151
    %5198 = vmatpush.msra.mxu0 %v4147
    %5199 = vmatpush.msra.mxu0 %v4143
    %5200 = vmatpush.msra.mxu0 %v4139
    %5201 = vmatpush.msra.mxu0 %v4135
    %5202 = vmatpush.msra.mxu0 %v4131
    %5203 = vmatmul.f32.gmra.mxu0 %v5120
    %v5204 = vpop.f32.mrf.mxu0
    %v5205 = vadd.f32 0.0, %v5204
    %5206 = vdwg.mxu0
    %5207 = vmatpush.msra.mxu0 %v4192
    %5208 = vmatpush.msra.mxu0 %v4188
    %5209 = vmatpush.msra.mxu0 %v4184
    %5210 = vmatpush.msra.mxu0 %v4180
    %5211 = vmatpush.msra.mxu0 %v4176
    %5212 = vmatpush.msra.mxu0 %v4172
    %5213 = vmatpush.msra.mxu0 %v4168
    %5214 = vmatpush.msra.mxu0 %v4164
    %5215 = vmatpush.msra.mxu0 %v4160
    %5216 = vmatpush.msra.mxu0 %v4156
    %5217 = vmatpush.msra.mxu0 %v4152
    %5218 = vmatpush.msra.mxu0 %v4148
    %5219 = vmatpush.msra.mxu0 %v4144
    %5220 = vmatpush.msra.mxu0 %v4140
    %5221 = vmatpush.msra.mxu0 %v4136
    %5222 = vmatpush.msra.mxu0 %v4132
    %5223 = vmatmul.f32.gmra.mxu0 %v5120
    %v5224 = vpop.f32.mrf.mxu0
    %v5225 = vadd.f32 0.0, %v5224
    %5226 = vdwg.mxu0
    %v5231 = vrot.slane %v5165, 6
    %v5232 = vrot.slane %v5185, 6
    %v5233 = vrot.slane %v5205, 6
    %v5234 = vrot.slane %v5225, 6
    %v5239 = vadd.f32 %v5143, %v5231
    %v5240 = vadd.f32 %v5144, %v5232
    %v5241 = vadd.f32 %v5145, %v5233
    %v5242 = vadd.f32 %v5146, %v5234
    %v5243 = vxor.u32 %v5239, 2147483648
    %v5244 = vxor.u32 %v5240, 2147483648
    %v5245 = vxor.u32 %v5241, 2147483648
    %v5246 = vmul.f32 %v5243, 1.442695
    %v5247 = vpow.pop %v5246
    %v5248 = vmul.f32 %v5244, 1.442695
    %v5249 = vpow.pop %v5248
    %v5250 = vmul.f32 %v5245, 1.442695
    %v5251 = vpow.pop %v5250
    %v5252 = vadd.f32 %v5247, 1.0
    %v5253 = vadd.f32 %v5249, 1.0
    %v5254 = vadd.f32 %v5251, 1.0
    %v5255 = vrcp.pop %v5252
    %v5256 = vmul.f32 %v5252, %v5255
    %v5257 = vsub.f32 1.0, %v5256
    %v5258 = vmul.f32 %v5255, %v5257
    %v5259 = vadd.f32 %v5255, %v5258
    %vm5260 = vweird.f32 %v5252
    %vm5261 = vweird.f32 %v5255
    %vm5262 = vmor %vm5260, %vm5261
    %v5263 = vsel %vm5262, %v5255, %v5259
    %v5264 = vand.u32 2147483647, %v5252
    %vm5265 = vcmp.eq.f32.partialorder %v5264, 8.507059e+37
    %v5266 = vand.u32 %v5252, 2147483648
    %v5267 = vor.u32 1.1754944e-38, %v5266
    %v5268 = vsel %vm5265, %v5267, %v5263
    %v5269 = vmul.f32 1.0, %v5268
    %v5270 = vrcp.pop %v5253
    %v5271 = vmul.f32 %v5253, %v5270
    %v5272 = vsub.f32 1.0, %v5271
    %v5273 = vmul.f32 %v5270, %v5272
    %v5274 = vadd.f32 %v5270, %v5273
    %vm5275 = vweird.f32 %v5253
    %vm5276 = vweird.f32 %v5270
    %vm5277 = vmor %vm5275, %vm5276
    %v5278 = vsel %vm5277, %v5270, %v5274
    %v5279 = vand.u32 2147483647, %v5253
    %vm5280 = vcmp.eq.f32.partialorder %v5279, 8.507059e+37
    %v5281 = vand.u32 %v5253, 2147483648
    %v5282 = vor.u32 1.1754944e-38, %v5281
    %v5283 = vsel %vm5280, %v5282, %v5278
    %v5284 = vmul.f32 1.0, %v5283
    %v5285 = vrcp.pop %v5254
    %v5286 = vmul.f32 %v5254, %v5285
    %v5287 = vsub.f32 1.0, %v5286
    %v5288 = vmul.f32 %v5285, %v5287
    %v5289 = vadd.f32 %v5285, %v5288
    %vm5290 = vweird.f32 %v5254
    %vm5291 = vweird.f32 %v5285
    %vm5292 = vmor %vm5290, %vm5291
    %v5293 = vsel %vm5292, %v5285, %v5289
    %v5294 = vand.u32 2147483647, %v5254
    %vm5295 = vcmp.eq.f32.partialorder %v5294, 8.507059e+37
    %v5296 = vand.u32 %v5254, 2147483648
    %v5297 = vor.u32 1.1754944e-38, %v5296
    %v5298 = vsel %vm5295, %v5297, %v5293
    %v5299 = vmul.f32 1.0, %v5298
    %v5300 = vtanh.pop %v5242
    %v5302 = vrot.slane %v5118, 6
    %v5304 = vmul.f32 %v5284, %v5302
    %v5305 = vmul.f32 %v5269, %v5300
    %v5306 = vadd.f32 %v5304, %v5305
    %v5307 = vtanh.pop %v5306
    %v5308 = vmul.f32 %v5299, %v5307
    %5309 = vst.msk [vmem:[#allocation6 + $0xc] sm:$0xc] %vm4554, %v5308
    %5310 = vst.msk [vmem:[#allocation6 + $0x6] sm:$0xc] %vm4556, %v5308
    %v5311 = vld [vmem:[#allocation4 + $0x20] sm:$0x30]
    %v5312 = vld [vmem:[#allocation4 + $0x28] sm:$0x30]
    %v5313 = vld [vmem:[#allocation4 + $0x30] sm:$0x30]
    %v5314 = vld [vmem:[#allocation4 + $0x38] sm:$0x30]
    %v5315 = vld [vmem:[#allocation5] sm:$0xc]
    %v5316 = vld [vmem:[#allocation5 + $0x8] sm:$0xc]
    %v5317 = vld [vmem:[#allocation5 + $0x10] sm:$0xc]
    %v5318 = vld [vmem:[#allocation5 + $0x18] sm:$0xc]
    %v5323 = vrot.slane %v5315, 6
    %v5324 = vrot.slane %v5316, 6
    %v5325 = vrot.slane %v5317, 6
    %v5326 = vrot.slane %v5318, 6
    %v5331 = vadd.f32 %v5311, %v5323
    %v5332 = vadd.f32 %v5312, %v5324
    %v5333 = vadd.f32 %v5313, %v5325
    %v5334 = vadd.f32 %v5314, %v5326
    %v5336 = vrot.slane %v5308, 2
    %5338 = vmatpush.msra.mxu0 %v4189
    %5339 = vmatpush.msra.mxu0 %v4185
    %5340 = vmatpush.msra.mxu0 %v4181
    %5341 = vmatpush.msra.mxu0 %v4177
    %5342 = vmatpush.msra.mxu0 %v4173
    %5343 = vmatpush.msra.mxu0 %v4169
    %5344 = vmatpush.msra.mxu0 %v4165
    %5345 = vmatpush.msra.mxu0 %v4161
    %5346 = vmatpush.msra.mxu0 %v4157
    %5347 = vmatpush.msra.mxu0 %v4153
    %5348 = vmatpush.msra.mxu0 %v4149
    %5349 = vmatpush.msra.mxu0 %v4145
    %5350 = vmatpush.msra.mxu0 %v4141
    %5351 = vmatpush.msra.mxu0 %v4137
    %5352 = vmatpush.msra.mxu0 %v4133
    %5353 = vmatpush.msra.mxu0 %v4129
    %5354 = vmatmul.f32.gmra.mxu0 %v5336
    %v5355 = vpop.f32.mrf.mxu0
    %v5356 = vadd.f32 0.0, %v5355
    %5357 = vdwg.mxu0
    %5358 = vmatpush.msra.mxu0 %v4190
    %5359 = vmatpush.msra.mxu0 %v4186
    %5360 = vmatpush.msra.mxu0 %v4182
    %5361 = vmatpush.msra.mxu0 %v4178
    %5362 = vmatpush.msra.mxu0 %v4174
    %5363 = vmatpush.msra.mxu0 %v4170
    %5364 = vmatpush.msra.mxu0 %v4166
    %5365 = vmatpush.msra.mxu0 %v4162
    %5366 = vmatpush.msra.mxu0 %v4158
    %5367 = vmatpush.msra.mxu0 %v4154
    %5368 = vmatpush.msra.mxu0 %v4150
    %5369 = vmatpush.msra.mxu0 %v4146
    %5370 = vmatpush.msra.mxu0 %v4142
    %5371 = vmatpush.msra.mxu0 %v4138
    %5372 = vmatpush.msra.mxu0 %v4134
    %5373 = vmatpush.msra.mxu0 %v4130
    %5374 = vmatmul.f32.gmra.mxu0 %v5336
    %v5375 = vpop.f32.mrf.mxu0
    %v5376 = vadd.f32 0.0, %v5375
    %5377 = vdwg.mxu0
    %5378 = vmatpush.msra.mxu0 %v4191
    %5379 = vmatpush.msra.mxu0 %v4187
    %5380 = vmatpush.msra.mxu0 %v4183
    %5381 = vmatpush.msra.mxu0 %v4179
    %5382 = vmatpush.msra.mxu0 %v4175
    %5383 = vmatpush.msra.mxu0 %v4171
    %5384 = vmatpush.msra.mxu0 %v4167
    %5385 = vmatpush.msra.mxu0 %v4163
    %5386 = vmatpush.msra.mxu0 %v4159
    %5387 = vmatpush.msra.mxu0 %v4155
    %5388 = vmatpush.msra.mxu0 %v4151
    %5389 = vmatpush.msra.mxu0 %v4147
    %5390 = vmatpush.msra.mxu0 %v4143
    %5391 = vmatpush.msra.mxu0 %v4139
    %5392 = vmatpush.msra.mxu0 %v4135
    %5393 = vmatpush.msra.mxu0 %v4131
    %5394 = vmatmul.f32.gmra.mxu0 %v5336
    %v5395 = vpop.f32.mrf.mxu0
    %v5396 = vadd.f32 0.0, %v5395
    %5397 = vdwg.mxu0
    %5398 = vmatpush.msra.mxu0 %v4192
    %5399 = vmatpush.msra.mxu0 %v4188
    %5400 = vmatpush.msra.mxu0 %v4184
    %5401 = vmatpush.msra.mxu0 %v4180
    %5402 = vmatpush.msra.mxu0 %v4176
    %5403 = vmatpush.msra.mxu0 %v4172
    %5404 = vmatpush.msra.mxu0 %v4168
    %5405 = vmatpush.msra.mxu0 %v4164
    %5406 = vmatpush.msra.mxu0 %v4160
    %5407 = vmatpush.msra.mxu0 %v4156
    %5408 = vmatpush.msra.mxu0 %v4152
    %5409 = vmatpush.msra.mxu0 %v4148
    %5410 = vmatpush.msra.mxu0 %v4144
    %5411 = vmatpush.msra.mxu0 %v4140
    %5412 = vmatpush.msra.mxu0 %v4136
    %5413 = vmatpush.msra.mxu0 %v4132
    %5414 = vmatmul.f32.gmra.mxu0 %v5336
    %v5415 = vpop.f32.mrf.mxu0
    %v5416 = vadd.f32 0.0, %v5415
    %5417 = vdwg.mxu0
    %v5422 = vrot.slane %v5356, 4
    %v5423 = vrot.slane %v5376, 4
    %v5424 = vrot.slane %v5396, 4
    %v5425 = vrot.slane %v5416, 4
    %v5430 = vadd.f32 %v5331, %v5422
    %v5431 = vadd.f32 %v5332, %v5423
    %v5432 = vadd.f32 %v5333, %v5424
    %v5433 = vadd.f32 %v5334, %v5425
    %v5434 = vxor.u32 %v5430, 2147483648
    %v5435 = vxor.u32 %v5431, 2147483648
    %v5436 = vxor.u32 %v5432, 2147483648
    %v5437 = vmul.f32 %v5434, 1.442695
    %v5438 = vpow.pop %v5437
    %v5439 = vmul.f32 %v5435, 1.442695
    %v5440 = vpow.pop %v5439
    %v5441 = vmul.f32 %v5436, 1.442695
    %v5442 = vpow.pop %v5441
    %v5443 = vadd.f32 %v5438, 1.0
    %v5444 = vadd.f32 %v5440, 1.0
    %v5445 = vadd.f32 %v5442, 1.0
    %v5446 = vrcp.pop %v5443
    %v5447 = vmul.f32 %v5443, %v5446
    %v5448 = vsub.f32 1.0, %v5447
    %v5449 = vmul.f32 %v5446, %v5448
    %v5450 = vadd.f32 %v5446, %v5449
    %vm5451 = vweird.f32 %v5443
    %vm5452 = vweird.f32 %v5446
    %vm5453 = vmor %vm5451, %vm5452
    %v5454 = vsel %vm5453, %v5446, %v5450
    %v5455 = vand.u32 2147483647, %v5443
    %vm5456 = vcmp.eq.f32.partialorder %v5455, 8.507059e+37
    %v5457 = vand.u32 %v5443, 2147483648
    %v5458 = vor.u32 1.1754944e-38, %v5457
    %v5459 = vsel %vm5456, %v5458, %v5454
    %v5460 = vmul.f32 1.0, %v5459
    %v5461 = vrcp.pop %v5444
    %v5462 = vmul.f32 %v5444, %v5461
    %v5463 = vsub.f32 1.0, %v5462
    %v5464 = vmul.f32 %v5461, %v5463
    %v5465 = vadd.f32 %v5461, %v5464
    %vm5466 = vweird.f32 %v5444
    %vm5467 = vweird.f32 %v5461
    %vm5468 = vmor %vm5466, %vm5467
    %v5469 = vsel %vm5468, %v5461, %v5465
    %v5470 = vand.u32 2147483647, %v5444
    %vm5471 = vcmp.eq.f32.partialorder %v5470, 8.507059e+37
    %v5472 = vand.u32 %v5444, 2147483648
    %v5473 = vor.u32 1.1754944e-38, %v5472
    %v5474 = vsel %vm5471, %v5473, %v5469
    %v5475 = vmul.f32 1.0, %v5474
    %v5476 = vrcp.pop %v5445
    %v5477 = vmul.f32 %v5445, %v5476
    %v5478 = vsub.f32 1.0, %v5477
    %v5479 = vmul.f32 %v5476, %v5478
    %v5480 = vadd.f32 %v5476, %v5479
    %vm5481 = vweird.f32 %v5445
    %vm5482 = vweird.f32 %v5476
    %vm5483 = vmor %vm5481, %vm5482
    %v5484 = vsel %vm5483, %v5476, %v5480
    %v5485 = vand.u32 2147483647, %v5445
    %vm5486 = vcmp.eq.f32.partialorder %v5485, 8.507059e+37
    %v5487 = vand.u32 %v5445, 2147483648
    %v5488 = vor.u32 1.1754944e-38, %v5487
    %v5489 = vsel %vm5486, %v5488, %v5484
    %v5490 = vmul.f32 1.0, %v5489
    %v5491 = vtanh.pop %v5433
    %v5493 = vrot.slane %v5306, 6
    %v5495 = vmul.f32 %v5475, %v5493
    %v5496 = vmul.f32 %v5460, %v5491
    %v5497 = vadd.f32 %v5495, %v5496
    %v5498 = vtanh.pop %v5497
    %v5499 = vmul.f32 %v5490, %v5498
    %5500 = vst.msk [vmem:[#allocation6 + $0xc] sm:$0x30] %vm4747, %v5499
    %5501 = vst.msk [vmem:[#allocation6 + $0x2] sm:$0x30] %vm4749, %v5499
    %v5502 = vld [vmem:[#allocation4 + $0x20] sm:$0xc0]
    %v5503 = vld [vmem:[#allocation4 + $0x28] sm:$0xc0]
    %v5504 = vld [vmem:[#allocation4 + $0x30] sm:$0xc0]
    %v5505 = vld [vmem:[#allocation4 + $0x38] sm:$0xc0]
    %v5506 = vld [vmem:[#allocation5] sm:$0x3]
    %v5507 = vld [vmem:[#allocation5 + $0x8] sm:$0x3]
    %v5508 = vld [vmem:[#allocation5 + $0x10] sm:$0x3]
    %v5509 = vld [vmem:[#allocation5 + $0x18] sm:$0x3]
    %v5514 = vrot.slane %v5506, 2
    %v5515 = vrot.slane %v5507, 2
    %v5516 = vrot.slane %v5508, 2
    %v5517 = vrot.slane %v5509, 2
    %v5522 = vadd.f32 %v5502, %v5514
    %v5523 = vadd.f32 %v5503, %v5515
    %v5524 = vadd.f32 %v5504, %v5516
    %v5525 = vadd.f32 %v5505, %v5517
    %v5527 = vrot.slane %v5499, 4
    %5529 = vmatpush.msra.mxu0 %v4189
    %5530 = vmatpush.msra.mxu0 %v4185
    %5531 = vmatpush.msra.mxu0 %v4181
    %5532 = vmatpush.msra.mxu0 %v4177
    %5533 = vmatpush.msra.mxu0 %v4173
    %5534 = vmatpush.msra.mxu0 %v4169
    %5535 = vmatpush.msra.mxu0 %v4165
    %5536 = vmatpush.msra.mxu0 %v4161
    %5537 = vmatpush.msra.mxu0 %v4157
    %5538 = vmatpush.msra.mxu0 %v4153
    %5539 = vmatpush.msra.mxu0 %v4149
    %5540 = vmatpush.msra.mxu0 %v4145
    %5541 = vmatpush.msra.mxu0 %v4141
    %5542 = vmatpush.msra.mxu0 %v4137
    %5543 = vmatpush.msra.mxu0 %v4133
    %5544 = vmatpush.msra.mxu0 %v4129
    %5545 = vmatmul.f32.gmra.mxu0 %v5527
    %v5546 = vpop.f32.mrf.mxu0
    %v5547 = vadd.f32 0.0, %v5546
    %5548 = vdwg.mxu0
    %5549 = vmatpush.msra.mxu0 %v4190
    %5550 = vmatpush.msra.mxu0 %v4186
    %5551 = vmatpush.msra.mxu0 %v4182
    %5552 = vmatpush.msra.mxu0 %v4178
    %5553 = vmatpush.msra.mxu0 %v4174
    %5554 = vmatpush.msra.mxu0 %v4170
    %5555 = vmatpush.msra.mxu0 %v4166
    %5556 = vmatpush.msra.mxu0 %v4162
    %5557 = vmatpush.msra.mxu0 %v4158
    %5558 = vmatpush.msra.mxu0 %v4154
    %5559 = vmatpush.msra.mxu0 %v4150
    %5560 = vmatpush.msra.mxu0 %v4146
    %5561 = vmatpush.msra.mxu0 %v4142
    %5562 = vmatpush.msra.mxu0 %v4138
    %5563 = vmatpush.msra.mxu0 %v4134
    %5564 = vmatpush.msra.mxu0 %v4130
    %5565 = vmatmul.f32.gmra.mxu0 %v5527
    %v5566 = vpop.f32.mrf.mxu0
    %v5567 = vadd.f32 0.0, %v5566
    %5568 = vdwg.mxu0
    %5569 = vmatpush.msra.mxu0 %v4191
    %5570 = vmatpush.msra.mxu0 %v4187
    %5571 = vmatpush.msra.mxu0 %v4183
    %5572 = vmatpush.msra.mxu0 %v4179
    %5573 = vmatpush.msra.mxu0 %v4175
    %5574 = vmatpush.msra.mxu0 %v4171
    %5575 = vmatpush.msra.mxu0 %v4167
    %5576 = vmatpush.msra.mxu0 %v4163
    %5577 = vmatpush.msra.mxu0 %v4159
    %5578 = vmatpush.msra.mxu0 %v4155
    %5579 = vmatpush.msra.mxu0 %v4151
    %5580 = vmatpush.msra.mxu0 %v4147
    %5581 = vmatpush.msra.mxu0 %v4143
    %5582 = vmatpush.msra.mxu0 %v4139
    %5583 = vmatpush.msra.mxu0 %v4135
    %5584 = vmatpush.msra.mxu0 %v4131
    %5585 = vmatmul.f32.gmra.mxu0 %v5527
    %v5586 = vpop.f32.mrf.mxu0
    %v5587 = vadd.f32 0.0, %v5586
    %5588 = vdwg.mxu0
    %5589 = vmatpush.msra.mxu0 %v4192
    %5590 = vmatpush.msra.mxu0 %v4188
    %5591 = vmatpush.msra.mxu0 %v4184
    %5592 = vmatpush.msra.mxu0 %v4180
    %5593 = vmatpush.msra.mxu0 %v4176
    %5594 = vmatpush.msra.mxu0 %v4172
    %5595 = vmatpush.msra.mxu0 %v4168
    %5596 = vmatpush.msra.mxu0 %v4164
    %5597 = vmatpush.msra.mxu0 %v4160
    %5598 = vmatpush.msra.mxu0 %v4156
    %5599 = vmatpush.msra.mxu0 %v4152
    %5600 = vmatpush.msra.mxu0 %v4148
    %5601 = vmatpush.msra.mxu0 %v4144
    %5602 = vmatpush.msra.mxu0 %v4140
    %5603 = vmatpush.msra.mxu0 %v4136
    %5604 = vmatpush.msra.mxu0 %v4132
    %5605 = vmatmul.f32.gmra.mxu0 %v5527
    %v5606 = vpop.f32.mrf.mxu0
    %v5607 = vadd.f32 0.0, %v5606
    %5608 = vdwg.mxu0
    %v5613 = vrot.slane %v5547, 2
    %v5614 = vrot.slane %v5567, 2
    %v5615 = vrot.slane %v5587, 2
    %v5616 = vrot.slane %v5607, 2
    %v5621 = vadd.f32 %v5522, %v5613
    %v5622 = vadd.f32 %v5523, %v5614
    %v5623 = vadd.f32 %v5524, %v5615
    %v5624 = vadd.f32 %v5525, %v5616
    %v5625 = vxor.u32 %v5621, 2147483648
    %v5626 = vxor.u32 %v5622, 2147483648
    %v5627 = vxor.u32 %v5623, 2147483648
    %v5628 = vmul.f32 %v5625, 1.442695
    %v5629 = vpow.pop %v5628
    %v5630 = vmul.f32 %v5626, 1.442695
    %v5631 = vpow.pop %v5630
    %v5632 = vmul.f32 %v5627, 1.442695
    %v5633 = vpow.pop %v5632
    %v5634 = vadd.f32 %v5629, 1.0
    %v5635 = vadd.f32 %v5631, 1.0
    %v5636 = vadd.f32 %v5633, 1.0
    %v5637 = vrcp.pop %v5634
    %v5638 = vmul.f32 %v5634, %v5637
    %v5639 = vsub.f32 1.0, %v5638
    %v5640 = vmul.f32 %v5637, %v5639
    %v5641 = vadd.f32 %v5637, %v5640
    %vm5642 = vweird.f32 %v5634
    %vm5643 = vweird.f32 %v5637
    %vm5644 = vmor %vm5642, %vm5643
    %v5645 = vsel %vm5644, %v5637, %v5641
    %v5646 = vand.u32 2147483647, %v5634
    %vm5647 = vcmp.eq.f32.partialorder %v5646, 8.507059e+37
    %v5648 = vand.u32 %v5634, 2147483648
    %v5649 = vor.u32 1.1754944e-38, %v5648
    %v5650 = vsel %vm5647, %v5649, %v5645
    %v5651 = vmul.f32 1.0, %v5650
    %v5652 = vrcp.pop %v5635
    %v5653 = vmul.f32 %v5635, %v5652
    %v5654 = vsub.f32 1.0, %v5653
    %v5655 = vmul.f32 %v5652, %v5654
    %v5656 = vadd.f32 %v5652, %v5655
    %vm5657 = vweird.f32 %v5635
    %vm5658 = vweird.f32 %v5652
    %vm5659 = vmor %vm5657, %vm5658
    %v5660 = vsel %vm5659, %v5652, %v5656
    %v5661 = vand.u32 2147483647, %v5635
    %vm5662 = vcmp.eq.f32.partialorder %v5661, 8.507059e+37
    %v5663 = vand.u32 %v5635, 2147483648
    %v5664 = vor.u32 1.1754944e-38, %v5663
    %v5665 = vsel %vm5662, %v5664, %v5660
    %v5666 = vmul.f32 1.0, %v5665
    %v5667 = vrcp.pop %v5636
    %v5668 = vmul.f32 %v5636, %v5667
    %v5669 = vsub.f32 1.0, %v5668
    %v5670 = vmul.f32 %v5667, %v5669
    %v5671 = vadd.f32 %v5667, %v5670
    %vm5672 = vweird.f32 %v5636
    %vm5673 = vweird.f32 %v5667
    %vm5674 = vmor %vm5672, %vm5673
    %v5675 = vsel %vm5674, %v5667, %v5671
    %v5676 = vand.u32 2147483647, %v5636
    %vm5677 = vcmp.eq.f32.partialorder %v5676, 8.507059e+37
    %v5678 = vand.u32 %v5636, 2147483648
    %v5679 = vor.u32 1.1754944e-38, %v5678
    %v5680 = vsel %vm5677, %v5679, %v5675
    %v5681 = vmul.f32 1.0, %v5680
    %v5682 = vtanh.pop %v5624
    %v5684 = vrot.slane %v5497, 6
    %v5686 = vmul.f32 %v5666, %v5684
    %v5687 = vmul.f32 %v5651, %v5682
    %v5688 = vadd.f32 %v5686, %v5687
    %v5689 = vtanh.pop %v5688
    %v5690 = vmul.f32 %v5681, %v5689
    %5691 = vst.msk [vmem:[#allocation6 + $0xc] sm:$0xc0] %vm4940, %v5690
    %5692 = vst.msk [vmem:[#allocation6 - $0x2] sm:$0xc0] %vm4942, %v5690
    %v5693 = vld [vmem:[#allocation11] sm:$0x1]
    %v5694 = vperm.slane %v5693, 0
    %v5695 = vadd.f32 %v5694, 0.0
    %v5696 = vld [vmem:[#allocation6] sm:$0xff]
    %v5697 = vld [vmem:[#allocation6 + $0x8] sm:$0xff]
    %v5698 = vld [vmem:[%s3] sm:$0xff]
    %v5699 = vld [vmem:[%s3 + $0x8] sm:$0xff]
    %v5700 = vld [vmem:[%s3 + $0x10] sm:$0xff]
    %v5701 = vld [vmem:[%s3 + $0x18] sm:$0xff]
    %v5702 = vld [vmem:[%s3 + $0x20] sm:$0xff]
    %v5703 = vld [vmem:[%s3 + $0x28] sm:$0xff]
    %v5704 = vld [vmem:[%s3 + $0x30] sm:$0xff]
    %v5705 = vld [vmem:[%s3 + $0x38] sm:$0xff]
    %v5706 = vld [vmem:[%s3 + $0x40] sm:$0xff]
    %v5707 = vld [vmem:[%s3 + $0x48] sm:$0xff]
    %v5708 = vld [vmem:[%s3 + $0x50] sm:$0xff]
    %v5709 = vld [vmem:[%s3 + $0x58] sm:$0xff]
    %v5710 = vld [vmem:[%s3 + $0x60] sm:$0xff]
    %v5711 = vld [vmem:[%s3 + $0x68] sm:$0xff]
    %v5712 = vld [vmem:[%s3 + $0x70] sm:$0xff]
    %v5713 = vld [vmem:[%s3 + $0x78] sm:$0xff]
    %5714 = vmatpush.msra.mxu0 %v5713
    %5715 = vmatpush.msra.mxu0 %v5712
    %5716 = vmatpush.msra.mxu0 %v5711
    %5717 = vmatpush.msra.mxu0 %v5710
    %5718 = vmatpush.msra.mxu0 %v5709
    %5719 = vmatpush.msra.mxu0 %v5708
    %5720 = vmatpush.msra.mxu0 %v5707
    %5721 = vmatpush.msra.mxu0 %v5706
    %5722 = vmatpush.msra.mxu0 %v5705
    %5723 = vmatpush.msra.mxu0 %v5704
    %5724 = vmatpush.msra.mxu0 %v5703
    %5725 = vmatpush.msra.mxu0 %v5702
    %5726 = vmatpush.msra.mxu0 %v5701
    %5727 = vmatpush.msra.mxu0 %v5700
    %5728 = vmatpush.msra.mxu0 %v5699
    %5729 = vmatpush.msra.mxu0 %v5698
    %5730 = vmatmul.f32.gmra.mxu0 %v5696
    %v5731 = vpop.f32.mrf.mxu0
    %v5732 = vadd.f32 0.0, %v5731
    %5733 = vmatmul.f32.gmra.mxu0 %v5697
    %v5734 = vpop.f32.mrf.mxu0
    %v5735 = vadd.f32 0.0, %v5734
    %5736 = vdwg.mxu0
    %v5737 = vadd.f32 %v5695, %v5732
    %v5738 = vadd.f32 %v5695, %v5735
    %v5739 = vld [vmem:[#allocation6 + $0x2] sm:$0xff]
    %v5740 = vld [vmem:[#allocation6 + $0xa] sm:$0xff]
    %v5741 = vld [vmem:[%s3 + $0x80] sm:$0xff]
    %v5742 = vld [vmem:[%s3 + $0x88] sm:$0xff]
    %v5743 = vld [vmem:[%s3 + $0x90] sm:$0xff]
    %v5744 = vld [vmem:[%s3 + $0x98] sm:$0xff]
    %v5745 = vld [vmem:[%s3 + $0xa0] sm:$0xff]
    %v5746 = vld [vmem:[%s3 + $0xa8] sm:$0xff]
    %v5747 = vld [vmem:[%s3 + $0xb0] sm:$0xff]
    %v5748 = vld [vmem:[%s3 + $0xb8] sm:$0xff]
    %v5749 = vld [vmem:[%s3 + $0xc0] sm:$0xff]
    %v5750 = vld [vmem:[%s3 + $0xc8] sm:$0xff]
    %v5751 = vld [vmem:[%s3 + $0xd0] sm:$0xff]
    %v5752 = vld [vmem:[%s3 + $0xd8] sm:$0xff]
    %v5753 = vld [vmem:[%s3 + $0xe0] sm:$0xff]
    %v5754 = vld [vmem:[%s3 + $0xe8] sm:$0xff]
    %v5755 = vld [vmem:[%s3 + $0xf0] sm:$0xff]
    %v5756 = vld [vmem:[%s3 + $0xf8] sm:$0xff]
    %5757 = vmatpush.msra.mxu0 %v5756
    %5758 = vmatpush.msra.mxu0 %v5755
    %5759 = vmatpush.msra.mxu0 %v5754
    %5760 = vmatpush.msra.mxu0 %v5753
    %5761 = vmatpush.msra.mxu0 %v5752
    %5762 = vmatpush.msra.mxu0 %v5751
    %5763 = vmatpush.msra.mxu0 %v5750
    %5764 = vmatpush.msra.mxu0 %v5749
    %5765 = vmatpush.msra.mxu0 %v5748
    %5766 = vmatpush.msra.mxu0 %v5747
    %5767 = vmatpush.msra.mxu0 %v5746
    %5768 = vmatpush.msra.mxu0 %v5745
    %5769 = vmatpush.msra.mxu0 %v5744
    %5770 = vmatpush.msra.mxu0 %v5743
    %5771 = vmatpush.msra.mxu0 %v5742
    %5772 = vmatpush.msra.mxu0 %v5741
    %5773 = vmatmul.f32.gmra.mxu0 %v5739
    %v5774 = vpop.f32.mrf.mxu0
    %v5775 = vadd.f32 0.0, %v5774
    %5776 = vmatmul.f32.gmra.mxu0 %v5740
    %v5777 = vpop.f32.mrf.mxu0
    %v5778 = vadd.f32 0.0, %v5777
    %5779 = vdwg.mxu0
    %v5780 = vadd.f32 %v5737, %v5775
    %v5781 = vadd.f32 %v5738, %v5778
    %v5782 = vld [vmem:[#allocation6 + $0x4] sm:$0xff]
    %v5783 = vld [vmem:[#allocation6 + $0xc] sm:$0xff]
    %v5784 = vld [vmem:[%s3 + $0x100] sm:$0xff]
    %v5785 = vld [vmem:[%s3 + $0x108] sm:$0xff]
    %v5786 = vld [vmem:[%s3 + $0x110] sm:$0xff]
    %v5787 = vld [vmem:[%s3 + $0x118] sm:$0xff]
    %v5788 = vld [vmem:[%s3 + $0x120] sm:$0xff]
    %v5789 = vld [vmem:[%s3 + $0x128] sm:$0xff]
    %v5790 = vld [vmem:[%s3 + $0x130] sm:$0xff]
    %v5791 = vld [vmem:[%s3 + $0x138] sm:$0xff]
    %v5792 = vld [vmem:[%s3 + $0x140] sm:$0xff]
    %v5793 = vld [vmem:[%s3 + $0x148] sm:$0xff]
    %v5794 = vld [vmem:[%s3 + $0x150] sm:$0xff]
    %v5795 = vld [vmem:[%s3 + $0x158] sm:$0xff]
    %v5796 = vld [vmem:[%s3 + $0x160] sm:$0xff]
    %v5797 = vld [vmem:[%s3 + $0x168] sm:$0xff]
    %v5798 = vld [vmem:[%s3 + $0x170] sm:$0xff]
    %v5799 = vld [vmem:[%s3 + $0x178] sm:$0xff]
    %5800 = vmatpush.msra.mxu0 %v5799
    %5801 = vmatpush.msra.mxu0 %v5798
    %5802 = vmatpush.msra.mxu0 %v5797
    %5803 = vmatpush.msra.mxu0 %v5796
    %5804 = vmatpush.msra.mxu0 %v5795
    %5805 = vmatpush.msra.mxu0 %v5794
    %5806 = vmatpush.msra.mxu0 %v5793
    %5807 = vmatpush.msra.mxu0 %v5792
    %5808 = vmatpush.msra.mxu0 %v5791
    %5809 = vmatpush.msra.mxu0 %v5790
    %5810 = vmatpush.msra.mxu0 %v5789
    %5811 = vmatpush.msra.mxu0 %v5788
    %5812 = vmatpush.msra.mxu0 %v5787
    %5813 = vmatpush.msra.mxu0 %v5786
    %5814 = vmatpush.msra.mxu0 %v5785
    %5815 = vmatpush.msra.mxu0 %v5784
    %5816 = vmatmul.f32.gmra.mxu0 %v5782
    %v5817 = vpop.f32.mrf.mxu0
    %v5818 = vadd.f32 0.0, %v5817
    %5819 = vmatmul.f32.gmra.mxu0 %v5783
    %v5820 = vpop.f32.mrf.mxu0
    %v5821 = vadd.f32 0.0, %v5820
    %5822 = vdwg.mxu0
    %v5823 = vadd.f32 %v5780, %v5818
    %v5824 = vadd.f32 %v5781, %v5821
    %v5825 = vld [vmem:[#allocation6 + $0x6] sm:$0xff]
    %v5826 = vld [vmem:[#allocation6 + $0xe] sm:$0xff]
    %v5827 = vld [vmem:[%s3 + $0x180] sm:$0xff]
    %v5828 = vld [vmem:[%s3 + $0x188] sm:$0xff]
    %v5829 = vld [vmem:[%s3 + $0x190] sm:$0xff]
    %v5830 = vld [vmem:[%s3 + $0x198] sm:$0xff]
    %v5831 = vld [vmem:[%s3 + $0x1a0] sm:$0xff]
    %v5832 = vld [vmem:[%s3 + $0x1a8] sm:$0xff]
    %v5833 = vld [vmem:[%s3 + $0x1b0] sm:$0xff]
    %v5834 = vld [vmem:[%s3 + $0x1b8] sm:$0xff]
    %v5835 = vld [vmem:[%s3 + $0x1c0] sm:$0xff]
    %v5836 = vld [vmem:[%s3 + $0x1c8] sm:$0xff]
    %v5837 = vld [vmem:[%s3 + $0x1d0] sm:$0xff]
    %v5838 = vld [vmem:[%s3 + $0x1d8] sm:$0xff]
    %v5839 = vld [vmem:[%s3 + $0x1e0] sm:$0xff]
    %v5840 = vld [vmem:[%s3 + $0x1e8] sm:$0xff]
    %v5841 = vld [vmem:[%s3 + $0x1f0] sm:$0xff]
    %v5842 = vld [vmem:[%s3 + $0x1f8] sm:$0xff]
    %5843 = vmatpush.msra.mxu0 %v5842
    %5844 = vmatpush.msra.mxu0 %v5841
    %5845 = vmatpush.msra.mxu0 %v5840
    %5846 = vmatpush.msra.mxu0 %v5839
    %5847 = vmatpush.msra.mxu0 %v5838
    %5848 = vmatpush.msra.mxu0 %v5837
    %5849 = vmatpush.msra.mxu0 %v5836
    %5850 = vmatpush.msra.mxu0 %v5835
    %5851 = vmatpush.msra.mxu0 %v5834
    %5852 = vmatpush.msra.mxu0 %v5833
    %5853 = vmatpush.msra.mxu0 %v5832
    %5854 = vmatpush.msra.mxu0 %v5831
    %5855 = vmatpush.msra.mxu0 %v5830
    %5856 = vmatpush.msra.mxu0 %v5829
    %5857 = vmatpush.msra.mxu0 %v5828
    %5858 = vmatpush.msra.mxu0 %v5827
    %5859 = vmatmul.f32.gmra.mxu0 %v5825
    %v5860 = vpop.f32.mrf.mxu0
    %v5861 = vadd.f32 0.0, %v5860
    %5862 = vmatmul.f32.gmra.mxu0 %v5826
    %v5863 = vpop.f32.mrf.mxu0
    %v5864 = vadd.f32 0.0, %v5863
    %5865 = vdwg.mxu0
    %v5866 = vadd.f32 %v5823, %v5861
    %v5867 = vadd.f32 %v5824, %v5864
    %v5868 = vld [vmem:[#allocation6 + $0x8] sm:$0xff]
    %v5869 = vld [vmem:[#allocation6 + $0x10] sm:$0xff]
    %v5870 = vld [vmem:[%s3 + $0x200] sm:$0xff]
    %v5871 = vld [vmem:[%s3 + $0x208] sm:$0xff]
    %v5872 = vld [vmem:[%s3 + $0x210] sm:$0xff]
    %v5873 = vld [vmem:[%s3 + $0x218] sm:$0xff]
    %v5874 = vld [vmem:[%s3 + $0x220] sm:$0xff]
    %v5875 = vld [vmem:[%s3 + $0x228] sm:$0xff]
    %v5876 = vld [vmem:[%s3 + $0x230] sm:$0xff]
    %v5877 = vld [vmem:[%s3 + $0x238] sm:$0xff]
    %v5878 = vld [vmem:[%s3 + $0x240] sm:$0xff]
    %v5879 = vld [vmem:[%s3 + $0x248] sm:$0xff]
    %v5880 = vld [vmem:[%s3 + $0x250] sm:$0xff]
    %v5881 = vld [vmem:[%s3 + $0x258] sm:$0xff]
    %v5882 = vld [vmem:[%s3 + $0x260] sm:$0xff]
    %v5883 = vld [vmem:[%s3 + $0x268] sm:$0xff]
    %v5884 = vld [vmem:[%s3 + $0x270] sm:$0xff]
    %v5885 = vld [vmem:[%s3 + $0x278] sm:$0xff]
    %5886 = vmatpush.msra.mxu0 %v5885
    %5887 = vmatpush.msra.mxu0 %v5884
    %5888 = vmatpush.msra.mxu0 %v5883
    %5889 = vmatpush.msra.mxu0 %v5882
    %5890 = vmatpush.msra.mxu0 %v5881
    %5891 = vmatpush.msra.mxu0 %v5880
    %5892 = vmatpush.msra.mxu0 %v5879
    %5893 = vmatpush.msra.mxu0 %v5878
    %5894 = vmatpush.msra.mxu0 %v5877
    %5895 = vmatpush.msra.mxu0 %v5876
    %5896 = vmatpush.msra.mxu0 %v5875
    %5897 = vmatpush.msra.mxu0 %v5874
    %5898 = vmatpush.msra.mxu0 %v5873
    %5899 = vmatpush.msra.mxu0 %v5872
    %5900 = vmatpush.msra.mxu0 %v5871
    %5901 = vmatpush.msra.mxu0 %v5870
    %5902 = vmatmul.f32.gmra.mxu0 %v5868
    %v5903 = vpop.f32.mrf.mxu0
    %v5904 = vadd.f32 0.0, %v5903
    %5905 = vmatmul.f32.gmra.mxu0 %v5869
    %v5906 = vpop.f32.mrf.mxu0
    %v5907 = vadd.f32 0.0, %v5906
    %5908 = vdwg.mxu0
    %v5909 = vadd.f32 %v5866, %v5904
    %v5910 = vadd.f32 %v5867, %v5907
    %v5911 = vmax.f32 %v5909, 0.0
    %v5912 = vmax.f32 %v5910, 0.0
    %v5913 = vld [vmem:[%s4] sm:$0xff]
    %v5914 = vld [vmem:[%s4 + $0x8] sm:$0xff]
    %v5915 = vld [vmem:[%s4 + $0x10] sm:$0xff]
    %v5916 = vld [vmem:[%s4 + $0x18] sm:$0xff]
    %v5917 = vld [vmem:[%s4 + $0x20] sm:$0xff]
    %v5918 = vld [vmem:[%s4 + $0x28] sm:$0xff]
    %v5919 = vld [vmem:[%s4 + $0x30] sm:$0xff]
    %v5920 = vld [vmem:[%s4 + $0x38] sm:$0xff]
    %v5921 = vld [vmem:[#allocation11 + $0x1] sm:$0x1]
    %v5922 = vperm.slane %v5921, 0
    %v5924 = vsel %vm110, %v5911, 0
    %v5927 = vsel %vm110, %v5912, 0
    %5929 = vmatpush.msra.mxu0 0.0
    %5930 = vmatpush.msra.mxu0 0.0
    %5931 = vmatpush.msra.mxu0 0.0
    %5932 = vmatpush.msra.mxu0 0.0
    %5933 = vmatpush.msra.mxu0 0.0
    %5934 = vmatpush.msra.mxu0 0.0
    %5935 = vmatpush.msra.mxu0 0.0
    %5936 = vmatpush.msra.mxu0 0.0
    %5937 = vmatpush.msra.mxu0 %v5920
    %5938 = vmatpush.msra.mxu0 %v5919
    %5939 = vmatpush.msra.mxu0 %v5918
    %5940 = vmatpush.msra.mxu0 %v5917
    %5941 = vmatpush.msra.mxu0 %v5916
    %5942 = vmatpush.msra.mxu0 %v5915
    %5943 = vmatpush.msra.mxu0 %v5914
    %5944 = vmatpush.msra.mxu0 %v5913
    %5945 = vmatmul.f32.gmra.mxu0 %v5924
    %v5946 = vpop.f32.mrf.mxu0
    %v5947 = vadd.f32 %v5922, %v5946
    %5948 = vmatmul.f32.gmra.mxu0 %v5927
    %v5949 = vpop.f32.mrf.mxu0
    %v5950 = vadd.f32 %v5922, %v5949
    %5951 = vdwg.mxu0
    %vm5952 = vcmask 15360
    %5953 = vst.msk [vmem:[%s6] sm:$0xff] %vm5952, %v5947
    %5954 = vst.msk [vmem:[%s6 + $0x8] sm:$0xff] %vm5952, %v5950
    // Predicated region
    $region38: #{forward.1} parent=1 // pred_check
      _
    $region39: #{forward.1} parent=1 // pred_check_branch
      %5956 = sbr.rel (0) target = $region41
    $region40: #{forward.1} parent=1 // pred_region
      _
    $region41: #{forward.1} parent=1 // pred_fallthru
      _
    // Predicated region
    $region42: #{forward.1} parent=1 // pred_check
      _
    $region43: #{forward.1} parent=1 // pred_check_branch
      %5958 = sbr.rel (0) target = $region45
    $region44: #{forward.1} parent=1 // pred_region
      _
    $region45: #{forward.1} parent=1 // pred_fallthru
      _
    %5959 = vsyncpa [#allocation8], 1
    %5960 = vsyncpa [#allocation10], 1

</llo_original>
